<compile_context>
chip_gen: v6e
topology: v6e:2x2x1
jax: 0.10.0
libtpu: 0.0.40
codegen_flags: <defaults>
</compile_context>

<pallas_src>
import functools

import numpy as np
import jax
import jax.numpy as jnp
from jax.experimental import pallas as pl
from jax.experimental.pallas import tpu as pltpu


# ----------------------------------------------------------------------------
# In-kernel helpers
# ----------------------------------------------------------------------------
def _erf_gelu(x):
    """Exact GELU, erf via Abramowitz-Stegun 7.1.26 (|abs err| < 1.5e-7)."""
    z = x * 0.7071067811865476
    az = jnp.abs(z)
    t = 1.0 / (1.0 + 0.3275911 * az)
    poly = t * (0.254829592 + t * (-0.284496736 + t * (1.421413741
               + t * (-1.453152027 + t * 1.061405429))))
    erf_abs = 1.0 - poly * jnp.exp(-az * az)
    erf = jnp.where(z >= 0.0, erf_abs, -erf_abs)
    return 0.5 * x * (1.0 + erf)


# ----------------------------------------------------------------------------
# Fused PATM kernel: Bt samples per grid step.
# Layout: channels on sublanes, flattened H*W on lanes (lane-dense).
# ----------------------------------------------------------------------------
def _patm_kernel(x_ref, wcat_ref, wtap_ref, rw2_ref, bias_ref, mask_ref,
                 o_ref, stack_ref, *, C, C4, W, HW, BT):
    # ---- unpack the fused weight / bias operands (static sublane slices) ----
    Wc = wcat_ref[...]                      # (6C+C4, C): [w5 | proj_w | rw1_w]
    w5 = Wc[0:5 * C]
    pw = Wc[5 * C:6 * C]
    r1w = Wc[6 * C:6 * C + C4]
    Wt = wtap_ref[...]                      # (2C, 14C): [tap_h | tap_w]
    wtap_h = Wt[0:C]
    wtap_w = Wt[C:2 * C]
    bias = bias_ref[...]                    # (9C+C4, 1): [b5 | r2b | pb | r1b]
    b5 = bias[0:5 * C]
    r2b = bias[5 * C:8 * C]
    pb = bias[8 * C:9 * C]
    r1b = bias[9 * C:9 * C + C4]
    rw2 = rw2_ref[...]                      # (3C, C4)

    for s in range(BT):                     # Bt samples per grid step
        x = x_ref[s]                        # (C, HW)

        # --- five shared-input 1x1 convs fused into a single MXU matmul -----
        y5 = jnp.dot(w5, x, preferred_element_type=jnp.float32) + b5
        th_h = jnp.maximum(y5[0 * C:1 * C], 0.0)   # theta_h_conv (+BN folded, ReLU)
        th_w = jnp.maximum(y5[1 * C:2 * C], 0.0)   # theta_w_conv
        x_h = y5[2 * C:3 * C]                      # fc_h
        x_w = y5[3 * C:4 * C]                      # fc_w
        c_p = y5[4 * C:5 * C]                      # fc_c

        # --- wave modulation (EUP sin/cos, VPU products), cos/sin stacked ---
        cs_h = jnp.concatenate([x_h * jnp.cos(th_h), x_h * jnp.sin(th_h)], axis=0)
        cs_w = jnp.concatenate([x_w * jnp.cos(th_w), x_w * jnp.sin(th_w)], axis=0)

        # --- grouped (1,7)/(7,1) convs as ONE K=14C matmul per direction ----
        # Build the stacked input tap-by-tap (roll on XLU, mask on VPU) into
        # the VMEM scratch, then a single MXU matmul with the prepacked
        # (C, 14C) weight that encodes the grouped conv's channel pairing.
        def tap_conv(cs, wtap, mask_base, step):
            for t in range(7):                       # unrolled 7-tap build
                d = t - 3                            # spatial offset of this tap
                sft = (-d * step) % HW               # rolled[:, i] = cs[:, i + d*step]
                rolled = cs if sft == 0 else pltpu.roll(cs, sft, 1)
                m = mask_ref[mask_base + t]          # (1, HW) zero-pad validity mask
                stack_ref[pl.ds(2 * C * t, 2 * C), :] = rolled * m
            return jnp.dot(wtap, stack_ref[...], preferred_element_type=jnp.float32)

        h_o = tap_conv(cs_h, wtap_h, 0, 1)           # tfc_h: kernel (1,7) along W
        w_o = tap_conv(cs_w, wtap_w, 7, W)           # tfc_w: kernel (7,1) along H

        # --- channel-attention tail: pool -> Mlp -> softmax -> reweight ------
        a_vec = jnp.mean(h_o + w_o + c_p, axis=1, keepdims=True)           # (C, 1)
        r1 = _erf_gelu(jnp.dot(r1w, a_vec, preferred_element_type=jnp.float32) + r1b)
        r2 = jnp.dot(rw2, r1, preferred_element_type=jnp.float32) + r2b    # (3C, 1)
        a0, a1, a2 = r2[0:C], r2[C:2 * C], r2[2 * C:3 * C]
        mx = jnp.maximum(jnp.maximum(a0, a1), a2)
        e0, e1, e2 = jnp.exp(a0 - mx), jnp.exp(a1 - mx), jnp.exp(a2 - mx)
        inv = 1.0 / (e0 + e1 + e2)

        out = h_o * (e0 * inv) + w_o * (e1 * inv) + c_p * (e2 * inv)
        o_ref[s] = jnp.dot(pw, out, preferred_element_type=jnp.float32) + pb


# ----------------------------------------------------------------------------
# Host-side parameter preparation (torch layout -> kernel layout; numpy, done
# once at build time — hoisted out of the traced forward).
# ----------------------------------------------------------------------------
def _pack_tap_weights(w_pair, C):
    """Fold the grouped-conv channel pairing into one (C, 14C) matmul weight.

    w_pair: (C, 2, 7) = torch Conv2d(2C, C, k, groups=C) weight (squeezed).
    Stack row layout per tap t: rows [2Ct, 2Ct+C) are the rolled cos products,
    rows [2Ct+C, 2C(t+1)) the rolled sin products.
    """
    Wt = np.zeros((C, 14 * C), np.float32)
    for c in range(C):
        for j in (0, 1):
            m = 2 * c + j                       # concatenated input channel
            half, idx = (0, m) if m < C else (1, m - C)
            for t in range(7):
                Wt[c, 2 * C * t + half * C + idx] = w_pair[c, j, t]
    return Wt


def _tap_masks(H, W):
    """Zero-padding validity masks, (14, 1, H*W): rows 0-6 along W, 7-13 along H."""
    HW = H * W
    pos = np.arange(HW)
    wpos = pos % W
    mw = np.stack([((wpos + d >= 0) & (wpos + d < W)) for d in range(-3, 4)])
    mh = np.stack([((pos + d * W >= 0) & (pos + d * W < HW)) for d in range(-3, 4)])
    m = np.concatenate([mw, mh], 0).astype(np.float32).reshape(14, 1, HW)
    return jnp.asarray(m)


def prepare_kernel_params(p, C):
    eps = 1e-5

    def np32(a):
        return np.asarray(a, np.float32)

    def fold_bn(w, b, gamma, beta, mean, var):
        s = np32(gamma) / np.sqrt(np32(var) + eps)
        return np32(w) * s[:, None], (np32(b) - np32(mean)) * s + np32(beta)

    th_h_w, th_h_b = fold_bn(p['theta_h_w'], p['theta_h_b'], p['bn_h_gamma'],
                             p['bn_h_beta'], p['bn_h_mean'], p['bn_h_var'])
    th_w_w, th_w_b = fold_bn(p['theta_w_w'], p['theta_w_b'], p['bn_w_gamma'],
                             p['bn_w_beta'], p['bn_w_mean'], p['bn_w_var'])

    w5 = np.concatenate([th_h_w, th_w_w, np32(p['fc_h_w']), np32(p['fc_w_w']),
                         np32(p['fc_c_w'])], 0)                       # (5C, C)
    zeros = np.zeros((C,), np.float32)                                # qkv_bias=False
    b5 = np.concatenate([th_h_b, th_w_b, zeros, zeros, zeros])

    wtap = np.concatenate([_pack_tap_weights(np32(p['tfc_h_w']), C),
                           _pack_tap_weights(np32(p['tfc_w_w']), C)], 0)   # (2C, 14C)

    C4 = int(p['rw1_w'].shape[0])
    # reweight fc2 outputs are ordered o = 3c + s in torch; reorder to s-major
    # (s*C + c) so the in-kernel softmax is three aligned sublane slices.
    perm = np.arange(3 * C).reshape(C, 3).T.reshape(-1)
    rw2_w = np32(p['rw2_w'])[perm]
    rw2_b = np32(p['rw2_b'])[perm]

    wcat = np.concatenate([w5, np32(p['proj_w']), np32(p['rw1_w'])], 0)     # (6C+C4, C)
    bias = np.concatenate([b5, rw2_b, np32(p['proj_b']),
                           np32(p['rw1_b'])])[:, None]                      # (9C+C4, 1)

    return dict(wcat=jnp.asarray(wcat), wtap=jnp.asarray(wtap),
                rw2_w=jnp.asarray(rw2_w), bias=jnp.asarray(bias), C4=C4)


# ----------------------------------------------------------------------------
# Grid-step batching heuristic + VMEM budget
# ----------------------------------------------------------------------------
def _choose_block_batch(B, C, HW):
    """Largest divisor of B that leaves >=2 grid steps (v7x: both TensorCores
    get work) and keeps the per-step VMEM footprint modest (v7x: 64 MiB)."""
    budget = 12 * 2**20
    per_sample = 16 * C * HW * 4                 # dbl-buffered IO + live intermediates
    cap = max(1, (budget - 14 * C * HW * 4) // per_sample)
    target = B // 2 if B > 1 else 1
    bt = 1
    for d in range(1, B + 1):
        if B % d == 0 and d <= target and d <= cap:
            bt = d
    return bt


def _vmem_limit(BT, C, C4, HW):
    f = 4
    io = 2 * 2 * BT * C * HW * f                 # in + out blocks, double-buffered
    stack = 14 * C * HW * f                      # tap-stack scratch
    weights = 2 * f * ((6 * C + C4) * C + 28 * C * C + 3 * C * C4
                       + (9 * C + C4) + 14 * 8 * max(HW, 128))
    live = 12 * C * HW * f                       # y5, cs, h_o, w_o, out, ...
    est = io + stack + weights + live
    return int(min(48 * 2**20, max(16 * 2**20, 2 * est)))


# ----------------------------------------------------------------------------
# Public builder (NCHW in, NCHW out — same as the PyTorch module)
# ----------------------------------------------------------------------------
def build_patm_forward(params, H, W, block_batch=None):
    C = int(params['proj_w'].shape[0])
    HW = H * W
    kp = prepare_kernel_params(params, C)        # hoisted: once per model
    C4 = kp['C4']
    masks = _tap_masks(H, W)                     # hoisted: once per (H, W)

    def forward(x_nchw):
        B = x_nchw.shape[0]
        BT = block_batch or _choose_block_batch(B, C, HW)
        assert B % BT == 0, (B, BT)
        x = x_nchw.reshape(B, C, HW).astype(jnp.float32)   # pure reshape, no transpose

        def fullspec(a):
            nd = a.ndim
            return pl.BlockSpec(a.shape, lambda i, _nd=nd: (0,) * _nd)

        kernel = functools.partial(_patm_kernel, C=C, C4=C4, W=W, HW=HW, BT=BT)
        out = pl.pallas_call(
            kernel,
            grid=(B // BT,),
            in_specs=[pl.BlockSpec((BT, C, HW), lambda i: (i, 0, 0)),
                      fullspec(kp['wcat']), fullspec(kp['wtap']),
                      fullspec(kp['rw2_w']), fullspec(kp['bias']),
                      fullspec(masks)],
            out_specs=pl.BlockSpec((BT, C, HW), lambda i: (i, 0, 0)),
            out_shape=jax.ShapeDtypeStruct((B, C, HW), jnp.float32),
            scratch_shapes=[pltpu.VMEM((14 * C, HW), jnp.float32)],
            compiler_params=pltpu.CompilerParams(
                dimension_semantics=("parallel",),
                vmem_limit_bytes=_vmem_limit(BT, C, C4, HW)),
        )(x, kp['wcat'], kp['wtap'], kp['rw2_w'], kp['bias'], masks)
        return out.reshape(B, C, H, W)

    return jax.jit(forward)


# ----------------------------------------------------------------------------
# Pure-JAX reference (mirrors the PyTorch PATM forward, eval mode)
# ----------------------------------------------------------------------------
def patm_reference(p, x):
    eps = 1e-5
    B, C, H, W = x.shape
    hi = jax.lax.Precision.HIGHEST

    def conv1x1(z, w, b=None):
        y = jnp.einsum('oc,bchw->bohw', w, z, precision=hi)
        if b is not None:
            y = y + b[None, :, None, None]
        return y

    def bn(z, g, bta, mean, var):
        return ((z - mean[None, :, None, None])
                / jnp.sqrt(var[None, :, None, None] + eps)
                * g[None, :, None, None] + bta[None, :, None, None])

    th_h = jax.nn.relu(bn(conv1x1(x, p['theta_h_w'], p['theta_h_b']),
                          p['bn_h_gamma'], p['bn_h_beta'], p['bn_h_mean'], p['bn_h_var']))
    th_w = jax.nn.relu(bn(conv1x1(x, p['theta_w_w'], p['theta_w_b']),
                          p['bn_w_gamma'], p['bn_w_beta'], p['bn_w_mean'], p['bn_w_var']))
    x_h = conv1x1(x, p['fc_h_w'])
    x_w = conv1x1(x, p['fc_w_w'])
    c_ = conv1x1(x, p['fc_c_w'])
    cat_h = jnp.concatenate([x_h * jnp.cos(th_h), x_h * jnp.sin(th_h)], axis=1)
    cat_w = jnp.concatenate([x_w * jnp.cos(th_w), x_w * jnp.sin(th_w)], axis=1)

    def grouped(cat, w, kh, kw):
        k = w.reshape(C, 2, kh, kw)
        return jax.lax.conv_general_dilated(
            cat, k, (1, 1), ((kh // 2, kh // 2), (kw // 2, kw // 2)),
            dimension_numbers=('NCHW', 'OIHW', 'NCHW'),
            feature_group_count=C, precision=hi)

    h = grouped(cat_h, p['tfc_h_w'], 1, 7)
    w_ = grouped(cat_w, p['tfc_w_w'], 7, 1)
    a = jnp.mean(h + w_ + c_, axis=(2, 3))
    a = jax.nn.gelu(jnp.einsum('bc,oc->bo', a, p['rw1_w'], precision=hi) + p['rw1_b'],
                    approximate=False)
    a = jnp.einsum('bc,oc->bo', a, p['rw2_w'], precision=hi) + p['rw2_b']
    a = jax.nn.softmax(a.reshape(B, C, 3).transpose(2, 0, 1), axis=0)
    out = (h * a[0][:, :, None, None] + w_ * a[1][:, :, None, None]
           + c_ * a[2][:, :, None, None])
    return conv1x1(out, p['proj_w'], p['proj_b'])


# ----------------------------------------------------------------------------
# Parameters (torch layout: Conv2d weights are (out, in); BN eval statistics)
# ----------------------------------------------------------------------------
def init_patm_params(key, C):
    ks = jax.random.split(key, 23)

    def nrm(k, shape, s=0.1):
        return s * jax.random.normal(k, shape, jnp.float32)

    C4 = max(C // 4, 1)
    return dict(
        fc_h_w=nrm(ks[0], (C, C)),
        fc_w_w=nrm(ks[1], (C, C)),
        fc_c_w=nrm(ks[2], (C, C)),
        theta_h_w=nrm(ks[3], (C, C)), theta_h_b=nrm(ks[4], (C,)),
        theta_w_w=nrm(ks[5], (C, C)), theta_w_b=nrm(ks[6], (C,)),
        bn_h_gamma=1.0 + nrm(ks[7], (C,)), bn_h_beta=nrm(ks[8], (C,)),
        bn_h_mean=nrm(ks[9], (C,)),
        bn_h_var=1.0 + 0.5 * jax.random.uniform(ks[10], (C,), jnp.float32),
        bn_w_gamma=1.0 + nrm(ks[11], (C,)), bn_w_beta=nrm(ks[12], (C,)),
        bn_w_mean=nrm(ks[13], (C,)),
        bn_w_var=1.0 + 0.5 * jax.random.uniform(ks[14], (C,), jnp.float32),
        tfc_h_w=nrm(ks[15], (C, 2, 7)),   # Conv2d(2C, C, (1,7), groups=C), squeezed
        tfc_w_w=nrm(ks[16], (C, 2, 7)),   # Conv2d(2C, C, (7,1), groups=C), squeezed
        rw1_w=nrm(ks[17], (C4, C)), rw1_b=nrm(ks[18], (C4,)),
        rw2_w=nrm(ks[19], (3 * C, C4)), rw2_b=nrm(ks[20], (3 * C,)),
        proj_w=nrm(ks[21], (C, C)), proj_b=nrm(ks[22], (C,)),
    )


# ----------------------------------------------------------------------------
if __name__ == "__main__":
    root = jax.random.PRNGKey(0)
    k_par, k_x = jax.random.split(root)

    # Non-square H != W guards the flattened-HW roll/mask indexing.
    B, C, H, W = 4, 16, 16, 12
    params = init_patm_params(k_par, C)
    x = jax.random.normal(k_x, (B, C, H, W), jnp.float32)

    fwd = build_patm_forward(params, H, W)       # Bt=2 -> grid=(2,) at this size
    out = fwd(x)
    jax.block_until_ready(out)

    ref = jax.jit(functools.partial(patm_reference, params))(x)
    jax.block_until_ready(ref)

    assert out.shape == (B, C, H, W), out.shape
    assert bool(jnp.all(jnp.isfinite(out)))
    max_err = float(jnp.max(jnp.abs(out - ref)))
    assert max_err < 5e-4, f"Pallas PATM vs JAX reference mismatch: {max_err}"
    print("KERNEL_OK")
</pallas_src>

<mosaic_0001>
module attributes {stable_mosaic.version = 11 : i64} {
  func.func @_patm_kernel(%arg0: i32, %arg1: memref<2x16x192xf32, #tpu.memory_space<vmem>>, %arg2: memref<100x16xf32, #tpu.memory_space<vmem>>, %arg3: memref<32x224xf32, #tpu.memory_space<vmem>>, %arg4: memref<48x4xf32, #tpu.memory_space<vmem>>, %arg5: memref<148x1xf32, #tpu.memory_space<vmem>>, %arg6: memref<14x1x192xf32, #tpu.memory_space<vmem>>, %arg7: memref<2x16x192xf32, #tpu.memory_space<vmem>>, %arg8: memref<224x192xf32, #tpu.memory_space<vmem>>) attributes {dimension_semantics = [#tpu.dimension_semantics<parallel>], iteration_bounds = array<i64: 2>, scalar_prefetch = 0 : i64, scratch_operands = 1 : i64, tpu.core_type = #tpu.core_type<tc>, window_params = [{transform_indices = @transform_0, window_bounds = array<i64: 2, 16, 192>}, {pipeline_mode = #tpu.pipeline_mode<synchronous>, transform_indices = @transform_1, window_bounds = array<i64: 100, 16>}, {pipeline_mode = #tpu.pipeline_mode<synchronous>, transform_indices = @transform_2, window_bounds = array<i64: 32, 224>}, {pipeline_mode = #tpu.pipeline_mode<synchronous>, transform_indices = @transform_3, window_bounds = array<i64: 48, 4>}, {pipeline_mode = #tpu.pipeline_mode<synchronous>, transform_indices = @transform_4, window_bounds = array<i64: 148, 1>}, {pipeline_mode = #tpu.pipeline_mode<synchronous>, transform_indices = @transform_5, window_bounds = array<i64: 14, 1, 192>}, {transform_indices = @transform_6, window_bounds = array<i64: 2, 16, 192>}]} {
    %c0 = arith.constant 0 : index
    %c0_0 = arith.constant 0 : index
    %0 = vector.load %arg2[%c0, %c0_0] : memref<100x16xf32, #tpu.memory_space<vmem>>, vector<100x16xf32>
    %1 = vector.extract_strided_slice %0 {offsets = [0, 0], sizes = [80, 16], strides = [1, 1]} : vector<100x16xf32> to vector<80x16xf32>
    %2 = vector.extract_strided_slice %0 {offsets = [80, 0], sizes = [16, 16], strides = [1, 1]} : vector<100x16xf32> to vector<16x16xf32>
    %3 = vector.extract_strided_slice %0 {offsets = [96, 0], sizes = [4, 16], strides = [1, 1]} : vector<100x16xf32> to vector<4x16xf32>
    %c0_1 = arith.constant 0 : index
    %c0_2 = arith.constant 0 : index
    %4 = vector.load %arg3[%c0_1, %c0_2] : memref<32x224xf32, #tpu.memory_space<vmem>>, vector<32x224xf32>
    %5 = vector.extract_strided_slice %4 {offsets = [0, 0], sizes = [16, 224], strides = [1, 1]} : vector<32x224xf32> to vector<16x224xf32>
    %6 = vector.extract_strided_slice %4 {offsets = [16, 0], sizes = [16, 224], strides = [1, 1]} : vector<32x224xf32> to vector<16x224xf32>
    %c0_3 = arith.constant 0 : index
    %c0_4 = arith.constant 0 : index
    %7 = vector.load %arg5[%c0_3, %c0_4] : memref<148x1xf32, #tpu.memory_space<vmem>>, vector<148x1xf32>
    %8 = vector.extract_strided_slice %7 {offsets = [0, 0], sizes = [80, 1], strides = [1, 1]} : vector<148x1xf32> to vector<80x1xf32>
    %9 = vector.extract_strided_slice %7 {offsets = [80, 0], sizes = [48, 1], strides = [1, 1]} : vector<148x1xf32> to vector<48x1xf32>
    %10 = vector.extract_strided_slice %7 {offsets = [128, 0], sizes = [16, 1], strides = [1, 1]} : vector<148x1xf32> to vector<16x1xf32>
    %11 = vector.extract_strided_slice %7 {offsets = [144, 0], sizes = [4, 1], strides = [1, 1]} : vector<148x1xf32> to vector<4x1xf32>
    %c0_5 = arith.constant 0 : index
    %c0_6 = arith.constant 0 : index
    %12 = vector.load %arg4[%c0_5, %c0_6] : memref<48x4xf32, #tpu.memory_space<vmem>>, vector<48x4xf32>
    %c0_7 = arith.constant 0 : index
    %c0_8 = arith.constant 0 : index
    %c0_9 = arith.constant 0 : index
    %13 = vector.load %arg1[%c0_7, %c0_8, %c0_9] : memref<2x16x192xf32, #tpu.memory_space<vmem>>, vector<1x16x192xf32>
    %14 = vector.shape_cast %13 : vector<1x16x192xf32> to vector<16x192xf32>
    %cst = arith.constant dense<0.000000e+00> : vector<80x192xf32>
    %15 = tpu.matmul %1, %14, %cst {dimension_numbers = #tpu.dot_dimension_numbers<[1], [0], [0], [1], [0, 0, 1, 1], [], []>} : vector<80x16xf32>, vector<16x192xf32>, vector<80x192xf32> -> vector<80x192xf32>
    %16 = vector.broadcast %8 : vector<80x1xf32> to vector<80x192xf32>
    %17 = arith.addf %15, %16 : vector<80x192xf32>
    %18 = vector.extract_strided_slice %17 {offsets = [0, 0], sizes = [16, 192], strides = [1, 1]} : vector<80x192xf32> to vector<16x192xf32>
    %cst_10 = arith.constant 0.000000e+00 : f32
    %19 = vector.broadcast %cst_10 : f32 to vector<16x192xf32>
    %20 = arith.maximumf %18, %19 : vector<16x192xf32>
    %21 = vector.extract_strided_slice %17 {offsets = [16, 0], sizes = [16, 192], strides = [1, 1]} : vector<80x192xf32> to vector<16x192xf32>
    %cst_11 = arith.constant 0.000000e+00 : f32
    %22 = vector.broadcast %cst_11 : f32 to vector<16x192xf32>
    %23 = arith.maximumf %21, %22 : vector<16x192xf32>
    %24 = vector.extract_strided_slice %17 {offsets = [32, 0], sizes = [16, 192], strides = [1, 1]} : vector<80x192xf32> to vector<16x192xf32>
    %25 = vector.extract_strided_slice %17 {offsets = [48, 0], sizes = [16, 192], strides = [1, 1]} : vector<80x192xf32> to vector<16x192xf32>
    %26 = vector.extract_strided_slice %17 {offsets = [64, 0], sizes = [16, 192], strides = [1, 1]} : vector<80x192xf32> to vector<16x192xf32>
    %27 = math.cos %20 : vector<16x192xf32>
    %28 = arith.mulf %24, %27 : vector<16x192xf32>
    %29 = math.sin %20 : vector<16x192xf32>
    %30 = arith.mulf %24, %29 : vector<16x192xf32>
    %31 = tpu.concatenate %28, %30 in 0 : vector<16x192xf32>, vector<16x192xf32> -> vector<32x192xf32>
    %32 = math.cos %23 : vector<16x192xf32>
    %33 = arith.mulf %25, %32 : vector<16x192xf32>
    %34 = math.sin %23 : vector<16x192xf32>
    %35 = arith.mulf %25, %34 : vector<16x192xf32>
    %36 = tpu.concatenate %33, %35 in 0 : vector<16x192xf32>, vector<16x192xf32> -> vector<32x192xf32>
    %c3_i32 = arith.constant 3 : i32
    %37 = tpu.dynamic_rotate %31 by %c3_i32 dim 1 : vector<32x192xf32>, i32 -> vector<32x192xf32>
    %c0_12 = arith.constant 0 : index
    %c0_13 = arith.constant 0 : index
    %c0_14 = arith.constant 0 : index
    %38 = vector.load %arg6[%c0_12, %c0_13, %c0_14] : memref<14x1x192xf32, #tpu.memory_space<vmem>>, vector<1x1x192xf32>
    %39 = vector.shape_cast %38 : vector<1x1x192xf32> to vector<1x192xf32>
    %40 = vector.broadcast %39 : vector<1x192xf32> to vector<32x192xf32>
    %41 = arith.mulf %37, %40 : vector<32x192xf32>
    %c0_15 = arith.constant 0 : index
    %c0_16 = arith.constant 0 : index
    %42 = vector.load %arg8[%c0_15, %c0_16] : memref<224x192xf32, #tpu.memory_space<vmem>>, vector<32x192xf32>
    tpu.vector_store %arg8[%c0_15, %c0_16], %41 {strides = array<i32>} : memref<224x192xf32, #tpu.memory_space<vmem>>, vector<32x192xf32>,
    %c2_i32 = arith.constant 2 : i32
    %43 = tpu.dynamic_rotate %31 by %c2_i32 dim 1 : vector<32x192xf32>, i32 -> vector<32x192xf32>
    %c1 = arith.constant 1 : index
    %c0_17 = arith.constant 0 : index
    %c0_18 = arith.constant 0 : index
    %44 = vector.load %arg6[%c1, %c0_17, %c0_18] : memref<14x1x192xf32, #tpu.memory_space<vmem>>, vector<1x1x192xf32>
    %45 = vector.shape_cast %44 : vector<1x1x192xf32> to vector<1x192xf32>
    %46 = vector.broadcast %45 : vector<1x192xf32> to vector<32x192xf32>
    %47 = arith.mulf %43, %46 : vector<32x192xf32>
    %c32 = arith.constant 32 : index
    %c0_19 = arith.constant 0 : index
    %48 = vector.load %arg8[%c32, %c0_19] : memref<224x192xf32, #tpu.memory_space<vmem>>, vector<32x192xf32>
    tpu.vector_store %arg8[%c32, %c0_19], %47 {strides = array<i32>} : memref<224x192xf32, #tpu.memory_space<vmem>>, vector<32x192xf32>,
    %c1_i32 = arith.constant 1 : i32
    %49 = tpu.dynamic_rotate %31 by %c1_i32 dim 1 : vector<32x192xf32>, i32 -> vector<32x192xf32>
    %c2 = arith.constant 2 : index
    %c0_20 = arith.constant 0 : index
    %c0_21 = arith.constant 0 : index
    %50 = vector.load %arg6[%c2, %c0_20, %c0_21] : memref<14x1x192xf32, #tpu.memory_space<vmem>>, vector<1x1x192xf32>
    %51 = vector.shape_cast %50 : vector<1x1x192xf32> to vector<1x192xf32>
    %52 = vector.broadcast %51 : vector<1x192xf32> to vector<32x192xf32>
    %53 = arith.mulf %49, %52 : vector<32x192xf32>
    %c64 = arith.constant 64 : index
    %c0_22 = arith.constant 0 : index
    %54 = vector.load %arg8[%c64, %c0_22] : memref<224x192xf32, #tpu.memory_space<vmem>>, vector<32x192xf32>
    tpu.vector_store %arg8[%c64, %c0_22], %53 {strides = array<i32>} : memref<224x192xf32, #tpu.memory_space<vmem>>, vector<32x192xf32>,
    %c3 = arith.constant 3 : index
    %c0_23 = arith.constant 0 : index
    %c0_24 = arith.constant 0 : index
    %55 = vector.load %arg6[%c3, %c0_23, %c0_24] : memref<14x1x192xf32, #tpu.memory_space<vmem>>, vector<1x1x192xf32>
    %56 = vector.shape_cast %55 : vector<1x1x192xf32> to vector<1x192xf32>
    %57 = vector.broadcast %56 : vector<1x192xf32> to vector<32x192xf32>
    %58 = arith.mulf %31, %57 : vector<32x192xf32>
    %c96 = arith.constant 96 : index
    %c0_25 = arith.constant 0 : index
    %59 = vector.load %arg8[%c96, %c0_25] : memref<224x192xf32, #tpu.memory_space<vmem>>, vector<32x192xf32>
    tpu.vector_store %arg8[%c96, %c0_25], %58 {strides = array<i32>} : memref<224x192xf32, #tpu.memory_space<vmem>>, vector<32x192xf32>,
    %c191_i32 = arith.constant 191 : i32
    %60 = tpu.dynamic_rotate %31 by %c191_i32 dim 1 : vector<32x192xf32>, i32 -> vector<32x192xf32>
    %c4 = arith.constant 4 : index
    %c0_26 = arith.constant 0 : index
    %c0_27 = arith.constant 0 : index
    %61 = vector.load %arg6[%c4, %c0_26, %c0_27] : memref<14x1x192xf32, #tpu.memory_space<vmem>>, vector<1x1x192xf32>
    %62 = vector.shape_cast %61 : vector<1x1x192xf32> to vector<1x192xf32>
    %63 = vector.broadcast %62 : vector<1x192xf32> to vector<32x192xf32>
    %64 = arith.mulf %60, %63 : vector<32x192xf32>
    %c128 = arith.constant 128 : index
    %c0_28 = arith.constant 0 : index
    %65 = vector.load %arg8[%c128, %c0_28] : memref<224x192xf32, #tpu.memory_space<vmem>>, vector<32x192xf32>
    tpu.vector_store %arg8[%c128, %c0_28], %64 {strides = array<i32>} : memref<224x192xf32, #tpu.memory_space<vmem>>, vector<32x192xf32>,
    %c190_i32 = arith.constant 190 : i32
    %66 = tpu.dynamic_rotate %31 by %c190_i32 dim 1 : vector<32x192xf32>, i32 -> vector<32x192xf32>
    %c5 = arith.constant 5 : index
    %c0_29 = arith.constant 0 : index
    %c0_30 = arith.constant 0 : index
    %67 = vector.load %arg6[%c5, %c0_29, %c0_30] : memref<14x1x192xf32, #tpu.memory_space<vmem>>, vector<1x1x192xf32>
    %68 = vector.shape_cast %67 : vector<1x1x192xf32> to vector<1x192xf32>
    %69 = vector.broadcast %68 : vector<1x192xf32> to vector<32x192xf32>
    %70 = arith.mulf %66, %69 : vector<32x192xf32>
    %c160 = arith.constant 160 : index
    %c0_31 = arith.constant 0 : index
    %71 = vector.load %arg8[%c160, %c0_31] : memref<224x192xf32, #tpu.memory_space<vmem>>, vector<32x192xf32>
    tpu.vector_store %arg8[%c160, %c0_31], %70 {strides = array<i32>} : memref<224x192xf32, #tpu.memory_space<vmem>>, vector<32x192xf32>,
    %c189_i32 = arith.constant 189 : i32
    %72 = tpu.dynamic_rotate %31 by %c189_i32 dim 1 : vector<32x192xf32>, i32 -> vector<32x192xf32>
    %c6 = arith.constant 6 : index
    %c0_32 = arith.constant 0 : index
    %c0_33 = arith.constant 0 : index
    %73 = vector.load %arg6[%c6, %c0_32, %c0_33] : memref<14x1x192xf32, #tpu.memory_space<vmem>>, vector<1x1x192xf32>
    %74 = vector.shape_cast %73 : vector<1x1x192xf32> to vector<1x192xf32>
    %75 = vector.broadcast %74 : vector<1x192xf32> to vector<32x192xf32>
    %76 = arith.mulf %72, %75 : vector<32x192xf32>
    %c192 = arith.constant 192 : index
    %c0_34 = arith.constant 0 : index
    %77 = vector.load %arg8[%c192, %c0_34] : memref<224x192xf32, #tpu.memory_space<vmem>>, vector<32x192xf32>
    tpu.vector_store %arg8[%c192, %c0_34], %76 {strides = array<i32>} : memref<224x192xf32, #tpu.memory_space<vmem>>, vector<32x192xf32>,
    %c0_35 = arith.constant 0 : index
    %c0_36 = arith.constant 0 : index
    %78 = vector.load %arg8[%c0_35, %c0_36] : memref<224x192xf32, #tpu.memory_space<vmem>>, vector<224x192xf32>
    %cst_37 = arith.constant dense<0.000000e+00> : vector<16x192xf32>
    %79 = tpu.matmul %5, %78, %cst_37 {dimension_numbers = #tpu.dot_dimension_numbers<[1], [0], [0], [1], [0, 0, 1, 1], [], []>} : vector<16x224xf32>, vector<224x192xf32>, vector<16x192xf32> -> vector<16x192xf32>
    %c36_i32 = arith.constant 36 : i32
    %80 = tpu.dynamic_rotate %36 by %c36_i32 dim 1 : vector<32x192xf32>, i32 -> vector<32x192xf32>
    %c7 = arith.constant 7 : index
    %c0_38 = arith.constant 0 : index
    %c0_39 = arith.constant 0 : index
    %81 = vector.load %arg6[%c7, %c0_38, %c0_39] : memref<14x1x192xf32, #tpu.memory_space<vmem>>, vector<1x1x192xf32>
    %82 = vector.shape_cast %81 : vector<1x1x192xf32> to vector<1x192xf32>
    %83 = vector.broadcast %82 : vector<1x192xf32> to vector<32x192xf32>
    %84 = arith.mulf %80, %83 : vector<32x192xf32>
    %c0_40 = arith.constant 0 : index
    %c0_41 = arith.constant 0 : index
    %85 = vector.load %arg8[%c0_40, %c0_41] : memref<224x192xf32, #tpu.memory_space<vmem>>, vector<32x192xf32>
    tpu.vector_store %arg8[%c0_40, %c0_41], %84 {strides = array<i32>} : memref<224x192xf32, #tpu.memory_space<vmem>>, vector<32x192xf32>,
    %c24_i32 = arith.constant 24 : i32
    %86 = tpu.dynamic_rotate %36 by %c24_i32 dim 1 : vector<32x192xf32>, i32 -> vector<32x192xf32>
    %c8 = arith.constant 8 : index
    %c0_42 = arith.constant 0 : index
    %c0_43 = arith.constant 0 : index
    %87 = vector.load %arg6[%c8, %c0_42, %c0_43] : memref<14x1x192xf32, #tpu.memory_space<vmem>>, vector<1x1x192xf32>
    %88 = vector.shape_cast %87 : vector<1x1x192xf32> to vector<1x192xf32>
    %89 = vector.broadcast %88 : vector<1x192xf32> to vector<32x192xf32>
    %90 = arith.mulf %86, %89 : vector<32x192xf32>
    %c32_44 = arith.constant 32 : index
    %c0_45 = arith.constant 0 : index
    %91 = vector.load %arg8[%c32_44, %c0_45] : memref<224x192xf32, #tpu.memory_space<vmem>>, vector<32x192xf32>
    tpu.vector_store %arg8[%c32_44, %c0_45], %90 {strides = array<i32>} : memref<224x192xf32, #tpu.memory_space<vmem>>, vector<32x192xf32>,
    %c12_i32 = arith.constant 12 : i32
    %92 = tpu.dynamic_rotate %36 by %c12_i32 dim 1 : vector<32x192xf32>, i32 -> vector<32x192xf32>
    %c9 = arith.constant 9 : index
    %c0_46 = arith.constant 0 : index
    %c0_47 = arith.constant 0 : index
    %93 = vector.load %arg6[%c9, %c0_46, %c0_47] : memref<14x1x192xf32, #tpu.memory_space<vmem>>, vector<1x1x192xf32>
    %94 = vector.shape_cast %93 : vector<1x1x192xf32> to vector<1x192xf32>
    %95 = vector.broadcast %94 : vector<1x192xf32> to vector<32x192xf32>
    %96 = arith.mulf %92, %95 : vector<32x192xf32>
    %c64_48 = arith.constant 64 : index
    %c0_49 = arith.constant 0 : index
    %97 = vector.load %arg8[%c64_48, %c0_49] : memref<224x192xf32, #tpu.memory_space<vmem>>, vector<32x192xf32>
    tpu.vector_store %arg8[%c64_48, %c0_49], %96 {strides = array<i32>} : memref<224x192xf32, #tpu.memory_space<vmem>>, vector<32x192xf32>,
    %c10 = arith.constant 10 : index
    %c0_50 = arith.constant 0 : index
    %c0_51 = arith.constant 0 : index
    %98 = vector.load %arg6[%c10, %c0_50, %c0_51] : memref<14x1x192xf32, #tpu.memory_space<vmem>>, vector<1x1x192xf32>
    %99 = vector.shape_cast %98 : vector<1x1x192xf32> to vector<1x192xf32>
    %100 = vector.broadcast %99 : vector<1x192xf32> to vector<32x192xf32>
    %101 = arith.mulf %36, %100 : vector<32x192xf32>
    %c96_52 = arith.constant 96 : index
    %c0_53 = arith.constant 0 : index
    %102 = vector.load %arg8[%c96_52, %c0_53] : memref<224x192xf32, #tpu.memory_space<vmem>>, vector<32x192xf32>
    tpu.vector_store %arg8[%c96_52, %c0_53], %101 {strides = array<i32>} : memref<224x192xf32, #tpu.memory_space<vmem>>, vector<32x192xf32>,
    %c180_i32 = arith.constant 180 : i32
    %103 = tpu.dynamic_rotate %36 by %c180_i32 dim 1 : vector<32x192xf32>, i32 -> vector<32x192xf32>
    %c11 = arith.constant 11 : index
    %c0_54 = arith.constant 0 : index
    %c0_55 = arith.constant 0 : index
    %104 = vector.load %arg6[%c11, %c0_54, %c0_55] : memref<14x1x192xf32, #tpu.memory_space<vmem>>, vector<1x1x192xf32>
    %105 = vector.shape_cast %104 : vector<1x1x192xf32> to vector<1x192xf32>
    %106 = vector.broadcast %105 : vector<1x192xf32> to vector<32x192xf32>
    %107 = arith.mulf %103, %106 : vector<32x192xf32>
    %c128_56 = arith.constant 128 : index
    %c0_57 = arith.constant 0 : index
    %108 = vector.load %arg8[%c128_56, %c0_57] : memref<224x192xf32, #tpu.memory_space<vmem>>, vector<32x192xf32>
    tpu.vector_store %arg8[%c128_56, %c0_57], %107 {strides = array<i32>} : memref<224x192xf32, #tpu.memory_space<vmem>>, vector<32x192xf32>,
    %c168_i32 = arith.constant 168 : i32
    %109 = tpu.dynamic_rotate %36 by %c168_i32 dim 1 : vector<32x192xf32>, i32 -> vector<32x192xf32>
    %c12 = arith.constant 12 : index
    %c0_58 = arith.constant 0 : index
    %c0_59 = arith.constant 0 : index
    %110 = vector.load %arg6[%c12, %c0_58, %c0_59] : memref<14x1x192xf32, #tpu.memory_space<vmem>>, vector<1x1x192xf32>
    %111 = vector.shape_cast %110 : vector<1x1x192xf32> to vector<1x192xf32>
    %112 = vector.broadcast %111 : vector<1x192xf32> to vector<32x192xf32>
    %113 = arith.mulf %109, %112 : vector<32x192xf32>
    %c160_60 = arith.constant 160 : index
    %c0_61 = arith.constant 0 : index
    %114 = vector.load %arg8[%c160_60, %c0_61] : memref<224x192xf32, #tpu.memory_space<vmem>>, vector<32x192xf32>
    tpu.vector_store %arg8[%c160_60, %c0_61], %113 {strides = array<i32>} : memref<224x192xf32, #tpu.memory_space<vmem>>, vector<32x192xf32>,
    %c156_i32 = arith.constant 156 : i32
    %115 = tpu.dynamic_rotate %36 by %c156_i32 dim 1 : vector<32x192xf32>, i32 -> vector<32x192xf32>
    %c13 = arith.constant 13 : index
    %c0_62 = arith.constant 0 : index
    %c0_63 = arith.constant 0 : index
    %116 = vector.load %arg6[%c13, %c0_62, %c0_63] : memref<14x1x192xf32, #tpu.memory_space<vmem>>, vector<1x1x192xf32>
    %117 = vector.shape_cast %116 : vector<1x1x192xf32> to vector<1x192xf32>
    %118 = vector.broadcast %117 : vector<1x192xf32> to vector<32x192xf32>
    %119 = arith.mulf %115, %118 : vector<32x192xf32>
    %c192_64 = arith.constant 192 : index
    %c0_65 = arith.constant 0 : index
    %120 = vector.load %arg8[%c192_64, %c0_65] : memref<224x192xf32, #tpu.memory_space<vmem>>, vector<32x192xf32>
    tpu.vector_store %arg8[%c192_64, %c0_65], %119 {strides = array<i32>} : memref<224x192xf32, #tpu.memory_space<vmem>>, vector<32x192xf32>,
    %c0_66 = arith.constant 0 : index
    %c0_67 = arith.constant 0 : index
    %121 = vector.load %arg8[%c0_66, %c0_67] : memref<224x192xf32, #tpu.memory_space<vmem>>, vector<224x192xf32>
    %cst_68 = arith.constant dense<0.000000e+00> : vector<16x192xf32>
    %122 = tpu.matmul %6, %121, %cst_68 {dimension_numbers = #tpu.dot_dimension_numbers<[1], [0], [0], [1], [0, 0, 1, 1], [], []>} : vector<16x224xf32>, vector<224x192xf32>, vector<16x192xf32> -> vector<16x192xf32>
    %123 = arith.addf %79, %122 : vector<16x192xf32>
    %124 = arith.addf %123, %26 : vector<16x192xf32>
    %cst_69 = arith.constant dense<0.000000e+00> : vector<16xf32>
    %125 = vector.multi_reduction <add>, %124, %cst_69 [1] : vector<16x192xf32> to vector<16xf32>
    %126 = vector.shape_cast %125 : vector<16xf32> to vector<16x1xf32>
    %cst_70 = arith.constant 1.920000e+02 : f32
    %127 = vector.broadcast %cst_70 : f32 to vector<16x1xf32>
    %128 = arith.divf %126, %127 : vector<16x1xf32>
    %cst_71 = arith.constant dense<0.000000e+00> : vector<4x1xf32>
    %129 = tpu.matmul %3, %128, %cst_71 {dimension_numbers = #tpu.dot_dimension_numbers<[1], [0], [0], [1], [0, 0, 1, 1], [], []>} : vector<4x16xf32>, vector<16x1xf32>, vector<4x1xf32> -> vector<4x1xf32>
    %130 = arith.addf %129, %11 : vector<4x1xf32>
    %cst_72 = arith.constant 0.707106769 : f32
    %131 = vector.broadcast %cst_72 : f32 to vector<4x1xf32>
    %132 = arith.mulf %130, %131 : vector<4x1xf32>
    %133 = math.absf %132 : vector<4x1xf32>
    %cst_73 = arith.constant 0.327591091 : f32
    %134 = vector.broadcast %cst_73 : f32 to vector<4x1xf32>
    %135 = arith.mulf %134, %133 : vector<4x1xf32>
    %cst_74 = arith.constant 1.000000e+00 : f32
    %136 = vector.broadcast %cst_74 : f32 to vector<4x1xf32>
    %137 = arith.addf %136, %135 : vector<4x1xf32>
    %cst_75 = arith.constant 1.000000e+00 : f32
    %138 = vector.broadcast %cst_75 : f32 to vector<4x1xf32>
    %139 = arith.divf %138, %137 : vector<4x1xf32>
    %cst_76 = arith.constant 1.06140542 : f32
    %140 = vector.broadcast %cst_76 : f32 to vector<4x1xf32>
    %141 = arith.mulf %139, %140 : vector<4x1xf32>
    %cst_77 = arith.constant -1.45315206 : f32
    %142 = vector.broadcast %cst_77 : f32 to vector<4x1xf32>
    %143 = arith.addf %142, %141 : vector<4x1xf32>
    %144 = arith.mulf %139, %143 : vector<4x1xf32>
    %cst_78 = arith.constant 1.42141378 : f32
    %145 = vector.broadcast %cst_78 : f32 to vector<4x1xf32>
    %146 = arith.addf %145, %144 : vector<4x1xf32>
    %147 = arith.mulf %139, %146 : vector<4x1xf32>
    %cst_79 = arith.constant -0.284496725 : f32
    %148 = vector.broadcast %cst_79 : f32 to vector<4x1xf32>
    %149 = arith.addf %148, %147 : vector<4x1xf32>
    %150 = arith.mulf %139, %149 : vector<4x1xf32>
    %cst_80 = arith.constant 0.254829586 : f32
    %151 = vector.broadcast %cst_80 : f32 to vector<4x1xf32>
    %152 = arith.addf %151, %150 : vector<4x1xf32>
    %153 = arith.mulf %139, %152 : vector<4x1xf32>
    %cst_81 = arith.constant 0.000000e+00 : f32
    %154 = vector.broadcast %cst_81 : f32 to vector<4x1xf32>
    %155 = arith.subf %154, %133 : vector<4x1xf32>
    %156 = arith.mulf %155, %133 : vector<4x1xf32>
    %157 = math.exp %156 : vector<4x1xf32>
    %158 = arith.mulf %153, %157 : vector<4x1xf32>
    %cst_82 = arith.constant 1.000000e+00 : f32
    %159 = vector.broadcast %cst_82 : f32 to vector<4x1xf32>
    %160 = arith.subf %159, %158 : vector<4x1xf32>
    %cst_83 = arith.constant 0.000000e+00 : f32
    %161 = vector.broadcast %cst_83 : f32 to vector<4x1xf32>
    %162 = arith.cmpf oge, %132, %161 : vector<4x1xf32>
    %cst_84 = arith.constant 0.000000e+00 : f32
    %163 = vector.broadcast %cst_84 : f32 to vector<4x1xf32>
    %164 = arith.subf %163, %160 : vector<4x1xf32>
    %165 = arith.select %162, %160, %164 : vector<4x1xi1>, vector<4x1xf32>
    %cst_85 = arith.constant 5.000000e-01 : f32
    %166 = vector.broadcast %cst_85 : f32 to vector<4x1xf32>
    %167 = arith.mulf %166, %130 : vector<4x1xf32>
    %cst_86 = arith.constant 1.000000e+00 : f32
    %168 = vector.broadcast %cst_86 : f32 to vector<4x1xf32>
    %169 = arith.addf %168, %165 : vector<4x1xf32>
    %170 = arith.mulf %167, %169 : vector<4x1xf32>
    %cst_87 = arith.constant dense<0.000000e+00> : vector<48x1xf32>
    %171 = tpu.matmul %12, %170, %cst_87 {dimension_numbers = #tpu.dot_dimension_numbers<[1], [0], [0], [1], [0, 0, 1, 1], [], []>} : vector<48x4xf32>, vector<4x1xf32>, vector<48x1xf32> -> vector<48x1xf32>
    %172 = arith.addf %171, %9 : vector<48x1xf32>
    %173 = vector.extract_strided_slice %172 {offsets = [0, 0], sizes = [16, 1], strides = [1, 1]} : vector<48x1xf32> to vector<16x1xf32>
    %174 = vector.extract_strided_slice %172 {offsets = [16, 0], sizes = [16, 1], strides = [1, 1]} : vector<48x1xf32> to vector<16x1xf32>
    %175 = vector.extract_strided_slice %172 {offsets = [32, 0], sizes = [16, 1], strides = [1, 1]} : vector<48x1xf32> to vector<16x1xf32>
    %176 = arith.maximumf %173, %174 : vector<16x1xf32>
    %177 = arith.maximumf %176, %175 : vector<16x1xf32>
    %178 = arith.subf %173, %177 : vector<16x1xf32>
    %179 = math.exp %178 : vector<16x1xf32>
    %180 = arith.subf %174, %177 : vector<16x1xf32>
    %181 = math.exp %180 : vector<16x1xf32>
    %182 = arith.subf %175, %177 : vector<16x1xf32>
    %183 = math.exp %182 : vector<16x1xf32>
    %184 = arith.addf %179, %181 : vector<16x1xf32>
    %185 = arith.addf %184, %183 : vector<16x1xf32>
    %cst_88 = arith.constant 1.000000e+00 : f32
    %186 = vector.broadcast %cst_88 : f32 to vector<16x1xf32>
    %187 = arith.divf %186, %185 : vector<16x1xf32>
    %188 = arith.mulf %179, %187 : vector<16x1xf32>
    %189 = vector.broadcast %188 : vector<16x1xf32> to vector<16x192xf32>
    %190 = arith.mulf %79, %189 : vector<16x192xf32>
    %191 = arith.mulf %181, %187 : vector<16x1xf32>
    %192 = vector.broadcast %191 : vector<16x1xf32> to vector<16x192xf32>
    %193 = arith.mulf %122, %192 : vector<16x192xf32>
    %194 = arith.addf %190, %193 : vector<16x192xf32>
    %195 = arith.mulf %183, %187 : vector<16x1xf32>
    %196 = vector.broadcast %195 : vector<16x1xf32> to vector<16x192xf32>
    %197 = arith.mulf %26, %196 : vector<16x192xf32>
    %198 = arith.addf %194, %197 : vector<16x192xf32>
    %cst_89 = arith.constant dense<0.000000e+00> : vector<16x192xf32>
    %199 = tpu.matmul %2, %198, %cst_89 {dimension_numbers = #tpu.dot_dimension_numbers<[1], [0], [0], [1], [0, 0, 1, 1], [], []>} : vector<16x16xf32>, vector<16x192xf32>, vector<16x192xf32> -> vector<16x192xf32>
    %200 = vector.broadcast %10 : vector<16x1xf32> to vector<16x192xf32>
    %201 = arith.addf %199, %200 : vector<16x192xf32>
    %c0_90 = arith.constant 0 : index
    %c0_91 = arith.constant 0 : index
    %c0_92 = arith.constant 0 : index
    %202 = vector.load %arg7[%c0_90, %c0_91, %c0_92] : memref<2x16x192xf32, #tpu.memory_space<vmem>>, vector<1x16x192xf32>
    %203 = vector.shape_cast %202 : vector<1x16x192xf32> to vector<16x192xf32>
    %204 = vector.shape_cast %201 : vector<16x192xf32> to vector<1x16x192xf32>
    tpu.vector_store %arg7[%c0_90, %c0_91, %c0_92], %204 {strides = array<i32>} : memref<2x16x192xf32, #tpu.memory_space<vmem>>, vector<1x16x192xf32>,
    %c1_93 = arith.constant 1 : index
    %c0_94 = arith.constant 0 : index
    %c0_95 = arith.constant 0 : index
    %205 = vector.load %arg1[%c1_93, %c0_94, %c0_95] : memref<2x16x192xf32, #tpu.memory_space<vmem>>, vector<1x16x192xf32>
    %206 = vector.shape_cast %205 : vector<1x16x192xf32> to vector<16x192xf32>
    %cst_96 = arith.constant dense<0.000000e+00> : vector<80x192xf32>
    %207 = tpu.matmul %1, %206, %cst_96 {dimension_numbers = #tpu.dot_dimension_numbers<[1], [0], [0], [1], [0, 0, 1, 1], [], []>} : vector<80x16xf32>, vector<16x192xf32>, vector<80x192xf32> -> vector<80x192xf32>
    %208 = vector.broadcast %8 : vector<80x1xf32> to vector<80x192xf32>
    %209 = arith.addf %207, %208 : vector<80x192xf32>
    %210 = vector.extract_strided_slice %209 {offsets = [0, 0], sizes = [16, 192], strides = [1, 1]} : vector<80x192xf32> to vector<16x192xf32>
    %cst_97 = arith.constant 0.000000e+00 : f32
    %211 = vector.broadcast %cst_97 : f32 to vector<16x192xf32>
    %212 = arith.maximumf %210, %211 : vector<16x192xf32>
    %213 = vector.extract_strided_slice %209 {offsets = [16, 0], sizes = [16, 192], strides = [1, 1]} : vector<80x192xf32> to vector<16x192xf32>
    %cst_98 = arith.constant 0.000000e+00 : f32
    %214 = vector.broadcast %cst_98 : f32 to vector<16x192xf32>
    %215 = arith.maximumf %213, %214 : vector<16x192xf32>
    %216 = vector.extract_strided_slice %209 {offsets = [32, 0], sizes = [16, 192], strides = [1, 1]} : vector<80x192xf32> to vector<16x192xf32>
    %217 = vector.extract_strided_slice %209 {offsets = [48, 0], sizes = [16, 192], strides = [1, 1]} : vector<80x192xf32> to vector<16x192xf32>
    %218 = vector.extract_strided_slice %209 {offsets = [64, 0], sizes = [16, 192], strides = [1, 1]} : vector<80x192xf32> to vector<16x192xf32>
    %219 = math.cos %212 : vector<16x192xf32>
    %220 = arith.mulf %216, %219 : vector<16x192xf32>
    %221 = math.sin %212 : vector<16x192xf32>
    %222 = arith.mulf %216, %221 : vector<16x192xf32>
    %223 = tpu.concatenate %220, %222 in 0 : vector<16x192xf32>, vector<16x192xf32> -> vector<32x192xf32>
    %224 = math.cos %215 : vector<16x192xf32>
    %225 = arith.mulf %217, %224 : vector<16x192xf32>
    %226 = math.sin %215 : vector<16x192xf32>
    %227 = arith.mulf %217, %226 : vector<16x192xf32>
    %228 = tpu.concatenate %225, %227 in 0 : vector<16x192xf32>, vector<16x192xf32> -> vector<32x192xf32>
    %c3_i32_99 = arith.constant 3 : i32
    %229 = tpu.dynamic_rotate %223 by %c3_i32_99 dim 1 : vector<32x192xf32>, i32 -> vector<32x192xf32>
    %c0_100 = arith.constant 0 : index
    %c0_101 = arith.constant 0 : index
    %c0_102 = arith.constant 0 : index
    %230 = vector.load %arg6[%c0_100, %c0_101, %c0_102] : memref<14x1x192xf32, #tpu.memory_space<vmem>>, vector<1x1x192xf32>
    %231 = vector.shape_cast %230 : vector<1x1x192xf32> to vector<1x192xf32>
    %232 = vector.broadcast %231 : vector<1x192xf32> to vector<32x192xf32>
    %233 = arith.mulf %229, %232 : vector<32x192xf32>
    %c0_103 = arith.constant 0 : index
    %c0_104 = arith.constant 0 : index
    %234 = vector.load %arg8[%c0_103, %c0_104] : memref<224x192xf32, #tpu.memory_space<vmem>>, vector<32x192xf32>
    tpu.vector_store %arg8[%c0_103, %c0_104], %233 {strides = array<i32>} : memref<224x192xf32, #tpu.memory_space<vmem>>, vector<32x192xf32>,
    %c2_i32_105 = arith.constant 2 : i32
    %235 = tpu.dynamic_rotate %223 by %c2_i32_105 dim 1 : vector<32x192xf32>, i32 -> vector<32x192xf32>
    %c1_106 = arith.constant 1 : index
    %c0_107 = arith.constant 0 : index
    %c0_108 = arith.constant 0 : index
    %236 = vector.load %arg6[%c1_106, %c0_107, %c0_108] : memref<14x1x192xf32, #tpu.memory_space<vmem>>, vector<1x1x192xf32>
    %237 = vector.shape_cast %236 : vector<1x1x192xf32> to vector<1x192xf32>
    %238 = vector.broadcast %237 : vector<1x192xf32> to vector<32x192xf32>
    %239 = arith.mulf %235, %238 : vector<32x192xf32>
    %c32_109 = arith.constant 32 : index
    %c0_110 = arith.constant 0 : index
    %240 = vector.load %arg8[%c32_109, %c0_110] : memref<224x192xf32, #tpu.memory_space<vmem>>, vector<32x192xf32>
    tpu.vector_store %arg8[%c32_109, %c0_110], %239 {strides = array<i32>} : memref<224x192xf32, #tpu.memory_space<vmem>>, vector<32x192xf32>,
    %c1_i32_111 = arith.constant 1 : i32
    %241 = tpu.dynamic_rotate %223 by %c1_i32_111 dim 1 : vector<32x192xf32>, i32 -> vector<32x192xf32>
    %c2_112 = arith.constant 2 : index
    %c0_113 = arith.constant 0 : index
    %c0_114 = arith.constant 0 : index
    %242 = vector.load %arg6[%c2_112, %c0_113, %c0_114] : memref<14x1x192xf32, #tpu.memory_space<vmem>>, vector<1x1x192xf32>
    %243 = vector.shape_cast %242 : vector<1x1x192xf32> to vector<1x192xf32>
    %244 = vector.broadcast %243 : vector<1x192xf32> to vector<32x192xf32>
    %245 = arith.mulf %241, %244 : vector<32x192xf32>
    %c64_115 = arith.constant 64 : index
    %c0_116 = arith.constant 0 : index
    %246 = vector.load %arg8[%c64_115, %c0_116] : memref<224x192xf32, #tpu.memory_space<vmem>>, vector<32x192xf32>
    tpu.vector_store %arg8[%c64_115, %c0_116], %245 {strides = array<i32>} : memref<224x192xf32, #tpu.memory_space<vmem>>, vector<32x192xf32>,
    %c3_117 = arith.constant 3 : index
    %c0_118 = arith.constant 0 : index
    %c0_119 = arith.constant 0 : index
    %247 = vector.load %arg6[%c3_117, %c0_118, %c0_119] : memref<14x1x192xf32, #tpu.memory_space<vmem>>, vector<1x1x192xf32>
    %248 = vector.shape_cast %247 : vector<1x1x192xf32> to vector<1x192xf32>
    %249 = vector.broadcast %248 : vector<1x192xf32> to vector<32x192xf32>
    %250 = arith.mulf %223, %249 : vector<32x192xf32>
    %c96_120 = arith.constant 96 : index
    %c0_121 = arith.constant 0 : index
    %251 = vector.load %arg8[%c96_120, %c0_121] : memref<224x192xf32, #tpu.memory_space<vmem>>, vector<32x192xf32>
    tpu.vector_store %arg8[%c96_120, %c0_121], %250 {strides = array<i32>} : memref<224x192xf32, #tpu.memory_space<vmem>>, vector<32x192xf32>,
    %c191_i32_122 = arith.constant 191 : i32
    %252 = tpu.dynamic_rotate %223 by %c191_i32_122 dim 1 : vector<32x192xf32>, i32 -> vector<32x192xf32>
    %c4_123 = arith.constant 4 : index
    %c0_124 = arith.constant 0 : index
    %c0_125 = arith.constant 0 : index
    %253 = vector.load %arg6[%c4_123, %c0_124, %c0_125] : memref<14x1x192xf32, #tpu.memory_space<vmem>>, vector<1x1x192xf32>
    %254 = vector.shape_cast %253 : vector<1x1x192xf32> to vector<1x192xf32>
    %255 = vector.broadcast %254 : vector<1x192xf32> to vector<32x192xf32>
    %256 = arith.mulf %252, %255 : vector<32x192xf32>
    %c128_126 = arith.constant 128 : index
    %c0_127 = arith.constant 0 : index
    %257 = vector.load %arg8[%c128_126, %c0_127] : memref<224x192xf32, #tpu.memory_space<vmem>>, vector<32x192xf32>
    tpu.vector_store %arg8[%c128_126, %c0_127], %256 {strides = array<i32>} : memref<224x192xf32, #tpu.memory_space<vmem>>, vector<32x192xf32>,
    %c190_i32_128 = arith.constant 190 : i32
    %258 = tpu.dynamic_rotate %223 by %c190_i32_128 dim 1 : vector<32x192xf32>, i32 -> vector<32x192xf32>
    %c5_129 = arith.constant 5 : index
    %c0_130 = arith.constant 0 : index
    %c0_131 = arith.constant 0 : index
    %259 = vector.load %arg6[%c5_129, %c0_130, %c0_131] : memref<14x1x192xf32, #tpu.memory_space<vmem>>, vector<1x1x192xf32>
    %260 = vector.shape_cast %259 : vector<1x1x192xf32> to vector<1x192xf32>
    %261 = vector.broadcast %260 : vector<1x192xf32> to vector<32x192xf32>
    %262 = arith.mulf %258, %261 : vector<32x192xf32>
    %c160_132 = arith.constant 160 : index
    %c0_133 = arith.constant 0 : index
    %263 = vector.load %arg8[%c160_132, %c0_133] : memref<224x192xf32, #tpu.memory_space<vmem>>, vector<32x192xf32>
    tpu.vector_store %arg8[%c160_132, %c0_133], %262 {strides = array<i32>} : memref<224x192xf32, #tpu.memory_space<vmem>>, vector<32x192xf32>,
    %c189_i32_134 = arith.constant 189 : i32
    %264 = tpu.dynamic_rotate %223 by %c189_i32_134 dim 1 : vector<32x192xf32>, i32 -> vector<32x192xf32>
    %c6_135 = arith.constant 6 : index
    %c0_136 = arith.constant 0 : index
    %c0_137 = arith.constant 0 : index
    %265 = vector.load %arg6[%c6_135, %c0_136, %c0_137] : memref<14x1x192xf32, #tpu.memory_space<vmem>>, vector<1x1x192xf32>
    %266 = vector.shape_cast %265 : vector<1x1x192xf32> to vector<1x192xf32>
    %267 = vector.broadcast %266 : vector<1x192xf32> to vector<32x192xf32>
    %268 = arith.mulf %264, %267 : vector<32x192xf32>
    %c192_138 = arith.constant 192 : index
    %c0_139 = arith.constant 0 : index
    %269 = vector.load %arg8[%c192_138, %c0_139] : memref<224x192xf32, #tpu.memory_space<vmem>>, vector<32x192xf32>
    tpu.vector_store %arg8[%c192_138, %c0_139], %268 {strides = array<i32>} : memref<224x192xf32, #tpu.memory_space<vmem>>, vector<32x192xf32>,
    %c0_140 = arith.constant 0 : index
    %c0_141 = arith.constant 0 : index
    %270 = vector.load %arg8[%c0_140, %c0_141] : memref<224x192xf32, #tpu.memory_space<vmem>>, vector<224x192xf32>
    %cst_142 = arith.constant dense<0.000000e+00> : vector<16x192xf32>
    %271 = tpu.matmul %5, %270, %cst_142 {dimension_numbers = #tpu.dot_dimension_numbers<[1], [0], [0], [1], [0, 0, 1, 1], [], []>} : vector<16x224xf32>, vector<224x192xf32>, vector<16x192xf32> -> vector<16x192xf32>
    %c36_i32_143 = arith.constant 36 : i32
    %272 = tpu.dynamic_rotate %228 by %c36_i32_143 dim 1 : vector<32x192xf32>, i32 -> vector<32x192xf32>
    %c7_144 = arith.constant 7 : index
    %c0_145 = arith.constant 0 : index
    %c0_146 = arith.constant 0 : index
    %273 = vector.load %arg6[%c7_144, %c0_145, %c0_146] : memref<14x1x192xf32, #tpu.memory_space<vmem>>, vector<1x1x192xf32>
    %274 = vector.shape_cast %273 : vector<1x1x192xf32> to vector<1x192xf32>
    %275 = vector.broadcast %274 : vector<1x192xf32> to vector<32x192xf32>
    %276 = arith.mulf %272, %275 : vector<32x192xf32>
    %c0_147 = arith.constant 0 : index
    %c0_148 = arith.constant 0 : index
    %277 = vector.load %arg8[%c0_147, %c0_148] : memref<224x192xf32, #tpu.memory_space<vmem>>, vector<32x192xf32>
    tpu.vector_store %arg8[%c0_147, %c0_148], %276 {strides = array<i32>} : memref<224x192xf32, #tpu.memory_space<vmem>>, vector<32x192xf32>,
    %c24_i32_149 = arith.constant 24 : i32
    %278 = tpu.dynamic_rotate %228 by %c24_i32_149 dim 1 : vector<32x192xf32>, i32 -> vector<32x192xf32>
    %c8_150 = arith.constant 8 : index
    %c0_151 = arith.constant 0 : index
    %c0_152 = arith.constant 0 : index
    %279 = vector.load %arg6[%c8_150, %c0_151, %c0_152] : memref<14x1x192xf32, #tpu.memory_space<vmem>>, vector<1x1x192xf32>
    %280 = vector.shape_cast %279 : vector<1x1x192xf32> to vector<1x192xf32>
    %281 = vector.broadcast %280 : vector<1x192xf32> to vector<32x192xf32>
    %282 = arith.mulf %278, %281 : vector<32x192xf32>
    %c32_153 = arith.constant 32 : index
    %c0_154 = arith.constant 0 : index
    %283 = vector.load %arg8[%c32_153, %c0_154] : memref<224x192xf32, #tpu.memory_space<vmem>>, vector<32x192xf32>
    tpu.vector_store %arg8[%c32_153, %c0_154], %282 {strides = array<i32>} : memref<224x192xf32, #tpu.memory_space<vmem>>, vector<32x192xf32>,
    %c12_i32_155 = arith.constant 12 : i32
    %284 = tpu.dynamic_rotate %228 by %c12_i32_155 dim 1 : vector<32x192xf32>, i32 -> vector<32x192xf32>
    %c9_156 = arith.constant 9 : index
    %c0_157 = arith.constant 0 : index
    %c0_158 = arith.constant 0 : index
    %285 = vector.load %arg6[%c9_156, %c0_157, %c0_158] : memref<14x1x192xf32, #tpu.memory_space<vmem>>, vector<1x1x192xf32>
    %286 = vector.shape_cast %285 : vector<1x1x192xf32> to vector<1x192xf32>
    %287 = vector.broadcast %286 : vector<1x192xf32> to vector<32x192xf32>
    %288 = arith.mulf %284, %287 : vector<32x192xf32>
    %c64_159 = arith.constant 64 : index
    %c0_160 = arith.constant 0 : index
    %289 = vector.load %arg8[%c64_159, %c0_160] : memref<224x192xf32, #tpu.memory_space<vmem>>, vector<32x192xf32>
    tpu.vector_store %arg8[%c64_159, %c0_160], %288 {strides = array<i32>} : memref<224x192xf32, #tpu.memory_space<vmem>>, vector<32x192xf32>,
    %c10_161 = arith.constant 10 : index
    %c0_162 = arith.constant 0 : index
    %c0_163 = arith.constant 0 : index
    %290 = vector.load %arg6[%c10_161, %c0_162, %c0_163] : memref<14x1x192xf32, #tpu.memory_space<vmem>>, vector<1x1x192xf32>
    %291 = vector.shape_cast %290 : vector<1x1x192xf32> to vector<1x192xf32>
    %292 = vector.broadcast %291 : vector<1x192xf32> to vector<32x192xf32>
    %293 = arith.mulf %228, %292 : vector<32x192xf32>
    %c96_164 = arith.constant 96 : index
    %c0_165 = arith.constant 0 : index
    %294 = vector.load %arg8[%c96_164, %c0_165] : memref<224x192xf32, #tpu.memory_space<vmem>>, vector<32x192xf32>
    tpu.vector_store %arg8[%c96_164, %c0_165], %293 {strides = array<i32>} : memref<224x192xf32, #tpu.memory_space<vmem>>, vector<32x192xf32>,
    %c180_i32_166 = arith.constant 180 : i32
    %295 = tpu.dynamic_rotate %228 by %c180_i32_166 dim 1 : vector<32x192xf32>, i32 -> vector<32x192xf32>
    %c11_167 = arith.constant 11 : index
    %c0_168 = arith.constant 0 : index
    %c0_169 = arith.constant 0 : index
    %296 = vector.load %arg6[%c11_167, %c0_168, %c0_169] : memref<14x1x192xf32, #tpu.memory_space<vmem>>, vector<1x1x192xf32>
    %297 = vector.shape_cast %296 : vector<1x1x192xf32> to vector<1x192xf32>
    %298 = vector.broadcast %297 : vector<1x192xf32> to vector<32x192xf32>
    %299 = arith.mulf %295, %298 : vector<32x192xf32>
    %c128_170 = arith.constant 128 : index
    %c0_171 = arith.constant 0 : index
    %300 = vector.load %arg8[%c128_170, %c0_171] : memref<224x192xf32, #tpu.memory_space<vmem>>, vector<32x192xf32>
    tpu.vector_store %arg8[%c128_170, %c0_171], %299 {strides = array<i32>} : memref<224x192xf32, #tpu.memory_space<vmem>>, vector<32x192xf32>,
    %c168_i32_172 = arith.constant 168 : i32
    %301 = tpu.dynamic_rotate %228 by %c168_i32_172 dim 1 : vector<32x192xf32>, i32 -> vector<32x192xf32>
    %c12_173 = arith.constant 12 : index
    %c0_174 = arith.constant 0 : index
    %c0_175 = arith.constant 0 : index
    %302 = vector.load %arg6[%c12_173, %c0_174, %c0_175] : memref<14x1x192xf32, #tpu.memory_space<vmem>>, vector<1x1x192xf32>
    %303 = vector.shape_cast %302 : vector<1x1x192xf32> to vector<1x192xf32>
    %304 = vector.broadcast %303 : vector<1x192xf32> to vector<32x192xf32>
    %305 = arith.mulf %301, %304 : vector<32x192xf32>
    %c160_176 = arith.constant 160 : index
    %c0_177 = arith.constant 0 : index
    %306 = vector.load %arg8[%c160_176, %c0_177] : memref<224x192xf32, #tpu.memory_space<vmem>>, vector<32x192xf32>
    tpu.vector_store %arg8[%c160_176, %c0_177], %305 {strides = array<i32>} : memref<224x192xf32, #tpu.memory_space<vmem>>, vector<32x192xf32>,
    %c156_i32_178 = arith.constant 156 : i32
    %307 = tpu.dynamic_rotate %228 by %c156_i32_178 dim 1 : vector<32x192xf32>, i32 -> vector<32x192xf32>
    %c13_179 = arith.constant 13 : index
    %c0_180 = arith.constant 0 : index
    %c0_181 = arith.constant 0 : index
    %308 = vector.load %arg6[%c13_179, %c0_180, %c0_181] : memref<14x1x192xf32, #tpu.memory_space<vmem>>, vector<1x1x192xf32>
    %309 = vector.shape_cast %308 : vector<1x1x192xf32> to vector<1x192xf32>
    %310 = vector.broadcast %309 : vector<1x192xf32> to vector<32x192xf32>
    %311 = arith.mulf %307, %310 : vector<32x192xf32>
    %c192_182 = arith.constant 192 : index
    %c0_183 = arith.constant 0 : index
    %312 = vector.load %arg8[%c192_182, %c0_183] : memref<224x192xf32, #tpu.memory_space<vmem>>, vector<32x192xf32>
    tpu.vector_store %arg8[%c192_182, %c0_183], %311 {strides = array<i32>} : memref<224x192xf32, #tpu.memory_space<vmem>>, vector<32x192xf32>,
    %c0_184 = arith.constant 0 : index
    %c0_185 = arith.constant 0 : index
    %313 = vector.load %arg8[%c0_184, %c0_185] : memref<224x192xf32, #tpu.memory_space<vmem>>, vector<224x192xf32>
    %cst_186 = arith.constant dense<0.000000e+00> : vector<16x192xf32>
    %314 = tpu.matmul %6, %313, %cst_186 {dimension_numbers = #tpu.dot_dimension_numbers<[1], [0], [0], [1], [0, 0, 1, 1], [], []>} : vector<16x224xf32>, vector<224x192xf32>, vector<16x192xf32> -> vector<16x192xf32>
    %315 = arith.addf %271, %314 : vector<16x192xf32>
    %316 = arith.addf %315, %218 : vector<16x192xf32>
    %cst_187 = arith.constant dense<0.000000e+00> : vector<16xf32>
    %317 = vector.multi_reduction <add>, %316, %cst_187 [1] : vector<16x192xf32> to vector<16xf32>
    %318 = vector.shape_cast %317 : vector<16xf32> to vector<16x1xf32>
    %cst_188 = arith.constant 1.920000e+02 : f32
    %319 = vector.broadcast %cst_188 : f32 to vector<16x1xf32>
    %320 = arith.divf %318, %319 : vector<16x1xf32>
    %cst_189 = arith.constant dense<0.000000e+00> : vector<4x1xf32>
    %321 = tpu.matmul %3, %320, %cst_189 {dimension_numbers = #tpu.dot_dimension_numbers<[1], [0], [0], [1], [0, 0, 1, 1], [], []>} : vector<4x16xf32>, vector<16x1xf32>, vector<4x1xf32> -> vector<4x1xf32>
    %322 = arith.addf %321, %11 : vector<4x1xf32>
    %cst_190 = arith.constant 0.707106769 : f32
    %323 = vector.broadcast %cst_190 : f32 to vector<4x1xf32>
    %324 = arith.mulf %322, %323 : vector<4x1xf32>
    %325 = math.absf %324 : vector<4x1xf32>
    %cst_191 = arith.constant 0.327591091 : f32
    %326 = vector.broadcast %cst_191 : f32 to vector<4x1xf32>
    %327 = arith.mulf %326, %325 : vector<4x1xf32>
    %cst_192 = arith.constant 1.000000e+00 : f32
    %328 = vector.broadcast %cst_192 : f32 to vector<4x1xf32>
    %329 = arith.addf %328, %327 : vector<4x1xf32>
    %cst_193 = arith.constant 1.000000e+00 : f32
    %330 = vector.broadcast %cst_193 : f32 to vector<4x1xf32>
    %331 = arith.divf %330, %329 : vector<4x1xf32>
    %cst_194 = arith.constant 1.06140542 : f32
    %332 = vector.broadcast %cst_194 : f32 to vector<4x1xf32>
    %333 = arith.mulf %331, %332 : vector<4x1xf32>
    %cst_195 = arith.constant -1.45315206 : f32
    %334 = vector.broadcast %cst_195 : f32 to vector<4x1xf32>
    %335 = arith.addf %334, %333 : vector<4x1xf32>
    %336 = arith.mulf %331, %335 : vector<4x1xf32>
    %cst_196 = arith.constant 1.42141378 : f32
    %337 = vector.broadcast %cst_196 : f32 to vector<4x1xf32>
    %338 = arith.addf %337, %336 : vector<4x1xf32>
    %339 = arith.mulf %331, %338 : vector<4x1xf32>
    %cst_197 = arith.constant -0.284496725 : f32
    %340 = vector.broadcast %cst_197 : f32 to vector<4x1xf32>
    %341 = arith.addf %340, %339 : vector<4x1xf32>
    %342 = arith.mulf %331, %341 : vector<4x1xf32>
    %cst_198 = arith.constant 0.254829586 : f32
    %343 = vector.broadcast %cst_198 : f32 to vector<4x1xf32>
    %344 = arith.addf %343, %342 : vector<4x1xf32>
    %345 = arith.mulf %331, %344 : vector<4x1xf32>
    %cst_199 = arith.constant 0.000000e+00 : f32
    %346 = vector.broadcast %cst_199 : f32 to vector<4x1xf32>
    %347 = arith.subf %346, %325 : vector<4x1xf32>
    %348 = arith.mulf %347, %325 : vector<4x1xf32>
    %349 = math.exp %348 : vector<4x1xf32>
    %350 = arith.mulf %345, %349 : vector<4x1xf32>
    %cst_200 = arith.constant 1.000000e+00 : f32
    %351 = vector.broadcast %cst_200 : f32 to vector<4x1xf32>
    %352 = arith.subf %351, %350 : vector<4x1xf32>
    %cst_201 = arith.constant 0.000000e+00 : f32
    %353 = vector.broadcast %cst_201 : f32 to vector<4x1xf32>
    %354 = arith.cmpf oge, %324, %353 : vector<4x1xf32>
    %cst_202 = arith.constant 0.000000e+00 : f32
    %355 = vector.broadcast %cst_202 : f32 to vector<4x1xf32>
    %356 = arith.subf %355, %352 : vector<4x1xf32>
    %357 = arith.select %354, %352, %356 : vector<4x1xi1>, vector<4x1xf32>
    %cst_203 = arith.constant 5.000000e-01 : f32
    %358 = vector.broadcast %cst_203 : f32 to vector<4x1xf32>
    %359 = arith.mulf %358, %322 : vector<4x1xf32>
    %cst_204 = arith.constant 1.000000e+00 : f32
    %360 = vector.broadcast %cst_204 : f32 to vector<4x1xf32>
    %361 = arith.addf %360, %357 : vector<4x1xf32>
    %362 = arith.mulf %359, %361 : vector<4x1xf32>
    %cst_205 = arith.constant dense<0.000000e+00> : vector<48x1xf32>
    %363 = tpu.matmul %12, %362, %cst_205 {dimension_numbers = #tpu.dot_dimension_numbers<[1], [0], [0], [1], [0, 0, 1, 1], [], []>} : vector<48x4xf32>, vector<4x1xf32>, vector<48x1xf32> -> vector<48x1xf32>
    %364 = arith.addf %363, %9 : vector<48x1xf32>
    %365 = vector.extract_strided_slice %364 {offsets = [0, 0], sizes = [16, 1], strides = [1, 1]} : vector<48x1xf32> to vector<16x1xf32>
    %366 = vector.extract_strided_slice %364 {offsets = [16, 0], sizes = [16, 1], strides = [1, 1]} : vector<48x1xf32> to vector<16x1xf32>
    %367 = vector.extract_strided_slice %364 {offsets = [32, 0], sizes = [16, 1], strides = [1, 1]} : vector<48x1xf32> to vector<16x1xf32>
    %368 = arith.maximumf %365, %366 : vector<16x1xf32>
    %369 = arith.maximumf %368, %367 : vector<16x1xf32>
    %370 = arith.subf %365, %369 : vector<16x1xf32>
    %371 = math.exp %370 : vector<16x1xf32>
    %372 = arith.subf %366, %369 : vector<16x1xf32>
    %373 = math.exp %372 : vector<16x1xf32>
    %374 = arith.subf %367, %369 : vector<16x1xf32>
    %375 = math.exp %374 : vector<16x1xf32>
    %376 = arith.addf %371, %373 : vector<16x1xf32>
    %377 = arith.addf %376, %375 : vector<16x1xf32>
    %cst_206 = arith.constant 1.000000e+00 : f32
    %378 = vector.broadcast %cst_206 : f32 to vector<16x1xf32>
    %379 = arith.divf %378, %377 : vector<16x1xf32>
    %380 = arith.mulf %371, %379 : vector<16x1xf32>
    %381 = vector.broadcast %380 : vector<16x1xf32> to vector<16x192xf32>
    %382 = arith.mulf %271, %381 : vector<16x192xf32>
    %383 = arith.mulf %373, %379 : vector<16x1xf32>
    %384 = vector.broadcast %383 : vector<16x1xf32> to vector<16x192xf32>
    %385 = arith.mulf %314, %384 : vector<16x192xf32>
    %386 = arith.addf %382, %385 : vector<16x192xf32>
    %387 = arith.mulf %375, %379 : vector<16x1xf32>
    %388 = vector.broadcast %387 : vector<16x1xf32> to vector<16x192xf32>
    %389 = arith.mulf %218, %388 : vector<16x192xf32>
    %390 = arith.addf %386, %389 : vector<16x192xf32>
    %cst_207 = arith.constant dense<0.000000e+00> : vector<16x192xf32>
    %391 = tpu.matmul %2, %390, %cst_207 {dimension_numbers = #tpu.dot_dimension_numbers<[1], [0], [0], [1], [0, 0, 1, 1], [], []>} : vector<16x16xf32>, vector<16x192xf32>, vector<16x192xf32> -> vector<16x192xf32>
    %392 = vector.broadcast %10 : vector<16x1xf32> to vector<16x192xf32>
    %393 = arith.addf %391, %392 : vector<16x192xf32>
    %c1_208 = arith.constant 1 : index
    %c0_209 = arith.constant 0 : index
    %c0_210 = arith.constant 0 : index
    %394 = vector.load %arg7[%c1_208, %c0_209, %c0_210] : memref<2x16x192xf32, #tpu.memory_space<vmem>>, vector<1x16x192xf32>
    %395 = vector.shape_cast %394 : vector<1x16x192xf32> to vector<16x192xf32>
    %396 = vector.shape_cast %393 : vector<16x192xf32> to vector<1x16x192xf32>
    tpu.vector_store %arg7[%c1_208, %c0_209, %c0_210], %396 {strides = array<i32>} : memref<2x16x192xf32, #tpu.memory_space<vmem>>, vector<1x16x192xf32>,
    return
  }
  func.func @transform_0(%arg0: i32) -> (i32, i32, i32) {
    %c0_i32 = arith.constant 0 : i32
    %c0_i32_0 = arith.constant 0 : i32
    %c0_i32_1 = arith.constant 0 : i32
    return %arg0, %c0_i32, %c0_i32_0 : i32, i32, i32
  }
  func.func @transform_1(%arg0: i32) -> (i32, i32) {
    %c0_i32 = arith.constant 0 : i32
    %c0_i32_0 = arith.constant 0 : i32
    %c0_i32_1 = arith.constant 0 : i32
    return %c0_i32, %c0_i32_0 : i32, i32
  }
  func.func @transform_2(%arg0: i32) -> (i32, i32) {
    %c0_i32 = arith.constant 0 : i32
    %c0_i32_0 = arith.constant 0 : i32
    %c0_i32_1 = arith.constant 0 : i32
    return %c0_i32, %c0_i32_0 : i32, i32
  }
  func.func @transform_3(%arg0: i32) -> (i32, i32) {
    %c0_i32 = arith.constant 0 : i32
    %c0_i32_0 = arith.constant 0 : i32
    %c0_i32_1 = arith.constant 0 : i32
    return %c0_i32, %c0_i32_0 : i32, i32
  }
  func.func @transform_4(%arg0: i32) -> (i32, i32) {
    %c0_i32 = arith.constant 0 : i32
    %c0_i32_0 = arith.constant 0 : i32
    %c0_i32_1 = arith.constant 0 : i32
    return %c0_i32, %c0_i32_0 : i32, i32
  }
  func.func @transform_5(%arg0: i32) -> (i32, i32, i32) {
    %c0_i32 = arith.constant 0 : i32
    %c0_i32_0 = arith.constant 0 : i32
    %c0_i32_1 = arith.constant 0 : i32
    %c0_i32_2 = arith.constant 0 : i32
    return %c0_i32, %c0_i32_0, %c0_i32_1 : i32, i32, i32
  }
  func.func @transform_6(%arg0: i32) -> (i32, i32, i32) {
    %c0_i32 = arith.constant 0 : i32
    %c0_i32_0 = arith.constant 0 : i32
    %c0_i32_1 = arith.constant 0 : i32
    return %arg0, %c0_i32, %c0_i32_0 : i32, i32, i32
  }
}

</mosaic_0001>

<llo_original>
// kernel: forward.1
$region0: #{forward.1}
  #allocation0 [shape = 'u32[]', space=smem, size = 0x4, offset = 0x4, fixed_abs, tag = 'smem constant byte address 0x4 - core index']
  #allocation1 [shape = 'u32[144,128]{1,0:T(1,128)}', space=vmem, size = 0x12000, scoped, tag = 'internal scratch']
  #allocation2 [shape = 'f32[224,192]{1,0:T(8,128)}', space=vmem, size = 0x38000, scoped, tag = 'scratch operand']
  %s0 = inlined_call_operand.vmem [shape: f32[4,16,192], index: 0, kind: input, shape index: {}]
  %s1 = inlined_call_operand.vmem [shape: f32[100,16], index: 1, kind: input, shape index: {}]
  %s2 = inlined_call_operand.vmem [shape: f32[32,224], index: 2, kind: input, shape index: {}]
  %s3 = inlined_call_operand.vmem [shape: f32[48,4], index: 3, kind: input, shape index: {}]
  %s4 = inlined_call_operand.vmem [shape: f32[148,1], index: 4, kind: input, shape index: {}]
  %s5 = inlined_call_operand.vmem [shape: f32[14,1,192], index: 5, kind: input, shape index: {}]
  %s6 = inlined_call_operand.vmem [shape: f32[4,16,192], index: 6, kind: output, shape index: {}]
  %s7 = sld [smem:[#allocation0]]
  $region57: #{forward.1} parent=0
    _
  %s9 = ssub.s32 1, %s7
  %s10 = scalar_select 0, %s9, %s7
  loop: start=0, step=1, limit=4
  $region2: #{forward.1} parent=0 // loop_pre_header
    _
  $region3: #{forward.1} parent=0 // loop_header
    %s12 = sphi 0, %s16
    %p13 = scmp.ge.s32.totalorder %s12, 4
    %s22 = sphi 0, %s24
    %s25 = sphi 0, %s22
    %s26 = sphi 0, %s25
    %s42 = sphi 0, %s26
    %s46 = sphi 0, %s46
    %s48 = sphi 0, %s46
    %s49 = sphi 0, %s48
    %s63 = sphi 0, %s49
    %s67 = sphi 0, %s67
    %s69 = sphi 0, %s67
    %s70 = sphi 0, %s69
    %s84 = sphi 0, %s70
    %s88 = sphi 0, %s88
    %s90 = sphi 0, %s88
    %s91 = sphi 0, %s90
    %s105 = sphi 0, %s91
    %s109 = sphi 0, %s109
    %s111 = sphi 0, %s109
    %s112 = sphi 0, %s111
    %s126 = sphi 0, %s112
    %s130 = sphi 0, %s130
    %s132 = sphi 0, %s130
    %s133 = sphi 0, %s132
    %s147 = sphi 0, %s133
    %s153 = sphi 0, %s155
    %s156 = sphi 0, %s153
    %s157 = sphi 0, %s156
    %s173 = sphi 0, %s157
  $region4: #{forward.1} parent=0 // loop_header_branch
    %15 = sbr.rel (%p13) target = $region8
  $region5: #{forward.1} parent=0 // loop_body
    %s17 = ssub.s32 %s12, 1
    %s18 = ssub.s32 %s12, 2
    %s19 = sadd.s32 %s12, 1
    %s20 = ssub.s32 %s12, %s19
    %p21 = scmp.eq.s32.totalorder %s20, 0
    %s23 = sadd.s32 %s22, 1
    %s24 = scalar_select %p21, %s22, %s23
    %p27 = pneg %p21
    %p28 = scmp.eq.s32.totalorder %s12, 1
    %p29 = por %p27, %p28
    %p30 = scmp.ne.s32.totalorder %s22, %s25
    %p31 = scmp.eq.s32.totalorder %s12, 0
    %p32 = por %p30, %p31
    %p33 = scmp.ne.s32.totalorder %s22, %s25
    %p34 = scmp.eq.s32.totalorder %s17, 1
    %p35 = por %p33, %p34
    %p36 = scmp.ne.s32.totalorder %s25, %s26
    %p37 = scmp.eq.s32.totalorder %s17, 0
    %p38 = por %p36, %p37
    %p39 = scmp.ne.s32.totalorder %s25, %s26
    %p40 = scmp.eq.s32.totalorder %s18, 1
    %p41 = por %p39, %p40
    %p43 = scmp.ne.s32.totalorder %s26, %s42
    %p44 = scmp.eq.s32.totalorder %s18, 0
    %p45 = por %p43, %p44
    %s47 = sadd.s32 %s46, 1
    %p50 = scmp.eq.s32.totalorder %s12, 1
    %p51 = scmp.ne.s32.totalorder %s46, %s48
    %p52 = scmp.eq.s32.totalorder %s12, 0
    %p53 = por %p51, %p52
    %p54 = scmp.ne.s32.totalorder %s46, %s48
    %p55 = scmp.eq.s32.totalorder %s17, 1
    %p56 = por %p54, %p55
    %p57 = scmp.ne.s32.totalorder %s48, %s49
    %p58 = scmp.eq.s32.totalorder %s17, 0
    %p59 = por %p57, %p58
    %p60 = scmp.ne.s32.totalorder %s48, %s49
    %p61 = scmp.eq.s32.totalorder %s18, 1
    %p62 = por %p60, %p61
    %p64 = scmp.ne.s32.totalorder %s49, %s63
    %p65 = scmp.eq.s32.totalorder %s18, 0
    %p66 = por %p64, %p65
    %s68 = sadd.s32 %s67, 1
    %p71 = scmp.eq.s32.totalorder %s12, 1
    %p72 = scmp.ne.s32.totalorder %s67, %s69
    %p73 = scmp.eq.s32.totalorder %s12, 0
    %p74 = por %p72, %p73
    %p75 = scmp.ne.s32.totalorder %s67, %s69
    %p76 = scmp.eq.s32.totalorder %s17, 1
    %p77 = por %p75, %p76
    %p78 = scmp.ne.s32.totalorder %s69, %s70
    %p79 = scmp.eq.s32.totalorder %s17, 0
    %p80 = por %p78, %p79
    %p81 = scmp.ne.s32.totalorder %s69, %s70
    %p82 = scmp.eq.s32.totalorder %s18, 1
    %p83 = por %p81, %p82
    %p85 = scmp.ne.s32.totalorder %s70, %s84
    %p86 = scmp.eq.s32.totalorder %s18, 0
    %p87 = por %p85, %p86
    %s89 = sadd.s32 %s88, 1
    %p92 = scmp.eq.s32.totalorder %s12, 1
    %p93 = scmp.ne.s32.totalorder %s88, %s90
    %p94 = scmp.eq.s32.totalorder %s12, 0
    %p95 = por %p93, %p94
    %p96 = scmp.ne.s32.totalorder %s88, %s90
    %p97 = scmp.eq.s32.totalorder %s17, 1
    %p98 = por %p96, %p97
    %p99 = scmp.ne.s32.totalorder %s90, %s91
    %p100 = scmp.eq.s32.totalorder %s17, 0
    %p101 = por %p99, %p100
    %p102 = scmp.ne.s32.totalorder %s90, %s91
    %p103 = scmp.eq.s32.totalorder %s18, 1
    %p104 = por %p102, %p103
    %p106 = scmp.ne.s32.totalorder %s91, %s105
    %p107 = scmp.eq.s32.totalorder %s18, 0
    %p108 = por %p106, %p107
    %s110 = sadd.s32 %s109, 1
    %p113 = scmp.eq.s32.totalorder %s12, 1
    %p114 = scmp.ne.s32.totalorder %s109, %s111
    %p115 = scmp.eq.s32.totalorder %s12, 0
    %p116 = por %p114, %p115
    %p117 = scmp.ne.s32.totalorder %s109, %s111
    %p118 = scmp.eq.s32.totalorder %s17, 1
    %p119 = por %p117, %p118
    %p120 = scmp.ne.s32.totalorder %s111, %s112
    %p121 = scmp.eq.s32.totalorder %s17, 0
    %p122 = por %p120, %p121
    %p123 = scmp.ne.s32.totalorder %s111, %s112
    %p124 = scmp.eq.s32.totalorder %s18, 1
    %p125 = por %p123, %p124
    %p127 = scmp.ne.s32.totalorder %s112, %s126
    %p128 = scmp.eq.s32.totalorder %s18, 0
    %p129 = por %p127, %p128
    %s131 = sadd.s32 %s130, 1
    %p134 = scmp.eq.s32.totalorder %s12, 1
    %p135 = scmp.ne.s32.totalorder %s130, %s132
    %p136 = scmp.eq.s32.totalorder %s12, 0
    %p137 = por %p135, %p136
    %p138 = scmp.ne.s32.totalorder %s130, %s132
    %p139 = scmp.eq.s32.totalorder %s17, 1
    %p140 = por %p138, %p139
    %p141 = scmp.ne.s32.totalorder %s132, %s133
    %p142 = scmp.eq.s32.totalorder %s17, 0
    %p143 = por %p141, %p142
    %p144 = scmp.ne.s32.totalorder %s132, %s133
    %p145 = scmp.eq.s32.totalorder %s18, 1
    %p146 = por %p144, %p145
    %p148 = scmp.ne.s32.totalorder %s133, %s147
    %p149 = scmp.eq.s32.totalorder %s18, 0
    %p150 = por %p148, %p149
    %s151 = ssub.s32 %s12, %s19
    %p152 = scmp.eq.s32.totalorder %s151, 0
    %s154 = sadd.s32 %s153, 1
    %s155 = scalar_select %p152, %s153, %s154
    %p158 = pneg %p152
    %p159 = scmp.eq.s32.totalorder %s12, 1
    %p160 = por %p158, %p159
    %p161 = scmp.ne.s32.totalorder %s153, %s156
    %p162 = scmp.eq.s32.totalorder %s12, 0
    %p163 = por %p161, %p162
    %p164 = scmp.ne.s32.totalorder %s153, %s156
    %p165 = scmp.eq.s32.totalorder %s17, 1
    %p166 = por %p164, %p165
    %p167 = scmp.ne.s32.totalorder %s156, %s157
    %p168 = scmp.eq.s32.totalorder %s17, 0
    %p169 = por %p167, %p168
    %p170 = scmp.ne.s32.totalorder %s156, %s157
    %p171 = scmp.eq.s32.totalorder %s18, 1
    %p172 = por %p170, %p171
    %p174 = scmp.ne.s32.totalorder %s157, %s173
    %p175 = scmp.eq.s32.totalorder %s18, 0
    %p176 = por %p174, %p175
    %p177 = scmp.le.s32.totalorder 1, %s12
    %p178 = scmp.lt.s32.totalorder %s12, 3
    %p179 = pnand %p177, %p178
    %p180 = pneg %p179
    // Predicated region
    $region9: #{forward.1} parent=5 // pred_check
      _
    $region10: #{forward.1} parent=5 // pred_check_branch
      %182 = sbr.rel (%p179) target = $region12
    $region11: #{forward.1} parent=5 // pred_region
      %s183 = ssub.s32 %s12, 1
      // Predicated region
      $region13: #{forward.1} parent=11 // pred_check
        %p184 = pneg %p59
      $region14: #{forward.1} parent=11 // pred_check_branch
        %186 = sbr.rel (%p184) target = $region16
      $region15: #{forward.1} parent=11 // pred_region
        _
      $region16: #{forward.1} parent=11 // pred_fallthru
        _
      // Predicated region
      $region17: #{forward.1} parent=11 // pred_check
        %p187 = pneg %p80
      $region18: #{forward.1} parent=11 // pred_check_branch
        %189 = sbr.rel (%p187) target = $region20
      $region19: #{forward.1} parent=11 // pred_region
        _
      $region20: #{forward.1} parent=11 // pred_fallthru
        _
      // Predicated region
      $region21: #{forward.1} parent=11 // pred_check
        %p190 = pneg %p101
      $region22: #{forward.1} parent=11 // pred_check_branch
        %192 = sbr.rel (%p190) target = $region24
      $region23: #{forward.1} parent=11 // pred_region
        _
      $region24: #{forward.1} parent=11 // pred_fallthru
        _
      // Predicated region
      $region25: #{forward.1} parent=11 // pred_check
        %p193 = pneg %p122
      $region26: #{forward.1} parent=11 // pred_check_branch
        %195 = sbr.rel (%p193) target = $region28
      $region27: #{forward.1} parent=11 // pred_region
        _
      $region28: #{forward.1} parent=11 // pred_fallthru
        _
      // Predicated region
      $region29: #{forward.1} parent=11 // pred_check
        %p196 = pneg %p143
      $region30: #{forward.1} parent=11 // pred_check_branch
        %198 = sbr.rel (%p196) target = $region32
      $region31: #{forward.1} parent=11 // pred_region
        _
      $region32: #{forward.1} parent=11 // pred_fallthru
        _
    $region12: #{forward.1} parent=5 // pred_fallthru
      _
    %p199 = scmp.lt.s32.totalorder %s12, 2
    // Predicated region
    $region33: #{forward.1} parent=5 // pred_check
      %p200 = pneg %p199
    $region34: #{forward.1} parent=5 // pred_check_branch
      %202 = sbr.rel (%p200) target = $region36
    $region35: #{forward.1} parent=5 // pred_region
      // Predicated region
      $region37: #{forward.1} parent=35 // pred_check
        %p203 = pneg %p32
      $region38: #{forward.1} parent=35 // pred_check_branch
        %205 = sbr.rel (%p203) target = $region40
      $region39: #{forward.1} parent=35 // pred_region
        %s206 = smul.u32 2, %s12
        %p207 = scmp.lt.s32.totalorder %s206, 3
        %s208 = scalar_select %p207, %s206, 3
        %s209 = smul.addr %s208, 4
        %s210 = smul.addr %s209, 8
        %s211 = scalar_lea.vmem %s0, %s210
        %s212 = smul.u32 2, %s12
      $region40: #{forward.1} parent=35 // pred_fallthru
        _
    $region36: #{forward.1} parent=5 // pred_fallthru
      _
    %p213 = scmp.le.s32.totalorder 1, %s12
    %p214 = scmp.lt.s32.totalorder %s12, 3
    %p215 = pnand %p213, %p214
    %p216 = pneg %p215
    // Predicated region
    $region41: #{forward.1} parent=5 // pred_check
      _
    $region42: #{forward.1} parent=5 // pred_check_branch
      %218 = sbr.rel (%p215) target = $region44
    $region43: #{forward.1} parent=5 // pred_region
      %s219 = ssub.s32 %s12, 1
      %s220 = smul.u32 2, %s17
      %p221 = scmp.lt.s32.totalorder %s220, 3
      %s222 = scalar_select %p221, %s220, 3
      %s223 = smul.addr %s222, 4
      %s224 = smul.addr %s223, 8
      %s225 = scalar_lea.vmem %s0, %s224
      %p226 = pneg %p38
      %p227 = pneg %p35
      %p228 = pneg %p59
      %p229 = pneg %p56
      %p230 = pneg %p80
      %p231 = pneg %p77
      %p232 = pneg %p101
      %p233 = pneg %p98
      %p234 = pneg %p122
      %p235 = pneg %p119
      %p236 = pneg %p143
      %p237 = pneg %p140
      %p238 = pneg %p169
      %p239 = pneg %p166
      %s240 = smul.u32 2, %s17
      %p241 = scmp.lt.s32.totalorder %s240, 3
      %s242 = scalar_select %p241, %s240, 3
      %s243 = smul.addr %s242, 4
      %s244 = smul.addr %s243, 8
      %s245 = scalar_lea.vmem %s6, %s244
      %s246 = smul.u32 2, %s17
      %p247 = scmp.lt.s32.totalorder %s246, 3
      %s248 = scalar_select %p247, %s246, 3
      %s249 = smul.addr %s248, 4
      %s250 = smul.addr %s249, 8
      %s251 = scalar_lea.vmem %s0, %s250
      %s252 = smul.u32 2, %s17
      %s253 = smul.u32 2, %s17
      %p254 = scmp.lt.s32.totalorder %s253, 3
      %s255 = scalar_select %p254, %s253, 3
      %s256 = smul.addr %s255, 4
      %s257 = smul.addr %s256, 8
      %s258 = scalar_lea.vmem %s6, %s257
      %s259 = smul.u32 2, %s17
      %v260 = vld [vmem:[%s1] sm:$0xff]
      %v261 = vld [vmem:[%s1 + $0x8] sm:$0xff]
      %v262 = vld [vmem:[%s1 + $0x10] sm:$0xff]
      %v263 = vld [vmem:[%s1 + $0x18] sm:$0xff]
      %v264 = vld [vmem:[%s1 + $0x20] sm:$0xff]
      %v265 = vld [vmem:[%s1 + $0x28] sm:$0xff]
      %v266 = vld [vmem:[%s1 + $0x30] sm:$0xff]
      %v267 = vld [vmem:[%s1 + $0x38] sm:$0xff]
      %v268 = vld [vmem:[%s1 + $0x40] sm:$0xff]
      %v269 = vld [vmem:[%s1 + $0x48] sm:$0xff]
      %v270 = vld [vmem:[%s1 + $0x50] sm:$0xff]
      %v271 = vld [vmem:[%s1 + $0x58] sm:$0xff]
      %v272 = vld [vmem:[%s1 + $0x60] sm:$0xf]
      %v273 = vld [vmem:[%s2] sm:$0xff]
      %v274 = vld [vmem:[%s2 + $0x8] sm:$0xff]
      %v275 = vld [vmem:[%s2 + $0x10] sm:$0xff]
      %v276 = vld [vmem:[%s2 + $0x18] sm:$0xff]
      %v277 = vld [vmem:[%s2 + $0x20] sm:$0xff]
      %v278 = vld [vmem:[%s2 + $0x28] sm:$0xff]
      %v279 = vld [vmem:[%s2 + $0x30] sm:$0xff]
      %v280 = vld [vmem:[%s2 + $0x38] sm:$0xff]
      %v281 = vld [vmem:[%s4] sm:$0xff]
      %v282 = vld [vmem:[%s4 + $0x8] sm:$0xff]
      %v283 = vld [vmem:[%s4 + $0x10] sm:$0xff]
      %v284 = vld [vmem:[%s4 + $0x18] sm:$0xff]
      %v285 = vld [vmem:[%s4 + $0x20] sm:$0xff]
      %v286 = vld [vmem:[%s4 + $0x28] sm:$0xff]
      %v287 = vld [vmem:[%s4 + $0x30] sm:$0xff]
      %v288 = vld [vmem:[%s4 + $0x38] sm:$0xff]
      %v289 = vld [vmem:[%s4 + $0x40] sm:$0xff]
      %v290 = vld [vmem:[%s4 + $0x48] sm:$0xff]
      %v291 = vld [vmem:[%s4 + $0x50] sm:$0xff]
      %v292 = vld [vmem:[%s4 + $0x58] sm:$0xff]
      %v293 = vld [vmem:[%s4 + $0x60] sm:$0xff]
      %v294 = vld [vmem:[%s4 + $0x68] sm:$0xff]
      %v295 = vld [vmem:[%s4 + $0x70] sm:$0xff]
      %v296 = vld [vmem:[%s4 + $0x78] sm:$0xff]
      %v297 = vld [vmem:[%s4 + $0x80] sm:$0xff]
      %v298 = vld [vmem:[%s4 + $0x88] sm:$0xff]
      %v299 = vld [vmem:[%s4 + $0x90] sm:$0xf]
      %v300 = vld [vmem:[%s3] sm:$0xff]
      %v301 = vld [vmem:[%s3 + $0x8] sm:$0xff]
      %v302 = vld [vmem:[%s3 + $0x10] sm:$0xff]
      %v303 = vld [vmem:[%s3 + $0x18] sm:$0xff]
      %v304 = vld [vmem:[%s3 + $0x20] sm:$0xff]
      %v305 = vld [vmem:[%s3 + $0x28] sm:$0xff]
      %v306 = vld [vmem:[%s251] sm:$0xff]
      %v307 = vld [vmem:[%s251 + $0x8] sm:$0xff]
      %v308 = vld [vmem:[%s251 + $0x10] sm:$0xff]
      %v309 = vld [vmem:[%s251 + $0x18] sm:$0xff]
      %311 = vset.pattern.permute.xlu0 0
      %312 = vperm.xlu0 %311, %v281
      %v313 = vpop.permute.xlu0 %312
      %316 = vset.pattern.permute.xlu0 0
      %317 = vperm.xlu0 %316, %v282
      %v318 = vpop.permute.xlu0 %317
      %321 = vset.pattern.permute.xlu0 0
      %322 = vperm.xlu0 %321, %v283
      %v323 = vpop.permute.xlu0 %322
      %326 = vset.pattern.permute.xlu0 0
      %327 = vperm.xlu0 %326, %v284
      %v328 = vpop.permute.xlu0 %327
      %331 = vset.pattern.permute.xlu0 0
      %332 = vperm.xlu0 %331, %v285
      %v333 = vpop.permute.xlu0 %332
      %336 = vset.pattern.permute.xlu0 0
      %337 = vperm.xlu0 %336, %v286
      %v338 = vpop.permute.xlu0 %337
      %341 = vset.pattern.permute.xlu0 0
      %342 = vperm.xlu0 %341, %v287
      %v343 = vpop.permute.xlu0 %342
      %346 = vset.pattern.permute.xlu0 0
      %347 = vperm.xlu0 %346, %v288
      %v348 = vpop.permute.xlu0 %347
      %351 = vset.pattern.permute.xlu0 0
      %352 = vperm.xlu0 %351, %v289
      %v353 = vpop.permute.xlu0 %352
      %356 = vset.pattern.permute.xlu0 0
      %357 = vperm.xlu0 %356, %v290
      %v358 = vpop.permute.xlu0 %357
      %vm360 = vcmask 130048
      %v362 = vsel %vm360, %v260, 0
      %v365 = vsel %vm360, %v261, 0
      %v368 = vsel %vm360, %v262, 0
      %v371 = vsel %vm360, %v263, 0
      %v374 = vsel %vm360, %v264, 0
      %v377 = vsel %vm360, %v265, 0
      %v380 = vsel %vm360, %v266, 0
      %v383 = vsel %vm360, %v267, 0
      %v386 = vsel %vm360, %v268, 0
      %v389 = vsel %vm360, %v269, 0
      %391 = vmatprep.subr.mxu0 0.0
      %392 = vmatpush1.msra.mxu0 0.0
      %393 = vmatprep.subr.mxu0 0.0
      %394 = vmatpush1.msra.mxu0 0.0
      %395 = vmatprep.subr.mxu0 0.0
      %396 = vmatpush1.msra.mxu0 0.0
      %397 = vmatprep.subr.mxu0 0.0
      %398 = vmatpush1.msra.mxu0 0.0
      %399 = vmatprep.subr.mxu0 0.0
      %400 = vmatpush1.msra.mxu0 0.0
      %401 = vmatprep.subr.mxu0 0.0
      %402 = vmatpush1.msra.mxu0 0.0
      %403 = vmatprep.subr.mxu0 0.0
      %404 = vmatpush1.msra.mxu0 0.0
      %405 = vmatprep.subr.mxu0 0.0
      %406 = vmatpush1.msra.mxu0 0.0
      %407 = vmatprep.subr.mxu0 0.0
      %408 = vmatpush1.msra.mxu0 0.0
      %409 = vmatprep.subr.mxu0 0.0
      %410 = vmatpush1.msra.mxu0 0.0
      %411 = vmatprep.subr.mxu0 0.0
      %412 = vmatpush1.msra.mxu0 0.0
      %413 = vmatprep.subr.mxu0 0.0
      %414 = vmatpush1.msra.mxu0 0.0
      %415 = vmatprep.subr.mxu0 0.0
      %416 = vmatpush1.msra.mxu0 0.0
      %417 = vmatprep.subr.mxu0 0.0
      %418 = vmatpush1.msra.mxu0 0.0
      %419 = vmatprep.subr.mxu0 %v309
      %420 = vmatpush1.msra.mxu0 %v308
      %421 = vmatprep.subr.mxu0 %v307
      %422 = vmatpush1.msra.mxu0 %v306
      %423 = vmatprep.subr.mxu0 0.0
      %424 = vmatpush2.msra.mxu0 0.0
      %425 = vmatprep.subr.mxu0 0.0
      %426 = vmatpush2.msra.mxu0 0.0
      %427 = vmatprep.subr.mxu0 0.0
      %428 = vmatpush2.msra.mxu0 0.0
      %429 = vmatprep.subr.mxu0 0.0
      %430 = vmatpush2.msra.mxu0 0.0
      %431 = vmatprep.subr.mxu0 0.0
      %432 = vmatpush2.msra.mxu0 0.0
      %433 = vmatprep.subr.mxu0 0.0
      %434 = vmatpush2.msra.mxu0 0.0
      %435 = vmatprep.subr.mxu0 0.0
      %436 = vmatpush2.msra.mxu0 0.0
      %437 = vmatprep.subr.mxu0 0.0
      %438 = vmatpush2.msra.mxu0 0.0
      %439 = vmatprep.subr.mxu0 0.0
      %440 = vmatpush2.msra.mxu0 0.0
      %441 = vmatprep.subr.mxu0 0.0
      %442 = vmatpush2.msra.mxu0 0.0
      %443 = vmatprep.subr.mxu0 0.0
      %444 = vmatpush2.msra.mxu0 0.0
      %445 = vmatprep.subr.mxu0 0.0
      %446 = vmatpush2.msra.mxu0 0.0
      %447 = vmatprep.subr.mxu0 0.0
      %448 = vmatpush2.msra.mxu0 0.0
      %449 = vmatprep.subr.mxu0 0.0
      %450 = vmatpush2.msra.mxu0 0.0
      %451 = vmatprep.subr.mxu0 0.0
      %452 = vmatpush2.msra.mxu0 0.0
      %453 = vmatprep.subr.mxu0 0.0
      %454 = vmatpush2.msra.mxu0 0.0
      %455 = vmatprep.mubr.f32.mxu0 0.0
      %456 = vmatmul.mubr.f32.gmra.mxu0 %v362
      %v457 = vpop.f32.mrf.mxu0
      %v458 = vadd.f32 %v313, %v457
      %v459 = vpop.f32.mrf.mxu0
      %v460 = vadd.f32 %v313, %v459
      %461 = vmatprep.mubr.f32.mxu0 0.0
      %462 = vmatmul.mubr.f32.gmra.mxu0 %v365
      %v463 = vpop.f32.mrf.mxu0
      %v464 = vadd.f32 %v318, %v463
      %v465 = vpop.f32.mrf.mxu0
      %v466 = vadd.f32 %v318, %v465
      %467 = vmatprep.mubr.f32.mxu0 0.0
      %468 = vmatmul.mubr.f32.gmra.mxu0 %v368
      %v469 = vpop.f32.mrf.mxu0
      %v470 = vadd.f32 %v323, %v469
      %v471 = vpop.f32.mrf.mxu0
      %v472 = vadd.f32 %v323, %v471
      %473 = vmatprep.mubr.f32.mxu0 0.0
      %474 = vmatmul.mubr.f32.gmra.mxu0 %v371
      %v475 = vpop.f32.mrf.mxu0
      %v476 = vadd.f32 %v328, %v475
      %v477 = vpop.f32.mrf.mxu0
      %v478 = vadd.f32 %v328, %v477
      %479 = vmatprep.mubr.f32.mxu0 0.0
      %480 = vmatmul.mubr.f32.gmra.mxu0 %v374
      %v481 = vpop.f32.mrf.mxu0
      %v482 = vadd.f32 %v333, %v481
      %v483 = vpop.f32.mrf.mxu0
      %v484 = vadd.f32 %v333, %v483
      %485 = vmatprep.mubr.f32.mxu0 0.0
      %486 = vmatmul.mubr.f32.gmra.mxu0 %v377
      %v487 = vpop.f32.mrf.mxu0
      %v488 = vadd.f32 %v338, %v487
      %v489 = vpop.f32.mrf.mxu0
      %v490 = vadd.f32 %v338, %v489
      %491 = vmatprep.mubr.f32.mxu0 0.0
      %492 = vmatmul.mubr.f32.gmra.mxu0 %v380
      %v493 = vpop.f32.mrf.mxu0
      %v494 = vadd.f32 %v343, %v493
      %v495 = vpop.f32.mrf.mxu0
      %v496 = vadd.f32 %v343, %v495
      %497 = vmatprep.mubr.f32.mxu0 0.0
      %498 = vmatmul.mubr.f32.gmra.mxu0 %v383
      %v499 = vpop.f32.mrf.mxu0
      %v500 = vadd.f32 %v348, %v499
      %v501 = vpop.f32.mrf.mxu0
      %v502 = vadd.f32 %v348, %v501
      %503 = vmatprep.mubr.f32.mxu0 0.0
      %504 = vmatmul.mubr.f32.gmra.mxu0 %v386
      %v505 = vpop.f32.mrf.mxu0
      %v506 = vadd.f32 %v353, %v505
      %v507 = vpop.f32.mrf.mxu0
      %v508 = vadd.f32 %v353, %v507
      %509 = vmatprep.mubr.f32.mxu0 0.0
      %510 = vmatmul.mubr.f32.gmra.mxu0 %v389
      %v511 = vpop.f32.mrf.mxu0
      %v512 = vadd.f32 %v358, %v511
      %v513 = vpop.f32.mrf.mxu0
      %v514 = vadd.f32 %v358, %v513
      %515 = vdwg.mxu0
      %v516 = vmax.f32 %v458, 0.0
      %v517 = vmax.f32 %v460, 0.0
      %v518 = vmax.f32 %v464, 0.0
      %v519 = vmax.f32 %v466, 0.0
      %v520 = vmax.f32 %v470, 0.0
      %v521 = vmax.f32 %v472, 0.0
      %v522 = vmax.f32 %v476, 0.0
      %v523 = vmax.f32 %v478, 0.0
      %v524 = vand.u32 2147483647, %v516
      %vm525 = vcmp.le.f32.partialorder %v524, 0.7853982
      %vm526 = vcmp.lt.s32.totalorder %v516, 0
      %v527 = vand.u32 %v516, 2139095040
      %v528 = vshrl.u32 %v527, 23
      %v529 = vsub.s32 %v528, 127
      %v530 = vand.u32 2147483647, %v516
      %v531 = vand.u32 %v530, 8388607
      %v532 = vor.u32 %v531, 8388608
      %v533 = vsub.s32 0, %v532
      %v534 = vadd.s32 %v529, 1
      %vm535 = vcmp.gt.s32.totalorder %v534, 0
      %v536 = vsel %vm535, %v534, 0
      %v537 = vshrl.u32 %v536, 5
      %v538 = vand.u32 %v536, 31
      %v539 = vsub.s32 32, %v538
      %v540 = vshrl.u32 683565275, %v539
      %v541 = vshll.u32 683565275, %v538
      %v542 = vshrl.u32 2475754826, %v539
      %v543 = vor.u32 %v541, %v542
      %v544 = vshll.u32 2475754826, %v538
      %v545 = vshrl.u32 2131351028, %v539
      %v546 = vor.u32 %v544, %v545
      %v547 = vshll.u32 2131351028, %v538
      %v548 = vshrl.u32 2102212464, %v539
      %v549 = vor.u32 %v547, %v548
      %v550 = vshll.u32 2102212464, %v538
      %v551 = vshrl.u32 920167782, %v539
      %v552 = vor.u32 %v550, %v551
      %v553 = vshll.u32 920167782, %v538
      %v554 = vshrl.u32 1326507024, %v539
      %v555 = vor.u32 %v553, %v554
      %vm556 = vcmp.lt.s32.totalorder %v537, 1
      %vm557 = vcmp.lt.s32.totalorder %v537, 2
      %vm558 = vcmp.lt.s32.totalorder %v537, 3
      %vm559 = vcmp.lt.s32.totalorder %v537, 4
      %v560 = vsel %vm556, %v540, %v543
      %v561 = vsel %vm559, %v549, 2102212464
      %v562 = vsel %vm558, %v546, %v561
      %v563 = vsel %vm557, %v560, %v562
      %v564 = vsel %vm556, %v543, %v546
      %v565 = vsel %vm559, %v552, 920167782
      %v566 = vsel %vm558, %v549, %v565
      %v567 = vsel %vm557, %v564, %v566
      %v568 = vsel %vm556, %v546, %v549
      %v569 = vsel %vm559, %v555, 1326507024
      %v570 = vsel %vm558, %v552, %v569
      %v571 = vsel %vm557, %v568, %v570
      %v572 = vshll.u32 %v532, 8
      %v573 = vmul.u32.u64.compose %v572, %v571
      %v574 = vextract.low.u32 %v573
      %v575 = vextract.high.u32 %v573
      %v576 = vmul.u32.u64.compose %v572, %v567
      %v577 = vextract.low.u32 %v576
      %v578 = vextract.high.u32 %v576
      %v579 = vmul.u32 %v572, %v563
      %v580 = vadd.s32 %v575, %v577
      %vm581 = vc.u32 %v575, %v577
      %v582 = vadd.s32 %v578, 1
      %v583 = vsel %vm581, %v582, %v578
      %v584 = vadd.s32 %v579, %v583
      %v585 = vadd.s32 %v584, 536870912
      %v586 = vshrl.u32 %v585, 30
      %v587 = vshll.u32 %v586, 30
      %v588 = vsub.s32 %v584, %v587
      %vm589 = vcmp.lt.s32.totalorder %v588, 0
      %v590 = vsub.s32 0, %v588
      %v591 = vsel %vm589, %v590, %v588
      %v592 = vclz %v591
      %v593 = vsub.s32 %v592, 2
      %vm594 = vcmp.gt.s32.totalorder 0, %v593
      %v595 = vsel %vm594, 0, %v593
      %v596 = vsub.s32 32, %v595
      %v597 = vshll.u32 %v588, %v595
      %v598 = vshrl.u32 %v580, %v596
      %v599 = vor.u32 %v597, %v598
      %v600 = vsub.s32 4294967266, %v595
      %v601 = vadd.s32 %v600, 127
      %v602 = vshll.u32 %v601, 23
      %v603 = vor.u32 4788187, %v602
      %v604 = vand.u32 2147483647, %v603
      %v606 = vcvt.s32.f32 %v599
      %v607 = vmul.f32 %v606, %v604
      %v608 = vxor.u32 %v607, 2147483648
      %v609 = vsel %vm526, %v608, %v607
      %v610 = vsub.s32 4, %v586
      %v611 = vsel %vm526, %v610, %v586
      %v612 = vsel %vm525, %v516, %v609
      %v613 = vsel %vm525, 0, %v611
      %v614 = vcosq.f32.pop %v612
      %v615 = vsinq.f32.pop %v612
      %vm616 = vweird.f32 %v516
      %v617 = vand.u32 %v613, 3
      %vm618 = vcmp.lt.s32.totalorder %v617, 2
      %vm619 = vcmp.eq.s32.totalorder %v617, 0
      %v620 = vxor.u32 %v615, 2147483648
      %v621 = vsel %vm619, %v614, %v620
      %vm622 = vcmp.eq.s32.totalorder %v617, 2
      %v623 = vxor.u32 %v614, 2147483648
      %v624 = vsel %vm622, %v623, %v615
      %v625 = vsel %vm618, %v621, %v624
      %v626 = vsel %vm616, nan, %v625
      %v627 = vand.u32 2147483647, %v517
      %vm628 = vcmp.le.f32.partialorder %v627, 0.7853982
      %vm629 = vcmp.lt.s32.totalorder %v517, 0
      %v630 = vand.u32 %v517, 2139095040
      %v631 = vshrl.u32 %v630, 23
      %v632 = vsub.s32 %v631, 127
      %v633 = vand.u32 2147483647, %v517
      %v634 = vand.u32 %v633, 8388607
      %v635 = vor.u32 %v634, 8388608
      %v636 = vsub.s32 0, %v635
      %v637 = vadd.s32 %v632, 1
      %vm638 = vcmp.gt.s32.totalorder %v637, 0
      %v639 = vsel %vm638, %v637, 0
      %v640 = vshrl.u32 %v639, 5
      %v641 = vand.u32 %v639, 31
      %v642 = vsub.s32 32, %v641
      %v643 = vshrl.u32 683565275, %v642
      %v644 = vshll.u32 683565275, %v641
      %v645 = vshrl.u32 2475754826, %v642
      %v646 = vor.u32 %v644, %v645
      %v647 = vshll.u32 2475754826, %v641
      %v648 = vshrl.u32 2131351028, %v642
      %v649 = vor.u32 %v647, %v648
      %v650 = vshll.u32 2131351028, %v641
      %v651 = vshrl.u32 2102212464, %v642
      %v652 = vor.u32 %v650, %v651
      %v653 = vshll.u32 2102212464, %v641
      %v654 = vshrl.u32 920167782, %v642
      %v655 = vor.u32 %v653, %v654
      %v656 = vshll.u32 920167782, %v641
      %v657 = vshrl.u32 1326507024, %v642
      %v658 = vor.u32 %v656, %v657
      %vm659 = vcmp.lt.s32.totalorder %v640, 1
      %vm660 = vcmp.lt.s32.totalorder %v640, 2
      %vm661 = vcmp.lt.s32.totalorder %v640, 3
      %vm662 = vcmp.lt.s32.totalorder %v640, 4
      %v663 = vsel %vm659, %v643, %v646
      %v664 = vsel %vm662, %v652, 2102212464
      %v665 = vsel %vm661, %v649, %v664
      %v666 = vsel %vm660, %v663, %v665
      %v667 = vsel %vm659, %v646, %v649
      %v668 = vsel %vm662, %v655, 920167782
      %v669 = vsel %vm661, %v652, %v668
      %v670 = vsel %vm660, %v667, %v669
      %v671 = vsel %vm659, %v649, %v652
      %v672 = vsel %vm662, %v658, 1326507024
      %v673 = vsel %vm661, %v655, %v672
      %v674 = vsel %vm660, %v671, %v673
      %v675 = vshll.u32 %v635, 8
      %v676 = vmul.u32.u64.compose %v675, %v674
      %v677 = vextract.low.u32 %v676
      %v678 = vextract.high.u32 %v676
      %v679 = vmul.u32.u64.compose %v675, %v670
      %v680 = vextract.low.u32 %v679
      %v681 = vextract.high.u32 %v679
      %v682 = vmul.u32 %v675, %v666
      %v683 = vadd.s32 %v678, %v680
      %vm684 = vc.u32 %v678, %v680
      %v685 = vadd.s32 %v681, 1
      %v686 = vsel %vm684, %v685, %v681
      %v687 = vadd.s32 %v682, %v686
      %v688 = vadd.s32 %v687, 536870912
      %v689 = vshrl.u32 %v688, 30
      %v690 = vshll.u32 %v689, 30
      %v691 = vsub.s32 %v687, %v690
      %vm692 = vcmp.lt.s32.totalorder %v691, 0
      %v693 = vsub.s32 0, %v691
      %v694 = vsel %vm692, %v693, %v691
      %v695 = vclz %v694
      %v696 = vsub.s32 %v695, 2
      %vm697 = vcmp.gt.s32.totalorder 0, %v696
      %v698 = vsel %vm697, 0, %v696
      %v699 = vsub.s32 32, %v698
      %v700 = vshll.u32 %v691, %v698
      %v701 = vshrl.u32 %v683, %v699
      %v702 = vor.u32 %v700, %v701
      %v703 = vsub.s32 4294967266, %v698
      %v704 = vadd.s32 %v703, 127
      %v705 = vshll.u32 %v704, 23
      %v706 = vor.u32 4788187, %v705
      %v707 = vand.u32 2147483647, %v706
      %v709 = vcvt.s32.f32 %v702
      %v710 = vmul.f32 %v709, %v707
      %v711 = vxor.u32 %v710, 2147483648
      %v712 = vsel %vm629, %v711, %v710
      %v713 = vsub.s32 4, %v689
      %v714 = vsel %vm629, %v713, %v689
      %v715 = vsel %vm628, %v517, %v712
      %v716 = vsel %vm628, 0, %v714
      %v717 = vcosq.f32.pop %v715
      %v718 = vsinq.f32.pop %v715
      %vm719 = vweird.f32 %v517
      %v720 = vand.u32 %v716, 3
      %vm721 = vcmp.lt.s32.totalorder %v720, 2
      %vm722 = vcmp.eq.s32.totalorder %v720, 0
      %v723 = vxor.u32 %v718, 2147483648
      %v724 = vsel %vm722, %v717, %v723
      %vm725 = vcmp.eq.s32.totalorder %v720, 2
      %v726 = vxor.u32 %v717, 2147483648
      %v727 = vsel %vm725, %v726, %v718
      %v728 = vsel %vm721, %v724, %v727
      %v729 = vsel %vm719, nan, %v728
      %v730 = vand.u32 2147483647, %v518
      %vm731 = vcmp.le.f32.partialorder %v730, 0.7853982
      %vm732 = vcmp.lt.s32.totalorder %v518, 0
      %v733 = vand.u32 %v518, 2139095040
      %v734 = vshrl.u32 %v733, 23
      %v735 = vsub.s32 %v734, 127
      %v736 = vand.u32 2147483647, %v518
      %v737 = vand.u32 %v736, 8388607
      %v738 = vor.u32 %v737, 8388608
      %v739 = vsub.s32 0, %v738
      %v740 = vadd.s32 %v735, 1
      %vm741 = vcmp.gt.s32.totalorder %v740, 0
      %v742 = vsel %vm741, %v740, 0
      %v743 = vshrl.u32 %v742, 5
      %v744 = vand.u32 %v742, 31
      %v745 = vsub.s32 32, %v744
      %v746 = vshrl.u32 683565275, %v745
      %v747 = vshll.u32 683565275, %v744
      %v748 = vshrl.u32 2475754826, %v745
      %v749 = vor.u32 %v747, %v748
      %v750 = vshll.u32 2475754826, %v744
      %v751 = vshrl.u32 2131351028, %v745
      %v752 = vor.u32 %v750, %v751
      %v753 = vshll.u32 2131351028, %v744
      %v754 = vshrl.u32 2102212464, %v745
      %v755 = vor.u32 %v753, %v754
      %v756 = vshll.u32 2102212464, %v744
      %v757 = vshrl.u32 920167782, %v745
      %v758 = vor.u32 %v756, %v757
      %v759 = vshll.u32 920167782, %v744
      %v760 = vshrl.u32 1326507024, %v745
      %v761 = vor.u32 %v759, %v760
      %vm762 = vcmp.lt.s32.totalorder %v743, 1
      %vm763 = vcmp.lt.s32.totalorder %v743, 2
      %vm764 = vcmp.lt.s32.totalorder %v743, 3
      %vm765 = vcmp.lt.s32.totalorder %v743, 4
      %v766 = vsel %vm762, %v746, %v749
      %v767 = vsel %vm765, %v755, 2102212464
      %v768 = vsel %vm764, %v752, %v767
      %v769 = vsel %vm763, %v766, %v768
      %v770 = vsel %vm762, %v749, %v752
      %v771 = vsel %vm765, %v758, 920167782
      %v772 = vsel %vm764, %v755, %v771
      %v773 = vsel %vm763, %v770, %v772
      %v774 = vsel %vm762, %v752, %v755
      %v775 = vsel %vm765, %v761, 1326507024
      %v776 = vsel %vm764, %v758, %v775
      %v777 = vsel %vm763, %v774, %v776
      %v778 = vshll.u32 %v738, 8
      %v779 = vmul.u32.u64.compose %v778, %v777
      %v780 = vextract.low.u32 %v779
      %v781 = vextract.high.u32 %v779
      %v782 = vmul.u32.u64.compose %v778, %v773
      %v783 = vextract.low.u32 %v782
      %v784 = vextract.high.u32 %v782
      %v785 = vmul.u32 %v778, %v769
      %v786 = vadd.s32 %v781, %v783
      %vm787 = vc.u32 %v781, %v783
      %v788 = vadd.s32 %v784, 1
      %v789 = vsel %vm787, %v788, %v784
      %v790 = vadd.s32 %v785, %v789
      %v791 = vadd.s32 %v790, 536870912
      %v792 = vshrl.u32 %v791, 30
      %v793 = vshll.u32 %v792, 30
      %v794 = vsub.s32 %v790, %v793
      %vm795 = vcmp.lt.s32.totalorder %v794, 0
      %v796 = vsub.s32 0, %v794
      %v797 = vsel %vm795, %v796, %v794
      %v798 = vclz %v797
      %v799 = vsub.s32 %v798, 2
      %vm800 = vcmp.gt.s32.totalorder 0, %v799
      %v801 = vsel %vm800, 0, %v799
      %v802 = vsub.s32 32, %v801
      %v803 = vshll.u32 %v794, %v801
      %v804 = vshrl.u32 %v786, %v802
      %v805 = vor.u32 %v803, %v804
      %v806 = vsub.s32 4294967266, %v801
      %v807 = vadd.s32 %v806, 127
      %v808 = vshll.u32 %v807, 23
      %v809 = vor.u32 4788187, %v808
      %v810 = vand.u32 2147483647, %v809
      %v812 = vcvt.s32.f32 %v805
      %v813 = vmul.f32 %v812, %v810
      %v814 = vxor.u32 %v813, 2147483648
      %v815 = vsel %vm732, %v814, %v813
      %v816 = vsub.s32 4, %v792
      %v817 = vsel %vm732, %v816, %v792
      %v818 = vsel %vm731, %v518, %v815
      %v819 = vsel %vm731, 0, %v817
      %v820 = vcosq.f32.pop %v818
      %v821 = vsinq.f32.pop %v818
      %vm822 = vweird.f32 %v518
      %v823 = vand.u32 %v819, 3
      %vm824 = vcmp.lt.s32.totalorder %v823, 2
      %vm825 = vcmp.eq.s32.totalorder %v823, 0
      %v826 = vxor.u32 %v821, 2147483648
      %v827 = vsel %vm825, %v820, %v826
      %vm828 = vcmp.eq.s32.totalorder %v823, 2
      %v829 = vxor.u32 %v820, 2147483648
      %v830 = vsel %vm828, %v829, %v821
      %v831 = vsel %vm824, %v827, %v830
      %v832 = vsel %vm822, nan, %v831
      %v833 = vand.u32 2147483647, %v519
      %vm834 = vcmp.le.f32.partialorder %v833, 0.7853982
      %vm835 = vcmp.lt.s32.totalorder %v519, 0
      %v836 = vand.u32 %v519, 2139095040
      %v837 = vshrl.u32 %v836, 23
      %v838 = vsub.s32 %v837, 127
      %v839 = vand.u32 2147483647, %v519
      %v840 = vand.u32 %v839, 8388607
      %v841 = vor.u32 %v840, 8388608
      %v842 = vsub.s32 0, %v841
      %v843 = vadd.s32 %v838, 1
      %vm844 = vcmp.gt.s32.totalorder %v843, 0
      %v845 = vsel %vm844, %v843, 0
      %v846 = vshrl.u32 %v845, 5
      %v847 = vand.u32 %v845, 31
      %v848 = vsub.s32 32, %v847
      %v849 = vshrl.u32 683565275, %v848
      %v850 = vshll.u32 683565275, %v847
      %v851 = vshrl.u32 2475754826, %v848
      %v852 = vor.u32 %v850, %v851
      %v853 = vshll.u32 2475754826, %v847
      %v854 = vshrl.u32 2131351028, %v848
      %v855 = vor.u32 %v853, %v854
      %v856 = vshll.u32 2131351028, %v847
      %v857 = vshrl.u32 2102212464, %v848
      %v858 = vor.u32 %v856, %v857
      %v859 = vshll.u32 2102212464, %v847
      %v860 = vshrl.u32 920167782, %v848
      %v861 = vor.u32 %v859, %v860
      %v862 = vshll.u32 920167782, %v847
      %v863 = vshrl.u32 1326507024, %v848
      %v864 = vor.u32 %v862, %v863
      %vm865 = vcmp.lt.s32.totalorder %v846, 1
      %vm866 = vcmp.lt.s32.totalorder %v846, 2
      %vm867 = vcmp.lt.s32.totalorder %v846, 3
      %vm868 = vcmp.lt.s32.totalorder %v846, 4
      %v869 = vsel %vm865, %v849, %v852
      %v870 = vsel %vm868, %v858, 2102212464
      %v871 = vsel %vm867, %v855, %v870
      %v872 = vsel %vm866, %v869, %v871
      %v873 = vsel %vm865, %v852, %v855
      %v874 = vsel %vm868, %v861, 920167782
      %v875 = vsel %vm867, %v858, %v874
      %v876 = vsel %vm866, %v873, %v875
      %v877 = vsel %vm865, %v855, %v858
      %v878 = vsel %vm868, %v864, 1326507024
      %v879 = vsel %vm867, %v861, %v878
      %v880 = vsel %vm866, %v877, %v879
      %v881 = vshll.u32 %v841, 8
      %v882 = vmul.u32.u64.compose %v881, %v880
      %v883 = vextract.low.u32 %v882
      %v884 = vextract.high.u32 %v882
      %v885 = vmul.u32.u64.compose %v881, %v876
      %v886 = vextract.low.u32 %v885
      %v887 = vextract.high.u32 %v885
      %v888 = vmul.u32 %v881, %v872
      %v889 = vadd.s32 %v884, %v886
      %vm890 = vc.u32 %v884, %v886
      %v891 = vadd.s32 %v887, 1
      %v892 = vsel %vm890, %v891, %v887
      %v893 = vadd.s32 %v888, %v892
      %v894 = vadd.s32 %v893, 536870912
      %v895 = vshrl.u32 %v894, 30
      %v896 = vshll.u32 %v895, 30
      %v897 = vsub.s32 %v893, %v896
      %vm898 = vcmp.lt.s32.totalorder %v897, 0
      %v899 = vsub.s32 0, %v897
      %v900 = vsel %vm898, %v899, %v897
      %v901 = vclz %v900
      %v902 = vsub.s32 %v901, 2
      %vm903 = vcmp.gt.s32.totalorder 0, %v902
      %v904 = vsel %vm903, 0, %v902
      %v905 = vsub.s32 32, %v904
      %v906 = vshll.u32 %v897, %v904
      %v907 = vshrl.u32 %v889, %v905
      %v908 = vor.u32 %v906, %v907
      %v909 = vsub.s32 4294967266, %v904
      %v910 = vadd.s32 %v909, 127
      %v911 = vshll.u32 %v910, 23
      %v912 = vor.u32 4788187, %v911
      %v913 = vand.u32 2147483647, %v912
      %v915 = vcvt.s32.f32 %v908
      %v916 = vmul.f32 %v915, %v913
      %v917 = vxor.u32 %v916, 2147483648
      %v918 = vsel %vm835, %v917, %v916
      %v919 = vsub.s32 4, %v895
      %v920 = vsel %vm835, %v919, %v895
      %v921 = vsel %vm834, %v519, %v918
      %v922 = vsel %vm834, 0, %v920
      %v923 = vcosq.f32.pop %v921
      %v924 = vsinq.f32.pop %v921
      %vm925 = vweird.f32 %v519
      %v926 = vand.u32 %v922, 3
      %vm927 = vcmp.lt.s32.totalorder %v926, 2
      %vm928 = vcmp.eq.s32.totalorder %v926, 0
      %v929 = vxor.u32 %v924, 2147483648
      %v930 = vsel %vm928, %v923, %v929
      %vm931 = vcmp.eq.s32.totalorder %v926, 2
      %v932 = vxor.u32 %v923, 2147483648
      %v933 = vsel %vm931, %v932, %v924
      %v934 = vsel %vm927, %v930, %v933
      %v935 = vsel %vm925, nan, %v934
      %v936 = vmul.f32 %v482, %v626
      %v937 = vmul.f32 %v484, %v729
      %v938 = vmul.f32 %v488, %v832
      %v939 = vmul.f32 %v490, %v935
      %v940 = vand.u32 2147483647, %v516
      %vm941 = vcmp.le.f32.partialorder %v940, 0.7853982
      %vm942 = vcmp.lt.s32.totalorder %v516, 0
      %v943 = vand.u32 %v516, 2139095040
      %v944 = vshrl.u32 %v943, 23
      %v945 = vsub.s32 %v944, 127
      %v946 = vand.u32 2147483647, %v516
      %v947 = vand.u32 %v946, 8388607
      %v948 = vor.u32 %v947, 8388608
      %v949 = vsub.s32 0, %v948
      %v950 = vadd.s32 %v945, 1
      %vm951 = vcmp.gt.s32.totalorder %v950, 0
      %v952 = vsel %vm951, %v950, 0
      %v953 = vshrl.u32 %v952, 5
      %v954 = vand.u32 %v952, 31
      %v955 = vsub.s32 32, %v954
      %v956 = vshrl.u32 683565275, %v955
      %v957 = vshll.u32 683565275, %v954
      %v958 = vshrl.u32 2475754826, %v955
      %v959 = vor.u32 %v957, %v958
      %v960 = vshll.u32 2475754826, %v954
      %v961 = vshrl.u32 2131351028, %v955
      %v962 = vor.u32 %v960, %v961
      %v963 = vshll.u32 2131351028, %v954
      %v964 = vshrl.u32 2102212464, %v955
      %v965 = vor.u32 %v963, %v964
      %v966 = vshll.u32 2102212464, %v954
      %v967 = vshrl.u32 920167782, %v955
      %v968 = vor.u32 %v966, %v967
      %v969 = vshll.u32 920167782, %v954
      %v970 = vshrl.u32 1326507024, %v955
      %v971 = vor.u32 %v969, %v970
      %vm972 = vcmp.lt.s32.totalorder %v953, 1
      %vm973 = vcmp.lt.s32.totalorder %v953, 2
      %vm974 = vcmp.lt.s32.totalorder %v953, 3
      %vm975 = vcmp.lt.s32.totalorder %v953, 4
      %v976 = vsel %vm972, %v956, %v959
      %v977 = vsel %vm975, %v965, 2102212464
      %v978 = vsel %vm974, %v962, %v977
      %v979 = vsel %vm973, %v976, %v978
      %v980 = vsel %vm972, %v959, %v962
      %v981 = vsel %vm975, %v968, 920167782
      %v982 = vsel %vm974, %v965, %v981
      %v983 = vsel %vm973, %v980, %v982
      %v984 = vsel %vm972, %v962, %v965
      %v985 = vsel %vm975, %v971, 1326507024
      %v986 = vsel %vm974, %v968, %v985
      %v987 = vsel %vm973, %v984, %v986
      %v988 = vshll.u32 %v948, 8
      %v989 = vmul.u32.u64.compose %v988, %v987
      %v990 = vextract.low.u32 %v989
      %v991 = vextract.high.u32 %v989
      %v992 = vmul.u32.u64.compose %v988, %v983
      %v993 = vextract.low.u32 %v992
      %v994 = vextract.high.u32 %v992
      %v995 = vmul.u32 %v988, %v979
      %v996 = vadd.s32 %v991, %v993
      %vm997 = vc.u32 %v991, %v993
      %v998 = vadd.s32 %v994, 1
      %v999 = vsel %vm997, %v998, %v994
      %v1000 = vadd.s32 %v995, %v999
      %v1001 = vadd.s32 %v1000, 536870912
      %v1002 = vshrl.u32 %v1001, 30
      %v1003 = vshll.u32 %v1002, 30
      %v1004 = vsub.s32 %v1000, %v1003
      %vm1005 = vcmp.lt.s32.totalorder %v1004, 0
      %v1006 = vsub.s32 0, %v1004
      %v1007 = vsel %vm1005, %v1006, %v1004
      %v1008 = vclz %v1007
      %v1009 = vsub.s32 %v1008, 2
      %vm1010 = vcmp.gt.s32.totalorder 0, %v1009
      %v1011 = vsel %vm1010, 0, %v1009
      %v1012 = vsub.s32 32, %v1011
      %v1013 = vshll.u32 %v1004, %v1011
      %v1014 = vshrl.u32 %v996, %v1012
      %v1015 = vor.u32 %v1013, %v1014
      %v1016 = vsub.s32 4294967266, %v1011
      %v1017 = vadd.s32 %v1016, 127
      %v1018 = vshll.u32 %v1017, 23
      %v1019 = vor.u32 4788187, %v1018
      %v1020 = vand.u32 2147483647, %v1019
      %v1022 = vcvt.s32.f32 %v1015
      %v1023 = vmul.f32 %v1022, %v1020
      %v1024 = vxor.u32 %v1023, 2147483648
      %v1025 = vsel %vm942, %v1024, %v1023
      %v1026 = vsub.s32 4, %v1002
      %v1027 = vsel %vm942, %v1026, %v1002
      %v1028 = vsel %vm941, %v516, %v1025
      %v1029 = vsel %vm941, 0, %v1027
      %v1030 = vcosq.f32.pop %v1028
      %v1031 = vsinq.f32.pop %v1028
      %vm1032 = vweird.f32 %v516
      %v1033 = vadd.s32 %v1029, 3
      %v1034 = vand.u32 %v1033, 3
      %vm1035 = vcmp.lt.s32.totalorder %v1034, 2
      %vm1036 = vcmp.eq.s32.totalorder %v1034, 0
      %v1037 = vxor.u32 %v1031, 2147483648
      %v1038 = vsel %vm1036, %v1030, %v1037
      %vm1039 = vcmp.eq.s32.totalorder %v1034, 2
      %v1040 = vxor.u32 %v1030, 2147483648
      %v1041 = vsel %vm1039, %v1040, %v1031
      %v1042 = vsel %vm1035, %v1038, %v1041
      %v1043 = vsel %vm1032, nan, %v1042
      %v1044 = vand.u32 2147483647, %v517
      %vm1045 = vcmp.le.f32.partialorder %v1044, 0.7853982
      %vm1046 = vcmp.lt.s32.totalorder %v517, 0
      %v1047 = vand.u32 %v517, 2139095040
      %v1048 = vshrl.u32 %v1047, 23
      %v1049 = vsub.s32 %v1048, 127
      %v1050 = vand.u32 2147483647, %v517
      %v1051 = vand.u32 %v1050, 8388607
      %v1052 = vor.u32 %v1051, 8388608
      %v1053 = vsub.s32 0, %v1052
      %v1054 = vadd.s32 %v1049, 1
      %vm1055 = vcmp.gt.s32.totalorder %v1054, 0
      %v1056 = vsel %vm1055, %v1054, 0
      %v1057 = vshrl.u32 %v1056, 5
      %v1058 = vand.u32 %v1056, 31
      %v1059 = vsub.s32 32, %v1058
      %v1060 = vshrl.u32 683565275, %v1059
      %v1061 = vshll.u32 683565275, %v1058
      %v1062 = vshrl.u32 2475754826, %v1059
      %v1063 = vor.u32 %v1061, %v1062
      %v1064 = vshll.u32 2475754826, %v1058
      %v1065 = vshrl.u32 2131351028, %v1059
      %v1066 = vor.u32 %v1064, %v1065
      %v1067 = vshll.u32 2131351028, %v1058
      %v1068 = vshrl.u32 2102212464, %v1059
      %v1069 = vor.u32 %v1067, %v1068
      %v1070 = vshll.u32 2102212464, %v1058
      %v1071 = vshrl.u32 920167782, %v1059
      %v1072 = vor.u32 %v1070, %v1071
      %v1073 = vshll.u32 920167782, %v1058
      %v1074 = vshrl.u32 1326507024, %v1059
      %v1075 = vor.u32 %v1073, %v1074
      %vm1076 = vcmp.lt.s32.totalorder %v1057, 1
      %vm1077 = vcmp.lt.s32.totalorder %v1057, 2
      %vm1078 = vcmp.lt.s32.totalorder %v1057, 3
      %vm1079 = vcmp.lt.s32.totalorder %v1057, 4
      %v1080 = vsel %vm1076, %v1060, %v1063
      %v1081 = vsel %vm1079, %v1069, 2102212464
      %v1082 = vsel %vm1078, %v1066, %v1081
      %v1083 = vsel %vm1077, %v1080, %v1082
      %v1084 = vsel %vm1076, %v1063, %v1066
      %v1085 = vsel %vm1079, %v1072, 920167782
      %v1086 = vsel %vm1078, %v1069, %v1085
      %v1087 = vsel %vm1077, %v1084, %v1086
      %v1088 = vsel %vm1076, %v1066, %v1069
      %v1089 = vsel %vm1079, %v1075, 1326507024
      %v1090 = vsel %vm1078, %v1072, %v1089
      %v1091 = vsel %vm1077, %v1088, %v1090
      %v1092 = vshll.u32 %v1052, 8
      %v1093 = vmul.u32.u64.compose %v1092, %v1091
      %v1094 = vextract.low.u32 %v1093
      %v1095 = vextract.high.u32 %v1093
      %v1096 = vmul.u32.u64.compose %v1092, %v1087
      %v1097 = vextract.low.u32 %v1096
      %v1098 = vextract.high.u32 %v1096
      %v1099 = vmul.u32 %v1092, %v1083
      %v1100 = vadd.s32 %v1095, %v1097
      %vm1101 = vc.u32 %v1095, %v1097
      %v1102 = vadd.s32 %v1098, 1
      %v1103 = vsel %vm1101, %v1102, %v1098
      %v1104 = vadd.s32 %v1099, %v1103
      %v1105 = vadd.s32 %v1104, 536870912
      %v1106 = vshrl.u32 %v1105, 30
      %v1107 = vshll.u32 %v1106, 30
      %v1108 = vsub.s32 %v1104, %v1107
      %vm1109 = vcmp.lt.s32.totalorder %v1108, 0
      %v1110 = vsub.s32 0, %v1108
      %v1111 = vsel %vm1109, %v1110, %v1108
      %v1112 = vclz %v1111
      %v1113 = vsub.s32 %v1112, 2
      %vm1114 = vcmp.gt.s32.totalorder 0, %v1113
      %v1115 = vsel %vm1114, 0, %v1113
      %v1116 = vsub.s32 32, %v1115
      %v1117 = vshll.u32 %v1108, %v1115
      %v1118 = vshrl.u32 %v1100, %v1116
      %v1119 = vor.u32 %v1117, %v1118
      %v1120 = vsub.s32 4294967266, %v1115
      %v1121 = vadd.s32 %v1120, 127
      %v1122 = vshll.u32 %v1121, 23
      %v1123 = vor.u32 4788187, %v1122
      %v1124 = vand.u32 2147483647, %v1123
      %v1126 = vcvt.s32.f32 %v1119
      %v1127 = vmul.f32 %v1126, %v1124
      %v1128 = vxor.u32 %v1127, 2147483648
      %v1129 = vsel %vm1046, %v1128, %v1127
      %v1130 = vsub.s32 4, %v1106
      %v1131 = vsel %vm1046, %v1130, %v1106
      %v1132 = vsel %vm1045, %v517, %v1129
      %v1133 = vsel %vm1045, 0, %v1131
      %v1134 = vcosq.f32.pop %v1132
      %v1135 = vsinq.f32.pop %v1132
      %vm1136 = vweird.f32 %v517
      %v1137 = vadd.s32 %v1133, 3
      %v1138 = vand.u32 %v1137, 3
      %vm1139 = vcmp.lt.s32.totalorder %v1138, 2
      %vm1140 = vcmp.eq.s32.totalorder %v1138, 0
      %v1141 = vxor.u32 %v1135, 2147483648
      %v1142 = vsel %vm1140, %v1134, %v1141
      %vm1143 = vcmp.eq.s32.totalorder %v1138, 2
      %v1144 = vxor.u32 %v1134, 2147483648
      %v1145 = vsel %vm1143, %v1144, %v1135
      %v1146 = vsel %vm1139, %v1142, %v1145
      %v1147 = vsel %vm1136, nan, %v1146
      %v1148 = vand.u32 2147483647, %v518
      %vm1149 = vcmp.le.f32.partialorder %v1148, 0.7853982
      %vm1150 = vcmp.lt.s32.totalorder %v518, 0
      %v1151 = vand.u32 %v518, 2139095040
      %v1152 = vshrl.u32 %v1151, 23
      %v1153 = vsub.s32 %v1152, 127
      %v1154 = vand.u32 2147483647, %v518
      %v1155 = vand.u32 %v1154, 8388607
      %v1156 = vor.u32 %v1155, 8388608
      %v1157 = vsub.s32 0, %v1156
      %v1158 = vadd.s32 %v1153, 1
      %vm1159 = vcmp.gt.s32.totalorder %v1158, 0
      %v1160 = vsel %vm1159, %v1158, 0
      %v1161 = vshrl.u32 %v1160, 5
      %v1162 = vand.u32 %v1160, 31
      %v1163 = vsub.s32 32, %v1162
      %v1164 = vshrl.u32 683565275, %v1163
      %v1165 = vshll.u32 683565275, %v1162
      %v1166 = vshrl.u32 2475754826, %v1163
      %v1167 = vor.u32 %v1165, %v1166
      %v1168 = vshll.u32 2475754826, %v1162
      %v1169 = vshrl.u32 2131351028, %v1163
      %v1170 = vor.u32 %v1168, %v1169
      %v1171 = vshll.u32 2131351028, %v1162
      %v1172 = vshrl.u32 2102212464, %v1163
      %v1173 = vor.u32 %v1171, %v1172
      %v1174 = vshll.u32 2102212464, %v1162
      %v1175 = vshrl.u32 920167782, %v1163
      %v1176 = vor.u32 %v1174, %v1175
      %v1177 = vshll.u32 920167782, %v1162
      %v1178 = vshrl.u32 1326507024, %v1163
      %v1179 = vor.u32 %v1177, %v1178
      %vm1180 = vcmp.lt.s32.totalorder %v1161, 1
      %vm1181 = vcmp.lt.s32.totalorder %v1161, 2
      %vm1182 = vcmp.lt.s32.totalorder %v1161, 3
      %vm1183 = vcmp.lt.s32.totalorder %v1161, 4
      %v1184 = vsel %vm1180, %v1164, %v1167
      %v1185 = vsel %vm1183, %v1173, 2102212464
      %v1186 = vsel %vm1182, %v1170, %v1185
      %v1187 = vsel %vm1181, %v1184, %v1186
      %v1188 = vsel %vm1180, %v1167, %v1170
      %v1189 = vsel %vm1183, %v1176, 920167782
      %v1190 = vsel %vm1182, %v1173, %v1189
      %v1191 = vsel %vm1181, %v1188, %v1190
      %v1192 = vsel %vm1180, %v1170, %v1173
      %v1193 = vsel %vm1183, %v1179, 1326507024
      %v1194 = vsel %vm1182, %v1176, %v1193
      %v1195 = vsel %vm1181, %v1192, %v1194
      %v1196 = vshll.u32 %v1156, 8
      %v1197 = vmul.u32.u64.compose %v1196, %v1195
      %v1198 = vextract.low.u32 %v1197
      %v1199 = vextract.high.u32 %v1197
      %v1200 = vmul.u32.u64.compose %v1196, %v1191
      %v1201 = vextract.low.u32 %v1200
      %v1202 = vextract.high.u32 %v1200
      %v1203 = vmul.u32 %v1196, %v1187
      %v1204 = vadd.s32 %v1199, %v1201
      %vm1205 = vc.u32 %v1199, %v1201
      %v1206 = vadd.s32 %v1202, 1
      %v1207 = vsel %vm1205, %v1206, %v1202
      %v1208 = vadd.s32 %v1203, %v1207
      %v1209 = vadd.s32 %v1208, 536870912
      %v1210 = vshrl.u32 %v1209, 30
      %v1211 = vshll.u32 %v1210, 30
      %v1212 = vsub.s32 %v1208, %v1211
      %vm1213 = vcmp.lt.s32.totalorder %v1212, 0
      %v1214 = vsub.s32 0, %v1212
      %v1215 = vsel %vm1213, %v1214, %v1212
      %v1216 = vclz %v1215
      %v1217 = vsub.s32 %v1216, 2
      %vm1218 = vcmp.gt.s32.totalorder 0, %v1217
      %v1219 = vsel %vm1218, 0, %v1217
      %v1220 = vsub.s32 32, %v1219
      %v1221 = vshll.u32 %v1212, %v1219
      %v1222 = vshrl.u32 %v1204, %v1220
      %v1223 = vor.u32 %v1221, %v1222
      %v1224 = vsub.s32 4294967266, %v1219
      %v1225 = vadd.s32 %v1224, 127
      %v1226 = vshll.u32 %v1225, 23
      %v1227 = vor.u32 4788187, %v1226
      %v1228 = vand.u32 2147483647, %v1227
      %v1230 = vcvt.s32.f32 %v1223
      %v1231 = vmul.f32 %v1230, %v1228
      %v1232 = vxor.u32 %v1231, 2147483648
      %v1233 = vsel %vm1150, %v1232, %v1231
      %v1234 = vsub.s32 4, %v1210
      %v1235 = vsel %vm1150, %v1234, %v1210
      %v1236 = vsel %vm1149, %v518, %v1233
      %v1237 = vsel %vm1149, 0, %v1235
      %v1238 = vcosq.f32.pop %v1236
      %v1239 = vsinq.f32.pop %v1236
      %vm1240 = vweird.f32 %v518
      %v1241 = vadd.s32 %v1237, 3
      %v1242 = vand.u32 %v1241, 3
      %vm1243 = vcmp.lt.s32.totalorder %v1242, 2
      %vm1244 = vcmp.eq.s32.totalorder %v1242, 0
      %v1245 = vxor.u32 %v1239, 2147483648
      %v1246 = vsel %vm1244, %v1238, %v1245
      %vm1247 = vcmp.eq.s32.totalorder %v1242, 2
      %v1248 = vxor.u32 %v1238, 2147483648
      %v1249 = vsel %vm1247, %v1248, %v1239
      %v1250 = vsel %vm1243, %v1246, %v1249
      %v1251 = vsel %vm1240, nan, %v1250
      %v1252 = vand.u32 2147483647, %v519
      %vm1253 = vcmp.le.f32.partialorder %v1252, 0.7853982
      %vm1254 = vcmp.lt.s32.totalorder %v519, 0
      %v1255 = vand.u32 %v519, 2139095040
      %v1256 = vshrl.u32 %v1255, 23
      %v1257 = vsub.s32 %v1256, 127
      %v1258 = vand.u32 2147483647, %v519
      %v1259 = vand.u32 %v1258, 8388607
      %v1260 = vor.u32 %v1259, 8388608
      %v1261 = vsub.s32 0, %v1260
      %v1262 = vadd.s32 %v1257, 1
      %vm1263 = vcmp.gt.s32.totalorder %v1262, 0
      %v1264 = vsel %vm1263, %v1262, 0
      %v1265 = vshrl.u32 %v1264, 5
      %v1266 = vand.u32 %v1264, 31
      %v1267 = vsub.s32 32, %v1266
      %v1268 = vshrl.u32 683565275, %v1267
      %v1269 = vshll.u32 683565275, %v1266
      %v1270 = vshrl.u32 2475754826, %v1267
      %v1271 = vor.u32 %v1269, %v1270
      %v1272 = vshll.u32 2475754826, %v1266
      %v1273 = vshrl.u32 2131351028, %v1267
      %v1274 = vor.u32 %v1272, %v1273
      %v1275 = vshll.u32 2131351028, %v1266
      %v1276 = vshrl.u32 2102212464, %v1267
      %v1277 = vor.u32 %v1275, %v1276
      %v1278 = vshll.u32 2102212464, %v1266
      %v1279 = vshrl.u32 920167782, %v1267
      %v1280 = vor.u32 %v1278, %v1279
      %v1281 = vshll.u32 920167782, %v1266
      %v1282 = vshrl.u32 1326507024, %v1267
      %v1283 = vor.u32 %v1281, %v1282
      %vm1284 = vcmp.lt.s32.totalorder %v1265, 1
      %vm1285 = vcmp.lt.s32.totalorder %v1265, 2
      %vm1286 = vcmp.lt.s32.totalorder %v1265, 3
      %vm1287 = vcmp.lt.s32.totalorder %v1265, 4
      %v1288 = vsel %vm1284, %v1268, %v1271
      %v1289 = vsel %vm1287, %v1277, 2102212464
      %v1290 = vsel %vm1286, %v1274, %v1289
      %v1291 = vsel %vm1285, %v1288, %v1290
      %v1292 = vsel %vm1284, %v1271, %v1274
      %v1293 = vsel %vm1287, %v1280, 920167782
      %v1294 = vsel %vm1286, %v1277, %v1293
      %v1295 = vsel %vm1285, %v1292, %v1294
      %v1296 = vsel %vm1284, %v1274, %v1277
      %v1297 = vsel %vm1287, %v1283, 1326507024
      %v1298 = vsel %vm1286, %v1280, %v1297
      %v1299 = vsel %vm1285, %v1296, %v1298
      %v1300 = vshll.u32 %v1260, 8
      %v1301 = vmul.u32.u64.compose %v1300, %v1299
      %v1302 = vextract.low.u32 %v1301
      %v1303 = vextract.high.u32 %v1301
      %v1304 = vmul.u32.u64.compose %v1300, %v1295
      %v1305 = vextract.low.u32 %v1304
      %v1306 = vextract.high.u32 %v1304
      %v1307 = vmul.u32 %v1300, %v1291
      %v1308 = vadd.s32 %v1303, %v1305
      %vm1309 = vc.u32 %v1303, %v1305
      %v1310 = vadd.s32 %v1306, 1
      %v1311 = vsel %vm1309, %v1310, %v1306
      %v1312 = vadd.s32 %v1307, %v1311
      %v1313 = vadd.s32 %v1312, 536870912
      %v1314 = vshrl.u32 %v1313, 30
      %v1315 = vshll.u32 %v1314, 30
      %v1316 = vsub.s32 %v1312, %v1315
      %vm1317 = vcmp.lt.s32.totalorder %v1316, 0
      %v1318 = vsub.s32 0, %v1316
      %v1319 = vsel %vm1317, %v1318, %v1316
      %v1320 = vclz %v1319
      %v1321 = vsub.s32 %v1320, 2
      %vm1322 = vcmp.gt.s32.totalorder 0, %v1321
      %v1323 = vsel %vm1322, 0, %v1321
      %v1324 = vsub.s32 32, %v1323
      %v1325 = vshll.u32 %v1316, %v1323
      %v1326 = vshrl.u32 %v1308, %v1324
      %v1327 = vor.u32 %v1325, %v1326
      %v1328 = vsub.s32 4294967266, %v1323
      %v1329 = vadd.s32 %v1328, 127
      %v1330 = vshll.u32 %v1329, 23
      %v1331 = vor.u32 4788187, %v1330
      %v1332 = vand.u32 2147483647, %v1331
      %v1334 = vcvt.s32.f32 %v1327
      %v1335 = vmul.f32 %v1334, %v1332
      %v1336 = vxor.u32 %v1335, 2147483648
      %v1337 = vsel %vm1254, %v1336, %v1335
      %v1338 = vsub.s32 4, %v1314
      %v1339 = vsel %vm1254, %v1338, %v1314
      %v1340 = vsel %vm1253, %v519, %v1337
      %v1341 = vsel %vm1253, 0, %v1339
      %v1342 = vcosq.f32.pop %v1340
      %v1343 = vsinq.f32.pop %v1340
      %vm1344 = vweird.f32 %v519
      %v1345 = vadd.s32 %v1341, 3
      %v1346 = vand.u32 %v1345, 3
      %vm1347 = vcmp.lt.s32.totalorder %v1346, 2
      %vm1348 = vcmp.eq.s32.totalorder %v1346, 0
      %v1349 = vxor.u32 %v1343, 2147483648
      %v1350 = vsel %vm1348, %v1342, %v1349
      %vm1351 = vcmp.eq.s32.totalorder %v1346, 2
      %v1352 = vxor.u32 %v1342, 2147483648
      %v1353 = vsel %vm1351, %v1352, %v1343
      %v1354 = vsel %vm1347, %v1350, %v1353
      %v1355 = vsel %vm1344, nan, %v1354
      %v1356 = vmul.f32 %v482, %v1043
      %v1357 = vmul.f32 %v484, %v1147
      %v1358 = vmul.f32 %v488, %v1251
      %v1359 = vmul.f32 %v490, %v1355
      %v1360 = vand.u32 2147483647, %v520
      %vm1361 = vcmp.le.f32.partialorder %v1360, 0.7853982
      %vm1362 = vcmp.lt.s32.totalorder %v520, 0
      %v1363 = vand.u32 %v520, 2139095040
      %v1364 = vshrl.u32 %v1363, 23
      %v1365 = vsub.s32 %v1364, 127
      %v1366 = vand.u32 2147483647, %v520
      %v1367 = vand.u32 %v1366, 8388607
      %v1368 = vor.u32 %v1367, 8388608
      %v1369 = vsub.s32 0, %v1368
      %v1370 = vadd.s32 %v1365, 1
      %vm1371 = vcmp.gt.s32.totalorder %v1370, 0
      %v1372 = vsel %vm1371, %v1370, 0
      %v1373 = vshrl.u32 %v1372, 5
      %v1374 = vand.u32 %v1372, 31
      %v1375 = vsub.s32 32, %v1374
      %v1376 = vshrl.u32 683565275, %v1375
      %v1377 = vshll.u32 683565275, %v1374
      %v1378 = vshrl.u32 2475754826, %v1375
      %v1379 = vor.u32 %v1377, %v1378
      %v1380 = vshll.u32 2475754826, %v1374
      %v1381 = vshrl.u32 2131351028, %v1375
      %v1382 = vor.u32 %v1380, %v1381
      %v1383 = vshll.u32 2131351028, %v1374
      %v1384 = vshrl.u32 2102212464, %v1375
      %v1385 = vor.u32 %v1383, %v1384
      %v1386 = vshll.u32 2102212464, %v1374
      %v1387 = vshrl.u32 920167782, %v1375
      %v1388 = vor.u32 %v1386, %v1387
      %v1389 = vshll.u32 920167782, %v1374
      %v1390 = vshrl.u32 1326507024, %v1375
      %v1391 = vor.u32 %v1389, %v1390
      %vm1392 = vcmp.lt.s32.totalorder %v1373, 1
      %vm1393 = vcmp.lt.s32.totalorder %v1373, 2
      %vm1394 = vcmp.lt.s32.totalorder %v1373, 3
      %vm1395 = vcmp.lt.s32.totalorder %v1373, 4
      %v1396 = vsel %vm1392, %v1376, %v1379
      %v1397 = vsel %vm1395, %v1385, 2102212464
      %v1398 = vsel %vm1394, %v1382, %v1397
      %v1399 = vsel %vm1393, %v1396, %v1398
      %v1400 = vsel %vm1392, %v1379, %v1382
      %v1401 = vsel %vm1395, %v1388, 920167782
      %v1402 = vsel %vm1394, %v1385, %v1401
      %v1403 = vsel %vm1393, %v1400, %v1402
      %v1404 = vsel %vm1392, %v1382, %v1385
      %v1405 = vsel %vm1395, %v1391, 1326507024
      %v1406 = vsel %vm1394, %v1388, %v1405
      %v1407 = vsel %vm1393, %v1404, %v1406
      %v1408 = vshll.u32 %v1368, 8
      %v1409 = vmul.u32.u64.compose %v1408, %v1407
      %v1410 = vextract.low.u32 %v1409
      %v1411 = vextract.high.u32 %v1409
      %v1412 = vmul.u32.u64.compose %v1408, %v1403
      %v1413 = vextract.low.u32 %v1412
      %v1414 = vextract.high.u32 %v1412
      %v1415 = vmul.u32 %v1408, %v1399
      %v1416 = vadd.s32 %v1411, %v1413
      %vm1417 = vc.u32 %v1411, %v1413
      %v1418 = vadd.s32 %v1414, 1
      %v1419 = vsel %vm1417, %v1418, %v1414
      %v1420 = vadd.s32 %v1415, %v1419
      %v1421 = vadd.s32 %v1420, 536870912
      %v1422 = vshrl.u32 %v1421, 30
      %v1423 = vshll.u32 %v1422, 30
      %v1424 = vsub.s32 %v1420, %v1423
      %vm1425 = vcmp.lt.s32.totalorder %v1424, 0
      %v1426 = vsub.s32 0, %v1424
      %v1427 = vsel %vm1425, %v1426, %v1424
      %v1428 = vclz %v1427
      %v1429 = vsub.s32 %v1428, 2
      %vm1430 = vcmp.gt.s32.totalorder 0, %v1429
      %v1431 = vsel %vm1430, 0, %v1429
      %v1432 = vsub.s32 32, %v1431
      %v1433 = vshll.u32 %v1424, %v1431
      %v1434 = vshrl.u32 %v1416, %v1432
      %v1435 = vor.u32 %v1433, %v1434
      %v1436 = vsub.s32 4294967266, %v1431
      %v1437 = vadd.s32 %v1436, 127
      %v1438 = vshll.u32 %v1437, 23
      %v1439 = vor.u32 4788187, %v1438
      %v1440 = vand.u32 2147483647, %v1439
      %v1442 = vcvt.s32.f32 %v1435
      %v1443 = vmul.f32 %v1442, %v1440
      %v1444 = vxor.u32 %v1443, 2147483648
      %v1445 = vsel %vm1362, %v1444, %v1443
      %v1446 = vsub.s32 4, %v1422
      %v1447 = vsel %vm1362, %v1446, %v1422
      %v1448 = vsel %vm1361, %v520, %v1445
      %v1449 = vsel %vm1361, 0, %v1447
      %v1450 = vcosq.f32.pop %v1448
      %v1451 = vsinq.f32.pop %v1448
      %vm1452 = vweird.f32 %v520
      %v1453 = vand.u32 %v1449, 3
      %vm1454 = vcmp.lt.s32.totalorder %v1453, 2
      %vm1455 = vcmp.eq.s32.totalorder %v1453, 0
      %v1456 = vxor.u32 %v1451, 2147483648
      %v1457 = vsel %vm1455, %v1450, %v1456
      %vm1458 = vcmp.eq.s32.totalorder %v1453, 2
      %v1459 = vxor.u32 %v1450, 2147483648
      %v1460 = vsel %vm1458, %v1459, %v1451
      %v1461 = vsel %vm1454, %v1457, %v1460
      %v1462 = vsel %vm1452, nan, %v1461
      %v1463 = vand.u32 2147483647, %v521
      %vm1464 = vcmp.le.f32.partialorder %v1463, 0.7853982
      %vm1465 = vcmp.lt.s32.totalorder %v521, 0
      %v1466 = vand.u32 %v521, 2139095040
      %v1467 = vshrl.u32 %v1466, 23
      %v1468 = vsub.s32 %v1467, 127
      %v1469 = vand.u32 2147483647, %v521
      %v1470 = vand.u32 %v1469, 8388607
      %v1471 = vor.u32 %v1470, 8388608
      %v1472 = vsub.s32 0, %v1471
      %v1473 = vadd.s32 %v1468, 1
      %vm1474 = vcmp.gt.s32.totalorder %v1473, 0
      %v1475 = vsel %vm1474, %v1473, 0
      %v1476 = vshrl.u32 %v1475, 5
      %v1477 = vand.u32 %v1475, 31
      %v1478 = vsub.s32 32, %v1477
      %v1479 = vshrl.u32 683565275, %v1478
      %v1480 = vshll.u32 683565275, %v1477
      %v1481 = vshrl.u32 2475754826, %v1478
      %v1482 = vor.u32 %v1480, %v1481
      %v1483 = vshll.u32 2475754826, %v1477
      %v1484 = vshrl.u32 2131351028, %v1478
      %v1485 = vor.u32 %v1483, %v1484
      %v1486 = vshll.u32 2131351028, %v1477
      %v1487 = vshrl.u32 2102212464, %v1478
      %v1488 = vor.u32 %v1486, %v1487
      %v1489 = vshll.u32 2102212464, %v1477
      %v1490 = vshrl.u32 920167782, %v1478
      %v1491 = vor.u32 %v1489, %v1490
      %v1492 = vshll.u32 920167782, %v1477
      %v1493 = vshrl.u32 1326507024, %v1478
      %v1494 = vor.u32 %v1492, %v1493
      %vm1495 = vcmp.lt.s32.totalorder %v1476, 1
      %vm1496 = vcmp.lt.s32.totalorder %v1476, 2
      %vm1497 = vcmp.lt.s32.totalorder %v1476, 3
      %vm1498 = vcmp.lt.s32.totalorder %v1476, 4
      %v1499 = vsel %vm1495, %v1479, %v1482
      %v1500 = vsel %vm1498, %v1488, 2102212464
      %v1501 = vsel %vm1497, %v1485, %v1500
      %v1502 = vsel %vm1496, %v1499, %v1501
      %v1503 = vsel %vm1495, %v1482, %v1485
      %v1504 = vsel %vm1498, %v1491, 920167782
      %v1505 = vsel %vm1497, %v1488, %v1504
      %v1506 = vsel %vm1496, %v1503, %v1505
      %v1507 = vsel %vm1495, %v1485, %v1488
      %v1508 = vsel %vm1498, %v1494, 1326507024
      %v1509 = vsel %vm1497, %v1491, %v1508
      %v1510 = vsel %vm1496, %v1507, %v1509
      %v1511 = vshll.u32 %v1471, 8
      %v1512 = vmul.u32.u64.compose %v1511, %v1510
      %v1513 = vextract.low.u32 %v1512
      %v1514 = vextract.high.u32 %v1512
      %v1515 = vmul.u32.u64.compose %v1511, %v1506
      %v1516 = vextract.low.u32 %v1515
      %v1517 = vextract.high.u32 %v1515
      %v1518 = vmul.u32 %v1511, %v1502
      %v1519 = vadd.s32 %v1514, %v1516
      %vm1520 = vc.u32 %v1514, %v1516
      %v1521 = vadd.s32 %v1517, 1
      %v1522 = vsel %vm1520, %v1521, %v1517
      %v1523 = vadd.s32 %v1518, %v1522
      %v1524 = vadd.s32 %v1523, 536870912
      %v1525 = vshrl.u32 %v1524, 30
      %v1526 = vshll.u32 %v1525, 30
      %v1527 = vsub.s32 %v1523, %v1526
      %vm1528 = vcmp.lt.s32.totalorder %v1527, 0
      %v1529 = vsub.s32 0, %v1527
      %v1530 = vsel %vm1528, %v1529, %v1527
      %v1531 = vclz %v1530
      %v1532 = vsub.s32 %v1531, 2
      %vm1533 = vcmp.gt.s32.totalorder 0, %v1532
      %v1534 = vsel %vm1533, 0, %v1532
      %v1535 = vsub.s32 32, %v1534
      %v1536 = vshll.u32 %v1527, %v1534
      %v1537 = vshrl.u32 %v1519, %v1535
      %v1538 = vor.u32 %v1536, %v1537
      %v1539 = vsub.s32 4294967266, %v1534
      %v1540 = vadd.s32 %v1539, 127
      %v1541 = vshll.u32 %v1540, 23
      %v1542 = vor.u32 4788187, %v1541
      %v1543 = vand.u32 2147483647, %v1542
      %v1545 = vcvt.s32.f32 %v1538
      %v1546 = vmul.f32 %v1545, %v1543
      %v1547 = vxor.u32 %v1546, 2147483648
      %v1548 = vsel %vm1465, %v1547, %v1546
      %v1549 = vsub.s32 4, %v1525
      %v1550 = vsel %vm1465, %v1549, %v1525
      %v1551 = vsel %vm1464, %v521, %v1548
      %v1552 = vsel %vm1464, 0, %v1550
      %v1553 = vcosq.f32.pop %v1551
      %v1554 = vsinq.f32.pop %v1551
      %vm1555 = vweird.f32 %v521
      %v1556 = vand.u32 %v1552, 3
      %vm1557 = vcmp.lt.s32.totalorder %v1556, 2
      %vm1558 = vcmp.eq.s32.totalorder %v1556, 0
      %v1559 = vxor.u32 %v1554, 2147483648
      %v1560 = vsel %vm1558, %v1553, %v1559
      %vm1561 = vcmp.eq.s32.totalorder %v1556, 2
      %v1562 = vxor.u32 %v1553, 2147483648
      %v1563 = vsel %vm1561, %v1562, %v1554
      %v1564 = vsel %vm1557, %v1560, %v1563
      %v1565 = vsel %vm1555, nan, %v1564
      %v1566 = vand.u32 2147483647, %v522
      %vm1567 = vcmp.le.f32.partialorder %v1566, 0.7853982
      %vm1568 = vcmp.lt.s32.totalorder %v522, 0
      %v1569 = vand.u32 %v522, 2139095040
      %v1570 = vshrl.u32 %v1569, 23
      %v1571 = vsub.s32 %v1570, 127
      %v1572 = vand.u32 2147483647, %v522
      %v1573 = vand.u32 %v1572, 8388607
      %v1574 = vor.u32 %v1573, 8388608
      %v1575 = vsub.s32 0, %v1574
      %v1576 = vadd.s32 %v1571, 1
      %vm1577 = vcmp.gt.s32.totalorder %v1576, 0
      %v1578 = vsel %vm1577, %v1576, 0
      %v1579 = vshrl.u32 %v1578, 5
      %v1580 = vand.u32 %v1578, 31
      %v1581 = vsub.s32 32, %v1580
      %v1582 = vshrl.u32 683565275, %v1581
      %v1583 = vshll.u32 683565275, %v1580
      %v1584 = vshrl.u32 2475754826, %v1581
      %v1585 = vor.u32 %v1583, %v1584
      %v1586 = vshll.u32 2475754826, %v1580
      %v1587 = vshrl.u32 2131351028, %v1581
      %v1588 = vor.u32 %v1586, %v1587
      %v1589 = vshll.u32 2131351028, %v1580
      %v1590 = vshrl.u32 2102212464, %v1581
      %v1591 = vor.u32 %v1589, %v1590
      %v1592 = vshll.u32 2102212464, %v1580
      %v1593 = vshrl.u32 920167782, %v1581
      %v1594 = vor.u32 %v1592, %v1593
      %v1595 = vshll.u32 920167782, %v1580
      %v1596 = vshrl.u32 1326507024, %v1581
      %v1597 = vor.u32 %v1595, %v1596
      %vm1598 = vcmp.lt.s32.totalorder %v1579, 1
      %vm1599 = vcmp.lt.s32.totalorder %v1579, 2
      %vm1600 = vcmp.lt.s32.totalorder %v1579, 3
      %vm1601 = vcmp.lt.s32.totalorder %v1579, 4
      %v1602 = vsel %vm1598, %v1582, %v1585
      %v1603 = vsel %vm1601, %v1591, 2102212464
      %v1604 = vsel %vm1600, %v1588, %v1603
      %v1605 = vsel %vm1599, %v1602, %v1604
      %v1606 = vsel %vm1598, %v1585, %v1588
      %v1607 = vsel %vm1601, %v1594, 920167782
      %v1608 = vsel %vm1600, %v1591, %v1607
      %v1609 = vsel %vm1599, %v1606, %v1608
      %v1610 = vsel %vm1598, %v1588, %v1591
      %v1611 = vsel %vm1601, %v1597, 1326507024
      %v1612 = vsel %vm1600, %v1594, %v1611
      %v1613 = vsel %vm1599, %v1610, %v1612
      %v1614 = vshll.u32 %v1574, 8
      %v1615 = vmul.u32.u64.compose %v1614, %v1613
      %v1616 = vextract.low.u32 %v1615
      %v1617 = vextract.high.u32 %v1615
      %v1618 = vmul.u32.u64.compose %v1614, %v1609
      %v1619 = vextract.low.u32 %v1618
      %v1620 = vextract.high.u32 %v1618
      %v1621 = vmul.u32 %v1614, %v1605
      %v1622 = vadd.s32 %v1617, %v1619
      %vm1623 = vc.u32 %v1617, %v1619
      %v1624 = vadd.s32 %v1620, 1
      %v1625 = vsel %vm1623, %v1624, %v1620
      %v1626 = vadd.s32 %v1621, %v1625
      %v1627 = vadd.s32 %v1626, 536870912
      %v1628 = vshrl.u32 %v1627, 30
      %v1629 = vshll.u32 %v1628, 30
      %v1630 = vsub.s32 %v1626, %v1629
      %vm1631 = vcmp.lt.s32.totalorder %v1630, 0
      %v1632 = vsub.s32 0, %v1630
      %v1633 = vsel %vm1631, %v1632, %v1630
      %v1634 = vclz %v1633
      %v1635 = vsub.s32 %v1634, 2
      %vm1636 = vcmp.gt.s32.totalorder 0, %v1635
      %v1637 = vsel %vm1636, 0, %v1635
      %v1638 = vsub.s32 32, %v1637
      %v1639 = vshll.u32 %v1630, %v1637
      %v1640 = vshrl.u32 %v1622, %v1638
      %v1641 = vor.u32 %v1639, %v1640
      %v1642 = vsub.s32 4294967266, %v1637
      %v1643 = vadd.s32 %v1642, 127
      %v1644 = vshll.u32 %v1643, 23
      %v1645 = vor.u32 4788187, %v1644
      %v1646 = vand.u32 2147483647, %v1645
      %v1648 = vcvt.s32.f32 %v1641
      %v1649 = vmul.f32 %v1648, %v1646
      %v1650 = vxor.u32 %v1649, 2147483648
      %v1651 = vsel %vm1568, %v1650, %v1649
      %v1652 = vsub.s32 4, %v1628
      %v1653 = vsel %vm1568, %v1652, %v1628
      %v1654 = vsel %vm1567, %v522, %v1651
      %v1655 = vsel %vm1567, 0, %v1653
      %v1656 = vcosq.f32.pop %v1654
      %v1657 = vsinq.f32.pop %v1654
      %vm1658 = vweird.f32 %v522
      %v1659 = vand.u32 %v1655, 3
      %vm1660 = vcmp.lt.s32.totalorder %v1659, 2
      %vm1661 = vcmp.eq.s32.totalorder %v1659, 0
      %v1662 = vxor.u32 %v1657, 2147483648
      %v1663 = vsel %vm1661, %v1656, %v1662
      %vm1664 = vcmp.eq.s32.totalorder %v1659, 2
      %v1665 = vxor.u32 %v1656, 2147483648
      %v1666 = vsel %vm1664, %v1665, %v1657
      %v1667 = vsel %vm1660, %v1663, %v1666
      %v1668 = vsel %vm1658, nan, %v1667
      %v1669 = vand.u32 2147483647, %v523
      %vm1670 = vcmp.le.f32.partialorder %v1669, 0.7853982
      %vm1671 = vcmp.lt.s32.totalorder %v523, 0
      %v1672 = vand.u32 %v523, 2139095040
      %v1673 = vshrl.u32 %v1672, 23
      %v1674 = vsub.s32 %v1673, 127
      %v1675 = vand.u32 2147483647, %v523
      %v1676 = vand.u32 %v1675, 8388607
      %v1677 = vor.u32 %v1676, 8388608
      %v1678 = vsub.s32 0, %v1677
      %v1679 = vadd.s32 %v1674, 1
      %vm1680 = vcmp.gt.s32.totalorder %v1679, 0
      %v1681 = vsel %vm1680, %v1679, 0
      %v1682 = vshrl.u32 %v1681, 5
      %v1683 = vand.u32 %v1681, 31
      %v1684 = vsub.s32 32, %v1683
      %v1685 = vshrl.u32 683565275, %v1684
      %v1686 = vshll.u32 683565275, %v1683
      %v1687 = vshrl.u32 2475754826, %v1684
      %v1688 = vor.u32 %v1686, %v1687
      %v1689 = vshll.u32 2475754826, %v1683
      %v1690 = vshrl.u32 2131351028, %v1684
      %v1691 = vor.u32 %v1689, %v1690
      %v1692 = vshll.u32 2131351028, %v1683
      %v1693 = vshrl.u32 2102212464, %v1684
      %v1694 = vor.u32 %v1692, %v1693
      %v1695 = vshll.u32 2102212464, %v1683
      %v1696 = vshrl.u32 920167782, %v1684
      %v1697 = vor.u32 %v1695, %v1696
      %v1698 = vshll.u32 920167782, %v1683
      %v1699 = vshrl.u32 1326507024, %v1684
      %v1700 = vor.u32 %v1698, %v1699
      %vm1701 = vcmp.lt.s32.totalorder %v1682, 1
      %vm1702 = vcmp.lt.s32.totalorder %v1682, 2
      %vm1703 = vcmp.lt.s32.totalorder %v1682, 3
      %vm1704 = vcmp.lt.s32.totalorder %v1682, 4
      %v1705 = vsel %vm1701, %v1685, %v1688
      %v1706 = vsel %vm1704, %v1694, 2102212464
      %v1707 = vsel %vm1703, %v1691, %v1706
      %v1708 = vsel %vm1702, %v1705, %v1707
      %v1709 = vsel %vm1701, %v1688, %v1691
      %v1710 = vsel %vm1704, %v1697, 920167782
      %v1711 = vsel %vm1703, %v1694, %v1710
      %v1712 = vsel %vm1702, %v1709, %v1711
      %v1713 = vsel %vm1701, %v1691, %v1694
      %v1714 = vsel %vm1704, %v1700, 1326507024
      %v1715 = vsel %vm1703, %v1697, %v1714
      %v1716 = vsel %vm1702, %v1713, %v1715
      %v1717 = vshll.u32 %v1677, 8
      %v1718 = vmul.u32.u64.compose %v1717, %v1716
      %v1719 = vextract.low.u32 %v1718
      %v1720 = vextract.high.u32 %v1718
      %v1721 = vmul.u32.u64.compose %v1717, %v1712
      %v1722 = vextract.low.u32 %v1721
      %v1723 = vextract.high.u32 %v1721
      %v1724 = vmul.u32 %v1717, %v1708
      %v1725 = vadd.s32 %v1720, %v1722
      %vm1726 = vc.u32 %v1720, %v1722
      %v1727 = vadd.s32 %v1723, 1
      %v1728 = vsel %vm1726, %v1727, %v1723
      %v1729 = vadd.s32 %v1724, %v1728
      %v1730 = vadd.s32 %v1729, 536870912
      %v1731 = vshrl.u32 %v1730, 30
      %v1732 = vshll.u32 %v1731, 30
      %v1733 = vsub.s32 %v1729, %v1732
      %vm1734 = vcmp.lt.s32.totalorder %v1733, 0
      %v1735 = vsub.s32 0, %v1733
      %v1736 = vsel %vm1734, %v1735, %v1733
      %v1737 = vclz %v1736
      %v1738 = vsub.s32 %v1737, 2
      %vm1739 = vcmp.gt.s32.totalorder 0, %v1738
      %v1740 = vsel %vm1739, 0, %v1738
      %v1741 = vsub.s32 32, %v1740
      %v1742 = vshll.u32 %v1733, %v1740
      %v1743 = vshrl.u32 %v1725, %v1741
      %v1744 = vor.u32 %v1742, %v1743
      %v1745 = vsub.s32 4294967266, %v1740
      %v1746 = vadd.s32 %v1745, 127
      %v1747 = vshll.u32 %v1746, 23
      %v1748 = vor.u32 4788187, %v1747
      %v1749 = vand.u32 2147483647, %v1748
      %v1751 = vcvt.s32.f32 %v1744
      %v1752 = vmul.f32 %v1751, %v1749
      %v1753 = vxor.u32 %v1752, 2147483648
      %v1754 = vsel %vm1671, %v1753, %v1752
      %v1755 = vsub.s32 4, %v1731
      %v1756 = vsel %vm1671, %v1755, %v1731
      %v1757 = vsel %vm1670, %v523, %v1754
      %v1758 = vsel %vm1670, 0, %v1756
      %v1759 = vcosq.f32.pop %v1757
      %v1760 = vsinq.f32.pop %v1757
      %vm1761 = vweird.f32 %v523
      %v1762 = vand.u32 %v1758, 3
      %vm1763 = vcmp.lt.s32.totalorder %v1762, 2
      %vm1764 = vcmp.eq.s32.totalorder %v1762, 0
      %v1765 = vxor.u32 %v1760, 2147483648
      %v1766 = vsel %vm1764, %v1759, %v1765
      %vm1767 = vcmp.eq.s32.totalorder %v1762, 2
      %v1768 = vxor.u32 %v1759, 2147483648
      %v1769 = vsel %vm1767, %v1768, %v1760
      %v1770 = vsel %vm1763, %v1766, %v1769
      %v1771 = vsel %vm1761, nan, %v1770
      %v1772 = vmul.f32 %v494, %v1462
      %v1773 = vmul.f32 %v496, %v1565
      %v1774 = vmul.f32 %v500, %v1668
      %v1775 = vmul.f32 %v502, %v1771
      %v1776 = vand.u32 2147483647, %v520
      %vm1777 = vcmp.le.f32.partialorder %v1776, 0.7853982
      %vm1778 = vcmp.lt.s32.totalorder %v520, 0
      %v1779 = vand.u32 %v520, 2139095040
      %v1780 = vshrl.u32 %v1779, 23
      %v1781 = vsub.s32 %v1780, 127
      %v1782 = vand.u32 2147483647, %v520
      %v1783 = vand.u32 %v1782, 8388607
      %v1784 = vor.u32 %v1783, 8388608
      %v1785 = vsub.s32 0, %v1784
      %v1786 = vadd.s32 %v1781, 1
      %vm1787 = vcmp.gt.s32.totalorder %v1786, 0
      %v1788 = vsel %vm1787, %v1786, 0
      %v1789 = vshrl.u32 %v1788, 5
      %v1790 = vand.u32 %v1788, 31
      %v1791 = vsub.s32 32, %v1790
      %v1792 = vshrl.u32 683565275, %v1791
      %v1793 = vshll.u32 683565275, %v1790
      %v1794 = vshrl.u32 2475754826, %v1791
      %v1795 = vor.u32 %v1793, %v1794
      %v1796 = vshll.u32 2475754826, %v1790
      %v1797 = vshrl.u32 2131351028, %v1791
      %v1798 = vor.u32 %v1796, %v1797
      %v1799 = vshll.u32 2131351028, %v1790
      %v1800 = vshrl.u32 2102212464, %v1791
      %v1801 = vor.u32 %v1799, %v1800
      %v1802 = vshll.u32 2102212464, %v1790
      %v1803 = vshrl.u32 920167782, %v1791
      %v1804 = vor.u32 %v1802, %v1803
      %v1805 = vshll.u32 920167782, %v1790
      %v1806 = vshrl.u32 1326507024, %v1791
      %v1807 = vor.u32 %v1805, %v1806
      %vm1808 = vcmp.lt.s32.totalorder %v1789, 1
      %vm1809 = vcmp.lt.s32.totalorder %v1789, 2
      %vm1810 = vcmp.lt.s32.totalorder %v1789, 3
      %vm1811 = vcmp.lt.s32.totalorder %v1789, 4
      %v1812 = vsel %vm1808, %v1792, %v1795
      %v1813 = vsel %vm1811, %v1801, 2102212464
      %v1814 = vsel %vm1810, %v1798, %v1813
      %v1815 = vsel %vm1809, %v1812, %v1814
      %v1816 = vsel %vm1808, %v1795, %v1798
      %v1817 = vsel %vm1811, %v1804, 920167782
      %v1818 = vsel %vm1810, %v1801, %v1817
      %v1819 = vsel %vm1809, %v1816, %v1818
      %v1820 = vsel %vm1808, %v1798, %v1801
      %v1821 = vsel %vm1811, %v1807, 1326507024
      %v1822 = vsel %vm1810, %v1804, %v1821
      %v1823 = vsel %vm1809, %v1820, %v1822
      %v1824 = vshll.u32 %v1784, 8
      %v1825 = vmul.u32.u64.compose %v1824, %v1823
      %v1826 = vextract.low.u32 %v1825
      %v1827 = vextract.high.u32 %v1825
      %v1828 = vmul.u32.u64.compose %v1824, %v1819
      %v1829 = vextract.low.u32 %v1828
      %v1830 = vextract.high.u32 %v1828
      %v1831 = vmul.u32 %v1824, %v1815
      %v1832 = vadd.s32 %v1827, %v1829
      %vm1833 = vc.u32 %v1827, %v1829
      %v1834 = vadd.s32 %v1830, 1
      %v1835 = vsel %vm1833, %v1834, %v1830
      %v1836 = vadd.s32 %v1831, %v1835
      %v1837 = vadd.s32 %v1836, 536870912
      %v1838 = vshrl.u32 %v1837, 30
      %v1839 = vshll.u32 %v1838, 30
      %v1840 = vsub.s32 %v1836, %v1839
      %vm1841 = vcmp.lt.s32.totalorder %v1840, 0
      %v1842 = vsub.s32 0, %v1840
      %v1843 = vsel %vm1841, %v1842, %v1840
      %v1844 = vclz %v1843
      %v1845 = vsub.s32 %v1844, 2
      %vm1846 = vcmp.gt.s32.totalorder 0, %v1845
      %v1847 = vsel %vm1846, 0, %v1845
      %v1848 = vsub.s32 32, %v1847
      %v1849 = vshll.u32 %v1840, %v1847
      %v1850 = vshrl.u32 %v1832, %v1848
      %v1851 = vor.u32 %v1849, %v1850
      %v1852 = vsub.s32 4294967266, %v1847
      %v1853 = vadd.s32 %v1852, 127
      %v1854 = vshll.u32 %v1853, 23
      %v1855 = vor.u32 4788187, %v1854
      %v1856 = vand.u32 2147483647, %v1855
      %v1858 = vcvt.s32.f32 %v1851
      %v1859 = vmul.f32 %v1858, %v1856
      %v1860 = vxor.u32 %v1859, 2147483648
      %v1861 = vsel %vm1778, %v1860, %v1859
      %v1862 = vsub.s32 4, %v1838
      %v1863 = vsel %vm1778, %v1862, %v1838
      %v1864 = vsel %vm1777, %v520, %v1861
      %v1865 = vsel %vm1777, 0, %v1863
      %v1866 = vcosq.f32.pop %v1864
      %v1867 = vsinq.f32.pop %v1864
      %vm1868 = vweird.f32 %v520
      %v1869 = vadd.s32 %v1865, 3
      %v1870 = vand.u32 %v1869, 3
      %vm1871 = vcmp.lt.s32.totalorder %v1870, 2
      %vm1872 = vcmp.eq.s32.totalorder %v1870, 0
      %v1873 = vxor.u32 %v1867, 2147483648
      %v1874 = vsel %vm1872, %v1866, %v1873
      %vm1875 = vcmp.eq.s32.totalorder %v1870, 2
      %v1876 = vxor.u32 %v1866, 2147483648
      %v1877 = vsel %vm1875, %v1876, %v1867
      %v1878 = vsel %vm1871, %v1874, %v1877
      %v1879 = vsel %vm1868, nan, %v1878
      %v1880 = vand.u32 2147483647, %v521
      %vm1881 = vcmp.le.f32.partialorder %v1880, 0.7853982
      %vm1882 = vcmp.lt.s32.totalorder %v521, 0
      %v1883 = vand.u32 %v521, 2139095040
      %v1884 = vshrl.u32 %v1883, 23
      %v1885 = vsub.s32 %v1884, 127
      %v1886 = vand.u32 2147483647, %v521
      %v1887 = vand.u32 %v1886, 8388607
      %v1888 = vor.u32 %v1887, 8388608
      %v1889 = vsub.s32 0, %v1888
      %v1890 = vadd.s32 %v1885, 1
      %vm1891 = vcmp.gt.s32.totalorder %v1890, 0
      %v1892 = vsel %vm1891, %v1890, 0
      %v1893 = vshrl.u32 %v1892, 5
      %v1894 = vand.u32 %v1892, 31
      %v1895 = vsub.s32 32, %v1894
      %v1896 = vshrl.u32 683565275, %v1895
      %v1897 = vshll.u32 683565275, %v1894
      %v1898 = vshrl.u32 2475754826, %v1895
      %v1899 = vor.u32 %v1897, %v1898
      %v1900 = vshll.u32 2475754826, %v1894
      %v1901 = vshrl.u32 2131351028, %v1895
      %v1902 = vor.u32 %v1900, %v1901
      %v1903 = vshll.u32 2131351028, %v1894
      %v1904 = vshrl.u32 2102212464, %v1895
      %v1905 = vor.u32 %v1903, %v1904
      %v1906 = vshll.u32 2102212464, %v1894
      %v1907 = vshrl.u32 920167782, %v1895
      %v1908 = vor.u32 %v1906, %v1907
      %v1909 = vshll.u32 920167782, %v1894
      %v1910 = vshrl.u32 1326507024, %v1895
      %v1911 = vor.u32 %v1909, %v1910
      %vm1912 = vcmp.lt.s32.totalorder %v1893, 1
      %vm1913 = vcmp.lt.s32.totalorder %v1893, 2
      %vm1914 = vcmp.lt.s32.totalorder %v1893, 3
      %vm1915 = vcmp.lt.s32.totalorder %v1893, 4
      %v1916 = vsel %vm1912, %v1896, %v1899
      %v1917 = vsel %vm1915, %v1905, 2102212464
      %v1918 = vsel %vm1914, %v1902, %v1917
      %v1919 = vsel %vm1913, %v1916, %v1918
      %v1920 = vsel %vm1912, %v1899, %v1902
      %v1921 = vsel %vm1915, %v1908, 920167782
      %v1922 = vsel %vm1914, %v1905, %v1921
      %v1923 = vsel %vm1913, %v1920, %v1922
      %v1924 = vsel %vm1912, %v1902, %v1905
      %v1925 = vsel %vm1915, %v1911, 1326507024
      %v1926 = vsel %vm1914, %v1908, %v1925
      %v1927 = vsel %vm1913, %v1924, %v1926
      %v1928 = vshll.u32 %v1888, 8
      %v1929 = vmul.u32.u64.compose %v1928, %v1927
      %v1930 = vextract.low.u32 %v1929
      %v1931 = vextract.high.u32 %v1929
      %v1932 = vmul.u32.u64.compose %v1928, %v1923
      %v1933 = vextract.low.u32 %v1932
      %v1934 = vextract.high.u32 %v1932
      %v1935 = vmul.u32 %v1928, %v1919
      %v1936 = vadd.s32 %v1931, %v1933
      %vm1937 = vc.u32 %v1931, %v1933
      %v1938 = vadd.s32 %v1934, 1
      %v1939 = vsel %vm1937, %v1938, %v1934
      %v1940 = vadd.s32 %v1935, %v1939
      %v1941 = vadd.s32 %v1940, 536870912
      %v1942 = vshrl.u32 %v1941, 30
      %v1943 = vshll.u32 %v1942, 30
      %v1944 = vsub.s32 %v1940, %v1943
      %vm1945 = vcmp.lt.s32.totalorder %v1944, 0
      %v1946 = vsub.s32 0, %v1944
      %v1947 = vsel %vm1945, %v1946, %v1944
      %v1948 = vclz %v1947
      %v1949 = vsub.s32 %v1948, 2
      %vm1950 = vcmp.gt.s32.totalorder 0, %v1949
      %v1951 = vsel %vm1950, 0, %v1949
      %v1952 = vsub.s32 32, %v1951
      %v1953 = vshll.u32 %v1944, %v1951
      %v1954 = vshrl.u32 %v1936, %v1952
      %v1955 = vor.u32 %v1953, %v1954
      %v1956 = vsub.s32 4294967266, %v1951
      %v1957 = vadd.s32 %v1956, 127
      %v1958 = vshll.u32 %v1957, 23
      %v1959 = vor.u32 4788187, %v1958
      %v1960 = vand.u32 2147483647, %v1959
      %v1962 = vcvt.s32.f32 %v1955
      %v1963 = vmul.f32 %v1962, %v1960
      %v1964 = vxor.u32 %v1963, 2147483648
      %v1965 = vsel %vm1882, %v1964, %v1963
      %v1966 = vsub.s32 4, %v1942
      %v1967 = vsel %vm1882, %v1966, %v1942
      %v1968 = vsel %vm1881, %v521, %v1965
      %v1969 = vsel %vm1881, 0, %v1967
      %v1970 = vcosq.f32.pop %v1968
      %v1971 = vsinq.f32.pop %v1968
      %vm1972 = vweird.f32 %v521
      %v1973 = vadd.s32 %v1969, 3
      %v1974 = vand.u32 %v1973, 3
      %vm1975 = vcmp.lt.s32.totalorder %v1974, 2
      %vm1976 = vcmp.eq.s32.totalorder %v1974, 0
      %v1977 = vxor.u32 %v1971, 2147483648
      %v1978 = vsel %vm1976, %v1970, %v1977
      %vm1979 = vcmp.eq.s32.totalorder %v1974, 2
      %v1980 = vxor.u32 %v1970, 2147483648
      %v1981 = vsel %vm1979, %v1980, %v1971
      %v1982 = vsel %vm1975, %v1978, %v1981
      %v1983 = vsel %vm1972, nan, %v1982
      %v1984 = vand.u32 2147483647, %v522
      %vm1985 = vcmp.le.f32.partialorder %v1984, 0.7853982
      %vm1986 = vcmp.lt.s32.totalorder %v522, 0
      %v1987 = vand.u32 %v522, 2139095040
      %v1988 = vshrl.u32 %v1987, 23
      %v1989 = vsub.s32 %v1988, 127
      %v1990 = vand.u32 2147483647, %v522
      %v1991 = vand.u32 %v1990, 8388607
      %v1992 = vor.u32 %v1991, 8388608
      %v1993 = vsub.s32 0, %v1992
      %v1994 = vadd.s32 %v1989, 1
      %vm1995 = vcmp.gt.s32.totalorder %v1994, 0
      %v1996 = vsel %vm1995, %v1994, 0
      %v1997 = vshrl.u32 %v1996, 5
      %v1998 = vand.u32 %v1996, 31
      %v1999 = vsub.s32 32, %v1998
      %v2000 = vshrl.u32 683565275, %v1999
      %v2001 = vshll.u32 683565275, %v1998
      %v2002 = vshrl.u32 2475754826, %v1999
      %v2003 = vor.u32 %v2001, %v2002
      %v2004 = vshll.u32 2475754826, %v1998
      %v2005 = vshrl.u32 2131351028, %v1999
      %v2006 = vor.u32 %v2004, %v2005
      %v2007 = vshll.u32 2131351028, %v1998
      %v2008 = vshrl.u32 2102212464, %v1999
      %v2009 = vor.u32 %v2007, %v2008
      %v2010 = vshll.u32 2102212464, %v1998
      %v2011 = vshrl.u32 920167782, %v1999
      %v2012 = vor.u32 %v2010, %v2011
      %v2013 = vshll.u32 920167782, %v1998
      %v2014 = vshrl.u32 1326507024, %v1999
      %v2015 = vor.u32 %v2013, %v2014
      %vm2016 = vcmp.lt.s32.totalorder %v1997, 1
      %vm2017 = vcmp.lt.s32.totalorder %v1997, 2
      %vm2018 = vcmp.lt.s32.totalorder %v1997, 3
      %vm2019 = vcmp.lt.s32.totalorder %v1997, 4
      %v2020 = vsel %vm2016, %v2000, %v2003
      %v2021 = vsel %vm2019, %v2009, 2102212464
      %v2022 = vsel %vm2018, %v2006, %v2021
      %v2023 = vsel %vm2017, %v2020, %v2022
      %v2024 = vsel %vm2016, %v2003, %v2006
      %v2025 = vsel %vm2019, %v2012, 920167782
      %v2026 = vsel %vm2018, %v2009, %v2025
      %v2027 = vsel %vm2017, %v2024, %v2026
      %v2028 = vsel %vm2016, %v2006, %v2009
      %v2029 = vsel %vm2019, %v2015, 1326507024
      %v2030 = vsel %vm2018, %v2012, %v2029
      %v2031 = vsel %vm2017, %v2028, %v2030
      %v2032 = vshll.u32 %v1992, 8
      %v2033 = vmul.u32.u64.compose %v2032, %v2031
      %v2034 = vextract.low.u32 %v2033
      %v2035 = vextract.high.u32 %v2033
      %v2036 = vmul.u32.u64.compose %v2032, %v2027
      %v2037 = vextract.low.u32 %v2036
      %v2038 = vextract.high.u32 %v2036
      %v2039 = vmul.u32 %v2032, %v2023
      %v2040 = vadd.s32 %v2035, %v2037
      %vm2041 = vc.u32 %v2035, %v2037
      %v2042 = vadd.s32 %v2038, 1
      %v2043 = vsel %vm2041, %v2042, %v2038
      %v2044 = vadd.s32 %v2039, %v2043
      %v2045 = vadd.s32 %v2044, 536870912
      %v2046 = vshrl.u32 %v2045, 30
      %v2047 = vshll.u32 %v2046, 30
      %v2048 = vsub.s32 %v2044, %v2047
      %vm2049 = vcmp.lt.s32.totalorder %v2048, 0
      %v2050 = vsub.s32 0, %v2048
      %v2051 = vsel %vm2049, %v2050, %v2048
      %v2052 = vclz %v2051
      %v2053 = vsub.s32 %v2052, 2
      %vm2054 = vcmp.gt.s32.totalorder 0, %v2053
      %v2055 = vsel %vm2054, 0, %v2053
      %v2056 = vsub.s32 32, %v2055
      %v2057 = vshll.u32 %v2048, %v2055
      %v2058 = vshrl.u32 %v2040, %v2056
      %v2059 = vor.u32 %v2057, %v2058
      %v2060 = vsub.s32 4294967266, %v2055
      %v2061 = vadd.s32 %v2060, 127
      %v2062 = vshll.u32 %v2061, 23
      %v2063 = vor.u32 4788187, %v2062
      %v2064 = vand.u32 2147483647, %v2063
      %v2066 = vcvt.s32.f32 %v2059
      %v2067 = vmul.f32 %v2066, %v2064
      %v2068 = vxor.u32 %v2067, 2147483648
      %v2069 = vsel %vm1986, %v2068, %v2067
      %v2070 = vsub.s32 4, %v2046
      %v2071 = vsel %vm1986, %v2070, %v2046
      %v2072 = vsel %vm1985, %v522, %v2069
      %v2073 = vsel %vm1985, 0, %v2071
      %v2074 = vcosq.f32.pop %v2072
      %v2075 = vsinq.f32.pop %v2072
      %vm2076 = vweird.f32 %v522
      %v2077 = vadd.s32 %v2073, 3
      %v2078 = vand.u32 %v2077, 3
      %vm2079 = vcmp.lt.s32.totalorder %v2078, 2
      %vm2080 = vcmp.eq.s32.totalorder %v2078, 0
      %v2081 = vxor.u32 %v2075, 2147483648
      %v2082 = vsel %vm2080, %v2074, %v2081
      %vm2083 = vcmp.eq.s32.totalorder %v2078, 2
      %v2084 = vxor.u32 %v2074, 2147483648
      %v2085 = vsel %vm2083, %v2084, %v2075
      %v2086 = vsel %vm2079, %v2082, %v2085
      %v2087 = vsel %vm2076, nan, %v2086
      %v2088 = vand.u32 2147483647, %v523
      %vm2089 = vcmp.le.f32.partialorder %v2088, 0.7853982
      %vm2090 = vcmp.lt.s32.totalorder %v523, 0
      %v2091 = vand.u32 %v523, 2139095040
      %v2092 = vshrl.u32 %v2091, 23
      %v2093 = vsub.s32 %v2092, 127
      %v2094 = vand.u32 2147483647, %v523
      %v2095 = vand.u32 %v2094, 8388607
      %v2096 = vor.u32 %v2095, 8388608
      %v2097 = vsub.s32 0, %v2096
      %v2098 = vadd.s32 %v2093, 1
      %vm2099 = vcmp.gt.s32.totalorder %v2098, 0
      %v2100 = vsel %vm2099, %v2098, 0
      %v2101 = vshrl.u32 %v2100, 5
      %v2102 = vand.u32 %v2100, 31
      %v2103 = vsub.s32 32, %v2102
      %v2104 = vshrl.u32 683565275, %v2103
      %v2105 = vshll.u32 683565275, %v2102
      %v2106 = vshrl.u32 2475754826, %v2103
      %v2107 = vor.u32 %v2105, %v2106
      %v2108 = vshll.u32 2475754826, %v2102
      %v2109 = vshrl.u32 2131351028, %v2103
      %v2110 = vor.u32 %v2108, %v2109
      %v2111 = vshll.u32 2131351028, %v2102
      %v2112 = vshrl.u32 2102212464, %v2103
      %v2113 = vor.u32 %v2111, %v2112
      %v2114 = vshll.u32 2102212464, %v2102
      %v2115 = vshrl.u32 920167782, %v2103
      %v2116 = vor.u32 %v2114, %v2115
      %v2117 = vshll.u32 920167782, %v2102
      %v2118 = vshrl.u32 1326507024, %v2103
      %v2119 = vor.u32 %v2117, %v2118
      %vm2120 = vcmp.lt.s32.totalorder %v2101, 1
      %vm2121 = vcmp.lt.s32.totalorder %v2101, 2
      %vm2122 = vcmp.lt.s32.totalorder %v2101, 3
      %vm2123 = vcmp.lt.s32.totalorder %v2101, 4
      %v2124 = vsel %vm2120, %v2104, %v2107
      %v2125 = vsel %vm2123, %v2113, 2102212464
      %v2126 = vsel %vm2122, %v2110, %v2125
      %v2127 = vsel %vm2121, %v2124, %v2126
      %v2128 = vsel %vm2120, %v2107, %v2110
      %v2129 = vsel %vm2123, %v2116, 920167782
      %v2130 = vsel %vm2122, %v2113, %v2129
      %v2131 = vsel %vm2121, %v2128, %v2130
      %v2132 = vsel %vm2120, %v2110, %v2113
      %v2133 = vsel %vm2123, %v2119, 1326507024
      %v2134 = vsel %vm2122, %v2116, %v2133
      %v2135 = vsel %vm2121, %v2132, %v2134
      %v2136 = vshll.u32 %v2096, 8
      %v2137 = vmul.u32.u64.compose %v2136, %v2135
      %v2138 = vextract.low.u32 %v2137
      %v2139 = vextract.high.u32 %v2137
      %v2140 = vmul.u32.u64.compose %v2136, %v2131
      %v2141 = vextract.low.u32 %v2140
      %v2142 = vextract.high.u32 %v2140
      %v2143 = vmul.u32 %v2136, %v2127
      %v2144 = vadd.s32 %v2139, %v2141
      %vm2145 = vc.u32 %v2139, %v2141
      %v2146 = vadd.s32 %v2142, 1
      %v2147 = vsel %vm2145, %v2146, %v2142
      %v2148 = vadd.s32 %v2143, %v2147
      %v2149 = vadd.s32 %v2148, 536870912
      %v2150 = vshrl.u32 %v2149, 30
      %v2151 = vshll.u32 %v2150, 30
      %v2152 = vsub.s32 %v2148, %v2151
      %vm2153 = vcmp.lt.s32.totalorder %v2152, 0
      %v2154 = vsub.s32 0, %v2152
      %v2155 = vsel %vm2153, %v2154, %v2152
      %v2156 = vclz %v2155
      %v2157 = vsub.s32 %v2156, 2
      %vm2158 = vcmp.gt.s32.totalorder 0, %v2157
      %v2159 = vsel %vm2158, 0, %v2157
      %v2160 = vsub.s32 32, %v2159
      %v2161 = vshll.u32 %v2152, %v2159
      %v2162 = vshrl.u32 %v2144, %v2160
      %v2163 = vor.u32 %v2161, %v2162
      %v2164 = vsub.s32 4294967266, %v2159
      %v2165 = vadd.s32 %v2164, 127
      %v2166 = vshll.u32 %v2165, 23
      %v2167 = vor.u32 4788187, %v2166
      %v2168 = vand.u32 2147483647, %v2167
      %v2170 = vcvt.s32.f32 %v2163
      %v2171 = vmul.f32 %v2170, %v2168
      %v2172 = vxor.u32 %v2171, 2147483648
      %v2173 = vsel %vm2090, %v2172, %v2171
      %v2174 = vsub.s32 4, %v2150
      %v2175 = vsel %vm2090, %v2174, %v2150
      %v2176 = vsel %vm2089, %v523, %v2173
      %v2177 = vsel %vm2089, 0, %v2175
      %v2178 = vcosq.f32.pop %v2176
      %v2179 = vsinq.f32.pop %v2176
      %vm2180 = vweird.f32 %v523
      %v2181 = vadd.s32 %v2177, 3
      %v2182 = vand.u32 %v2181, 3
      %vm2183 = vcmp.lt.s32.totalorder %v2182, 2
      %vm2184 = vcmp.eq.s32.totalorder %v2182, 0
      %v2185 = vxor.u32 %v2179, 2147483648
      %v2186 = vsel %vm2184, %v2178, %v2185
      %vm2187 = vcmp.eq.s32.totalorder %v2182, 2
      %v2188 = vxor.u32 %v2178, 2147483648
      %v2189 = vsel %vm2187, %v2188, %v2179
      %v2190 = vsel %vm2183, %v2186, %v2189
      %v2191 = vsel %vm2180, nan, %v2190
      %v2192 = vmul.f32 %v494, %v1879
      %v2193 = vmul.f32 %v496, %v1983
      %v2194 = vmul.f32 %v500, %v2087
      %v2195 = vmul.f32 %v502, %v2191
      %vm2196 = vcmask 1048064
      %2197 = vrot.lane.b32.xlu0 %v936, 64
      %v2198 = vpop.permute.xlu0 %2197
      %v2199 = vsel %vm2196, %v2198, %v937
      %2200 = vrot.lane.b32.xlu0 %v938, 64
      %v2201 = vpop.permute.xlu0 %2200
      %v2202 = vsel %vm2196, %v2201, %v939
      %2203 = vrot.lane.b32.xlu0 %v1356, 64
      %v2204 = vpop.permute.xlu0 %2203
      %v2205 = vsel %vm2196, %v2204, %v1357
      %2206 = vrot.lane.b32.xlu0 %v1358, 64
      %v2207 = vpop.permute.xlu0 %2206
      %v2208 = vsel %vm2196, %v2207, %v1359
      %2209 = vrot.lane.b32.xlu0 %v2199, 64
      %v2210 = vpop.permute.xlu0 %2209
      %2211 = vrot.lane.b32.xlu0 %v2202, 64
      %v2212 = vpop.permute.xlu0 %2211
      %2213 = vrot.lane.b32.xlu0 %v2205, 64
      %v2214 = vpop.permute.xlu0 %2213
      %2215 = vrot.lane.b32.xlu0 %v2208, 64
      %v2216 = vpop.permute.xlu0 %2215
      %v2217 = vsel %vm2196, %v2210, %v2198
      %v2218 = vsel %vm2196, %v2212, %v2201
      %v2219 = vsel %vm2196, %v2214, %v2204
      %v2220 = vsel %vm2196, %v2216, %v2207
      %v2221 = vld [vmem:[%s5] sm:$0x3]
      %v2223 = vlaneseq
      %v2224 = vshrl.u32 %v2223, 7
      %v2225 = vsub.s32 0, %v2224
      %v2226 = vrot.slane %v2221, %v2225
      %v2227 = vlaneseq
      %v2228 = vshrl.u32 %v2227, 7
      %v2229 = vsub.s32 1, %v2228
      %v2230 = vrot.slane %v2221, %v2229
      %2231 = vrot.lane.b32.xlu0 %v2226, 61
      %v2232 = vpop.permute.xlu0 %2231
      %2233 = vrot.lane.b32.xlu0 %v2230, 61
      %v2234 = vpop.permute.xlu0 %2233
      %vm2235 = vcmask 498688
      %v2236 = vsel %vm2235, %v2232, %v2234
      %v2239 = vmul.f32 %v2199, %v2232
      %v2240 = vmul.f32 %v2217, %v2236
      %v2241 = vmul.f32 %v2202, %v2232
      %v2242 = vmul.f32 %v2218, %v2236
      %v2243 = vmul.f32 %v2205, %v2232
      %v2244 = vmul.f32 %v2219, %v2236
      %v2245 = vmul.f32 %v2208, %v2232
      %v2246 = vmul.f32 %v2220, %v2236
      %2255 = vrot.lane.b32.xlu0 %v2239, 67
      %v2256 = vpop.permute.xlu0 %2255
      %2257 = vrot.lane.b32.xlu0 %v2240, 67
      %v2258 = vpop.permute.xlu0 %2257
      %2259 = vrot.lane.b32.xlu0 %v2241, 67
      %v2260 = vpop.permute.xlu0 %2259
      %2261 = vrot.lane.b32.xlu0 %v2242, 67
      %v2262 = vpop.permute.xlu0 %2261
      %2263 = vrot.lane.b32.xlu0 %v2243, 67
      %v2264 = vpop.permute.xlu0 %2263
      %2265 = vrot.lane.b32.xlu0 %v2244, 67
      %v2266 = vpop.permute.xlu0 %2265
      %2267 = vrot.lane.b32.xlu0 %v2245, 67
      %v2268 = vpop.permute.xlu0 %2267
      %2269 = vrot.lane.b32.xlu0 %v2246, 67
      %v2270 = vpop.permute.xlu0 %2269
      %vm2271 = vcmask 547840
      %v2272 = vsel %vm2271, %v2256, %v2258
      %v2273 = vsel %vm2271, %v2260, %v2262
      %v2274 = vsel %vm2271, %v2264, %v2266
      %v2275 = vsel %vm2271, %v2268, %v2270
      %2284 = vst [vmem:[#allocation2] sm:$0xff] %v2272
      %vm2285 = vcmask 523264
      %2286 = vst.msk [vmem:[#allocation2 + $0x8] sm:$0xff] %vm2285, %v2258
      %2287 = vst [vmem:[#allocation2 + $0x10] sm:$0xff] %v2273
      %2288 = vst.msk [vmem:[#allocation2 + $0x18] sm:$0xff] %vm2285, %v2262
      %2289 = vst [vmem:[#allocation2 + $0x20] sm:$0xff] %v2274
      %2290 = vst.msk [vmem:[#allocation2 + $0x28] sm:$0xff] %vm2285, %v2266
      %2291 = vst [vmem:[#allocation2 + $0x30] sm:$0xff] %v2275
      %2292 = vst.msk [vmem:[#allocation2 + $0x38] sm:$0xff] %vm2285, %v2270
      %s2293 = scalar_lea.vmem %s5, 2
      %v2294 = vld [vmem:[%s2293] sm:$0x3]
      %v2296 = vlaneseq
      %v2297 = vshrl.u32 %v2296, 7
      %v2298 = vsub.s32 0, %v2297
      %v2299 = vrot.slane %v2294, %v2298
      %v2300 = vlaneseq
      %v2301 = vshrl.u32 %v2300, 7
      %v2302 = vsub.s32 1, %v2301
      %v2303 = vrot.slane %v2294, %v2302
      %2304 = vrot.lane.b32.xlu0 %v2299, 62
      %v2305 = vpop.permute.xlu0 %2304
      %2306 = vrot.lane.b32.xlu0 %v2303, 62
      %v2307 = vpop.permute.xlu0 %2306
      %vm2308 = vcmask 506880
      %v2309 = vsel %vm2308, %v2305, %v2307
      %v2312 = vmul.f32 %v2199, %v2305
      %v2313 = vmul.f32 %v2217, %v2309
      %v2314 = vmul.f32 %v2202, %v2305
      %v2315 = vmul.f32 %v2218, %v2309
      %v2316 = vmul.f32 %v2205, %v2305
      %v2317 = vmul.f32 %v2219, %v2309
      %v2318 = vmul.f32 %v2208, %v2305
      %v2319 = vmul.f32 %v2220, %v2309
      %2328 = vrot.lane.b32.xlu0 %v2312, 66
      %v2329 = vpop.permute.xlu0 %2328
      %2330 = vrot.lane.b32.xlu0 %v2313, 66
      %v2331 = vpop.permute.xlu0 %2330
      %2332 = vrot.lane.b32.xlu0 %v2314, 66
      %v2333 = vpop.permute.xlu0 %2332
      %2334 = vrot.lane.b32.xlu0 %v2315, 66
      %v2335 = vpop.permute.xlu0 %2334
      %2336 = vrot.lane.b32.xlu0 %v2316, 66
      %v2337 = vpop.permute.xlu0 %2336
      %2338 = vrot.lane.b32.xlu0 %v2317, 66
      %v2339 = vpop.permute.xlu0 %2338
      %2340 = vrot.lane.b32.xlu0 %v2318, 66
      %v2341 = vpop.permute.xlu0 %2340
      %2342 = vrot.lane.b32.xlu0 %v2319, 66
      %v2343 = vpop.permute.xlu0 %2342
      %vm2344 = vcmask 539648
      %v2345 = vsel %vm2344, %v2329, %v2331
      %v2346 = vsel %vm2344, %v2333, %v2335
      %v2347 = vsel %vm2344, %v2337, %v2339
      %v2348 = vsel %vm2344, %v2341, %v2343
      %2357 = vst [vmem:[#allocation2 + $0x40] sm:$0xff] %v2345
      %2358 = vst.msk [vmem:[#allocation2 + $0x48] sm:$0xff] %vm2285, %v2331
      %2359 = vst [vmem:[#allocation2 + $0x50] sm:$0xff] %v2346
      %2360 = vst.msk [vmem:[#allocation2 + $0x58] sm:$0xff] %vm2285, %v2335
      %2361 = vst [vmem:[#allocation2 + $0x60] sm:$0xff] %v2347
      %2362 = vst.msk [vmem:[#allocation2 + $0x68] sm:$0xff] %vm2285, %v2339
      %2363 = vst [vmem:[#allocation2 + $0x70] sm:$0xff] %v2348
      %2364 = vst.msk [vmem:[#allocation2 + $0x78] sm:$0xff] %vm2285, %v2343
      %s2365 = scalar_lea.vmem %s5, 4
      %v2366 = vld [vmem:[%s2365] sm:$0x3]
      %v2368 = vlaneseq
      %v2369 = vshrl.u32 %v2368, 7
      %v2370 = vsub.s32 0, %v2369
      %v2371 = vrot.slane %v2366, %v2370
      %v2372 = vlaneseq
      %v2373 = vshrl.u32 %v2372, 7
      %v2374 = vsub.s32 1, %v2373
      %v2375 = vrot.slane %v2366, %v2374
      %2376 = vrot.lane.b32.xlu0 %v2371, 63
      %v2377 = vpop.permute.xlu0 %2376
      %2378 = vrot.lane.b32.xlu0 %v2375, 63
      %v2379 = vpop.permute.xlu0 %2378
      %vm2380 = vcmask 515072
      %v2381 = vsel %vm2380, %v2377, %v2379
      %v2384 = vmul.f32 %v2199, %v2377
      %v2385 = vmul.f32 %v2217, %v2381
      %v2386 = vmul.f32 %v2202, %v2377
      %v2387 = vmul.f32 %v2218, %v2381
      %v2388 = vmul.f32 %v2205, %v2377
      %v2389 = vmul.f32 %v2219, %v2381
      %v2390 = vmul.f32 %v2208, %v2377
      %v2391 = vmul.f32 %v2220, %v2381
      %2400 = vrot.lane.b32.xlu0 %v2384, 65
      %v2401 = vpop.permute.xlu0 %2400
      %2402 = vrot.lane.b32.xlu0 %v2385, 65
      %v2403 = vpop.permute.xlu0 %2402
      %2404 = vrot.lane.b32.xlu0 %v2386, 65
      %v2405 = vpop.permute.xlu0 %2404
      %2406 = vrot.lane.b32.xlu0 %v2387, 65
      %v2407 = vpop.permute.xlu0 %2406
      %2408 = vrot.lane.b32.xlu0 %v2388, 65
      %v2409 = vpop.permute.xlu0 %2408
      %2410 = vrot.lane.b32.xlu0 %v2389, 65
      %v2411 = vpop.permute.xlu0 %2410
      %2412 = vrot.lane.b32.xlu0 %v2390, 65
      %v2413 = vpop.permute.xlu0 %2412
      %2414 = vrot.lane.b32.xlu0 %v2391, 65
      %v2415 = vpop.permute.xlu0 %2414
      %vm2416 = vcmask 531456
      %v2417 = vsel %vm2416, %v2401, %v2403
      %v2418 = vsel %vm2416, %v2405, %v2407
      %v2419 = vsel %vm2416, %v2409, %v2411
      %v2420 = vsel %vm2416, %v2413, %v2415
      %2429 = vst [vmem:[#allocation2 + $0x80] sm:$0xff] %v2417
      %2430 = vst.msk [vmem:[#allocation2 + $0x88] sm:$0xff] %vm2285, %v2403
      %2431 = vst [vmem:[#allocation2 + $0x90] sm:$0xff] %v2418
      %2432 = vst.msk [vmem:[#allocation2 + $0x98] sm:$0xff] %vm2285, %v2407
      %2433 = vst [vmem:[#allocation2 + $0xa0] sm:$0xff] %v2419
      %2434 = vst.msk [vmem:[#allocation2 + $0xa8] sm:$0xff] %vm2285, %v2411
      %2435 = vst [vmem:[#allocation2 + $0xb0] sm:$0xff] %v2420
      %2436 = vst.msk [vmem:[#allocation2 + $0xb8] sm:$0xff] %vm2285, %v2415
      %s2437 = scalar_lea.vmem %s5, 6
      %v2438 = vld [vmem:[%s2437] sm:$0x3]
      %v2440 = vlaneseq
      %v2441 = vshrl.u32 %v2440, 7
      %v2442 = vsub.s32 0, %v2441
      %v2443 = vrot.slane %v2438, %v2442
      %v2444 = vlaneseq
      %v2445 = vshrl.u32 %v2444, 7
      %v2446 = vsub.s32 1, %v2445
      %v2447 = vrot.slane %v2438, %v2446
      %v2450 = vmul.f32 %v936, %v2443
      %v2451 = vmul.f32 %v937, %v2447
      %v2452 = vmul.f32 %v938, %v2443
      %v2453 = vmul.f32 %v939, %v2447
      %v2454 = vmul.f32 %v1356, %v2443
      %v2455 = vmul.f32 %v1357, %v2447
      %v2456 = vmul.f32 %v1358, %v2443
      %v2457 = vmul.f32 %v1359, %v2447
      %2458 = vst [vmem:[#allocation2 + $0xc0] sm:$0xff] %v2450
      %2459 = vst.msk [vmem:[#allocation2 + $0xc8] sm:$0xff] %vm2285, %v2451
      %2460 = vst [vmem:[#allocation2 + $0xd0] sm:$0xff] %v2452
      %2461 = vst.msk [vmem:[#allocation2 + $0xd8] sm:$0xff] %vm2285, %v2453
      %2462 = vst [vmem:[#allocation2 + $0xe0] sm:$0xff] %v2454
      %2463 = vst.msk [vmem:[#allocation2 + $0xe8] sm:$0xff] %vm2285, %v2455
      %2464 = vst [vmem:[#allocation2 + $0xf0] sm:$0xff] %v2456
      %2465 = vst.msk [vmem:[#allocation2 + $0xf8] sm:$0xff] %vm2285, %v2457
      %s2466 = scalar_lea.vmem %s5, 8
      %v2467 = vld [vmem:[%s2466] sm:$0x3]
      %v2469 = vlaneseq
      %v2470 = vshrl.u32 %v2469, 7
      %v2471 = vsub.s32 0, %v2470
      %v2472 = vrot.slane %v2467, %v2471
      %v2473 = vlaneseq
      %v2474 = vshrl.u32 %v2473, 7
      %v2475 = vsub.s32 1, %v2474
      %v2476 = vrot.slane %v2467, %v2475
      %2477 = vrot.lane.b32.xlu0 %v2472, 1
      %v2478 = vpop.permute.xlu0 %2477
      %2479 = vrot.lane.b32.xlu0 %v2476, 1
      %v2480 = vpop.permute.xlu0 %2479
      %vm2481 = vcmask 7168
      %v2482 = vsel %vm2481, %v2478, %v2480
      %v2485 = vmul.f32 %v936, %v2478
      %v2486 = vmul.f32 %v2199, %v2482
      %v2487 = vmul.f32 %v938, %v2478
      %v2488 = vmul.f32 %v2202, %v2482
      %v2489 = vmul.f32 %v1356, %v2478
      %v2490 = vmul.f32 %v2205, %v2482
      %v2491 = vmul.f32 %v1358, %v2478
      %v2492 = vmul.f32 %v2208, %v2482
      %2501 = vrot.lane.b32.xlu0 %v2485, 127
      %v2502 = vpop.permute.xlu0 %2501
      %2503 = vrot.lane.b32.xlu0 %v2486, 127
      %v2504 = vpop.permute.xlu0 %2503
      %2505 = vrot.lane.b32.xlu0 %v2487, 127
      %v2506 = vpop.permute.xlu0 %2505
      %2507 = vrot.lane.b32.xlu0 %v2488, 127
      %v2508 = vpop.permute.xlu0 %2507
      %2509 = vrot.lane.b32.xlu0 %v2489, 127
      %v2510 = vpop.permute.xlu0 %2509
      %2511 = vrot.lane.b32.xlu0 %v2490, 127
      %v2512 = vpop.permute.xlu0 %2511
      %2513 = vrot.lane.b32.xlu0 %v2491, 127
      %v2514 = vpop.permute.xlu0 %2513
      %2515 = vrot.lane.b32.xlu0 %v2492, 127
      %v2516 = vpop.permute.xlu0 %2515
      %vm2517 = vcmask 1039360
      %v2518 = vsel %vm2517, %v2502, %v2504
      %v2519 = vsel %vm2517, %v2506, %v2508
      %v2520 = vsel %vm2517, %v2510, %v2512
      %v2521 = vsel %vm2517, %v2514, %v2516
      %2530 = vst [vmem:[#allocation2 + $0x100] sm:$0xff] %v2518
      %2531 = vst.msk [vmem:[#allocation2 + $0x108] sm:$0xff] %vm2285, %v2504
      %2532 = vst [vmem:[#allocation2 + $0x110] sm:$0xff] %v2519
      %2533 = vst.msk [vmem:[#allocation2 + $0x118] sm:$0xff] %vm2285, %v2508
      %2534 = vst [vmem:[#allocation2 + $0x120] sm:$0xff] %v2520
      %2535 = vst.msk [vmem:[#allocation2 + $0x128] sm:$0xff] %vm2285, %v2512
      %2536 = vst [vmem:[#allocation2 + $0x130] sm:$0xff] %v2521
      %2537 = vst.msk [vmem:[#allocation2 + $0x138] sm:$0xff] %vm2285, %v2516
      %s2538 = scalar_lea.vmem %s5, 10
      %v2539 = vld [vmem:[%s2538] sm:$0x3]
      %v2541 = vlaneseq
      %v2542 = vshrl.u32 %v2541, 7
      %v2543 = vsub.s32 0, %v2542
      %v2544 = vrot.slane %v2539, %v2543
      %v2545 = vlaneseq
      %v2546 = vshrl.u32 %v2545, 7
      %v2547 = vsub.s32 1, %v2546
      %v2548 = vrot.slane %v2539, %v2547
      %2549 = vrot.lane.b32.xlu0 %v2544, 2
      %v2550 = vpop.permute.xlu0 %2549
      %2551 = vrot.lane.b32.xlu0 %v2548, 2
      %v2552 = vpop.permute.xlu0 %2551
      %vm2553 = vcmask 15360
      %v2554 = vsel %vm2553, %v2550, %v2552
      %v2557 = vmul.f32 %v936, %v2550
      %v2558 = vmul.f32 %v2199, %v2554
      %v2559 = vmul.f32 %v938, %v2550
      %v2560 = vmul.f32 %v2202, %v2554
      %v2561 = vmul.f32 %v1356, %v2550
      %v2562 = vmul.f32 %v2205, %v2554
      %v2563 = vmul.f32 %v1358, %v2550
      %v2564 = vmul.f32 %v2208, %v2554
      %2573 = vrot.lane.b32.xlu0 %v2557, 126
      %v2574 = vpop.permute.xlu0 %2573
      %2575 = vrot.lane.b32.xlu0 %v2558, 126
      %v2576 = vpop.permute.xlu0 %2575
      %2577 = vrot.lane.b32.xlu0 %v2559, 126
      %v2578 = vpop.permute.xlu0 %2577
      %2579 = vrot.lane.b32.xlu0 %v2560, 126
      %v2580 = vpop.permute.xlu0 %2579
      %2581 = vrot.lane.b32.xlu0 %v2561, 126
      %v2582 = vpop.permute.xlu0 %2581
      %2583 = vrot.lane.b32.xlu0 %v2562, 126
      %v2584 = vpop.permute.xlu0 %2583
      %2585 = vrot.lane.b32.xlu0 %v2563, 126
      %v2586 = vpop.permute.xlu0 %2585
      %2587 = vrot.lane.b32.xlu0 %v2564, 126
      %v2588 = vpop.permute.xlu0 %2587
      %vm2589 = vcmask 1031168
      %v2590 = vsel %vm2589, %v2574, %v2576
      %v2591 = vsel %vm2589, %v2578, %v2580
      %v2592 = vsel %vm2589, %v2582, %v2584
      %v2593 = vsel %vm2589, %v2586, %v2588
      %2602 = vst [vmem:[#allocation2 + $0x140] sm:$0xff] %v2590
      %2603 = vst.msk [vmem:[#allocation2 + $0x148] sm:$0xff] %vm2285, %v2576
      %2604 = vst [vmem:[#allocation2 + $0x150] sm:$0xff] %v2591
      %2605 = vst.msk [vmem:[#allocation2 + $0x158] sm:$0xff] %vm2285, %v2580
      %2606 = vst [vmem:[#allocation2 + $0x160] sm:$0xff] %v2592
      %2607 = vst.msk [vmem:[#allocation2 + $0x168] sm:$0xff] %vm2285, %v2584
      %2608 = vst [vmem:[#allocation2 + $0x170] sm:$0xff] %v2593
      %2609 = vst.msk [vmem:[#allocation2 + $0x178] sm:$0xff] %vm2285, %v2588
      %s2610 = scalar_lea.vmem %s5, 12
      %v2611 = vld [vmem:[%s2610] sm:$0x3]
      %v2613 = vlaneseq
      %v2614 = vshrl.u32 %v2613, 7
      %v2615 = vsub.s32 0, %v2614
      %v2616 = vrot.slane %v2611, %v2615
      %v2617 = vlaneseq
      %v2618 = vshrl.u32 %v2617, 7
      %v2619 = vsub.s32 1, %v2618
      %v2620 = vrot.slane %v2611, %v2619
      %2621 = vrot.lane.b32.xlu0 %v2616, 3
      %v2622 = vpop.permute.xlu0 %2621
      %2623 = vrot.lane.b32.xlu0 %v2620, 3
      %v2624 = vpop.permute.xlu0 %2623
      %vm2625 = vcmask 23552
      %v2626 = vsel %vm2625, %v2622, %v2624
      %v2629 = vmul.f32 %v936, %v2622
      %v2630 = vmul.f32 %v2199, %v2626
      %v2631 = vmul.f32 %v938, %v2622
      %v2632 = vmul.f32 %v2202, %v2626
      %v2633 = vmul.f32 %v1356, %v2622
      %v2634 = vmul.f32 %v2205, %v2626
      %v2635 = vmul.f32 %v1358, %v2622
      %v2636 = vmul.f32 %v2208, %v2626
      %2645 = vrot.lane.b32.xlu0 %v2629, 125
      %v2646 = vpop.permute.xlu0 %2645
      %2647 = vrot.lane.b32.xlu0 %v2630, 125
      %v2648 = vpop.permute.xlu0 %2647
      %2649 = vrot.lane.b32.xlu0 %v2631, 125
      %v2650 = vpop.permute.xlu0 %2649
      %2651 = vrot.lane.b32.xlu0 %v2632, 125
      %v2652 = vpop.permute.xlu0 %2651
      %2653 = vrot.lane.b32.xlu0 %v2633, 125
      %v2654 = vpop.permute.xlu0 %2653
      %2655 = vrot.lane.b32.xlu0 %v2634, 125
      %v2656 = vpop.permute.xlu0 %2655
      %2657 = vrot.lane.b32.xlu0 %v2635, 125
      %v2658 = vpop.permute.xlu0 %2657
      %2659 = vrot.lane.b32.xlu0 %v2636, 125
      %v2660 = vpop.permute.xlu0 %2659
      %vm2661 = vcmask 1022976
      %v2662 = vsel %vm2661, %v2646, %v2648
      %v2663 = vsel %vm2661, %v2650, %v2652
      %v2664 = vsel %vm2661, %v2654, %v2656
      %v2665 = vsel %vm2661, %v2658, %v2660
      %2674 = vst [vmem:[#allocation2 + $0x180] sm:$0xff] %v2662
      %2675 = vst.msk [vmem:[#allocation2 + $0x188] sm:$0xff] %vm2285, %v2648
      %2676 = vst [vmem:[#allocation2 + $0x190] sm:$0xff] %v2663
      %2677 = vst.msk [vmem:[#allocation2 + $0x198] sm:$0xff] %vm2285, %v2652
      %2678 = vst [vmem:[#allocation2 + $0x1a0] sm:$0xff] %v2664
      %2679 = vst.msk [vmem:[#allocation2 + $0x1a8] sm:$0xff] %vm2285, %v2656
      %2680 = vst [vmem:[#allocation2 + $0x1b0] sm:$0xff] %v2665
      %2681 = vst.msk [vmem:[#allocation2 + $0x1b8] sm:$0xff] %vm2285, %v2660
      %v2682 = vld [vmem:[#allocation2] sm:$0xff]
      %v2683 = vld [vmem:[#allocation2 + $0x8] sm:$0xff]
      %v2684 = vld [vmem:[#allocation2 + $0x10] sm:$0xff]
      %v2685 = vld [vmem:[#allocation2 + $0x18] sm:$0xff]
      %v2686 = vld [vmem:[#allocation2 + $0x20] sm:$0xff]
      %v2687 = vld [vmem:[#allocation2 + $0x28] sm:$0xff]
      %v2688 = vld [vmem:[#allocation2 + $0x30] sm:$0xff]
      %v2689 = vld [vmem:[#allocation2 + $0x38] sm:$0xff]
      %v2690 = vld [vmem:[#allocation2 + $0x40] sm:$0xff]
      %v2691 = vld [vmem:[#allocation2 + $0x48] sm:$0xff]
      %v2692 = vld [vmem:[#allocation2 + $0x50] sm:$0xff]
      %v2693 = vld [vmem:[#allocation2 + $0x58] sm:$0xff]
      %v2694 = vld [vmem:[#allocation2 + $0x60] sm:$0xff]
      %v2695 = vld [vmem:[#allocation2 + $0x68] sm:$0xff]
      %v2696 = vld [vmem:[#allocation2 + $0x70] sm:$0xff]
      %v2697 = vld [vmem:[#allocation2 + $0x78] sm:$0xff]
      %v2698 = vld [vmem:[#allocation2 + $0x80] sm:$0xff]
      %v2699 = vld [vmem:[#allocation2 + $0x88] sm:$0xff]
      %v2700 = vld [vmem:[#allocation2 + $0x90] sm:$0xff]
      %v2701 = vld [vmem:[#allocation2 + $0x98] sm:$0xff]
      %v2702 = vld [vmem:[#allocation2 + $0xa0] sm:$0xff]
      %v2703 = vld [vmem:[#allocation2 + $0xa8] sm:$0xff]
      %v2704 = vld [vmem:[#allocation2 + $0xb0] sm:$0xff]
      %v2705 = vld [vmem:[#allocation2 + $0xb8] sm:$0xff]
      %v2706 = vld [vmem:[#allocation2 + $0xc0] sm:$0xff]
      %v2707 = vld [vmem:[#allocation2 + $0xc8] sm:$0xff]
      %v2708 = vld [vmem:[#allocation2 + $0xd0] sm:$0xff]
      %v2709 = vld [vmem:[#allocation2 + $0xd8] sm:$0xff]
      %v2710 = vld [vmem:[#allocation2 + $0xe0] sm:$0xff]
      %v2711 = vld [vmem:[#allocation2 + $0xe8] sm:$0xff]
      %v2712 = vld [vmem:[#allocation2 + $0xf0] sm:$0xff]
      %v2713 = vld [vmem:[#allocation2 + $0xf8] sm:$0xff]
      %v2714 = vld [vmem:[#allocation2 + $0x100] sm:$0xff]
      %v2715 = vld [vmem:[#allocation2 + $0x108] sm:$0xff]
      %v2716 = vld [vmem:[#allocation2 + $0x110] sm:$0xff]
      %v2717 = vld [vmem:[#allocation2 + $0x118] sm:$0xff]
      %v2718 = vld [vmem:[#allocation2 + $0x120] sm:$0xff]
      %v2719 = vld [vmem:[#allocation2 + $0x128] sm:$0xff]
      %v2720 = vld [vmem:[#allocation2 + $0x130] sm:$0xff]
      %v2721 = vld [vmem:[#allocation2 + $0x138] sm:$0xff]
      %v2722 = vld [vmem:[#allocation2 + $0x140] sm:$0xff]
      %v2723 = vld [vmem:[#allocation2 + $0x148] sm:$0xff]
      %v2724 = vld [vmem:[#allocation2 + $0x150] sm:$0xff]
      %v2725 = vld [vmem:[#allocation2 + $0x158] sm:$0xff]
      %v2726 = vld [vmem:[#allocation2 + $0x160] sm:$0xff]
      %v2727 = vld [vmem:[#allocation2 + $0x168] sm:$0xff]
      %v2728 = vld [vmem:[#allocation2 + $0x170] sm:$0xff]
      %v2729 = vld [vmem:[#allocation2 + $0x178] sm:$0xff]
      %v2730 = vld [vmem:[#allocation2 + $0x180] sm:$0xff]
      %v2731 = vld [vmem:[#allocation2 + $0x188] sm:$0xff]
      %v2732 = vld [vmem:[#allocation2 + $0x190] sm:$0xff]
      %v2733 = vld [vmem:[#allocation2 + $0x198] sm:$0xff]
      %v2734 = vld [vmem:[#allocation2 + $0x1a0] sm:$0xff]
      %v2735 = vld [vmem:[#allocation2 + $0x1a8] sm:$0xff]
      %v2736 = vld [vmem:[#allocation2 + $0x1b0] sm:$0xff]
      %v2737 = vld [vmem:[#allocation2 + $0x1b8] sm:$0xff]
      %vm2738 = vcmask 785408
      %v2740 = vsel %vm2738, %v274, 0
      %v2743 = vsel %vm2738, %v276, 0
      %2745 = vmatprep.subr.mxu0 %v2713
      %2746 = vmatpush1.msra.mxu0 %v2712
      %2747 = vmatprep.subr.mxu0 %v2711
      %2748 = vmatpush1.msra.mxu0 %v2710
      %2749 = vmatprep.subr.mxu0 %v2709
      %2750 = vmatpush1.msra.mxu0 %v2708
      %2751 = vmatprep.subr.mxu0 %v2707
      %2752 = vmatpush1.msra.mxu0 %v2706
      %2753 = vmatprep.subr.mxu0 %v2705
      %2754 = vmatpush1.msra.mxu0 %v2704
      %2755 = vmatprep.subr.mxu0 %v2703
      %2756 = vmatpush1.msra.mxu0 %v2702
      %2757 = vmatprep.subr.mxu0 %v2701
      %2758 = vmatpush1.msra.mxu0 %v2700
      %2759 = vmatprep.subr.mxu0 %v2699
      %2760 = vmatpush1.msra.mxu0 %v2698
      %2761 = vmatprep.subr.mxu0 %v2697
      %2762 = vmatpush1.msra.mxu0 %v2696
      %2763 = vmatprep.subr.mxu0 %v2695
      %2764 = vmatpush1.msra.mxu0 %v2694
      %2765 = vmatprep.subr.mxu0 %v2693
      %2766 = vmatpush1.msra.mxu0 %v2692
      %2767 = vmatprep.subr.mxu0 %v2691
      %2768 = vmatpush1.msra.mxu0 %v2690
      %2769 = vmatprep.subr.mxu0 %v2689
      %2770 = vmatpush1.msra.mxu0 %v2688
      %2771 = vmatprep.subr.mxu0 %v2687
      %2772 = vmatpush1.msra.mxu0 %v2686
      %2773 = vmatprep.subr.mxu0 %v2685
      %2774 = vmatpush1.msra.mxu0 %v2684
      %2775 = vmatprep.subr.mxu0 %v2683
      %2776 = vmatpush1.msra.mxu0 %v2682
      %2777 = vmatprep.subr.mxu0 0.0
      %2778 = vmatpush2.msra.mxu0 0.0
      %2779 = vmatprep.subr.mxu0 0.0
      %2780 = vmatpush2.msra.mxu0 0.0
      %2781 = vmatprep.subr.mxu0 0.0
      %2782 = vmatpush2.msra.mxu0 0.0
      %2783 = vmatprep.subr.mxu0 0.0
      %2784 = vmatpush2.msra.mxu0 0.0
      %2785 = vmatprep.subr.mxu0 %v2737
      %2786 = vmatpush2.msra.mxu0 %v2736
      %2787 = vmatprep.subr.mxu0 %v2735
      %2788 = vmatpush2.msra.mxu0 %v2734
      %2789 = vmatprep.subr.mxu0 %v2733
      %2790 = vmatpush2.msra.mxu0 %v2732
      %2791 = vmatprep.subr.mxu0 %v2731
      %2792 = vmatpush2.msra.mxu0 %v2730
      %2793 = vmatprep.subr.mxu0 %v2729
      %2794 = vmatpush2.msra.mxu0 %v2728
      %2795 = vmatprep.subr.mxu0 %v2727
      %2796 = vmatpush2.msra.mxu0 %v2726
      %2797 = vmatprep.subr.mxu0 %v2725
      %2798 = vmatpush2.msra.mxu0 %v2724
      %2799 = vmatprep.subr.mxu0 %v2723
      %2800 = vmatpush2.msra.mxu0 %v2722
      %2801 = vmatprep.subr.mxu0 %v2721
      %2802 = vmatpush2.msra.mxu0 %v2720
      %2803 = vmatprep.subr.mxu0 %v2719
      %2804 = vmatpush2.msra.mxu0 %v2718
      %2805 = vmatprep.subr.mxu0 %v2717
      %2806 = vmatpush2.msra.mxu0 %v2716
      %2807 = vmatprep.subr.mxu0 %v2715
      %2808 = vmatpush2.msra.mxu0 %v2714
      %2809 = vmatprep.mubr.f32.mxu0 %v2740
      %2810 = vmatmul.mubr.f32.gmra.mxu0 %v273
      %v2811 = vpop.f32.mrf.mxu0
      %v2812 = vadd.f32 0.0, %v2811
      %v2813 = vpop.f32.mrf.mxu0
      %v2814 = vadd.f32 0.0, %v2813
      %2815 = vmatprep.mubr.f32.mxu0 %v2743
      %2816 = vmatmul.mubr.f32.gmra.mxu0 %v275
      %v2817 = vpop.f32.mrf.mxu0
      %v2818 = vadd.f32 0.0, %v2817
      %v2819 = vpop.f32.mrf.mxu0
      %v2820 = vadd.f32 0.0, %v2819
      %2821 = vdwg.mxu0
      %2822 = vrot.lane.b32.xlu0 %v1772, 64
      %v2823 = vpop.permute.xlu0 %2822
      %v2824 = vsel %vm2196, %v2823, %v1773
      %2825 = vrot.lane.b32.xlu0 %v1774, 64
      %v2826 = vpop.permute.xlu0 %2825
      %v2827 = vsel %vm2196, %v2826, %v1775
      %2828 = vrot.lane.b32.xlu0 %v2192, 64
      %v2829 = vpop.permute.xlu0 %2828
      %v2830 = vsel %vm2196, %v2829, %v2193
      %2831 = vrot.lane.b32.xlu0 %v2194, 64
      %v2832 = vpop.permute.xlu0 %2831
      %v2833 = vsel %vm2196, %v2832, %v2195
      %2834 = vrot.lane.b32.xlu0 %v2824, 64
      %v2835 = vpop.permute.xlu0 %2834
      %2836 = vrot.lane.b32.xlu0 %v2827, 64
      %v2837 = vpop.permute.xlu0 %2836
      %2838 = vrot.lane.b32.xlu0 %v2830, 64
      %v2839 = vpop.permute.xlu0 %2838
      %2840 = vrot.lane.b32.xlu0 %v2833, 64
      %v2841 = vpop.permute.xlu0 %2840
      %v2842 = vsel %vm2196, %v2835, %v2823
      %v2843 = vsel %vm2196, %v2837, %v2826
      %v2844 = vsel %vm2196, %v2839, %v2829
      %v2845 = vsel %vm2196, %v2841, %v2832
      %s2846 = scalar_lea.vmem %s5, 14
      %v2847 = vld [vmem:[%s2846] sm:$0x3]
      %v2849 = vlaneseq
      %v2850 = vshrl.u32 %v2849, 7
      %v2851 = vsub.s32 0, %v2850
      %v2852 = vrot.slane %v2847, %v2851
      %v2853 = vlaneseq
      %v2854 = vshrl.u32 %v2853, 7
      %v2855 = vsub.s32 1, %v2854
      %v2856 = vrot.slane %v2847, %v2855
      %2857 = vrot.lane.b32.xlu0 %v2852, 28
      %v2858 = vpop.permute.xlu0 %2857
      %2859 = vrot.lane.b32.xlu0 %v2856, 28
      %v2860 = vpop.permute.xlu0 %2859
      %vm2861 = vcmask 228352
      %v2862 = vsel %vm2861, %v2858, %v2860
      %v2865 = vmul.f32 %v2824, %v2858
      %v2866 = vmul.f32 %v2842, %v2862
      %v2867 = vmul.f32 %v2827, %v2858
      %v2868 = vmul.f32 %v2843, %v2862
      %v2869 = vmul.f32 %v2830, %v2858
      %v2870 = vmul.f32 %v2844, %v2862
      %v2871 = vmul.f32 %v2833, %v2858
      %v2872 = vmul.f32 %v2845, %v2862
      %2881 = vrot.lane.b32.xlu0 %v2865, 100
      %v2882 = vpop.permute.xlu0 %2881
      %2883 = vrot.lane.b32.xlu0 %v2866, 100
      %v2884 = vpop.permute.xlu0 %2883
      %2885 = vrot.lane.b32.xlu0 %v2867, 100
      %v2886 = vpop.permute.xlu0 %2885
      %2887 = vrot.lane.b32.xlu0 %v2868, 100
      %v2888 = vpop.permute.xlu0 %2887
      %2889 = vrot.lane.b32.xlu0 %v2869, 100
      %v2890 = vpop.permute.xlu0 %2889
      %2891 = vrot.lane.b32.xlu0 %v2870, 100
      %v2892 = vpop.permute.xlu0 %2891
      %2893 = vrot.lane.b32.xlu0 %v2871, 100
      %v2894 = vpop.permute.xlu0 %2893
      %2895 = vrot.lane.b32.xlu0 %v2872, 100
      %v2896 = vpop.permute.xlu0 %2895
      %vm2897 = vcmask 818176
      %v2898 = vsel %vm2897, %v2882, %v2884
      %v2899 = vsel %vm2897, %v2886, %v2888
      %v2900 = vsel %vm2897, %v2890, %v2892
      %v2901 = vsel %vm2897, %v2894, %v2896
      %2910 = vst [vmem:[#allocation2] sm:$0xff] %v2898
      %2911 = vst.msk [vmem:[#allocation2 + $0x8] sm:$0xff] %vm2285, %v2884
      %2912 = vst [vmem:[#allocation2 + $0x10] sm:$0xff] %v2899
      %2913 = vst.msk [vmem:[#allocation2 + $0x18] sm:$0xff] %vm2285, %v2888
      %2914 = vst [vmem:[#allocation2 + $0x20] sm:$0xff] %v2900
      %2915 = vst.msk [vmem:[#allocation2 + $0x28] sm:$0xff] %vm2285, %v2892
      %2916 = vst [vmem:[#allocation2 + $0x30] sm:$0xff] %v2901
      %2917 = vst.msk [vmem:[#allocation2 + $0x38] sm:$0xff] %vm2285, %v2896
      %s2918 = scalar_lea.vmem %s5, 16
      %v2919 = vld [vmem:[%s2918] sm:$0x3]
      %v2921 = vlaneseq
      %v2922 = vshrl.u32 %v2921, 7
      %v2923 = vsub.s32 0, %v2922
      %v2924 = vrot.slane %v2919, %v2923
      %v2925 = vlaneseq
      %v2926 = vshrl.u32 %v2925, 7
      %v2927 = vsub.s32 1, %v2926
      %v2928 = vrot.slane %v2919, %v2927
      %2929 = vrot.lane.b32.xlu0 %v2924, 40
      %v2930 = vpop.permute.xlu0 %2929
      %2931 = vrot.lane.b32.xlu0 %v2928, 40
      %v2932 = vpop.permute.xlu0 %2931
      %vm2933 = vcmask 326656
      %v2934 = vsel %vm2933, %v2930, %v2932
      %v2937 = vmul.f32 %v2824, %v2930
      %v2938 = vmul.f32 %v2842, %v2934
      %v2939 = vmul.f32 %v2827, %v2930
      %v2940 = vmul.f32 %v2843, %v2934
      %v2941 = vmul.f32 %v2830, %v2930
      %v2942 = vmul.f32 %v2844, %v2934
      %v2943 = vmul.f32 %v2833, %v2930
      %v2944 = vmul.f32 %v2845, %v2934
      %2953 = vrot.lane.b32.xlu0 %v2937, 88
      %v2954 = vpop.permute.xlu0 %2953
      %2955 = vrot.lane.b32.xlu0 %v2938, 88
      %v2956 = vpop.permute.xlu0 %2955
      %2957 = vrot.lane.b32.xlu0 %v2939, 88
      %v2958 = vpop.permute.xlu0 %2957
      %2959 = vrot.lane.b32.xlu0 %v2940, 88
      %v2960 = vpop.permute.xlu0 %2959
      %2961 = vrot.lane.b32.xlu0 %v2941, 88
      %v2962 = vpop.permute.xlu0 %2961
      %2963 = vrot.lane.b32.xlu0 %v2942, 88
      %v2964 = vpop.permute.xlu0 %2963
      %2965 = vrot.lane.b32.xlu0 %v2943, 88
      %v2966 = vpop.permute.xlu0 %2965
      %2967 = vrot.lane.b32.xlu0 %v2944, 88
      %v2968 = vpop.permute.xlu0 %2967
      %vm2969 = vcmask 719872
      %v2970 = vsel %vm2969, %v2954, %v2956
      %v2971 = vsel %vm2969, %v2958, %v2960
      %v2972 = vsel %vm2969, %v2962, %v2964
      %v2973 = vsel %vm2969, %v2966, %v2968
      %2982 = vst [vmem:[#allocation2 + $0x40] sm:$0xff] %v2970
      %2983 = vst.msk [vmem:[#allocation2 + $0x48] sm:$0xff] %vm2285, %v2956
      %2984 = vst [vmem:[#allocation2 + $0x50] sm:$0xff] %v2971
      %2985 = vst.msk [vmem:[#allocation2 + $0x58] sm:$0xff] %vm2285, %v2960
      %2986 = vst [vmem:[#allocation2 + $0x60] sm:$0xff] %v2972
      %2987 = vst.msk [vmem:[#allocation2 + $0x68] sm:$0xff] %vm2285, %v2964
      %2988 = vst [vmem:[#allocation2 + $0x70] sm:$0xff] %v2973
      %2989 = vst.msk [vmem:[#allocation2 + $0x78] sm:$0xff] %vm2285, %v2968
      %s2990 = scalar_lea.vmem %s5, 18
      %v2991 = vld [vmem:[%s2990] sm:$0x3]
      %v2993 = vlaneseq
      %v2994 = vshrl.u32 %v2993, 7
      %v2995 = vsub.s32 0, %v2994
      %v2996 = vrot.slane %v2991, %v2995
      %v2997 = vlaneseq
      %v2998 = vshrl.u32 %v2997, 7
      %v2999 = vsub.s32 1, %v2998
      %v3000 = vrot.slane %v2991, %v2999
      %3001 = vrot.lane.b32.xlu0 %v2996, 52
      %v3002 = vpop.permute.xlu0 %3001
      %3003 = vrot.lane.b32.xlu0 %v3000, 52
      %v3004 = vpop.permute.xlu0 %3003
      %vm3005 = vcmask 424960
      %v3006 = vsel %vm3005, %v3002, %v3004
      %v3009 = vmul.f32 %v2824, %v3002
      %v3010 = vmul.f32 %v2842, %v3006
      %v3011 = vmul.f32 %v2827, %v3002
      %v3012 = vmul.f32 %v2843, %v3006
      %v3013 = vmul.f32 %v2830, %v3002
      %v3014 = vmul.f32 %v2844, %v3006
      %v3015 = vmul.f32 %v2833, %v3002
      %v3016 = vmul.f32 %v2845, %v3006
      %3025 = vrot.lane.b32.xlu0 %v3009, 76
      %v3026 = vpop.permute.xlu0 %3025
      %3027 = vrot.lane.b32.xlu0 %v3010, 76
      %v3028 = vpop.permute.xlu0 %3027
      %3029 = vrot.lane.b32.xlu0 %v3011, 76
      %v3030 = vpop.permute.xlu0 %3029
      %3031 = vrot.lane.b32.xlu0 %v3012, 76
      %v3032 = vpop.permute.xlu0 %3031
      %3033 = vrot.lane.b32.xlu0 %v3013, 76
      %v3034 = vpop.permute.xlu0 %3033
      %3035 = vrot.lane.b32.xlu0 %v3014, 76
      %v3036 = vpop.permute.xlu0 %3035
      %3037 = vrot.lane.b32.xlu0 %v3015, 76
      %v3038 = vpop.permute.xlu0 %3037
      %3039 = vrot.lane.b32.xlu0 %v3016, 76
      %v3040 = vpop.permute.xlu0 %3039
      %vm3041 = vcmask 621568
      %v3042 = vsel %vm3041, %v3026, %v3028
      %v3043 = vsel %vm3041, %v3030, %v3032
      %v3044 = vsel %vm3041, %v3034, %v3036
      %v3045 = vsel %vm3041, %v3038, %v3040
      %3054 = vst [vmem:[#allocation2 + $0x80] sm:$0xff] %v3042
      %3055 = vst.msk [vmem:[#allocation2 + $0x88] sm:$0xff] %vm2285, %v3028
      %3056 = vst [vmem:[#allocation2 + $0x90] sm:$0xff] %v3043
      %3057 = vst.msk [vmem:[#allocation2 + $0x98] sm:$0xff] %vm2285, %v3032
      %3058 = vst [vmem:[#allocation2 + $0xa0] sm:$0xff] %v3044
      %3059 = vst.msk [vmem:[#allocation2 + $0xa8] sm:$0xff] %vm2285, %v3036
      %3060 = vst [vmem:[#allocation2 + $0xb0] sm:$0xff] %v3045
      %3061 = vst.msk [vmem:[#allocation2 + $0xb8] sm:$0xff] %vm2285, %v3040
      %s3062 = scalar_lea.vmem %s5, 20
      %v3063 = vld [vmem:[%s3062] sm:$0x3]
      %v3065 = vlaneseq
      %v3066 = vshrl.u32 %v3065, 7
      %v3067 = vsub.s32 0, %v3066
      %v3068 = vrot.slane %v3063, %v3067
      %v3069 = vlaneseq
      %v3070 = vshrl.u32 %v3069, 7
      %v3071 = vsub.s32 1, %v3070
      %v3072 = vrot.slane %v3063, %v3071
      %v3075 = vmul.f32 %v1772, %v3068
      %v3076 = vmul.f32 %v1773, %v3072
      %v3077 = vmul.f32 %v1774, %v3068
      %v3078 = vmul.f32 %v1775, %v3072
      %v3079 = vmul.f32 %v2192, %v3068
      %v3080 = vmul.f32 %v2193, %v3072
      %v3081 = vmul.f32 %v2194, %v3068
      %v3082 = vmul.f32 %v2195, %v3072
      %3083 = vst [vmem:[#allocation2 + $0xc0] sm:$0xff] %v3075
      %3084 = vst.msk [vmem:[#allocation2 + $0xc8] sm:$0xff] %vm2285, %v3076
      %3085 = vst [vmem:[#allocation2 + $0xd0] sm:$0xff] %v3077
      %3086 = vst.msk [vmem:[#allocation2 + $0xd8] sm:$0xff] %vm2285, %v3078
      %3087 = vst [vmem:[#allocation2 + $0xe0] sm:$0xff] %v3079
      %3088 = vst.msk [vmem:[#allocation2 + $0xe8] sm:$0xff] %vm2285, %v3080
      %3089 = vst [vmem:[#allocation2 + $0xf0] sm:$0xff] %v3081
      %3090 = vst.msk [vmem:[#allocation2 + $0xf8] sm:$0xff] %vm2285, %v3082
      %s3091 = scalar_lea.vmem %s5, 22
      %v3092 = vld [vmem:[%s3091] sm:$0x3]
      %v3094 = vlaneseq
      %v3095 = vshrl.u32 %v3094, 7
      %v3096 = vsub.s32 0, %v3095
      %v3097 = vrot.slane %v3092, %v3096
      %v3098 = vlaneseq
      %v3099 = vshrl.u32 %v3098, 7
      %v3100 = vsub.s32 1, %v3099
      %v3101 = vrot.slane %v3092, %v3100
      %3102 = vrot.lane.b32.xlu0 %v3097, 12
      %v3103 = vpop.permute.xlu0 %3102
      %3104 = vrot.lane.b32.xlu0 %v3101, 12
      %v3105 = vpop.permute.xlu0 %3104
      %vm3106 = vcmask 97280
      %v3107 = vsel %vm3106, %v3103, %v3105
      %v3110 = vmul.f32 %v1772, %v3103
      %v3111 = vmul.f32 %v2824, %v3107
      %v3112 = vmul.f32 %v1774, %v3103
      %v3113 = vmul.f32 %v2827, %v3107
      %v3114 = vmul.f32 %v2192, %v3103
      %v3115 = vmul.f32 %v2830, %v3107
      %v3116 = vmul.f32 %v2194, %v3103
      %v3117 = vmul.f32 %v2833, %v3107
      %3126 = vrot.lane.b32.xlu0 %v3110, 116
      %v3127 = vpop.permute.xlu0 %3126
      %3128 = vrot.lane.b32.xlu0 %v3111, 116
      %v3129 = vpop.permute.xlu0 %3128
      %3130 = vrot.lane.b32.xlu0 %v3112, 116
      %v3131 = vpop.permute.xlu0 %3130
      %3132 = vrot.lane.b32.xlu0 %v3113, 116
      %v3133 = vpop.permute.xlu0 %3132
      %3134 = vrot.lane.b32.xlu0 %v3114, 116
      %v3135 = vpop.permute.xlu0 %3134
      %3136 = vrot.lane.b32.xlu0 %v3115, 116
      %v3137 = vpop.permute.xlu0 %3136
      %3138 = vrot.lane.b32.xlu0 %v3116, 116
      %v3139 = vpop.permute.xlu0 %3138
      %3140 = vrot.lane.b32.xlu0 %v3117, 116
      %v3141 = vpop.permute.xlu0 %3140
      %vm3142 = vcmask 949248
      %v3143 = vsel %vm3142, %v3127, %v3129
      %v3144 = vsel %vm3142, %v3131, %v3133
      %v3145 = vsel %vm3142, %v3135, %v3137
      %v3146 = vsel %vm3142, %v3139, %v3141
      %3155 = vst [vmem:[#allocation2 + $0x100] sm:$0xff] %v3143
      %3156 = vst.msk [vmem:[#allocation2 + $0x108] sm:$0xff] %vm2285, %v3129
      %3157 = vst [vmem:[#allocation2 + $0x110] sm:$0xff] %v3144
      %3158 = vst.msk [vmem:[#allocation2 + $0x118] sm:$0xff] %vm2285, %v3133
      %3159 = vst [vmem:[#allocation2 + $0x120] sm:$0xff] %v3145
      %3160 = vst.msk [vmem:[#allocation2 + $0x128] sm:$0xff] %vm2285, %v3137
      %3161 = vst [vmem:[#allocation2 + $0x130] sm:$0xff] %v3146
      %3162 = vst.msk [vmem:[#allocation2 + $0x138] sm:$0xff] %vm2285, %v3141
      %s3163 = scalar_lea.vmem %s5, 24
      %v3164 = vld [vmem:[%s3163] sm:$0x3]
      %v3166 = vlaneseq
      %v3167 = vshrl.u32 %v3166, 7
      %v3168 = vsub.s32 0, %v3167
      %v3169 = vrot.slane %v3164, %v3168
      %v3170 = vlaneseq
      %v3171 = vshrl.u32 %v3170, 7
      %v3172 = vsub.s32 1, %v3171
      %v3173 = vrot.slane %v3164, %v3172
      %3174 = vrot.lane.b32.xlu0 %v3169, 24
      %v3175 = vpop.permute.xlu0 %3174
      %3176 = vrot.lane.b32.xlu0 %v3173, 24
      %v3177 = vpop.permute.xlu0 %3176
      %vm3178 = vcmask 195584
      %v3179 = vsel %vm3178, %v3175, %v3177
      %v3182 = vmul.f32 %v1772, %v3175
      %v3183 = vmul.f32 %v2824, %v3179
      %v3184 = vmul.f32 %v1774, %v3175
      %v3185 = vmul.f32 %v2827, %v3179
      %v3186 = vmul.f32 %v2192, %v3175
      %v3187 = vmul.f32 %v2830, %v3179
      %v3188 = vmul.f32 %v2194, %v3175
      %v3189 = vmul.f32 %v2833, %v3179
      %3198 = vrot.lane.b32.xlu0 %v3182, 104
      %v3199 = vpop.permute.xlu0 %3198
      %3200 = vrot.lane.b32.xlu0 %v3183, 104
      %v3201 = vpop.permute.xlu0 %3200
      %3202 = vrot.lane.b32.xlu0 %v3184, 104
      %v3203 = vpop.permute.xlu0 %3202
      %3204 = vrot.lane.b32.xlu0 %v3185, 104
      %v3205 = vpop.permute.xlu0 %3204
      %3206 = vrot.lane.b32.xlu0 %v3186, 104
      %v3207 = vpop.permute.xlu0 %3206
      %3208 = vrot.lane.b32.xlu0 %v3187, 104
      %v3209 = vpop.permute.xlu0 %3208
      %3210 = vrot.lane.b32.xlu0 %v3188, 104
      %v3211 = vpop.permute.xlu0 %3210
      %3212 = vrot.lane.b32.xlu0 %v3189, 104
      %v3213 = vpop.permute.xlu0 %3212
      %vm3214 = vcmask 850944
      %v3215 = vsel %vm3214, %v3199, %v3201
      %v3216 = vsel %vm3214, %v3203, %v3205
      %v3217 = vsel %vm3214, %v3207, %v3209
      %v3218 = vsel %vm3214, %v3211, %v3213
      %3227 = vst [vmem:[#allocation2 + $0x140] sm:$0xff] %v3215
      %3228 = vst.msk [vmem:[#allocation2 + $0x148] sm:$0xff] %vm2285, %v3201
      %3229 = vst [vmem:[#allocation2 + $0x150] sm:$0xff] %v3216
      %3230 = vst.msk [vmem:[#allocation2 + $0x158] sm:$0xff] %vm2285, %v3205
      %3231 = vst [vmem:[#allocation2 + $0x160] sm:$0xff] %v3217
      %3232 = vst.msk [vmem:[#allocation2 + $0x168] sm:$0xff] %vm2285, %v3209
      %3233 = vst [vmem:[#allocation2 + $0x170] sm:$0xff] %v3218
      %3234 = vst.msk [vmem:[#allocation2 + $0x178] sm:$0xff] %vm2285, %v3213
      %s3235 = scalar_lea.vmem %s5, 26
      %v3236 = vld [vmem:[%s3235] sm:$0x3]
      %v3238 = vlaneseq
      %v3239 = vshrl.u32 %v3238, 7
      %v3240 = vsub.s32 0, %v3239
      %v3241 = vrot.slane %v3236, %v3240
      %v3242 = vlaneseq
      %v3243 = vshrl.u32 %v3242, 7
      %v3244 = vsub.s32 1, %v3243
      %v3245 = vrot.slane %v3236, %v3244
      %3246 = vrot.lane.b32.xlu0 %v3241, 36
      %v3247 = vpop.permute.xlu0 %3246
      %3248 = vrot.lane.b32.xlu0 %v3245, 36
      %v3249 = vpop.permute.xlu0 %3248
      %vm3250 = vcmask 293888
      %v3251 = vsel %vm3250, %v3247, %v3249
      %v3254 = vmul.f32 %v1772, %v3247
      %v3255 = vmul.f32 %v2824, %v3251
      %v3256 = vmul.f32 %v1774, %v3247
      %v3257 = vmul.f32 %v2827, %v3251
      %v3258 = vmul.f32 %v2192, %v3247
      %v3259 = vmul.f32 %v2830, %v3251
      %v3260 = vmul.f32 %v2194, %v3247
      %v3261 = vmul.f32 %v2833, %v3251
      %3270 = vrot.lane.b32.xlu0 %v3254, 92
      %v3271 = vpop.permute.xlu0 %3270
      %3272 = vrot.lane.b32.xlu0 %v3255, 92
      %v3273 = vpop.permute.xlu0 %3272
      %3274 = vrot.lane.b32.xlu0 %v3256, 92
      %v3275 = vpop.permute.xlu0 %3274
      %3276 = vrot.lane.b32.xlu0 %v3257, 92
      %v3277 = vpop.permute.xlu0 %3276
      %3278 = vrot.lane.b32.xlu0 %v3258, 92
      %v3279 = vpop.permute.xlu0 %3278
      %3280 = vrot.lane.b32.xlu0 %v3259, 92
      %v3281 = vpop.permute.xlu0 %3280
      %3282 = vrot.lane.b32.xlu0 %v3260, 92
      %v3283 = vpop.permute.xlu0 %3282
      %3284 = vrot.lane.b32.xlu0 %v3261, 92
      %v3285 = vpop.permute.xlu0 %3284
      %vm3286 = vcmask 752640
      %v3287 = vsel %vm3286, %v3271, %v3273
      %v3288 = vsel %vm3286, %v3275, %v3277
      %v3289 = vsel %vm3286, %v3279, %v3281
      %v3290 = vsel %vm3286, %v3283, %v3285
      %3299 = vst [vmem:[#allocation2 + $0x180] sm:$0xff] %v3287
      %3300 = vst.msk [vmem:[#allocation2 + $0x188] sm:$0xff] %vm2285, %v3273
      %3301 = vst [vmem:[#allocation2 + $0x190] sm:$0xff] %v3288
      %3302 = vst.msk [vmem:[#allocation2 + $0x198] sm:$0xff] %vm2285, %v3277
      %3303 = vst [vmem:[#allocation2 + $0x1a0] sm:$0xff] %v3289
      %3304 = vst.msk [vmem:[#allocation2 + $0x1a8] sm:$0xff] %vm2285, %v3281
      %3305 = vst [vmem:[#allocation2 + $0x1b0] sm:$0xff] %v3290
      %3306 = vst.msk [vmem:[#allocation2 + $0x1b8] sm:$0xff] %vm2285, %v3285
      %v3307 = vld [vmem:[#allocation2] sm:$0xff]
      %v3308 = vld [vmem:[#allocation2 + $0x8] sm:$0xff]
      %v3309 = vld [vmem:[#allocation2 + $0x10] sm:$0xff]
      %v3310 = vld [vmem:[#allocation2 + $0x18] sm:$0xff]
      %v3311 = vld [vmem:[#allocation2 + $0x20] sm:$0xff]
      %v3312 = vld [vmem:[#allocation2 + $0x28] sm:$0xff]
      %v3313 = vld [vmem:[#allocation2 + $0x30] sm:$0xff]
      %v3314 = vld [vmem:[#allocation2 + $0x38] sm:$0xff]
      %v3315 = vld [vmem:[#allocation2 + $0x40] sm:$0xff]
      %v3316 = vld [vmem:[#allocation2 + $0x48] sm:$0xff]
      %v3317 = vld [vmem:[#allocation2 + $0x50] sm:$0xff]
      %v3318 = vld [vmem:[#allocation2 + $0x58] sm:$0xff]
      %v3319 = vld [vmem:[#allocation2 + $0x60] sm:$0xff]
      %v3320 = vld [vmem:[#allocation2 + $0x68] sm:$0xff]
      %v3321 = vld [vmem:[#allocation2 + $0x70] sm:$0xff]
      %v3322 = vld [vmem:[#allocation2 + $0x78] sm:$0xff]
      %v3323 = vld [vmem:[#allocation2 + $0x80] sm:$0xff]
      %v3324 = vld [vmem:[#allocation2 + $0x88] sm:$0xff]
      %v3325 = vld [vmem:[#allocation2 + $0x90] sm:$0xff]
      %v3326 = vld [vmem:[#allocation2 + $0x98] sm:$0xff]
      %v3327 = vld [vmem:[#allocation2 + $0xa0] sm:$0xff]
      %v3328 = vld [vmem:[#allocation2 + $0xa8] sm:$0xff]
      %v3329 = vld [vmem:[#allocation2 + $0xb0] sm:$0xff]
      %v3330 = vld [vmem:[#allocation2 + $0xb8] sm:$0xff]
      %v3331 = vld [vmem:[#allocation2 + $0xc0] sm:$0xff]
      %v3332 = vld [vmem:[#allocation2 + $0xc8] sm:$0xff]
      %v3333 = vld [vmem:[#allocation2 + $0xd0] sm:$0xff]
      %v3334 = vld [vmem:[#allocation2 + $0xd8] sm:$0xff]
      %v3335 = vld [vmem:[#allocation2 + $0xe0] sm:$0xff]
      %v3336 = vld [vmem:[#allocation2 + $0xe8] sm:$0xff]
      %v3337 = vld [vmem:[#allocation2 + $0xf0] sm:$0xff]
      %v3338 = vld [vmem:[#allocation2 + $0xf8] sm:$0xff]
      %v3339 = vld [vmem:[#allocation2 + $0x100] sm:$0xff]
      %v3340 = vld [vmem:[#allocation2 + $0x108] sm:$0xff]
      %v3341 = vld [vmem:[#allocation2 + $0x110] sm:$0xff]
      %v3342 = vld [vmem:[#allocation2 + $0x118] sm:$0xff]
      %v3343 = vld [vmem:[#allocation2 + $0x120] sm:$0xff]
      %v3344 = vld [vmem:[#allocation2 + $0x128] sm:$0xff]
      %v3345 = vld [vmem:[#allocation2 + $0x130] sm:$0xff]
      %v3346 = vld [vmem:[#allocation2 + $0x138] sm:$0xff]
      %v3347 = vld [vmem:[#allocation2 + $0x140] sm:$0xff]
      %v3348 = vld [vmem:[#allocation2 + $0x148] sm:$0xff]
      %v3349 = vld [vmem:[#allocation2 + $0x150] sm:$0xff]
      %v3350 = vld [vmem:[#allocation2 + $0x158] sm:$0xff]
      %v3351 = vld [vmem:[#allocation2 + $0x160] sm:$0xff]
      %v3352 = vld [vmem:[#allocation2 + $0x168] sm:$0xff]
      %v3353 = vld [vmem:[#allocation2 + $0x170] sm:$0xff]
      %v3354 = vld [vmem:[#allocation2 + $0x178] sm:$0xff]
      %v3355 = vld [vmem:[#allocation2 + $0x180] sm:$0xff]
      %v3356 = vld [vmem:[#allocation2 + $0x188] sm:$0xff]
      %v3357 = vld [vmem:[#allocation2 + $0x190] sm:$0xff]
      %v3358 = vld [vmem:[#allocation2 + $0x198] sm:$0xff]
      %v3359 = vld [vmem:[#allocation2 + $0x1a0] sm:$0xff]
      %v3360 = vld [vmem:[#allocation2 + $0x1a8] sm:$0xff]
      %v3361 = vld [vmem:[#allocation2 + $0x1b0] sm:$0xff]
      %v3362 = vld [vmem:[#allocation2 + $0x1b8] sm:$0xff]
      %v3364 = vsel %vm2738, %v278, 0
      %v3367 = vsel %vm2738, %v280, 0
      %3369 = vmatprep.subr.mxu0 %v3338
      %3370 = vmatpush1.msra.mxu0 %v3337
      %3371 = vmatprep.subr.mxu0 %v3336
      %3372 = vmatpush1.msra.mxu0 %v3335
      %3373 = vmatprep.subr.mxu0 %v3334
      %3374 = vmatpush1.msra.mxu0 %v3333
      %3375 = vmatprep.subr.mxu0 %v3332
      %3376 = vmatpush1.msra.mxu0 %v3331
      %3377 = vmatprep.subr.mxu0 %v3330
      %3378 = vmatpush1.msra.mxu0 %v3329
      %3379 = vmatprep.subr.mxu0 %v3328
      %3380 = vmatpush1.msra.mxu0 %v3327
      %3381 = vmatprep.subr.mxu0 %v3326
      %3382 = vmatpush1.msra.mxu0 %v3325
      %3383 = vmatprep.subr.mxu0 %v3324
      %3384 = vmatpush1.msra.mxu0 %v3323
      %3385 = vmatprep.subr.mxu0 %v3322
      %3386 = vmatpush1.msra.mxu0 %v3321
      %3387 = vmatprep.subr.mxu0 %v3320
      %3388 = vmatpush1.msra.mxu0 %v3319
      %3389 = vmatprep.subr.mxu0 %v3318
      %3390 = vmatpush1.msra.mxu0 %v3317
      %3391 = vmatprep.subr.mxu0 %v3316
      %3392 = vmatpush1.msra.mxu0 %v3315
      %3393 = vmatprep.subr.mxu0 %v3314
      %3394 = vmatpush1.msra.mxu0 %v3313
      %3395 = vmatprep.subr.mxu0 %v3312
      %3396 = vmatpush1.msra.mxu0 %v3311
      %3397 = vmatprep.subr.mxu0 %v3310
      %3398 = vmatpush1.msra.mxu0 %v3309
      %3399 = vmatprep.subr.mxu0 %v3308
      %3400 = vmatpush1.msra.mxu0 %v3307
      %3401 = vmatprep.subr.mxu0 0.0
      %3402 = vmatpush2.msra.mxu0 0.0
      %3403 = vmatprep.subr.mxu0 0.0
      %3404 = vmatpush2.msra.mxu0 0.0
      %3405 = vmatprep.subr.mxu0 0.0
      %3406 = vmatpush2.msra.mxu0 0.0
      %3407 = vmatprep.subr.mxu0 0.0
      %3408 = vmatpush2.msra.mxu0 0.0
      %3409 = vmatprep.subr.mxu0 %v3362
      %3410 = vmatpush2.msra.mxu0 %v3361
      %3411 = vmatprep.subr.mxu0 %v3360
      %3412 = vmatpush2.msra.mxu0 %v3359
      %3413 = vmatprep.subr.mxu0 %v3358
      %3414 = vmatpush2.msra.mxu0 %v3357
      %3415 = vmatprep.subr.mxu0 %v3356
      %3416 = vmatpush2.msra.mxu0 %v3355
      %3417 = vmatprep.subr.mxu0 %v3354
      %3418 = vmatpush2.msra.mxu0 %v3353
      %3419 = vmatprep.subr.mxu0 %v3352
      %3420 = vmatpush2.msra.mxu0 %v3351
      %3421 = vmatprep.subr.mxu0 %v3350
      %3422 = vmatpush2.msra.mxu0 %v3349
      %3423 = vmatprep.subr.mxu0 %v3348
      %3424 = vmatpush2.msra.mxu0 %v3347
      %3425 = vmatprep.subr.mxu0 %v3346
      %3426 = vmatpush2.msra.mxu0 %v3345
      %3427 = vmatprep.subr.mxu0 %v3344
      %3428 = vmatpush2.msra.mxu0 %v3343
      %3429 = vmatprep.subr.mxu0 %v3342
      %3430 = vmatpush2.msra.mxu0 %v3341
      %3431 = vmatprep.subr.mxu0 %v3340
      %3432 = vmatpush2.msra.mxu0 %v3339
      %3433 = vmatprep.mubr.f32.mxu0 %v3364
      %3434 = vmatmul.mubr.f32.gmra.mxu0 %v277
      %v3435 = vpop.f32.mrf.mxu0
      %v3436 = vadd.f32 0.0, %v3435
      %v3437 = vpop.f32.mrf.mxu0
      %v3438 = vadd.f32 0.0, %v3437
      %3439 = vmatprep.mubr.f32.mxu0 %v3367
      %3440 = vmatmul.mubr.f32.gmra.mxu0 %v279
      %v3441 = vpop.f32.mrf.mxu0
      %v3442 = vadd.f32 0.0, %v3441
      %v3443 = vpop.f32.mrf.mxu0
      %v3444 = vadd.f32 0.0, %v3443
      %3445 = vdwg.mxu0
      %v3446 = vadd.f32 %v2812, %v3436
      %v3447 = vadd.f32 %v2814, %v3438
      %v3448 = vadd.f32 %v2818, %v3442
      %v3449 = vadd.f32 %v2820, %v3444
      %v3450 = vadd.f32 %v3446, %v506
      %v3451 = vadd.f32 %v3447, %v508
      %v3452 = vadd.f32 %v3448, %v512
      %v3453 = vadd.f32 %v3449, %v514
      %v3454 = vsel %vm2285, %v3451, 0.0
      %v3455 = vadd.f32 %v3450, %v3454
      %3456 = vadd.xlane.f32.xlu0 %v3455
      %v3457 = vpop.xlane.xlu0 %3456
      %v3458 = vsel %vm2285, %v3453, 0.0
      %v3459 = vadd.f32 %v3452, %v3458
      %3460 = vadd.xlane.f32.xlu0 %v3459
      %v3461 = vpop.xlane.xlu0 %3460
      %v3462 = vrcp.pop 192.0
      %v3463 = vmul.f32 %v3457, %v3462
      %v3464 = vmul.f32 %v3461, %v3462
      %v3466 = vsel %vm360, %v272, 0
      %3468 = vmatprep.subr.mxu0 0.0
      %3469 = vmatpush1.msra.mxu0 0.0
      %3470 = vmatprep.subr.mxu0 0.0
      %3471 = vmatpush1.msra.mxu0 0.0
      %3472 = vmatprep.subr.mxu0 0.0
      %3473 = vmatpush1.msra.mxu0 0.0
      %3474 = vmatprep.subr.mxu0 0.0
      %3475 = vmatpush1.msra.mxu0 0.0
      %3476 = vmatprep.subr.mxu0 0.0
      %3477 = vmatpush1.msra.mxu0 0.0
      %3478 = vmatprep.subr.mxu0 0.0
      %3479 = vmatpush1.msra.mxu0 0.0
      %3480 = vmatprep.subr.mxu0 0.0
      %3481 = vmatpush1.msra.mxu0 0.0
      %3482 = vmatprep.subr.mxu0 0.0
      %3483 = vmatpush1.msra.mxu0 0.0
      %3484 = vmatprep.subr.mxu0 0.0
      %3485 = vmatpush1.msra.mxu0 0.0
      %3486 = vmatprep.subr.mxu0 0.0
      %3487 = vmatpush1.msra.mxu0 0.0
      %3488 = vmatprep.subr.mxu0 0.0
      %3489 = vmatpush1.msra.mxu0 0.0
      %3490 = vmatprep.subr.mxu0 0.0
      %3491 = vmatpush1.msra.mxu0 0.0
      %3492 = vmatprep.subr.mxu0 0.0
      %3493 = vmatpush1.msra.mxu0 0.0
      %3494 = vmatprep.subr.mxu0 0.0
      %3495 = vmatpush1.msra.mxu0 0.0
      %3496 = vmatprep.subr.mxu0 0.0
      %3497 = vmatpush1.msra.mxu0 %v3464
      %3498 = vmatprep.subr.mxu0 0.0
      %3499 = vmatpush1.msra.mxu0 %v3463
      %3500 = vmatprep.subr.mxu0 0.0
      %3501 = vmatpush2.msra.mxu0 0.0
      %3502 = vmatprep.subr.mxu0 0.0
      %3503 = vmatpush2.msra.mxu0 0.0
      %3504 = vmatprep.subr.mxu0 0.0
      %3505 = vmatpush2.msra.mxu0 0.0
      %3506 = vmatprep.subr.mxu0 0.0
      %3507 = vmatpush2.msra.mxu0 0.0
      %3508 = vmatprep.subr.mxu0 0.0
      %3509 = vmatpush2.msra.mxu0 0.0
      %3510 = vmatprep.subr.mxu0 0.0
      %3511 = vmatpush2.msra.mxu0 0.0
      %3512 = vmatprep.subr.mxu0 0.0
      %3513 = vmatpush2.msra.mxu0 0.0
      %3514 = vmatprep.subr.mxu0 0.0
      %3515 = vmatpush2.msra.mxu0 0.0
      %3516 = vmatprep.subr.mxu0 0.0
      %3517 = vmatpush2.msra.mxu0 0.0
      %3518 = vmatprep.subr.mxu0 0.0
      %3519 = vmatpush2.msra.mxu0 0.0
      %3520 = vmatprep.subr.mxu0 0.0
      %3521 = vmatpush2.msra.mxu0 0.0
      %3522 = vmatprep.subr.mxu0 0.0
      %3523 = vmatpush2.msra.mxu0 0.0
      %3524 = vmatprep.subr.mxu0 0.0
      %3525 = vmatpush2.msra.mxu0 0.0
      %3526 = vmatprep.subr.mxu0 0.0
      %3527 = vmatpush2.msra.mxu0 0.0
      %3528 = vmatprep.subr.mxu0 0.0
      %3529 = vmatpush2.msra.mxu0 0.0
      %3530 = vmatprep.subr.mxu0 0.0
      %3531 = vmatpush2.msra.mxu0 0.0
      %3532 = vmatprep.mubr.f32.mxu0 0.0
      %3533 = vmatmul.mubr.f32.gmra.mxu0 %v3466
      %v3534 = vpop.f32.mrf.mxu0
      %v3535 = vadd.f32 %v299, %v3534
      %v3536 = vpop.f32.mrf.mxu0
      %3537 = vdwg.mxu0
      %v3538 = vmul.f32 %v3535, 0.70710677
      %v3539 = vand.u32 2147483647, %v3538
      %v3540 = vmul.f32 %v3539, 0.3275911
      %v3541 = vadd.f32 %v3540, 1.0
      %v3542 = vrcp.pop %v3541
      %v3543 = vmul.f32 1.0, %v3542
      %v3544 = vmul.f32 %v3543, 1.0614054
      %v3545 = vadd.f32 %v3544, -1.4531521
      %v3546 = vmul.f32 %v3543, %v3545
      %v3547 = vadd.f32 %v3546, 1.4214138
      %v3548 = vmul.f32 %v3543, %v3547
      %v3549 = vadd.f32 %v3548, -0.28449672
      %v3550 = vmul.f32 %v3543, %v3549
      %v3551 = vadd.f32 %v3550, 0.2548296
      %v3552 = vmul.f32 %v3543, %v3551
      %v3553 = vsub.f32 0.0, %v3539
      %v3554 = vmul.f32 %v3553, %v3539
      %v3555 = vmul.f32 %v3554, 1.442695
      %v3556 = vpow.pop %v3555
      %v3557 = vmul.f32 %v3552, %v3556
      %v3558 = vsub.f32 1.0, %v3557
      %vm3559 = vcmp.ge.f32.partialorder %v3538, 0.0
      %v3560 = vsub.f32 0.0, %v3558
      %v3561 = vsel %vm3559, %v3558, %v3560
      %v3562 = vmul.f32 %v3535, 0.5
      %v3563 = vadd.f32 %v3561, 1.0
      %v3564 = vmul.f32 %v3562, %v3563
      %vm3565 = vcmask 31744
      %v3567 = vsel %vm3565, %v300, 0
      %v3570 = vsel %vm3565, %v301, 0
      %v3573 = vsel %vm3565, %v302, 0
      %v3576 = vsel %vm3565, %v303, 0
      %v3579 = vsel %vm3565, %v304, 0
      %v3582 = vsel %vm3565, %v305, 0
      %vm3584 = vcmask 1043456
      %v3586 = vsel %vm3584, %v3564, 0
      %3588 = vmatprep.subr.mxu0 0.0
      %3589 = vmatpush1.msra.mxu0 0.0
      %3590 = vmatprep.subr.mxu0 0.0
      %3591 = vmatpush1.msra.mxu0 0.0
      %3592 = vmatprep.subr.mxu0 0.0
      %3593 = vmatpush1.msra.mxu0 0.0
      %3594 = vmatprep.subr.mxu0 0.0
      %3595 = vmatpush1.msra.mxu0 0.0
      %3596 = vmatprep.subr.mxu0 0.0
      %3597 = vmatpush1.msra.mxu0 0.0
      %3598 = vmatprep.subr.mxu0 0.0
      %3599 = vmatpush1.msra.mxu0 0.0
      %3600 = vmatprep.subr.mxu0 0.0
      %3601 = vmatpush1.msra.mxu0 0.0
      %3602 = vmatprep.subr.mxu0 0.0
      %3603 = vmatpush1.msra.mxu0 0.0
      %3604 = vmatprep.subr.mxu0 0.0
      %3605 = vmatpush1.msra.mxu0 0.0
      %3606 = vmatprep.subr.mxu0 0.0
      %3607 = vmatpush1.msra.mxu0 0.0
      %3608 = vmatprep.subr.mxu0 0.0
      %3609 = vmatpush1.msra.mxu0 0.0
      %3610 = vmatprep.subr.mxu0 0.0
      %3611 = vmatpush1.msra.mxu0 0.0
      %3612 = vmatprep.subr.mxu0 0.0
      %3613 = vmatpush1.msra.mxu0 0.0
      %3614 = vmatprep.subr.mxu0 0.0
      %3615 = vmatpush1.msra.mxu0 0.0
      %3616 = vmatprep.subr.mxu0 0.0
      %3617 = vmatpush1.msra.mxu0 0.0
      %3618 = vmatprep.subr.mxu0 0.0
      %3619 = vmatpush1.msra.mxu0 %v3586
      %3620 = vmatprep.subr.mxu0 0.0
      %3621 = vmatpush2.msra.mxu0 0.0
      %3622 = vmatprep.subr.mxu0 0.0
      %3623 = vmatpush2.msra.mxu0 0.0
      %3624 = vmatprep.subr.mxu0 0.0
      %3625 = vmatpush2.msra.mxu0 0.0
      %3626 = vmatprep.subr.mxu0 0.0
      %3627 = vmatpush2.msra.mxu0 0.0
      %3628 = vmatprep.subr.mxu0 0.0
      %3629 = vmatpush2.msra.mxu0 0.0
      %3630 = vmatprep.subr.mxu0 0.0
      %3631 = vmatpush2.msra.mxu0 0.0
      %3632 = vmatprep.subr.mxu0 0.0
      %3633 = vmatpush2.msra.mxu0 0.0
      %3634 = vmatprep.subr.mxu0 0.0
      %3635 = vmatpush2.msra.mxu0 0.0
      %3636 = vmatprep.subr.mxu0 0.0
      %3637 = vmatpush2.msra.mxu0 0.0
      %3638 = vmatprep.subr.mxu0 0.0
      %3639 = vmatpush2.msra.mxu0 0.0
      %3640 = vmatprep.subr.mxu0 0.0
      %3641 = vmatpush2.msra.mxu0 0.0
      %3642 = vmatprep.subr.mxu0 0.0
      %3643 = vmatpush2.msra.mxu0 0.0
      %3644 = vmatprep.subr.mxu0 0.0
      %3645 = vmatpush2.msra.mxu0 0.0
      %3646 = vmatprep.subr.mxu0 0.0
      %3647 = vmatpush2.msra.mxu0 0.0
      %3648 = vmatprep.subr.mxu0 0.0
      %3649 = vmatpush2.msra.mxu0 0.0
      %3650 = vmatprep.subr.mxu0 0.0
      %3651 = vmatpush2.msra.mxu0 0.0
      %3652 = vmatprep.mubr.f32.mxu0 0.0
      %3653 = vmatmul.mubr.f32.gmra.mxu0 %v3567
      %v3654 = vpop.f32.mrf.mxu0
      %v3655 = vadd.f32 %v291, %v3654
      %v3656 = vpop.f32.mrf.mxu0
      %3657 = vmatprep.mubr.f32.mxu0 0.0
      %3658 = vmatmul.mubr.f32.gmra.mxu0 %v3570
      %v3659 = vpop.f32.mrf.mxu0
      %v3660 = vadd.f32 %v292, %v3659
      %v3661 = vpop.f32.mrf.mxu0
      %3662 = vmatprep.mubr.f32.mxu0 0.0
      %3663 = vmatmul.mubr.f32.gmra.mxu0 %v3573
      %v3664 = vpop.f32.mrf.mxu0
      %v3665 = vadd.f32 %v293, %v3664
      %v3666 = vpop.f32.mrf.mxu0
      %3667 = vmatprep.mubr.f32.mxu0 0.0
      %3668 = vmatmul.mubr.f32.gmra.mxu0 %v3576
      %v3669 = vpop.f32.mrf.mxu0
      %v3670 = vadd.f32 %v294, %v3669
      %v3671 = vpop.f32.mrf.mxu0
      %3672 = vmatprep.mubr.f32.mxu0 0.0
      %3673 = vmatmul.mubr.f32.gmra.mxu0 %v3579
      %v3674 = vpop.f32.mrf.mxu0
      %v3675 = vadd.f32 %v295, %v3674
      %v3676 = vpop.f32.mrf.mxu0
      %3677 = vmatprep.mubr.f32.mxu0 0.0
      %3678 = vmatmul.mubr.f32.gmra.mxu0 %v3582
      %v3679 = vpop.f32.mrf.mxu0
      %v3680 = vadd.f32 %v296, %v3679
      %v3681 = vpop.f32.mrf.mxu0
      %3682 = vdwg.mxu0
      %v3683 = vmax.f32 %v3655, %v3665
      %v3684 = vmax.f32 %v3660, %v3670
      %v3685 = vmax.f32 %v3683, %v3675
      %v3686 = vmax.f32 %v3684, %v3680
      %v3687 = vsub.f32 %v3655, %v3685
      %v3688 = vsub.f32 %v3660, %v3686
      %v3689 = vmul.f32 %v3687, 1.442695
      %v3690 = vpow.pop %v3689
      %v3691 = vmul.f32 %v3688, 1.442695
      %v3692 = vpow.pop %v3691
      %v3693 = vsub.f32 %v3665, %v3685
      %v3694 = vsub.f32 %v3670, %v3686
      %v3695 = vmul.f32 %v3693, 1.442695
      %v3696 = vpow.pop %v3695
      %v3697 = vmul.f32 %v3694, 1.442695
      %v3698 = vpow.pop %v3697
      %v3699 = vsub.f32 %v3675, %v3685
      %v3700 = vsub.f32 %v3680, %v3686
      %v3701 = vmul.f32 %v3699, 1.442695
      %v3702 = vpow.pop %v3701
      %v3703 = vmul.f32 %v3700, 1.442695
      %v3704 = vpow.pop %v3703
      %v3705 = vadd.f32 %v3690, %v3696
      %v3706 = vadd.f32 %v3692, %v3698
      %v3707 = vadd.f32 %v3705, %v3702
      %v3708 = vadd.f32 %v3706, %v3704
      %v3709 = vrcp.pop %v3707
      %v3710 = vmul.f32 1.0, %v3709
      %v3711 = vrcp.pop %v3708
      %v3712 = vmul.f32 1.0, %v3711
      %v3713 = vmul.f32 %v3690, %v3710
      %v3714 = vmul.f32 %v3692, %v3712
      %3716 = vset.pattern.permute.xlu0 0
      %3717 = vperm.xlu0 %3716, %v3713
      %v3718 = vpop.permute.xlu0 %3717
      %3721 = vset.pattern.permute.xlu0 0
      %3722 = vperm.xlu0 %3721, %v3714
      %v3723 = vpop.permute.xlu0 %3722
      %v3725 = vmul.f32 %v2812, %v3718
      %v3726 = vmul.f32 %v2814, %v3718
      %v3727 = vmul.f32 %v2818, %v3723
      %v3728 = vmul.f32 %v2820, %v3723
      %v3729 = vmul.f32 %v3696, %v3710
      %v3730 = vmul.f32 %v3698, %v3712
      %3732 = vset.pattern.permute.xlu0 0
      %3733 = vperm.xlu0 %3732, %v3729
      %v3734 = vpop.permute.xlu0 %3733
      %3737 = vset.pattern.permute.xlu0 0
      %3738 = vperm.xlu0 %3737, %v3730
      %v3739 = vpop.permute.xlu0 %3738
      %v3741 = vmul.f32 %v3436, %v3734
      %v3742 = vmul.f32 %v3438, %v3734
      %v3743 = vmul.f32 %v3442, %v3739
      %v3744 = vmul.f32 %v3444, %v3739
      %v3745 = vadd.f32 %v3725, %v3741
      %v3746 = vadd.f32 %v3726, %v3742
      %v3747 = vadd.f32 %v3727, %v3743
      %v3748 = vadd.f32 %v3728, %v3744
      %v3749 = vmul.f32 %v3702, %v3710
      %v3750 = vmul.f32 %v3704, %v3712
      %3752 = vset.pattern.permute.xlu0 0
      %3753 = vperm.xlu0 %3752, %v3749
      %v3754 = vpop.permute.xlu0 %3753
      %3757 = vset.pattern.permute.xlu0 0
      %3758 = vperm.xlu0 %3757, %v3750
      %v3759 = vpop.permute.xlu0 %3758
      %v3761 = vmul.f32 %v506, %v3754
      %v3762 = vmul.f32 %v508, %v3754
      %v3763 = vmul.f32 %v512, %v3759
      %v3764 = vmul.f32 %v514, %v3759
      %v3765 = vadd.f32 %v3745, %v3761
      %v3766 = vadd.f32 %v3746, %v3762
      %v3767 = vadd.f32 %v3747, %v3763
      %v3768 = vadd.f32 %v3748, %v3764
      %3770 = vset.pattern.permute.xlu0 0
      %3771 = vperm.xlu0 %3770, %v297
      %v3772 = vpop.permute.xlu0 %3771
      %3775 = vset.pattern.permute.xlu0 0
      %3776 = vperm.xlu0 %3775, %v298
      %v3777 = vpop.permute.xlu0 %3776
      %v3780 = vsel %vm360, %v270, 0
      %v3783 = vsel %vm360, %v271, 0
      %3785 = vmatprep.subr.mxu0 0.0
      %3786 = vmatpush1.msra.mxu0 0.0
      %3787 = vmatprep.subr.mxu0 0.0
      %3788 = vmatpush1.msra.mxu0 0.0
      %3789 = vmatprep.subr.mxu0 0.0
      %3790 = vmatpush1.msra.mxu0 0.0
      %3791 = vmatprep.subr.mxu0 0.0
      %3792 = vmatpush1.msra.mxu0 0.0
      %3793 = vmatprep.subr.mxu0 0.0
      %3794 = vmatpush1.msra.mxu0 0.0
      %3795 = vmatprep.subr.mxu0 0.0
      %3796 = vmatpush1.msra.mxu0 0.0
      %3797 = vmatprep.subr.mxu0 0.0
      %3798 = vmatpush1.msra.mxu0 0.0
      %3799 = vmatprep.subr.mxu0 0.0
      %3800 = vmatpush1.msra.mxu0 0.0
      %3801 = vmatprep.subr.mxu0 0.0
      %3802 = vmatpush1.msra.mxu0 0.0
      %3803 = vmatprep.subr.mxu0 0.0
      %3804 = vmatpush1.msra.mxu0 0.0
      %3805 = vmatprep.subr.mxu0 0.0
      %3806 = vmatpush1.msra.mxu0 0.0
      %3807 = vmatprep.subr.mxu0 0.0
      %3808 = vmatpush1.msra.mxu0 0.0
      %3809 = vmatprep.subr.mxu0 0.0
      %3810 = vmatpush1.msra.mxu0 0.0
      %3811 = vmatprep.subr.mxu0 0.0
      %3812 = vmatpush1.msra.mxu0 0.0
      %3813 = vmatprep.subr.mxu0 %v3768
      %3814 = vmatpush1.msra.mxu0 %v3767
      %3815 = vmatprep.subr.mxu0 %v3766
      %3816 = vmatpush1.msra.mxu0 %v3765
      %3817 = vmatprep.subr.mxu0 0.0
      %3818 = vmatpush2.msra.mxu0 0.0
      %3819 = vmatprep.subr.mxu0 0.0
      %3820 = vmatpush2.msra.mxu0 0.0
      %3821 = vmatprep.subr.mxu0 0.0
      %3822 = vmatpush2.msra.mxu0 0.0
      %3823 = vmatprep.subr.mxu0 0.0
      %3824 = vmatpush2.msra.mxu0 0.0
      %3825 = vmatprep.subr.mxu0 0.0
      %3826 = vmatpush2.msra.mxu0 0.0
      %3827 = vmatprep.subr.mxu0 0.0
      %3828 = vmatpush2.msra.mxu0 0.0
      %3829 = vmatprep.subr.mxu0 0.0
      %3830 = vmatpush2.msra.mxu0 0.0
      %3831 = vmatprep.subr.mxu0 0.0
      %3832 = vmatpush2.msra.mxu0 0.0
      %3833 = vmatprep.subr.mxu0 0.0
      %3834 = vmatpush2.msra.mxu0 0.0
      %3835 = vmatprep.subr.mxu0 0.0
      %3836 = vmatpush2.msra.mxu0 0.0
      %3837 = vmatprep.subr.mxu0 0.0
      %3838 = vmatpush2.msra.mxu0 0.0
      %3839 = vmatprep.subr.mxu0 0.0
      %3840 = vmatpush2.msra.mxu0 0.0
      %3841 = vmatprep.subr.mxu0 0.0
      %3842 = vmatpush2.msra.mxu0 0.0
      %3843 = vmatprep.subr.mxu0 0.0
      %3844 = vmatpush2.msra.mxu0 0.0
      %3845 = vmatprep.subr.mxu0 0.0
      %3846 = vmatpush2.msra.mxu0 0.0
      %3847 = vmatprep.subr.mxu0 0.0
      %3848 = vmatpush2.msra.mxu0 0.0
      %3849 = vmatprep.mubr.f32.mxu0 0.0
      %3850 = vmatmul.mubr.f32.gmra.mxu0 %v3780
      %v3851 = vpop.f32.mrf.mxu0
      %v3852 = vadd.f32 %v3772, %v3851
      %v3853 = vpop.f32.mrf.mxu0
      %v3854 = vadd.f32 %v3772, %v3853
      %3855 = vmatprep.mubr.f32.mxu0 0.0
      %3856 = vmatmul.mubr.f32.gmra.mxu0 %v3783
      %v3857 = vpop.f32.mrf.mxu0
      %v3858 = vadd.f32 %v3777, %v3857
      %v3859 = vpop.f32.mrf.mxu0
      %v3860 = vadd.f32 %v3777, %v3859
      %3861 = vdwg.mxu0
      %3862 = vst [vmem:[%s258] sm:$0xff] %v3852
      %3863 = vst.msk [vmem:[%s258 + $0x8] sm:$0xff] %vm2285, %v3854
      %3864 = vst [vmem:[%s258 + $0x10] sm:$0xff] %v3858
      %3865 = vst.msk [vmem:[%s258 + $0x18] sm:$0xff] %vm2285, %v3860
      %s3866 = scalar_lea.vmem %s251, 32
      %v3867 = vld [vmem:[%s3866] sm:$0xff]
      %v3868 = vld [vmem:[%s3866 + $0x8] sm:$0xff]
      %v3869 = vld [vmem:[%s3866 + $0x10] sm:$0xff]
      %v3870 = vld [vmem:[%s3866 + $0x18] sm:$0xff]
      %3871 = vmatprep.subr.mxu0 0.0
      %3872 = vmatpush1.msra.mxu0 0.0
      %3873 = vmatprep.subr.mxu0 0.0
      %3874 = vmatpush1.msra.mxu0 0.0
      %3875 = vmatprep.subr.mxu0 0.0
      %3876 = vmatpush1.msra.mxu0 0.0
      %3877 = vmatprep.subr.mxu0 0.0
      %3878 = vmatpush1.msra.mxu0 0.0
      %3879 = vmatprep.subr.mxu0 0.0
      %3880 = vmatpush1.msra.mxu0 0.0
      %3881 = vmatprep.subr.mxu0 0.0
      %3882 = vmatpush1.msra.mxu0 0.0
      %3883 = vmatprep.subr.mxu0 0.0
      %3884 = vmatpush1.msra.mxu0 0.0
      %3885 = vmatprep.subr.mxu0 0.0
      %3886 = vmatpush1.msra.mxu0 0.0
      %3887 = vmatprep.subr.mxu0 0.0
      %3888 = vmatpush1.msra.mxu0 0.0
      %3889 = vmatprep.subr.mxu0 0.0
      %3890 = vmatpush1.msra.mxu0 0.0
      %3891 = vmatprep.subr.mxu0 0.0
      %3892 = vmatpush1.msra.mxu0 0.0
      %3893 = vmatprep.subr.mxu0 0.0
      %3894 = vmatpush1.msra.mxu0 0.0
      %3895 = vmatprep.subr.mxu0 0.0
      %3896 = vmatpush1.msra.mxu0 0.0
      %3897 = vmatprep.subr.mxu0 0.0
      %3898 = vmatpush1.msra.mxu0 0.0
      %3899 = vmatprep.subr.mxu0 %v3870
      %3900 = vmatpush1.msra.mxu0 %v3869
      %3901 = vmatprep.subr.mxu0 %v3868
      %3902 = vmatpush1.msra.mxu0 %v3867
      %3903 = vmatprep.subr.mxu0 0.0
      %3904 = vmatpush2.msra.mxu0 0.0
      %3905 = vmatprep.subr.mxu0 0.0
      %3906 = vmatpush2.msra.mxu0 0.0
      %3907 = vmatprep.subr.mxu0 0.0
      %3908 = vmatpush2.msra.mxu0 0.0
      %3909 = vmatprep.subr.mxu0 0.0
      %3910 = vmatpush2.msra.mxu0 0.0
      %3911 = vmatprep.subr.mxu0 0.0
      %3912 = vmatpush2.msra.mxu0 0.0
      %3913 = vmatprep.subr.mxu0 0.0
      %3914 = vmatpush2.msra.mxu0 0.0
      %3915 = vmatprep.subr.mxu0 0.0
      %3916 = vmatpush2.msra.mxu0 0.0
      %3917 = vmatprep.subr.mxu0 0.0
      %3918 = vmatpush2.msra.mxu0 0.0
      %3919 = vmatprep.subr.mxu0 0.0
      %3920 = vmatpush2.msra.mxu0 0.0
      %3921 = vmatprep.subr.mxu0 0.0
      %3922 = vmatpush2.msra.mxu0 0.0
      %3923 = vmatprep.subr.mxu0 0.0
      %3924 = vmatpush2.msra.mxu0 0.0
      %3925 = vmatprep.subr.mxu0 0.0
      %3926 = vmatpush2.msra.mxu0 0.0
      %3927 = vmatprep.subr.mxu0 0.0
      %3928 = vmatpush2.msra.mxu0 0.0
      %3929 = vmatprep.subr.mxu0 0.0
      %3930 = vmatpush2.msra.mxu0 0.0
      %3931 = vmatprep.subr.mxu0 0.0
      %3932 = vmatpush2.msra.mxu0 0.0
      %3933 = vmatprep.subr.mxu0 0.0
      %3934 = vmatpush2.msra.mxu0 0.0
      %3935 = vmatprep.mubr.f32.mxu0 0.0
      %3936 = vmatmul.mubr.f32.gmra.mxu0 %v362
      %v3937 = vpop.f32.mrf.mxu0
      %v3938 = vadd.f32 %v313, %v3937
      %v3939 = vpop.f32.mrf.mxu0
      %v3940 = vadd.f32 %v313, %v3939
      %3941 = vmatprep.mubr.f32.mxu0 0.0
      %3942 = vmatmul.mubr.f32.gmra.mxu0 %v365
      %v3943 = vpop.f32.mrf.mxu0
      %v3944 = vadd.f32 %v318, %v3943
      %v3945 = vpop.f32.mrf.mxu0
      %v3946 = vadd.f32 %v318, %v3945
      %3947 = vmatprep.mubr.f32.mxu0 0.0
      %3948 = vmatmul.mubr.f32.gmra.mxu0 %v368
      %v3949 = vpop.f32.mrf.mxu0
      %v3950 = vadd.f32 %v323, %v3949
      %v3951 = vpop.f32.mrf.mxu0
      %v3952 = vadd.f32 %v323, %v3951
      %3953 = vmatprep.mubr.f32.mxu0 0.0
      %3954 = vmatmul.mubr.f32.gmra.mxu0 %v371
      %v3955 = vpop.f32.mrf.mxu0
      %v3956 = vadd.f32 %v328, %v3955
      %v3957 = vpop.f32.mrf.mxu0
      %v3958 = vadd.f32 %v328, %v3957
      %3959 = vmatprep.mubr.f32.mxu0 0.0
      %3960 = vmatmul.mubr.f32.gmra.mxu0 %v374
      %v3961 = vpop.f32.mrf.mxu0
      %v3962 = vadd.f32 %v333, %v3961
      %v3963 = vpop.f32.mrf.mxu0
      %v3964 = vadd.f32 %v333, %v3963
      %3965 = vmatprep.mubr.f32.mxu0 0.0
      %3966 = vmatmul.mubr.f32.gmra.mxu0 %v377
      %v3967 = vpop.f32.mrf.mxu0
      %v3968 = vadd.f32 %v338, %v3967
      %v3969 = vpop.f32.mrf.mxu0
      %v3970 = vadd.f32 %v338, %v3969
      %3971 = vmatprep.mubr.f32.mxu0 0.0
      %3972 = vmatmul.mubr.f32.gmra.mxu0 %v380
      %v3973 = vpop.f32.mrf.mxu0
      %v3974 = vadd.f32 %v343, %v3973
      %v3975 = vpop.f32.mrf.mxu0
      %v3976 = vadd.f32 %v343, %v3975
      %3977 = vmatprep.mubr.f32.mxu0 0.0
      %3978 = vmatmul.mubr.f32.gmra.mxu0 %v383
      %v3979 = vpop.f32.mrf.mxu0
      %v3980 = vadd.f32 %v348, %v3979
      %v3981 = vpop.f32.mrf.mxu0
      %v3982 = vadd.f32 %v348, %v3981
      %3983 = vmatprep.mubr.f32.mxu0 0.0
      %3984 = vmatmul.mubr.f32.gmra.mxu0 %v386
      %v3985 = vpop.f32.mrf.mxu0
      %v3986 = vadd.f32 %v353, %v3985
      %v3987 = vpop.f32.mrf.mxu0
      %v3988 = vadd.f32 %v353, %v3987
      %3989 = vmatprep.mubr.f32.mxu0 0.0
      %3990 = vmatmul.mubr.f32.gmra.mxu0 %v389
      %v3991 = vpop.f32.mrf.mxu0
      %v3992 = vadd.f32 %v358, %v3991
      %v3993 = vpop.f32.mrf.mxu0
      %v3994 = vadd.f32 %v358, %v3993
      %3995 = vdwg.mxu0
      %v3996 = vmax.f32 %v3938, 0.0
      %v3997 = vmax.f32 %v3940, 0.0
      %v3998 = vmax.f32 %v3944, 0.0
      %v3999 = vmax.f32 %v3946, 0.0
      %v4000 = vmax.f32 %v3950, 0.0
      %v4001 = vmax.f32 %v3952, 0.0
      %v4002 = vmax.f32 %v3956, 0.0
      %v4003 = vmax.f32 %v3958, 0.0
      %v4004 = vand.u32 2147483647, %v3996
      %vm4005 = vcmp.le.f32.partialorder %v4004, 0.7853982
      %vm4006 = vcmp.lt.s32.totalorder %v3996, 0
      %v4007 = vand.u32 %v3996, 2139095040
      %v4008 = vshrl.u32 %v4007, 23
      %v4009 = vsub.s32 %v4008, 127
      %v4010 = vand.u32 2147483647, %v3996
      %v4011 = vand.u32 %v4010, 8388607
      %v4012 = vor.u32 %v4011, 8388608
      %v4013 = vsub.s32 0, %v4012
      %v4014 = vadd.s32 %v4009, 1
      %vm4015 = vcmp.gt.s32.totalorder %v4014, 0
      %v4016 = vsel %vm4015, %v4014, 0
      %v4017 = vshrl.u32 %v4016, 5
      %v4018 = vand.u32 %v4016, 31
      %v4019 = vsub.s32 32, %v4018
      %v4020 = vshrl.u32 683565275, %v4019
      %v4021 = vshll.u32 683565275, %v4018
      %v4022 = vshrl.u32 2475754826, %v4019
      %v4023 = vor.u32 %v4021, %v4022
      %v4024 = vshll.u32 2475754826, %v4018
      %v4025 = vshrl.u32 2131351028, %v4019
      %v4026 = vor.u32 %v4024, %v4025
      %v4027 = vshll.u32 2131351028, %v4018
      %v4028 = vshrl.u32 2102212464, %v4019
      %v4029 = vor.u32 %v4027, %v4028
      %v4030 = vshll.u32 2102212464, %v4018
      %v4031 = vshrl.u32 920167782, %v4019
      %v4032 = vor.u32 %v4030, %v4031
      %v4033 = vshll.u32 920167782, %v4018
      %v4034 = vshrl.u32 1326507024, %v4019
      %v4035 = vor.u32 %v4033, %v4034
      %vm4036 = vcmp.lt.s32.totalorder %v4017, 1
      %vm4037 = vcmp.lt.s32.totalorder %v4017, 2
      %vm4038 = vcmp.lt.s32.totalorder %v4017, 3
      %vm4039 = vcmp.lt.s32.totalorder %v4017, 4
      %v4040 = vsel %vm4036, %v4020, %v4023
      %v4041 = vsel %vm4039, %v4029, 2102212464
      %v4042 = vsel %vm4038, %v4026, %v4041
      %v4043 = vsel %vm4037, %v4040, %v4042
      %v4044 = vsel %vm4036, %v4023, %v4026
      %v4045 = vsel %vm4039, %v4032, 920167782
      %v4046 = vsel %vm4038, %v4029, %v4045
      %v4047 = vsel %vm4037, %v4044, %v4046
      %v4048 = vsel %vm4036, %v4026, %v4029
      %v4049 = vsel %vm4039, %v4035, 1326507024
      %v4050 = vsel %vm4038, %v4032, %v4049
      %v4051 = vsel %vm4037, %v4048, %v4050
      %v4052 = vshll.u32 %v4012, 8
      %v4053 = vmul.u32.u64.compose %v4052, %v4051
      %v4054 = vextract.low.u32 %v4053
      %v4055 = vextract.high.u32 %v4053
      %v4056 = vmul.u32.u64.compose %v4052, %v4047
      %v4057 = vextract.low.u32 %v4056
      %v4058 = vextract.high.u32 %v4056
      %v4059 = vmul.u32 %v4052, %v4043
      %v4060 = vadd.s32 %v4055, %v4057
      %vm4061 = vc.u32 %v4055, %v4057
      %v4062 = vadd.s32 %v4058, 1
      %v4063 = vsel %vm4061, %v4062, %v4058
      %v4064 = vadd.s32 %v4059, %v4063
      %v4065 = vadd.s32 %v4064, 536870912
      %v4066 = vshrl.u32 %v4065, 30
      %v4067 = vshll.u32 %v4066, 30
      %v4068 = vsub.s32 %v4064, %v4067
      %vm4069 = vcmp.lt.s32.totalorder %v4068, 0
      %v4070 = vsub.s32 0, %v4068
      %v4071 = vsel %vm4069, %v4070, %v4068
      %v4072 = vclz %v4071
      %v4073 = vsub.s32 %v4072, 2
      %vm4074 = vcmp.gt.s32.totalorder 0, %v4073
      %v4075 = vsel %vm4074, 0, %v4073
      %v4076 = vsub.s32 32, %v4075
      %v4077 = vshll.u32 %v4068, %v4075
      %v4078 = vshrl.u32 %v4060, %v4076
      %v4079 = vor.u32 %v4077, %v4078
      %v4080 = vsub.s32 4294967266, %v4075
      %v4081 = vadd.s32 %v4080, 127
      %v4082 = vshll.u32 %v4081, 23
      %v4083 = vor.u32 4788187, %v4082
      %v4084 = vand.u32 2147483647, %v4083
      %v4086 = vcvt.s32.f32 %v4079
      %v4087 = vmul.f32 %v4086, %v4084
      %v4088 = vxor.u32 %v4087, 2147483648
      %v4089 = vsel %vm4006, %v4088, %v4087
      %v4090 = vsub.s32 4, %v4066
      %v4091 = vsel %vm4006, %v4090, %v4066
      %v4092 = vsel %vm4005, %v3996, %v4089
      %v4093 = vsel %vm4005, 0, %v4091
      %v4094 = vcosq.f32.pop %v4092
      %v4095 = vsinq.f32.pop %v4092
      %vm4096 = vweird.f32 %v3996
      %v4097 = vand.u32 %v4093, 3
      %vm4098 = vcmp.lt.s32.totalorder %v4097, 2
      %vm4099 = vcmp.eq.s32.totalorder %v4097, 0
      %v4100 = vxor.u32 %v4095, 2147483648
      %v4101 = vsel %vm4099, %v4094, %v4100
      %vm4102 = vcmp.eq.s32.totalorder %v4097, 2
      %v4103 = vxor.u32 %v4094, 2147483648
      %v4104 = vsel %vm4102, %v4103, %v4095
      %v4105 = vsel %vm4098, %v4101, %v4104
      %v4106 = vsel %vm4096, nan, %v4105
      %v4107 = vand.u32 2147483647, %v3997
      %vm4108 = vcmp.le.f32.partialorder %v4107, 0.7853982
      %vm4109 = vcmp.lt.s32.totalorder %v3997, 0
      %v4110 = vand.u32 %v3997, 2139095040
      %v4111 = vshrl.u32 %v4110, 23
      %v4112 = vsub.s32 %v4111, 127
      %v4113 = vand.u32 2147483647, %v3997
      %v4114 = vand.u32 %v4113, 8388607
      %v4115 = vor.u32 %v4114, 8388608
      %v4116 = vsub.s32 0, %v4115
      %v4117 = vadd.s32 %v4112, 1
      %vm4118 = vcmp.gt.s32.totalorder %v4117, 0
      %v4119 = vsel %vm4118, %v4117, 0
      %v4120 = vshrl.u32 %v4119, 5
      %v4121 = vand.u32 %v4119, 31
      %v4122 = vsub.s32 32, %v4121
      %v4123 = vshrl.u32 683565275, %v4122
      %v4124 = vshll.u32 683565275, %v4121
      %v4125 = vshrl.u32 2475754826, %v4122
      %v4126 = vor.u32 %v4124, %v4125
      %v4127 = vshll.u32 2475754826, %v4121
      %v4128 = vshrl.u32 2131351028, %v4122
      %v4129 = vor.u32 %v4127, %v4128
      %v4130 = vshll.u32 2131351028, %v4121
      %v4131 = vshrl.u32 2102212464, %v4122
      %v4132 = vor.u32 %v4130, %v4131
      %v4133 = vshll.u32 2102212464, %v4121
      %v4134 = vshrl.u32 920167782, %v4122
      %v4135 = vor.u32 %v4133, %v4134
      %v4136 = vshll.u32 920167782, %v4121
      %v4137 = vshrl.u32 1326507024, %v4122
      %v4138 = vor.u32 %v4136, %v4137
      %vm4139 = vcmp.lt.s32.totalorder %v4120, 1
      %vm4140 = vcmp.lt.s32.totalorder %v4120, 2
      %vm4141 = vcmp.lt.s32.totalorder %v4120, 3
      %vm4142 = vcmp.lt.s32.totalorder %v4120, 4
      %v4143 = vsel %vm4139, %v4123, %v4126
      %v4144 = vsel %vm4142, %v4132, 2102212464
      %v4145 = vsel %vm4141, %v4129, %v4144
      %v4146 = vsel %vm4140, %v4143, %v4145
      %v4147 = vsel %vm4139, %v4126, %v4129
      %v4148 = vsel %vm4142, %v4135, 920167782
      %v4149 = vsel %vm4141, %v4132, %v4148
      %v4150 = vsel %vm4140, %v4147, %v4149
      %v4151 = vsel %vm4139, %v4129, %v4132
      %v4152 = vsel %vm4142, %v4138, 1326507024
      %v4153 = vsel %vm4141, %v4135, %v4152
      %v4154 = vsel %vm4140, %v4151, %v4153
      %v4155 = vshll.u32 %v4115, 8
      %v4156 = vmul.u32.u64.compose %v4155, %v4154
      %v4157 = vextract.low.u32 %v4156
      %v4158 = vextract.high.u32 %v4156
      %v4159 = vmul.u32.u64.compose %v4155, %v4150
      %v4160 = vextract.low.u32 %v4159
      %v4161 = vextract.high.u32 %v4159
      %v4162 = vmul.u32 %v4155, %v4146
      %v4163 = vadd.s32 %v4158, %v4160
      %vm4164 = vc.u32 %v4158, %v4160
      %v4165 = vadd.s32 %v4161, 1
      %v4166 = vsel %vm4164, %v4165, %v4161
      %v4167 = vadd.s32 %v4162, %v4166
      %v4168 = vadd.s32 %v4167, 536870912
      %v4169 = vshrl.u32 %v4168, 30
      %v4170 = vshll.u32 %v4169, 30
      %v4171 = vsub.s32 %v4167, %v4170
      %vm4172 = vcmp.lt.s32.totalorder %v4171, 0
      %v4173 = vsub.s32 0, %v4171
      %v4174 = vsel %vm4172, %v4173, %v4171
      %v4175 = vclz %v4174
      %v4176 = vsub.s32 %v4175, 2
      %vm4177 = vcmp.gt.s32.totalorder 0, %v4176
      %v4178 = vsel %vm4177, 0, %v4176
      %v4179 = vsub.s32 32, %v4178
      %v4180 = vshll.u32 %v4171, %v4178
      %v4181 = vshrl.u32 %v4163, %v4179
      %v4182 = vor.u32 %v4180, %v4181
      %v4183 = vsub.s32 4294967266, %v4178
      %v4184 = vadd.s32 %v4183, 127
      %v4185 = vshll.u32 %v4184, 23
      %v4186 = vor.u32 4788187, %v4185
      %v4187 = vand.u32 2147483647, %v4186
      %v4189 = vcvt.s32.f32 %v4182
      %v4190 = vmul.f32 %v4189, %v4187
      %v4191 = vxor.u32 %v4190, 2147483648
      %v4192 = vsel %vm4109, %v4191, %v4190
      %v4193 = vsub.s32 4, %v4169
      %v4194 = vsel %vm4109, %v4193, %v4169
      %v4195 = vsel %vm4108, %v3997, %v4192
      %v4196 = vsel %vm4108, 0, %v4194
      %v4197 = vcosq.f32.pop %v4195
      %v4198 = vsinq.f32.pop %v4195
      %vm4199 = vweird.f32 %v3997
      %v4200 = vand.u32 %v4196, 3
      %vm4201 = vcmp.lt.s32.totalorder %v4200, 2
      %vm4202 = vcmp.eq.s32.totalorder %v4200, 0
      %v4203 = vxor.u32 %v4198, 2147483648
      %v4204 = vsel %vm4202, %v4197, %v4203
      %vm4205 = vcmp.eq.s32.totalorder %v4200, 2
      %v4206 = vxor.u32 %v4197, 2147483648
      %v4207 = vsel %vm4205, %v4206, %v4198
      %v4208 = vsel %vm4201, %v4204, %v4207
      %v4209 = vsel %vm4199, nan, %v4208
      %v4210 = vand.u32 2147483647, %v3998
      %vm4211 = vcmp.le.f32.partialorder %v4210, 0.7853982
      %vm4212 = vcmp.lt.s32.totalorder %v3998, 0
      %v4213 = vand.u32 %v3998, 2139095040
      %v4214 = vshrl.u32 %v4213, 23
      %v4215 = vsub.s32 %v4214, 127
      %v4216 = vand.u32 2147483647, %v3998
      %v4217 = vand.u32 %v4216, 8388607
      %v4218 = vor.u32 %v4217, 8388608
      %v4219 = vsub.s32 0, %v4218
      %v4220 = vadd.s32 %v4215, 1
      %vm4221 = vcmp.gt.s32.totalorder %v4220, 0
      %v4222 = vsel %vm4221, %v4220, 0
      %v4223 = vshrl.u32 %v4222, 5
      %v4224 = vand.u32 %v4222, 31
      %v4225 = vsub.s32 32, %v4224
      %v4226 = vshrl.u32 683565275, %v4225
      %v4227 = vshll.u32 683565275, %v4224
      %v4228 = vshrl.u32 2475754826, %v4225
      %v4229 = vor.u32 %v4227, %v4228
      %v4230 = vshll.u32 2475754826, %v4224
      %v4231 = vshrl.u32 2131351028, %v4225
      %v4232 = vor.u32 %v4230, %v4231
      %v4233 = vshll.u32 2131351028, %v4224
      %v4234 = vshrl.u32 2102212464, %v4225
      %v4235 = vor.u32 %v4233, %v4234
      %v4236 = vshll.u32 2102212464, %v4224
      %v4237 = vshrl.u32 920167782, %v4225
      %v4238 = vor.u32 %v4236, %v4237
      %v4239 = vshll.u32 920167782, %v4224
      %v4240 = vshrl.u32 1326507024, %v4225
      %v4241 = vor.u32 %v4239, %v4240
      %vm4242 = vcmp.lt.s32.totalorder %v4223, 1
      %vm4243 = vcmp.lt.s32.totalorder %v4223, 2
      %vm4244 = vcmp.lt.s32.totalorder %v4223, 3
      %vm4245 = vcmp.lt.s32.totalorder %v4223, 4
      %v4246 = vsel %vm4242, %v4226, %v4229
      %v4247 = vsel %vm4245, %v4235, 2102212464
      %v4248 = vsel %vm4244, %v4232, %v4247
      %v4249 = vsel %vm4243, %v4246, %v4248
      %v4250 = vsel %vm4242, %v4229, %v4232
      %v4251 = vsel %vm4245, %v4238, 920167782
      %v4252 = vsel %vm4244, %v4235, %v4251
      %v4253 = vsel %vm4243, %v4250, %v4252
      %v4254 = vsel %vm4242, %v4232, %v4235
      %v4255 = vsel %vm4245, %v4241, 1326507024
      %v4256 = vsel %vm4244, %v4238, %v4255
      %v4257 = vsel %vm4243, %v4254, %v4256
      %v4258 = vshll.u32 %v4218, 8
      %v4259 = vmul.u32.u64.compose %v4258, %v4257
      %v4260 = vextract.low.u32 %v4259
      %v4261 = vextract.high.u32 %v4259
      %v4262 = vmul.u32.u64.compose %v4258, %v4253
      %v4263 = vextract.low.u32 %v4262
      %v4264 = vextract.high.u32 %v4262
      %v4265 = vmul.u32 %v4258, %v4249
      %v4266 = vadd.s32 %v4261, %v4263
      %vm4267 = vc.u32 %v4261, %v4263
      %v4268 = vadd.s32 %v4264, 1
      %v4269 = vsel %vm4267, %v4268, %v4264
      %v4270 = vadd.s32 %v4265, %v4269
      %v4271 = vadd.s32 %v4270, 536870912
      %v4272 = vshrl.u32 %v4271, 30
      %v4273 = vshll.u32 %v4272, 30
      %v4274 = vsub.s32 %v4270, %v4273
      %vm4275 = vcmp.lt.s32.totalorder %v4274, 0
      %v4276 = vsub.s32 0, %v4274
      %v4277 = vsel %vm4275, %v4276, %v4274
      %v4278 = vclz %v4277
      %v4279 = vsub.s32 %v4278, 2
      %vm4280 = vcmp.gt.s32.totalorder 0, %v4279
      %v4281 = vsel %vm4280, 0, %v4279
      %v4282 = vsub.s32 32, %v4281
      %v4283 = vshll.u32 %v4274, %v4281
      %v4284 = vshrl.u32 %v4266, %v4282
      %v4285 = vor.u32 %v4283, %v4284
      %v4286 = vsub.s32 4294967266, %v4281
      %v4287 = vadd.s32 %v4286, 127
      %v4288 = vshll.u32 %v4287, 23
      %v4289 = vor.u32 4788187, %v4288
      %v4290 = vand.u32 2147483647, %v4289
      %v4292 = vcvt.s32.f32 %v4285
      %v4293 = vmul.f32 %v4292, %v4290
      %v4294 = vxor.u32 %v4293, 2147483648
      %v4295 = vsel %vm4212, %v4294, %v4293
      %v4296 = vsub.s32 4, %v4272
      %v4297 = vsel %vm4212, %v4296, %v4272
      %v4298 = vsel %vm4211, %v3998, %v4295
      %v4299 = vsel %vm4211, 0, %v4297
      %v4300 = vcosq.f32.pop %v4298
      %v4301 = vsinq.f32.pop %v4298
      %vm4302 = vweird.f32 %v3998
      %v4303 = vand.u32 %v4299, 3
      %vm4304 = vcmp.lt.s32.totalorder %v4303, 2
      %vm4305 = vcmp.eq.s32.totalorder %v4303, 0
      %v4306 = vxor.u32 %v4301, 2147483648
      %v4307 = vsel %vm4305, %v4300, %v4306
      %vm4308 = vcmp.eq.s32.totalorder %v4303, 2
      %v4309 = vxor.u32 %v4300, 2147483648
      %v4310 = vsel %vm4308, %v4309, %v4301
      %v4311 = vsel %vm4304, %v4307, %v4310
      %v4312 = vsel %vm4302, nan, %v4311
      %v4313 = vand.u32 2147483647, %v3999
      %vm4314 = vcmp.le.f32.partialorder %v4313, 0.7853982
      %vm4315 = vcmp.lt.s32.totalorder %v3999, 0
      %v4316 = vand.u32 %v3999, 2139095040
      %v4317 = vshrl.u32 %v4316, 23
      %v4318 = vsub.s32 %v4317, 127
      %v4319 = vand.u32 2147483647, %v3999
      %v4320 = vand.u32 %v4319, 8388607
      %v4321 = vor.u32 %v4320, 8388608
      %v4322 = vsub.s32 0, %v4321
      %v4323 = vadd.s32 %v4318, 1
      %vm4324 = vcmp.gt.s32.totalorder %v4323, 0
      %v4325 = vsel %vm4324, %v4323, 0
      %v4326 = vshrl.u32 %v4325, 5
      %v4327 = vand.u32 %v4325, 31
      %v4328 = vsub.s32 32, %v4327
      %v4329 = vshrl.u32 683565275, %v4328
      %v4330 = vshll.u32 683565275, %v4327
      %v4331 = vshrl.u32 2475754826, %v4328
      %v4332 = vor.u32 %v4330, %v4331
      %v4333 = vshll.u32 2475754826, %v4327
      %v4334 = vshrl.u32 2131351028, %v4328
      %v4335 = vor.u32 %v4333, %v4334
      %v4336 = vshll.u32 2131351028, %v4327
      %v4337 = vshrl.u32 2102212464, %v4328
      %v4338 = vor.u32 %v4336, %v4337
      %v4339 = vshll.u32 2102212464, %v4327
      %v4340 = vshrl.u32 920167782, %v4328
      %v4341 = vor.u32 %v4339, %v4340
      %v4342 = vshll.u32 920167782, %v4327
      %v4343 = vshrl.u32 1326507024, %v4328
      %v4344 = vor.u32 %v4342, %v4343
      %vm4345 = vcmp.lt.s32.totalorder %v4326, 1
      %vm4346 = vcmp.lt.s32.totalorder %v4326, 2
      %vm4347 = vcmp.lt.s32.totalorder %v4326, 3
      %vm4348 = vcmp.lt.s32.totalorder %v4326, 4
      %v4349 = vsel %vm4345, %v4329, %v4332
      %v4350 = vsel %vm4348, %v4338, 2102212464
      %v4351 = vsel %vm4347, %v4335, %v4350
      %v4352 = vsel %vm4346, %v4349, %v4351
      %v4353 = vsel %vm4345, %v4332, %v4335
      %v4354 = vsel %vm4348, %v4341, 920167782
      %v4355 = vsel %vm4347, %v4338, %v4354
      %v4356 = vsel %vm4346, %v4353, %v4355
      %v4357 = vsel %vm4345, %v4335, %v4338
      %v4358 = vsel %vm4348, %v4344, 1326507024
      %v4359 = vsel %vm4347, %v4341, %v4358
      %v4360 = vsel %vm4346, %v4357, %v4359
      %v4361 = vshll.u32 %v4321, 8
      %v4362 = vmul.u32.u64.compose %v4361, %v4360
      %v4363 = vextract.low.u32 %v4362
      %v4364 = vextract.high.u32 %v4362
      %v4365 = vmul.u32.u64.compose %v4361, %v4356
      %v4366 = vextract.low.u32 %v4365
      %v4367 = vextract.high.u32 %v4365
      %v4368 = vmul.u32 %v4361, %v4352
      %v4369 = vadd.s32 %v4364, %v4366
      %vm4370 = vc.u32 %v4364, %v4366
      %v4371 = vadd.s32 %v4367, 1
      %v4372 = vsel %vm4370, %v4371, %v4367
      %v4373 = vadd.s32 %v4368, %v4372
      %v4374 = vadd.s32 %v4373, 536870912
      %v4375 = vshrl.u32 %v4374, 30
      %v4376 = vshll.u32 %v4375, 30
      %v4377 = vsub.s32 %v4373, %v4376
      %vm4378 = vcmp.lt.s32.totalorder %v4377, 0
      %v4379 = vsub.s32 0, %v4377
      %v4380 = vsel %vm4378, %v4379, %v4377
      %v4381 = vclz %v4380
      %v4382 = vsub.s32 %v4381, 2
      %vm4383 = vcmp.gt.s32.totalorder 0, %v4382
      %v4384 = vsel %vm4383, 0, %v4382
      %v4385 = vsub.s32 32, %v4384
      %v4386 = vshll.u32 %v4377, %v4384
      %v4387 = vshrl.u32 %v4369, %v4385
      %v4388 = vor.u32 %v4386, %v4387
      %v4389 = vsub.s32 4294967266, %v4384
      %v4390 = vadd.s32 %v4389, 127
      %v4391 = vshll.u32 %v4390, 23
      %v4392 = vor.u32 4788187, %v4391
      %v4393 = vand.u32 2147483647, %v4392
      %v4395 = vcvt.s32.f32 %v4388
      %v4396 = vmul.f32 %v4395, %v4393
      %v4397 = vxor.u32 %v4396, 2147483648
      %v4398 = vsel %vm4315, %v4397, %v4396
      %v4399 = vsub.s32 4, %v4375
      %v4400 = vsel %vm4315, %v4399, %v4375
      %v4401 = vsel %vm4314, %v3999, %v4398
      %v4402 = vsel %vm4314, 0, %v4400
      %v4403 = vcosq.f32.pop %v4401
      %v4404 = vsinq.f32.pop %v4401
      %vm4405 = vweird.f32 %v3999
      %v4406 = vand.u32 %v4402, 3
      %vm4407 = vcmp.lt.s32.totalorder %v4406, 2
      %vm4408 = vcmp.eq.s32.totalorder %v4406, 0
      %v4409 = vxor.u32 %v4404, 2147483648
      %v4410 = vsel %vm4408, %v4403, %v4409
      %vm4411 = vcmp.eq.s32.totalorder %v4406, 2
      %v4412 = vxor.u32 %v4403, 2147483648
      %v4413 = vsel %vm4411, %v4412, %v4404
      %v4414 = vsel %vm4407, %v4410, %v4413
      %v4415 = vsel %vm4405, nan, %v4414
      %v4416 = vmul.f32 %v3962, %v4106
      %v4417 = vmul.f32 %v3964, %v4209
      %v4418 = vmul.f32 %v3968, %v4312
      %v4419 = vmul.f32 %v3970, %v4415
      %v4420 = vand.u32 2147483647, %v3996
      %vm4421 = vcmp.le.f32.partialorder %v4420, 0.7853982
      %vm4422 = vcmp.lt.s32.totalorder %v3996, 0
      %v4423 = vand.u32 %v3996, 2139095040
      %v4424 = vshrl.u32 %v4423, 23
      %v4425 = vsub.s32 %v4424, 127
      %v4426 = vand.u32 2147483647, %v3996
      %v4427 = vand.u32 %v4426, 8388607
      %v4428 = vor.u32 %v4427, 8388608
      %v4429 = vsub.s32 0, %v4428
      %v4430 = vadd.s32 %v4425, 1
      %vm4431 = vcmp.gt.s32.totalorder %v4430, 0
      %v4432 = vsel %vm4431, %v4430, 0
      %v4433 = vshrl.u32 %v4432, 5
      %v4434 = vand.u32 %v4432, 31
      %v4435 = vsub.s32 32, %v4434
      %v4436 = vshrl.u32 683565275, %v4435
      %v4437 = vshll.u32 683565275, %v4434
      %v4438 = vshrl.u32 2475754826, %v4435
      %v4439 = vor.u32 %v4437, %v4438
      %v4440 = vshll.u32 2475754826, %v4434
      %v4441 = vshrl.u32 2131351028, %v4435
      %v4442 = vor.u32 %v4440, %v4441
      %v4443 = vshll.u32 2131351028, %v4434
      %v4444 = vshrl.u32 2102212464, %v4435
      %v4445 = vor.u32 %v4443, %v4444
      %v4446 = vshll.u32 2102212464, %v4434
      %v4447 = vshrl.u32 920167782, %v4435
      %v4448 = vor.u32 %v4446, %v4447
      %v4449 = vshll.u32 920167782, %v4434
      %v4450 = vshrl.u32 1326507024, %v4435
      %v4451 = vor.u32 %v4449, %v4450
      %vm4452 = vcmp.lt.s32.totalorder %v4433, 1
      %vm4453 = vcmp.lt.s32.totalorder %v4433, 2
      %vm4454 = vcmp.lt.s32.totalorder %v4433, 3
      %vm4455 = vcmp.lt.s32.totalorder %v4433, 4
      %v4456 = vsel %vm4452, %v4436, %v4439
      %v4457 = vsel %vm4455, %v4445, 2102212464
      %v4458 = vsel %vm4454, %v4442, %v4457
      %v4459 = vsel %vm4453, %v4456, %v4458
      %v4460 = vsel %vm4452, %v4439, %v4442
      %v4461 = vsel %vm4455, %v4448, 920167782
      %v4462 = vsel %vm4454, %v4445, %v4461
      %v4463 = vsel %vm4453, %v4460, %v4462
      %v4464 = vsel %vm4452, %v4442, %v4445
      %v4465 = vsel %vm4455, %v4451, 1326507024
      %v4466 = vsel %vm4454, %v4448, %v4465
      %v4467 = vsel %vm4453, %v4464, %v4466
      %v4468 = vshll.u32 %v4428, 8
      %v4469 = vmul.u32.u64.compose %v4468, %v4467
      %v4470 = vextract.low.u32 %v4469
      %v4471 = vextract.high.u32 %v4469
      %v4472 = vmul.u32.u64.compose %v4468, %v4463
      %v4473 = vextract.low.u32 %v4472
      %v4474 = vextract.high.u32 %v4472
      %v4475 = vmul.u32 %v4468, %v4459
      %v4476 = vadd.s32 %v4471, %v4473
      %vm4477 = vc.u32 %v4471, %v4473
      %v4478 = vadd.s32 %v4474, 1
      %v4479 = vsel %vm4477, %v4478, %v4474
      %v4480 = vadd.s32 %v4475, %v4479
      %v4481 = vadd.s32 %v4480, 536870912
      %v4482 = vshrl.u32 %v4481, 30
      %v4483 = vshll.u32 %v4482, 30
      %v4484 = vsub.s32 %v4480, %v4483
      %vm4485 = vcmp.lt.s32.totalorder %v4484, 0
      %v4486 = vsub.s32 0, %v4484
      %v4487 = vsel %vm4485, %v4486, %v4484
      %v4488 = vclz %v4487
      %v4489 = vsub.s32 %v4488, 2
      %vm4490 = vcmp.gt.s32.totalorder 0, %v4489
      %v4491 = vsel %vm4490, 0, %v4489
      %v4492 = vsub.s32 32, %v4491
      %v4493 = vshll.u32 %v4484, %v4491
      %v4494 = vshrl.u32 %v4476, %v4492
      %v4495 = vor.u32 %v4493, %v4494
      %v4496 = vsub.s32 4294967266, %v4491
      %v4497 = vadd.s32 %v4496, 127
      %v4498 = vshll.u32 %v4497, 23
      %v4499 = vor.u32 4788187, %v4498
      %v4500 = vand.u32 2147483647, %v4499
      %v4502 = vcvt.s32.f32 %v4495
      %v4503 = vmul.f32 %v4502, %v4500
      %v4504 = vxor.u32 %v4503, 2147483648
      %v4505 = vsel %vm4422, %v4504, %v4503
      %v4506 = vsub.s32 4, %v4482
      %v4507 = vsel %vm4422, %v4506, %v4482
      %v4508 = vsel %vm4421, %v3996, %v4505
      %v4509 = vsel %vm4421, 0, %v4507
      %v4510 = vcosq.f32.pop %v4508
      %v4511 = vsinq.f32.pop %v4508
      %vm4512 = vweird.f32 %v3996
      %v4513 = vadd.s32 %v4509, 3
      %v4514 = vand.u32 %v4513, 3
      %vm4515 = vcmp.lt.s32.totalorder %v4514, 2
      %vm4516 = vcmp.eq.s32.totalorder %v4514, 0
      %v4517 = vxor.u32 %v4511, 2147483648
      %v4518 = vsel %vm4516, %v4510, %v4517
      %vm4519 = vcmp.eq.s32.totalorder %v4514, 2
      %v4520 = vxor.u32 %v4510, 2147483648
      %v4521 = vsel %vm4519, %v4520, %v4511
      %v4522 = vsel %vm4515, %v4518, %v4521
      %v4523 = vsel %vm4512, nan, %v4522
      %v4524 = vand.u32 2147483647, %v3997
      %vm4525 = vcmp.le.f32.partialorder %v4524, 0.7853982
      %vm4526 = vcmp.lt.s32.totalorder %v3997, 0
      %v4527 = vand.u32 %v3997, 2139095040
      %v4528 = vshrl.u32 %v4527, 23
      %v4529 = vsub.s32 %v4528, 127
      %v4530 = vand.u32 2147483647, %v3997
      %v4531 = vand.u32 %v4530, 8388607
      %v4532 = vor.u32 %v4531, 8388608
      %v4533 = vsub.s32 0, %v4532
      %v4534 = vadd.s32 %v4529, 1
      %vm4535 = vcmp.gt.s32.totalorder %v4534, 0
      %v4536 = vsel %vm4535, %v4534, 0
      %v4537 = vshrl.u32 %v4536, 5
      %v4538 = vand.u32 %v4536, 31
      %v4539 = vsub.s32 32, %v4538
      %v4540 = vshrl.u32 683565275, %v4539
      %v4541 = vshll.u32 683565275, %v4538
      %v4542 = vshrl.u32 2475754826, %v4539
      %v4543 = vor.u32 %v4541, %v4542
      %v4544 = vshll.u32 2475754826, %v4538
      %v4545 = vshrl.u32 2131351028, %v4539
      %v4546 = vor.u32 %v4544, %v4545
      %v4547 = vshll.u32 2131351028, %v4538
      %v4548 = vshrl.u32 2102212464, %v4539
      %v4549 = vor.u32 %v4547, %v4548
      %v4550 = vshll.u32 2102212464, %v4538
      %v4551 = vshrl.u32 920167782, %v4539
      %v4552 = vor.u32 %v4550, %v4551
      %v4553 = vshll.u32 920167782, %v4538
      %v4554 = vshrl.u32 1326507024, %v4539
      %v4555 = vor.u32 %v4553, %v4554
      %vm4556 = vcmp.lt.s32.totalorder %v4537, 1
      %vm4557 = vcmp.lt.s32.totalorder %v4537, 2
      %vm4558 = vcmp.lt.s32.totalorder %v4537, 3
      %vm4559 = vcmp.lt.s32.totalorder %v4537, 4
      %v4560 = vsel %vm4556, %v4540, %v4543
      %v4561 = vsel %vm4559, %v4549, 2102212464
      %v4562 = vsel %vm4558, %v4546, %v4561
      %v4563 = vsel %vm4557, %v4560, %v4562
      %v4564 = vsel %vm4556, %v4543, %v4546
      %v4565 = vsel %vm4559, %v4552, 920167782
      %v4566 = vsel %vm4558, %v4549, %v4565
      %v4567 = vsel %vm4557, %v4564, %v4566
      %v4568 = vsel %vm4556, %v4546, %v4549
      %v4569 = vsel %vm4559, %v4555, 1326507024
      %v4570 = vsel %vm4558, %v4552, %v4569
      %v4571 = vsel %vm4557, %v4568, %v4570
      %v4572 = vshll.u32 %v4532, 8
      %v4573 = vmul.u32.u64.compose %v4572, %v4571
      %v4574 = vextract.low.u32 %v4573
      %v4575 = vextract.high.u32 %v4573
      %v4576 = vmul.u32.u64.compose %v4572, %v4567
      %v4577 = vextract.low.u32 %v4576
      %v4578 = vextract.high.u32 %v4576
      %v4579 = vmul.u32 %v4572, %v4563
      %v4580 = vadd.s32 %v4575, %v4577
      %vm4581 = vc.u32 %v4575, %v4577
      %v4582 = vadd.s32 %v4578, 1
      %v4583 = vsel %vm4581, %v4582, %v4578
      %v4584 = vadd.s32 %v4579, %v4583
      %v4585 = vadd.s32 %v4584, 536870912
      %v4586 = vshrl.u32 %v4585, 30
      %v4587 = vshll.u32 %v4586, 30
      %v4588 = vsub.s32 %v4584, %v4587
      %vm4589 = vcmp.lt.s32.totalorder %v4588, 0
      %v4590 = vsub.s32 0, %v4588
      %v4591 = vsel %vm4589, %v4590, %v4588
      %v4592 = vclz %v4591
      %v4593 = vsub.s32 %v4592, 2
      %vm4594 = vcmp.gt.s32.totalorder 0, %v4593
      %v4595 = vsel %vm4594, 0, %v4593
      %v4596 = vsub.s32 32, %v4595
      %v4597 = vshll.u32 %v4588, %v4595
      %v4598 = vshrl.u32 %v4580, %v4596
      %v4599 = vor.u32 %v4597, %v4598
      %v4600 = vsub.s32 4294967266, %v4595
      %v4601 = vadd.s32 %v4600, 127
      %v4602 = vshll.u32 %v4601, 23
      %v4603 = vor.u32 4788187, %v4602
      %v4604 = vand.u32 2147483647, %v4603
      %v4606 = vcvt.s32.f32 %v4599
      %v4607 = vmul.f32 %v4606, %v4604
      %v4608 = vxor.u32 %v4607, 2147483648
      %v4609 = vsel %vm4526, %v4608, %v4607
      %v4610 = vsub.s32 4, %v4586
      %v4611 = vsel %vm4526, %v4610, %v4586
      %v4612 = vsel %vm4525, %v3997, %v4609
      %v4613 = vsel %vm4525, 0, %v4611
      %v4614 = vcosq.f32.pop %v4612
      %v4615 = vsinq.f32.pop %v4612
      %vm4616 = vweird.f32 %v3997
      %v4617 = vadd.s32 %v4613, 3
      %v4618 = vand.u32 %v4617, 3
      %vm4619 = vcmp.lt.s32.totalorder %v4618, 2
      %vm4620 = vcmp.eq.s32.totalorder %v4618, 0
      %v4621 = vxor.u32 %v4615, 2147483648
      %v4622 = vsel %vm4620, %v4614, %v4621
      %vm4623 = vcmp.eq.s32.totalorder %v4618, 2
      %v4624 = vxor.u32 %v4614, 2147483648
      %v4625 = vsel %vm4623, %v4624, %v4615
      %v4626 = vsel %vm4619, %v4622, %v4625
      %v4627 = vsel %vm4616, nan, %v4626
      %v4628 = vand.u32 2147483647, %v3998
      %vm4629 = vcmp.le.f32.partialorder %v4628, 0.7853982
      %vm4630 = vcmp.lt.s32.totalorder %v3998, 0
      %v4631 = vand.u32 %v3998, 2139095040
      %v4632 = vshrl.u32 %v4631, 23
      %v4633 = vsub.s32 %v4632, 127
      %v4634 = vand.u32 2147483647, %v3998
      %v4635 = vand.u32 %v4634, 8388607
      %v4636 = vor.u32 %v4635, 8388608
      %v4637 = vsub.s32 0, %v4636
      %v4638 = vadd.s32 %v4633, 1
      %vm4639 = vcmp.gt.s32.totalorder %v4638, 0
      %v4640 = vsel %vm4639, %v4638, 0
      %v4641 = vshrl.u32 %v4640, 5
      %v4642 = vand.u32 %v4640, 31
      %v4643 = vsub.s32 32, %v4642
      %v4644 = vshrl.u32 683565275, %v4643
      %v4645 = vshll.u32 683565275, %v4642
      %v4646 = vshrl.u32 2475754826, %v4643
      %v4647 = vor.u32 %v4645, %v4646
      %v4648 = vshll.u32 2475754826, %v4642
      %v4649 = vshrl.u32 2131351028, %v4643
      %v4650 = vor.u32 %v4648, %v4649
      %v4651 = vshll.u32 2131351028, %v4642
      %v4652 = vshrl.u32 2102212464, %v4643
      %v4653 = vor.u32 %v4651, %v4652
      %v4654 = vshll.u32 2102212464, %v4642
      %v4655 = vshrl.u32 920167782, %v4643
      %v4656 = vor.u32 %v4654, %v4655
      %v4657 = vshll.u32 920167782, %v4642
      %v4658 = vshrl.u32 1326507024, %v4643
      %v4659 = vor.u32 %v4657, %v4658
      %vm4660 = vcmp.lt.s32.totalorder %v4641, 1
      %vm4661 = vcmp.lt.s32.totalorder %v4641, 2
      %vm4662 = vcmp.lt.s32.totalorder %v4641, 3
      %vm4663 = vcmp.lt.s32.totalorder %v4641, 4
      %v4664 = vsel %vm4660, %v4644, %v4647
      %v4665 = vsel %vm4663, %v4653, 2102212464
      %v4666 = vsel %vm4662, %v4650, %v4665
      %v4667 = vsel %vm4661, %v4664, %v4666
      %v4668 = vsel %vm4660, %v4647, %v4650
      %v4669 = vsel %vm4663, %v4656, 920167782
      %v4670 = vsel %vm4662, %v4653, %v4669
      %v4671 = vsel %vm4661, %v4668, %v4670
      %v4672 = vsel %vm4660, %v4650, %v4653
      %v4673 = vsel %vm4663, %v4659, 1326507024
      %v4674 = vsel %vm4662, %v4656, %v4673
      %v4675 = vsel %vm4661, %v4672, %v4674
      %v4676 = vshll.u32 %v4636, 8
      %v4677 = vmul.u32.u64.compose %v4676, %v4675
      %v4678 = vextract.low.u32 %v4677
      %v4679 = vextract.high.u32 %v4677
      %v4680 = vmul.u32.u64.compose %v4676, %v4671
      %v4681 = vextract.low.u32 %v4680
      %v4682 = vextract.high.u32 %v4680
      %v4683 = vmul.u32 %v4676, %v4667
      %v4684 = vadd.s32 %v4679, %v4681
      %vm4685 = vc.u32 %v4679, %v4681
      %v4686 = vadd.s32 %v4682, 1
      %v4687 = vsel %vm4685, %v4686, %v4682
      %v4688 = vadd.s32 %v4683, %v4687
      %v4689 = vadd.s32 %v4688, 536870912
      %v4690 = vshrl.u32 %v4689, 30
      %v4691 = vshll.u32 %v4690, 30
      %v4692 = vsub.s32 %v4688, %v4691
      %vm4693 = vcmp.lt.s32.totalorder %v4692, 0
      %v4694 = vsub.s32 0, %v4692
      %v4695 = vsel %vm4693, %v4694, %v4692
      %v4696 = vclz %v4695
      %v4697 = vsub.s32 %v4696, 2
      %vm4698 = vcmp.gt.s32.totalorder 0, %v4697
      %v4699 = vsel %vm4698, 0, %v4697
      %v4700 = vsub.s32 32, %v4699
      %v4701 = vshll.u32 %v4692, %v4699
      %v4702 = vshrl.u32 %v4684, %v4700
      %v4703 = vor.u32 %v4701, %v4702
      %v4704 = vsub.s32 4294967266, %v4699
      %v4705 = vadd.s32 %v4704, 127
      %v4706 = vshll.u32 %v4705, 23
      %v4707 = vor.u32 4788187, %v4706
      %v4708 = vand.u32 2147483647, %v4707
      %v4710 = vcvt.s32.f32 %v4703
      %v4711 = vmul.f32 %v4710, %v4708
      %v4712 = vxor.u32 %v4711, 2147483648
      %v4713 = vsel %vm4630, %v4712, %v4711
      %v4714 = vsub.s32 4, %v4690
      %v4715 = vsel %vm4630, %v4714, %v4690
      %v4716 = vsel %vm4629, %v3998, %v4713
      %v4717 = vsel %vm4629, 0, %v4715
      %v4718 = vcosq.f32.pop %v4716
      %v4719 = vsinq.f32.pop %v4716
      %vm4720 = vweird.f32 %v3998
      %v4721 = vadd.s32 %v4717, 3
      %v4722 = vand.u32 %v4721, 3
      %vm4723 = vcmp.lt.s32.totalorder %v4722, 2
      %vm4724 = vcmp.eq.s32.totalorder %v4722, 0
      %v4725 = vxor.u32 %v4719, 2147483648
      %v4726 = vsel %vm4724, %v4718, %v4725
      %vm4727 = vcmp.eq.s32.totalorder %v4722, 2
      %v4728 = vxor.u32 %v4718, 2147483648
      %v4729 = vsel %vm4727, %v4728, %v4719
      %v4730 = vsel %vm4723, %v4726, %v4729
      %v4731 = vsel %vm4720, nan, %v4730
      %v4732 = vand.u32 2147483647, %v3999
      %vm4733 = vcmp.le.f32.partialorder %v4732, 0.7853982
      %vm4734 = vcmp.lt.s32.totalorder %v3999, 0
      %v4735 = vand.u32 %v3999, 2139095040
      %v4736 = vshrl.u32 %v4735, 23
      %v4737 = vsub.s32 %v4736, 127
      %v4738 = vand.u32 2147483647, %v3999
      %v4739 = vand.u32 %v4738, 8388607
      %v4740 = vor.u32 %v4739, 8388608
      %v4741 = vsub.s32 0, %v4740
      %v4742 = vadd.s32 %v4737, 1
      %vm4743 = vcmp.gt.s32.totalorder %v4742, 0
      %v4744 = vsel %vm4743, %v4742, 0
      %v4745 = vshrl.u32 %v4744, 5
      %v4746 = vand.u32 %v4744, 31
      %v4747 = vsub.s32 32, %v4746
      %v4748 = vshrl.u32 683565275, %v4747
      %v4749 = vshll.u32 683565275, %v4746
      %v4750 = vshrl.u32 2475754826, %v4747
      %v4751 = vor.u32 %v4749, %v4750
      %v4752 = vshll.u32 2475754826, %v4746
      %v4753 = vshrl.u32 2131351028, %v4747
      %v4754 = vor.u32 %v4752, %v4753
      %v4755 = vshll.u32 2131351028, %v4746
      %v4756 = vshrl.u32 2102212464, %v4747
      %v4757 = vor.u32 %v4755, %v4756
      %v4758 = vshll.u32 2102212464, %v4746
      %v4759 = vshrl.u32 920167782, %v4747
      %v4760 = vor.u32 %v4758, %v4759
      %v4761 = vshll.u32 920167782, %v4746
      %v4762 = vshrl.u32 1326507024, %v4747
      %v4763 = vor.u32 %v4761, %v4762
      %vm4764 = vcmp.lt.s32.totalorder %v4745, 1
      %vm4765 = vcmp.lt.s32.totalorder %v4745, 2
      %vm4766 = vcmp.lt.s32.totalorder %v4745, 3
      %vm4767 = vcmp.lt.s32.totalorder %v4745, 4
      %v4768 = vsel %vm4764, %v4748, %v4751
      %v4769 = vsel %vm4767, %v4757, 2102212464
      %v4770 = vsel %vm4766, %v4754, %v4769
      %v4771 = vsel %vm4765, %v4768, %v4770
      %v4772 = vsel %vm4764, %v4751, %v4754
      %v4773 = vsel %vm4767, %v4760, 920167782
      %v4774 = vsel %vm4766, %v4757, %v4773
      %v4775 = vsel %vm4765, %v4772, %v4774
      %v4776 = vsel %vm4764, %v4754, %v4757
      %v4777 = vsel %vm4767, %v4763, 1326507024
      %v4778 = vsel %vm4766, %v4760, %v4777
      %v4779 = vsel %vm4765, %v4776, %v4778
      %v4780 = vshll.u32 %v4740, 8
      %v4781 = vmul.u32.u64.compose %v4780, %v4779
      %v4782 = vextract.low.u32 %v4781
      %v4783 = vextract.high.u32 %v4781
      %v4784 = vmul.u32.u64.compose %v4780, %v4775
      %v4785 = vextract.low.u32 %v4784
      %v4786 = vextract.high.u32 %v4784
      %v4787 = vmul.u32 %v4780, %v4771
      %v4788 = vadd.s32 %v4783, %v4785
      %vm4789 = vc.u32 %v4783, %v4785
      %v4790 = vadd.s32 %v4786, 1
      %v4791 = vsel %vm4789, %v4790, %v4786
      %v4792 = vadd.s32 %v4787, %v4791
      %v4793 = vadd.s32 %v4792, 536870912
      %v4794 = vshrl.u32 %v4793, 30
      %v4795 = vshll.u32 %v4794, 30
      %v4796 = vsub.s32 %v4792, %v4795
      %vm4797 = vcmp.lt.s32.totalorder %v4796, 0
      %v4798 = vsub.s32 0, %v4796
      %v4799 = vsel %vm4797, %v4798, %v4796
      %v4800 = vclz %v4799
      %v4801 = vsub.s32 %v4800, 2
      %vm4802 = vcmp.gt.s32.totalorder 0, %v4801
      %v4803 = vsel %vm4802, 0, %v4801
      %v4804 = vsub.s32 32, %v4803
      %v4805 = vshll.u32 %v4796, %v4803
      %v4806 = vshrl.u32 %v4788, %v4804
      %v4807 = vor.u32 %v4805, %v4806
      %v4808 = vsub.s32 4294967266, %v4803
      %v4809 = vadd.s32 %v4808, 127
      %v4810 = vshll.u32 %v4809, 23
      %v4811 = vor.u32 4788187, %v4810
      %v4812 = vand.u32 2147483647, %v4811
      %v4814 = vcvt.s32.f32 %v4807
      %v4815 = vmul.f32 %v4814, %v4812
      %v4816 = vxor.u32 %v4815, 2147483648
      %v4817 = vsel %vm4734, %v4816, %v4815
      %v4818 = vsub.s32 4, %v4794
      %v4819 = vsel %vm4734, %v4818, %v4794
      %v4820 = vsel %vm4733, %v3999, %v4817
      %v4821 = vsel %vm4733, 0, %v4819
      %v4822 = vcosq.f32.pop %v4820
      %v4823 = vsinq.f32.pop %v4820
      %vm4824 = vweird.f32 %v3999
      %v4825 = vadd.s32 %v4821, 3
      %v4826 = vand.u32 %v4825, 3
      %vm4827 = vcmp.lt.s32.totalorder %v4826, 2
      %vm4828 = vcmp.eq.s32.totalorder %v4826, 0
      %v4829 = vxor.u32 %v4823, 2147483648
      %v4830 = vsel %vm4828, %v4822, %v4829
      %vm4831 = vcmp.eq.s32.totalorder %v4826, 2
      %v4832 = vxor.u32 %v4822, 2147483648
      %v4833 = vsel %vm4831, %v4832, %v4823
      %v4834 = vsel %vm4827, %v4830, %v4833
      %v4835 = vsel %vm4824, nan, %v4834
      %v4836 = vmul.f32 %v3962, %v4523
      %v4837 = vmul.f32 %v3964, %v4627
      %v4838 = vmul.f32 %v3968, %v4731
      %v4839 = vmul.f32 %v3970, %v4835
      %v4840 = vand.u32 2147483647, %v4000
      %vm4841 = vcmp.le.f32.partialorder %v4840, 0.7853982
      %vm4842 = vcmp.lt.s32.totalorder %v4000, 0
      %v4843 = vand.u32 %v4000, 2139095040
      %v4844 = vshrl.u32 %v4843, 23
      %v4845 = vsub.s32 %v4844, 127
      %v4846 = vand.u32 2147483647, %v4000
      %v4847 = vand.u32 %v4846, 8388607
      %v4848 = vor.u32 %v4847, 8388608
      %v4849 = vsub.s32 0, %v4848
      %v4850 = vadd.s32 %v4845, 1
      %vm4851 = vcmp.gt.s32.totalorder %v4850, 0
      %v4852 = vsel %vm4851, %v4850, 0
      %v4853 = vshrl.u32 %v4852, 5
      %v4854 = vand.u32 %v4852, 31
      %v4855 = vsub.s32 32, %v4854
      %v4856 = vshrl.u32 683565275, %v4855
      %v4857 = vshll.u32 683565275, %v4854
      %v4858 = vshrl.u32 2475754826, %v4855
      %v4859 = vor.u32 %v4857, %v4858
      %v4860 = vshll.u32 2475754826, %v4854
      %v4861 = vshrl.u32 2131351028, %v4855
      %v4862 = vor.u32 %v4860, %v4861
      %v4863 = vshll.u32 2131351028, %v4854
      %v4864 = vshrl.u32 2102212464, %v4855
      %v4865 = vor.u32 %v4863, %v4864
      %v4866 = vshll.u32 2102212464, %v4854
      %v4867 = vshrl.u32 920167782, %v4855
      %v4868 = vor.u32 %v4866, %v4867
      %v4869 = vshll.u32 920167782, %v4854
      %v4870 = vshrl.u32 1326507024, %v4855
      %v4871 = vor.u32 %v4869, %v4870
      %vm4872 = vcmp.lt.s32.totalorder %v4853, 1
      %vm4873 = vcmp.lt.s32.totalorder %v4853, 2
      %vm4874 = vcmp.lt.s32.totalorder %v4853, 3
      %vm4875 = vcmp.lt.s32.totalorder %v4853, 4
      %v4876 = vsel %vm4872, %v4856, %v4859
      %v4877 = vsel %vm4875, %v4865, 2102212464
      %v4878 = vsel %vm4874, %v4862, %v4877
      %v4879 = vsel %vm4873, %v4876, %v4878
      %v4880 = vsel %vm4872, %v4859, %v4862
      %v4881 = vsel %vm4875, %v4868, 920167782
      %v4882 = vsel %vm4874, %v4865, %v4881
      %v4883 = vsel %vm4873, %v4880, %v4882
      %v4884 = vsel %vm4872, %v4862, %v4865
      %v4885 = vsel %vm4875, %v4871, 1326507024
      %v4886 = vsel %vm4874, %v4868, %v4885
      %v4887 = vsel %vm4873, %v4884, %v4886
      %v4888 = vshll.u32 %v4848, 8
      %v4889 = vmul.u32.u64.compose %v4888, %v4887
      %v4890 = vextract.low.u32 %v4889
      %v4891 = vextract.high.u32 %v4889
      %v4892 = vmul.u32.u64.compose %v4888, %v4883
      %v4893 = vextract.low.u32 %v4892
      %v4894 = vextract.high.u32 %v4892
      %v4895 = vmul.u32 %v4888, %v4879
      %v4896 = vadd.s32 %v4891, %v4893
      %vm4897 = vc.u32 %v4891, %v4893
      %v4898 = vadd.s32 %v4894, 1
      %v4899 = vsel %vm4897, %v4898, %v4894
      %v4900 = vadd.s32 %v4895, %v4899
      %v4901 = vadd.s32 %v4900, 536870912
      %v4902 = vshrl.u32 %v4901, 30
      %v4903 = vshll.u32 %v4902, 30
      %v4904 = vsub.s32 %v4900, %v4903
      %vm4905 = vcmp.lt.s32.totalorder %v4904, 0
      %v4906 = vsub.s32 0, %v4904
      %v4907 = vsel %vm4905, %v4906, %v4904
      %v4908 = vclz %v4907
      %v4909 = vsub.s32 %v4908, 2
      %vm4910 = vcmp.gt.s32.totalorder 0, %v4909
      %v4911 = vsel %vm4910, 0, %v4909
      %v4912 = vsub.s32 32, %v4911
      %v4913 = vshll.u32 %v4904, %v4911
      %v4914 = vshrl.u32 %v4896, %v4912
      %v4915 = vor.u32 %v4913, %v4914
      %v4916 = vsub.s32 4294967266, %v4911
      %v4917 = vadd.s32 %v4916, 127
      %v4918 = vshll.u32 %v4917, 23
      %v4919 = vor.u32 4788187, %v4918
      %v4920 = vand.u32 2147483647, %v4919
      %v4922 = vcvt.s32.f32 %v4915
      %v4923 = vmul.f32 %v4922, %v4920
      %v4924 = vxor.u32 %v4923, 2147483648
      %v4925 = vsel %vm4842, %v4924, %v4923
      %v4926 = vsub.s32 4, %v4902
      %v4927 = vsel %vm4842, %v4926, %v4902
      %v4928 = vsel %vm4841, %v4000, %v4925
      %v4929 = vsel %vm4841, 0, %v4927
      %v4930 = vcosq.f32.pop %v4928
      %v4931 = vsinq.f32.pop %v4928
      %vm4932 = vweird.f32 %v4000
      %v4933 = vand.u32 %v4929, 3
      %vm4934 = vcmp.lt.s32.totalorder %v4933, 2
      %vm4935 = vcmp.eq.s32.totalorder %v4933, 0
      %v4936 = vxor.u32 %v4931, 2147483648
      %v4937 = vsel %vm4935, %v4930, %v4936
      %vm4938 = vcmp.eq.s32.totalorder %v4933, 2
      %v4939 = vxor.u32 %v4930, 2147483648
      %v4940 = vsel %vm4938, %v4939, %v4931
      %v4941 = vsel %vm4934, %v4937, %v4940
      %v4942 = vsel %vm4932, nan, %v4941
      %v4943 = vand.u32 2147483647, %v4001
      %vm4944 = vcmp.le.f32.partialorder %v4943, 0.7853982
      %vm4945 = vcmp.lt.s32.totalorder %v4001, 0
      %v4946 = vand.u32 %v4001, 2139095040
      %v4947 = vshrl.u32 %v4946, 23
      %v4948 = vsub.s32 %v4947, 127
      %v4949 = vand.u32 2147483647, %v4001
      %v4950 = vand.u32 %v4949, 8388607
      %v4951 = vor.u32 %v4950, 8388608
      %v4952 = vsub.s32 0, %v4951
      %v4953 = vadd.s32 %v4948, 1
      %vm4954 = vcmp.gt.s32.totalorder %v4953, 0
      %v4955 = vsel %vm4954, %v4953, 0
      %v4956 = vshrl.u32 %v4955, 5
      %v4957 = vand.u32 %v4955, 31
      %v4958 = vsub.s32 32, %v4957
      %v4959 = vshrl.u32 683565275, %v4958
      %v4960 = vshll.u32 683565275, %v4957
      %v4961 = vshrl.u32 2475754826, %v4958
      %v4962 = vor.u32 %v4960, %v4961
      %v4963 = vshll.u32 2475754826, %v4957
      %v4964 = vshrl.u32 2131351028, %v4958
      %v4965 = vor.u32 %v4963, %v4964
      %v4966 = vshll.u32 2131351028, %v4957
      %v4967 = vshrl.u32 2102212464, %v4958
      %v4968 = vor.u32 %v4966, %v4967
      %v4969 = vshll.u32 2102212464, %v4957
      %v4970 = vshrl.u32 920167782, %v4958
      %v4971 = vor.u32 %v4969, %v4970
      %v4972 = vshll.u32 920167782, %v4957
      %v4973 = vshrl.u32 1326507024, %v4958
      %v4974 = vor.u32 %v4972, %v4973
      %vm4975 = vcmp.lt.s32.totalorder %v4956, 1
      %vm4976 = vcmp.lt.s32.totalorder %v4956, 2
      %vm4977 = vcmp.lt.s32.totalorder %v4956, 3
      %vm4978 = vcmp.lt.s32.totalorder %v4956, 4
      %v4979 = vsel %vm4975, %v4959, %v4962
      %v4980 = vsel %vm4978, %v4968, 2102212464
      %v4981 = vsel %vm4977, %v4965, %v4980
      %v4982 = vsel %vm4976, %v4979, %v4981
      %v4983 = vsel %vm4975, %v4962, %v4965
      %v4984 = vsel %vm4978, %v4971, 920167782
      %v4985 = vsel %vm4977, %v4968, %v4984
      %v4986 = vsel %vm4976, %v4983, %v4985
      %v4987 = vsel %vm4975, %v4965, %v4968
      %v4988 = vsel %vm4978, %v4974, 1326507024
      %v4989 = vsel %vm4977, %v4971, %v4988
      %v4990 = vsel %vm4976, %v4987, %v4989
      %v4991 = vshll.u32 %v4951, 8
      %v4992 = vmul.u32.u64.compose %v4991, %v4990
      %v4993 = vextract.low.u32 %v4992
      %v4994 = vextract.high.u32 %v4992
      %v4995 = vmul.u32.u64.compose %v4991, %v4986
      %v4996 = vextract.low.u32 %v4995
      %v4997 = vextract.high.u32 %v4995
      %v4998 = vmul.u32 %v4991, %v4982
      %v4999 = vadd.s32 %v4994, %v4996
      %vm5000 = vc.u32 %v4994, %v4996
      %v5001 = vadd.s32 %v4997, 1
      %v5002 = vsel %vm5000, %v5001, %v4997
      %v5003 = vadd.s32 %v4998, %v5002
      %v5004 = vadd.s32 %v5003, 536870912
      %v5005 = vshrl.u32 %v5004, 30
      %v5006 = vshll.u32 %v5005, 30
      %v5007 = vsub.s32 %v5003, %v5006
      %vm5008 = vcmp.lt.s32.totalorder %v5007, 0
      %v5009 = vsub.s32 0, %v5007
      %v5010 = vsel %vm5008, %v5009, %v5007
      %v5011 = vclz %v5010
      %v5012 = vsub.s32 %v5011, 2
      %vm5013 = vcmp.gt.s32.totalorder 0, %v5012
      %v5014 = vsel %vm5013, 0, %v5012
      %v5015 = vsub.s32 32, %v5014
      %v5016 = vshll.u32 %v5007, %v5014
      %v5017 = vshrl.u32 %v4999, %v5015
      %v5018 = vor.u32 %v5016, %v5017
      %v5019 = vsub.s32 4294967266, %v5014
      %v5020 = vadd.s32 %v5019, 127
      %v5021 = vshll.u32 %v5020, 23
      %v5022 = vor.u32 4788187, %v5021
      %v5023 = vand.u32 2147483647, %v5022
      %v5025 = vcvt.s32.f32 %v5018
      %v5026 = vmul.f32 %v5025, %v5023
      %v5027 = vxor.u32 %v5026, 2147483648
      %v5028 = vsel %vm4945, %v5027, %v5026
      %v5029 = vsub.s32 4, %v5005
      %v5030 = vsel %vm4945, %v5029, %v5005
      %v5031 = vsel %vm4944, %v4001, %v5028
      %v5032 = vsel %vm4944, 0, %v5030
      %v5033 = vcosq.f32.pop %v5031
      %v5034 = vsinq.f32.pop %v5031
      %vm5035 = vweird.f32 %v4001
      %v5036 = vand.u32 %v5032, 3
      %vm5037 = vcmp.lt.s32.totalorder %v5036, 2
      %vm5038 = vcmp.eq.s32.totalorder %v5036, 0
      %v5039 = vxor.u32 %v5034, 2147483648
      %v5040 = vsel %vm5038, %v5033, %v5039
      %vm5041 = vcmp.eq.s32.totalorder %v5036, 2
      %v5042 = vxor.u32 %v5033, 2147483648
      %v5043 = vsel %vm5041, %v5042, %v5034
      %v5044 = vsel %vm5037, %v5040, %v5043
      %v5045 = vsel %vm5035, nan, %v5044
      %v5046 = vand.u32 2147483647, %v4002
      %vm5047 = vcmp.le.f32.partialorder %v5046, 0.7853982
      %vm5048 = vcmp.lt.s32.totalorder %v4002, 0
      %v5049 = vand.u32 %v4002, 2139095040
      %v5050 = vshrl.u32 %v5049, 23
      %v5051 = vsub.s32 %v5050, 127
      %v5052 = vand.u32 2147483647, %v4002
      %v5053 = vand.u32 %v5052, 8388607
      %v5054 = vor.u32 %v5053, 8388608
      %v5055 = vsub.s32 0, %v5054
      %v5056 = vadd.s32 %v5051, 1
      %vm5057 = vcmp.gt.s32.totalorder %v5056, 0
      %v5058 = vsel %vm5057, %v5056, 0
      %v5059 = vshrl.u32 %v5058, 5
      %v5060 = vand.u32 %v5058, 31
      %v5061 = vsub.s32 32, %v5060
      %v5062 = vshrl.u32 683565275, %v5061
      %v5063 = vshll.u32 683565275, %v5060
      %v5064 = vshrl.u32 2475754826, %v5061
      %v5065 = vor.u32 %v5063, %v5064
      %v5066 = vshll.u32 2475754826, %v5060
      %v5067 = vshrl.u32 2131351028, %v5061
      %v5068 = vor.u32 %v5066, %v5067
      %v5069 = vshll.u32 2131351028, %v5060
      %v5070 = vshrl.u32 2102212464, %v5061
      %v5071 = vor.u32 %v5069, %v5070
      %v5072 = vshll.u32 2102212464, %v5060
      %v5073 = vshrl.u32 920167782, %v5061
      %v5074 = vor.u32 %v5072, %v5073
      %v5075 = vshll.u32 920167782, %v5060
      %v5076 = vshrl.u32 1326507024, %v5061
      %v5077 = vor.u32 %v5075, %v5076
      %vm5078 = vcmp.lt.s32.totalorder %v5059, 1
      %vm5079 = vcmp.lt.s32.totalorder %v5059, 2
      %vm5080 = vcmp.lt.s32.totalorder %v5059, 3
      %vm5081 = vcmp.lt.s32.totalorder %v5059, 4
      %v5082 = vsel %vm5078, %v5062, %v5065
      %v5083 = vsel %vm5081, %v5071, 2102212464
      %v5084 = vsel %vm5080, %v5068, %v5083
      %v5085 = vsel %vm5079, %v5082, %v5084
      %v5086 = vsel %vm5078, %v5065, %v5068
      %v5087 = vsel %vm5081, %v5074, 920167782
      %v5088 = vsel %vm5080, %v5071, %v5087
      %v5089 = vsel %vm5079, %v5086, %v5088
      %v5090 = vsel %vm5078, %v5068, %v5071
      %v5091 = vsel %vm5081, %v5077, 1326507024
      %v5092 = vsel %vm5080, %v5074, %v5091
      %v5093 = vsel %vm5079, %v5090, %v5092
      %v5094 = vshll.u32 %v5054, 8
      %v5095 = vmul.u32.u64.compose %v5094, %v5093
      %v5096 = vextract.low.u32 %v5095
      %v5097 = vextract.high.u32 %v5095
      %v5098 = vmul.u32.u64.compose %v5094, %v5089
      %v5099 = vextract.low.u32 %v5098
      %v5100 = vextract.high.u32 %v5098
      %v5101 = vmul.u32 %v5094, %v5085
      %v5102 = vadd.s32 %v5097, %v5099
      %vm5103 = vc.u32 %v5097, %v5099
      %v5104 = vadd.s32 %v5100, 1
      %v5105 = vsel %vm5103, %v5104, %v5100
      %v5106 = vadd.s32 %v5101, %v5105
      %v5107 = vadd.s32 %v5106, 536870912
      %v5108 = vshrl.u32 %v5107, 30
      %v5109 = vshll.u32 %v5108, 30
      %v5110 = vsub.s32 %v5106, %v5109
      %vm5111 = vcmp.lt.s32.totalorder %v5110, 0
      %v5112 = vsub.s32 0, %v5110
      %v5113 = vsel %vm5111, %v5112, %v5110
      %v5114 = vclz %v5113
      %v5115 = vsub.s32 %v5114, 2
      %vm5116 = vcmp.gt.s32.totalorder 0, %v5115
      %v5117 = vsel %vm5116, 0, %v5115
      %v5118 = vsub.s32 32, %v5117
      %v5119 = vshll.u32 %v5110, %v5117
      %v5120 = vshrl.u32 %v5102, %v5118
      %v5121 = vor.u32 %v5119, %v5120
      %v5122 = vsub.s32 4294967266, %v5117
      %v5123 = vadd.s32 %v5122, 127
      %v5124 = vshll.u32 %v5123, 23
      %v5125 = vor.u32 4788187, %v5124
      %v5126 = vand.u32 2147483647, %v5125
      %v5128 = vcvt.s32.f32 %v5121
      %v5129 = vmul.f32 %v5128, %v5126
      %v5130 = vxor.u32 %v5129, 2147483648
      %v5131 = vsel %vm5048, %v5130, %v5129
      %v5132 = vsub.s32 4, %v5108
      %v5133 = vsel %vm5048, %v5132, %v5108
      %v5134 = vsel %vm5047, %v4002, %v5131
      %v5135 = vsel %vm5047, 0, %v5133
      %v5136 = vcosq.f32.pop %v5134
      %v5137 = vsinq.f32.pop %v5134
      %vm5138 = vweird.f32 %v4002
      %v5139 = vand.u32 %v5135, 3
      %vm5140 = vcmp.lt.s32.totalorder %v5139, 2
      %vm5141 = vcmp.eq.s32.totalorder %v5139, 0
      %v5142 = vxor.u32 %v5137, 2147483648
      %v5143 = vsel %vm5141, %v5136, %v5142
      %vm5144 = vcmp.eq.s32.totalorder %v5139, 2
      %v5145 = vxor.u32 %v5136, 2147483648
      %v5146 = vsel %vm5144, %v5145, %v5137
      %v5147 = vsel %vm5140, %v5143, %v5146
      %v5148 = vsel %vm5138, nan, %v5147
      %v5149 = vand.u32 2147483647, %v4003
      %vm5150 = vcmp.le.f32.partialorder %v5149, 0.7853982
      %vm5151 = vcmp.lt.s32.totalorder %v4003, 0
      %v5152 = vand.u32 %v4003, 2139095040
      %v5153 = vshrl.u32 %v5152, 23
      %v5154 = vsub.s32 %v5153, 127
      %v5155 = vand.u32 2147483647, %v4003
      %v5156 = vand.u32 %v5155, 8388607
      %v5157 = vor.u32 %v5156, 8388608
      %v5158 = vsub.s32 0, %v5157
      %v5159 = vadd.s32 %v5154, 1
      %vm5160 = vcmp.gt.s32.totalorder %v5159, 0
      %v5161 = vsel %vm5160, %v5159, 0
      %v5162 = vshrl.u32 %v5161, 5
      %v5163 = vand.u32 %v5161, 31
      %v5164 = vsub.s32 32, %v5163
      %v5165 = vshrl.u32 683565275, %v5164
      %v5166 = vshll.u32 683565275, %v5163
      %v5167 = vshrl.u32 2475754826, %v5164
      %v5168 = vor.u32 %v5166, %v5167
      %v5169 = vshll.u32 2475754826, %v5163
      %v5170 = vshrl.u32 2131351028, %v5164
      %v5171 = vor.u32 %v5169, %v5170
      %v5172 = vshll.u32 2131351028, %v5163
      %v5173 = vshrl.u32 2102212464, %v5164
      %v5174 = vor.u32 %v5172, %v5173
      %v5175 = vshll.u32 2102212464, %v5163
      %v5176 = vshrl.u32 920167782, %v5164
      %v5177 = vor.u32 %v5175, %v5176
      %v5178 = vshll.u32 920167782, %v5163
      %v5179 = vshrl.u32 1326507024, %v5164
      %v5180 = vor.u32 %v5178, %v5179
      %vm5181 = vcmp.lt.s32.totalorder %v5162, 1
      %vm5182 = vcmp.lt.s32.totalorder %v5162, 2
      %vm5183 = vcmp.lt.s32.totalorder %v5162, 3
      %vm5184 = vcmp.lt.s32.totalorder %v5162, 4
      %v5185 = vsel %vm5181, %v5165, %v5168
      %v5186 = vsel %vm5184, %v5174, 2102212464
      %v5187 = vsel %vm5183, %v5171, %v5186
      %v5188 = vsel %vm5182, %v5185, %v5187
      %v5189 = vsel %vm5181, %v5168, %v5171
      %v5190 = vsel %vm5184, %v5177, 920167782
      %v5191 = vsel %vm5183, %v5174, %v5190
      %v5192 = vsel %vm5182, %v5189, %v5191
      %v5193 = vsel %vm5181, %v5171, %v5174
      %v5194 = vsel %vm5184, %v5180, 1326507024
      %v5195 = vsel %vm5183, %v5177, %v5194
      %v5196 = vsel %vm5182, %v5193, %v5195
      %v5197 = vshll.u32 %v5157, 8
      %v5198 = vmul.u32.u64.compose %v5197, %v5196
      %v5199 = vextract.low.u32 %v5198
      %v5200 = vextract.high.u32 %v5198
      %v5201 = vmul.u32.u64.compose %v5197, %v5192
      %v5202 = vextract.low.u32 %v5201
      %v5203 = vextract.high.u32 %v5201
      %v5204 = vmul.u32 %v5197, %v5188
      %v5205 = vadd.s32 %v5200, %v5202
      %vm5206 = vc.u32 %v5200, %v5202
      %v5207 = vadd.s32 %v5203, 1
      %v5208 = vsel %vm5206, %v5207, %v5203
      %v5209 = vadd.s32 %v5204, %v5208
      %v5210 = vadd.s32 %v5209, 536870912
      %v5211 = vshrl.u32 %v5210, 30
      %v5212 = vshll.u32 %v5211, 30
      %v5213 = vsub.s32 %v5209, %v5212
      %vm5214 = vcmp.lt.s32.totalorder %v5213, 0
      %v5215 = vsub.s32 0, %v5213
      %v5216 = vsel %vm5214, %v5215, %v5213
      %v5217 = vclz %v5216
      %v5218 = vsub.s32 %v5217, 2
      %vm5219 = vcmp.gt.s32.totalorder 0, %v5218
      %v5220 = vsel %vm5219, 0, %v5218
      %v5221 = vsub.s32 32, %v5220
      %v5222 = vshll.u32 %v5213, %v5220
      %v5223 = vshrl.u32 %v5205, %v5221
      %v5224 = vor.u32 %v5222, %v5223
      %v5225 = vsub.s32 4294967266, %v5220
      %v5226 = vadd.s32 %v5225, 127
      %v5227 = vshll.u32 %v5226, 23
      %v5228 = vor.u32 4788187, %v5227
      %v5229 = vand.u32 2147483647, %v5228
      %v5231 = vcvt.s32.f32 %v5224
      %v5232 = vmul.f32 %v5231, %v5229
      %v5233 = vxor.u32 %v5232, 2147483648
      %v5234 = vsel %vm5151, %v5233, %v5232
      %v5235 = vsub.s32 4, %v5211
      %v5236 = vsel %vm5151, %v5235, %v5211
      %v5237 = vsel %vm5150, %v4003, %v5234
      %v5238 = vsel %vm5150, 0, %v5236
      %v5239 = vcosq.f32.pop %v5237
      %v5240 = vsinq.f32.pop %v5237
      %vm5241 = vweird.f32 %v4003
      %v5242 = vand.u32 %v5238, 3
      %vm5243 = vcmp.lt.s32.totalorder %v5242, 2
      %vm5244 = vcmp.eq.s32.totalorder %v5242, 0
      %v5245 = vxor.u32 %v5240, 2147483648
      %v5246 = vsel %vm5244, %v5239, %v5245
      %vm5247 = vcmp.eq.s32.totalorder %v5242, 2
      %v5248 = vxor.u32 %v5239, 2147483648
      %v5249 = vsel %vm5247, %v5248, %v5240
      %v5250 = vsel %vm5243, %v5246, %v5249
      %v5251 = vsel %vm5241, nan, %v5250
      %v5252 = vmul.f32 %v3974, %v4942
      %v5253 = vmul.f32 %v3976, %v5045
      %v5254 = vmul.f32 %v3980, %v5148
      %v5255 = vmul.f32 %v3982, %v5251
      %v5256 = vand.u32 2147483647, %v4000
      %vm5257 = vcmp.le.f32.partialorder %v5256, 0.7853982
      %vm5258 = vcmp.lt.s32.totalorder %v4000, 0
      %v5259 = vand.u32 %v4000, 2139095040
      %v5260 = vshrl.u32 %v5259, 23
      %v5261 = vsub.s32 %v5260, 127
      %v5262 = vand.u32 2147483647, %v4000
      %v5263 = vand.u32 %v5262, 8388607
      %v5264 = vor.u32 %v5263, 8388608
      %v5265 = vsub.s32 0, %v5264
      %v5266 = vadd.s32 %v5261, 1
      %vm5267 = vcmp.gt.s32.totalorder %v5266, 0
      %v5268 = vsel %vm5267, %v5266, 0
      %v5269 = vshrl.u32 %v5268, 5
      %v5270 = vand.u32 %v5268, 31
      %v5271 = vsub.s32 32, %v5270
      %v5272 = vshrl.u32 683565275, %v5271
      %v5273 = vshll.u32 683565275, %v5270
      %v5274 = vshrl.u32 2475754826, %v5271
      %v5275 = vor.u32 %v5273, %v5274
      %v5276 = vshll.u32 2475754826, %v5270
      %v5277 = vshrl.u32 2131351028, %v5271
      %v5278 = vor.u32 %v5276, %v5277
      %v5279 = vshll.u32 2131351028, %v5270
      %v5280 = vshrl.u32 2102212464, %v5271
      %v5281 = vor.u32 %v5279, %v5280
      %v5282 = vshll.u32 2102212464, %v5270
      %v5283 = vshrl.u32 920167782, %v5271
      %v5284 = vor.u32 %v5282, %v5283
      %v5285 = vshll.u32 920167782, %v5270
      %v5286 = vshrl.u32 1326507024, %v5271
      %v5287 = vor.u32 %v5285, %v5286
      %vm5288 = vcmp.lt.s32.totalorder %v5269, 1
      %vm5289 = vcmp.lt.s32.totalorder %v5269, 2
      %vm5290 = vcmp.lt.s32.totalorder %v5269, 3
      %vm5291 = vcmp.lt.s32.totalorder %v5269, 4
      %v5292 = vsel %vm5288, %v5272, %v5275
      %v5293 = vsel %vm5291, %v5281, 2102212464
      %v5294 = vsel %vm5290, %v5278, %v5293
      %v5295 = vsel %vm5289, %v5292, %v5294
      %v5296 = vsel %vm5288, %v5275, %v5278
      %v5297 = vsel %vm5291, %v5284, 920167782
      %v5298 = vsel %vm5290, %v5281, %v5297
      %v5299 = vsel %vm5289, %v5296, %v5298
      %v5300 = vsel %vm5288, %v5278, %v5281
      %v5301 = vsel %vm5291, %v5287, 1326507024
      %v5302 = vsel %vm5290, %v5284, %v5301
      %v5303 = vsel %vm5289, %v5300, %v5302
      %v5304 = vshll.u32 %v5264, 8
      %v5305 = vmul.u32.u64.compose %v5304, %v5303
      %v5306 = vextract.low.u32 %v5305
      %v5307 = vextract.high.u32 %v5305
      %v5308 = vmul.u32.u64.compose %v5304, %v5299
      %v5309 = vextract.low.u32 %v5308
      %v5310 = vextract.high.u32 %v5308
      %v5311 = vmul.u32 %v5304, %v5295
      %v5312 = vadd.s32 %v5307, %v5309
      %vm5313 = vc.u32 %v5307, %v5309
      %v5314 = vadd.s32 %v5310, 1
      %v5315 = vsel %vm5313, %v5314, %v5310
      %v5316 = vadd.s32 %v5311, %v5315
      %v5317 = vadd.s32 %v5316, 536870912
      %v5318 = vshrl.u32 %v5317, 30
      %v5319 = vshll.u32 %v5318, 30
      %v5320 = vsub.s32 %v5316, %v5319
      %vm5321 = vcmp.lt.s32.totalorder %v5320, 0
      %v5322 = vsub.s32 0, %v5320
      %v5323 = vsel %vm5321, %v5322, %v5320
      %v5324 = vclz %v5323
      %v5325 = vsub.s32 %v5324, 2
      %vm5326 = vcmp.gt.s32.totalorder 0, %v5325
      %v5327 = vsel %vm5326, 0, %v5325
      %v5328 = vsub.s32 32, %v5327
      %v5329 = vshll.u32 %v5320, %v5327
      %v5330 = vshrl.u32 %v5312, %v5328
      %v5331 = vor.u32 %v5329, %v5330
      %v5332 = vsub.s32 4294967266, %v5327
      %v5333 = vadd.s32 %v5332, 127
      %v5334 = vshll.u32 %v5333, 23
      %v5335 = vor.u32 4788187, %v5334
      %v5336 = vand.u32 2147483647, %v5335
      %v5338 = vcvt.s32.f32 %v5331
      %v5339 = vmul.f32 %v5338, %v5336
      %v5340 = vxor.u32 %v5339, 2147483648
      %v5341 = vsel %vm5258, %v5340, %v5339
      %v5342 = vsub.s32 4, %v5318
      %v5343 = vsel %vm5258, %v5342, %v5318
      %v5344 = vsel %vm5257, %v4000, %v5341
      %v5345 = vsel %vm5257, 0, %v5343
      %v5346 = vcosq.f32.pop %v5344
      %v5347 = vsinq.f32.pop %v5344
      %vm5348 = vweird.f32 %v4000
      %v5349 = vadd.s32 %v5345, 3
      %v5350 = vand.u32 %v5349, 3
      %vm5351 = vcmp.lt.s32.totalorder %v5350, 2
      %vm5352 = vcmp.eq.s32.totalorder %v5350, 0
      %v5353 = vxor.u32 %v5347, 2147483648
      %v5354 = vsel %vm5352, %v5346, %v5353
      %vm5355 = vcmp.eq.s32.totalorder %v5350, 2
      %v5356 = vxor.u32 %v5346, 2147483648
      %v5357 = vsel %vm5355, %v5356, %v5347
      %v5358 = vsel %vm5351, %v5354, %v5357
      %v5359 = vsel %vm5348, nan, %v5358
      %v5360 = vand.u32 2147483647, %v4001
      %vm5361 = vcmp.le.f32.partialorder %v5360, 0.7853982
      %vm5362 = vcmp.lt.s32.totalorder %v4001, 0
      %v5363 = vand.u32 %v4001, 2139095040
      %v5364 = vshrl.u32 %v5363, 23
      %v5365 = vsub.s32 %v5364, 127
      %v5366 = vand.u32 2147483647, %v4001
      %v5367 = vand.u32 %v5366, 8388607
      %v5368 = vor.u32 %v5367, 8388608
      %v5369 = vsub.s32 0, %v5368
      %v5370 = vadd.s32 %v5365, 1
      %vm5371 = vcmp.gt.s32.totalorder %v5370, 0
      %v5372 = vsel %vm5371, %v5370, 0
      %v5373 = vshrl.u32 %v5372, 5
      %v5374 = vand.u32 %v5372, 31
      %v5375 = vsub.s32 32, %v5374
      %v5376 = vshrl.u32 683565275, %v5375
      %v5377 = vshll.u32 683565275, %v5374
      %v5378 = vshrl.u32 2475754826, %v5375
      %v5379 = vor.u32 %v5377, %v5378
      %v5380 = vshll.u32 2475754826, %v5374
      %v5381 = vshrl.u32 2131351028, %v5375
      %v5382 = vor.u32 %v5380, %v5381
      %v5383 = vshll.u32 2131351028, %v5374
      %v5384 = vshrl.u32 2102212464, %v5375
      %v5385 = vor.u32 %v5383, %v5384
      %v5386 = vshll.u32 2102212464, %v5374
      %v5387 = vshrl.u32 920167782, %v5375
      %v5388 = vor.u32 %v5386, %v5387
      %v5389 = vshll.u32 920167782, %v5374
      %v5390 = vshrl.u32 1326507024, %v5375
      %v5391 = vor.u32 %v5389, %v5390
      %vm5392 = vcmp.lt.s32.totalorder %v5373, 1
      %vm5393 = vcmp.lt.s32.totalorder %v5373, 2
      %vm5394 = vcmp.lt.s32.totalorder %v5373, 3
      %vm5395 = vcmp.lt.s32.totalorder %v5373, 4
      %v5396 = vsel %vm5392, %v5376, %v5379
      %v5397 = vsel %vm5395, %v5385, 2102212464
      %v5398 = vsel %vm5394, %v5382, %v5397
      %v5399 = vsel %vm5393, %v5396, %v5398
      %v5400 = vsel %vm5392, %v5379, %v5382
      %v5401 = vsel %vm5395, %v5388, 920167782
      %v5402 = vsel %vm5394, %v5385, %v5401
      %v5403 = vsel %vm5393, %v5400, %v5402
      %v5404 = vsel %vm5392, %v5382, %v5385
      %v5405 = vsel %vm5395, %v5391, 1326507024
      %v5406 = vsel %vm5394, %v5388, %v5405
      %v5407 = vsel %vm5393, %v5404, %v5406
      %v5408 = vshll.u32 %v5368, 8
      %v5409 = vmul.u32.u64.compose %v5408, %v5407
      %v5410 = vextract.low.u32 %v5409
      %v5411 = vextract.high.u32 %v5409
      %v5412 = vmul.u32.u64.compose %v5408, %v5403
      %v5413 = vextract.low.u32 %v5412
      %v5414 = vextract.high.u32 %v5412
      %v5415 = vmul.u32 %v5408, %v5399
      %v5416 = vadd.s32 %v5411, %v5413
      %vm5417 = vc.u32 %v5411, %v5413
      %v5418 = vadd.s32 %v5414, 1
      %v5419 = vsel %vm5417, %v5418, %v5414
      %v5420 = vadd.s32 %v5415, %v5419
      %v5421 = vadd.s32 %v5420, 536870912
      %v5422 = vshrl.u32 %v5421, 30
      %v5423 = vshll.u32 %v5422, 30
      %v5424 = vsub.s32 %v5420, %v5423
      %vm5425 = vcmp.lt.s32.totalorder %v5424, 0
      %v5426 = vsub.s32 0, %v5424
      %v5427 = vsel %vm5425, %v5426, %v5424
      %v5428 = vclz %v5427
      %v5429 = vsub.s32 %v5428, 2
      %vm5430 = vcmp.gt.s32.totalorder 0, %v5429
      %v5431 = vsel %vm5430, 0, %v5429
      %v5432 = vsub.s32 32, %v5431
      %v5433 = vshll.u32 %v5424, %v5431
      %v5434 = vshrl.u32 %v5416, %v5432
      %v5435 = vor.u32 %v5433, %v5434
      %v5436 = vsub.s32 4294967266, %v5431
      %v5437 = vadd.s32 %v5436, 127
      %v5438 = vshll.u32 %v5437, 23
      %v5439 = vor.u32 4788187, %v5438
      %v5440 = vand.u32 2147483647, %v5439
      %v5442 = vcvt.s32.f32 %v5435
      %v5443 = vmul.f32 %v5442, %v5440
      %v5444 = vxor.u32 %v5443, 2147483648
      %v5445 = vsel %vm5362, %v5444, %v5443
      %v5446 = vsub.s32 4, %v5422
      %v5447 = vsel %vm5362, %v5446, %v5422
      %v5448 = vsel %vm5361, %v4001, %v5445
      %v5449 = vsel %vm5361, 0, %v5447
      %v5450 = vcosq.f32.pop %v5448
      %v5451 = vsinq.f32.pop %v5448
      %vm5452 = vweird.f32 %v4001
      %v5453 = vadd.s32 %v5449, 3
      %v5454 = vand.u32 %v5453, 3
      %vm5455 = vcmp.lt.s32.totalorder %v5454, 2
      %vm5456 = vcmp.eq.s32.totalorder %v5454, 0
      %v5457 = vxor.u32 %v5451, 2147483648
      %v5458 = vsel %vm5456, %v5450, %v5457
      %vm5459 = vcmp.eq.s32.totalorder %v5454, 2
      %v5460 = vxor.u32 %v5450, 2147483648
      %v5461 = vsel %vm5459, %v5460, %v5451
      %v5462 = vsel %vm5455, %v5458, %v5461
      %v5463 = vsel %vm5452, nan, %v5462
      %v5464 = vand.u32 2147483647, %v4002
      %vm5465 = vcmp.le.f32.partialorder %v5464, 0.7853982
      %vm5466 = vcmp.lt.s32.totalorder %v4002, 0
      %v5467 = vand.u32 %v4002, 2139095040
      %v5468 = vshrl.u32 %v5467, 23
      %v5469 = vsub.s32 %v5468, 127
      %v5470 = vand.u32 2147483647, %v4002
      %v5471 = vand.u32 %v5470, 8388607
      %v5472 = vor.u32 %v5471, 8388608
      %v5473 = vsub.s32 0, %v5472
      %v5474 = vadd.s32 %v5469, 1
      %vm5475 = vcmp.gt.s32.totalorder %v5474, 0
      %v5476 = vsel %vm5475, %v5474, 0
      %v5477 = vshrl.u32 %v5476, 5
      %v5478 = vand.u32 %v5476, 31
      %v5479 = vsub.s32 32, %v5478
      %v5480 = vshrl.u32 683565275, %v5479
      %v5481 = vshll.u32 683565275, %v5478
      %v5482 = vshrl.u32 2475754826, %v5479
      %v5483 = vor.u32 %v5481, %v5482
      %v5484 = vshll.u32 2475754826, %v5478
      %v5485 = vshrl.u32 2131351028, %v5479
      %v5486 = vor.u32 %v5484, %v5485
      %v5487 = vshll.u32 2131351028, %v5478
      %v5488 = vshrl.u32 2102212464, %v5479
      %v5489 = vor.u32 %v5487, %v5488
      %v5490 = vshll.u32 2102212464, %v5478
      %v5491 = vshrl.u32 920167782, %v5479
      %v5492 = vor.u32 %v5490, %v5491
      %v5493 = vshll.u32 920167782, %v5478
      %v5494 = vshrl.u32 1326507024, %v5479
      %v5495 = vor.u32 %v5493, %v5494
      %vm5496 = vcmp.lt.s32.totalorder %v5477, 1
      %vm5497 = vcmp.lt.s32.totalorder %v5477, 2
      %vm5498 = vcmp.lt.s32.totalorder %v5477, 3
      %vm5499 = vcmp.lt.s32.totalorder %v5477, 4
      %v5500 = vsel %vm5496, %v5480, %v5483
      %v5501 = vsel %vm5499, %v5489, 2102212464
      %v5502 = vsel %vm5498, %v5486, %v5501
      %v5503 = vsel %vm5497, %v5500, %v5502
      %v5504 = vsel %vm5496, %v5483, %v5486
      %v5505 = vsel %vm5499, %v5492, 920167782
      %v5506 = vsel %vm5498, %v5489, %v5505
      %v5507 = vsel %vm5497, %v5504, %v5506
      %v5508 = vsel %vm5496, %v5486, %v5489
      %v5509 = vsel %vm5499, %v5495, 1326507024
      %v5510 = vsel %vm5498, %v5492, %v5509
      %v5511 = vsel %vm5497, %v5508, %v5510
      %v5512 = vshll.u32 %v5472, 8
      %v5513 = vmul.u32.u64.compose %v5512, %v5511
      %v5514 = vextract.low.u32 %v5513
      %v5515 = vextract.high.u32 %v5513
      %v5516 = vmul.u32.u64.compose %v5512, %v5507
      %v5517 = vextract.low.u32 %v5516
      %v5518 = vextract.high.u32 %v5516
      %v5519 = vmul.u32 %v5512, %v5503
      %v5520 = vadd.s32 %v5515, %v5517
      %vm5521 = vc.u32 %v5515, %v5517
      %v5522 = vadd.s32 %v5518, 1
      %v5523 = vsel %vm5521, %v5522, %v5518
      %v5524 = vadd.s32 %v5519, %v5523
      %v5525 = vadd.s32 %v5524, 536870912
      %v5526 = vshrl.u32 %v5525, 30
      %v5527 = vshll.u32 %v5526, 30
      %v5528 = vsub.s32 %v5524, %v5527
      %vm5529 = vcmp.lt.s32.totalorder %v5528, 0
      %v5530 = vsub.s32 0, %v5528
      %v5531 = vsel %vm5529, %v5530, %v5528
      %v5532 = vclz %v5531
      %v5533 = vsub.s32 %v5532, 2
      %vm5534 = vcmp.gt.s32.totalorder 0, %v5533
      %v5535 = vsel %vm5534, 0, %v5533
      %v5536 = vsub.s32 32, %v5535
      %v5537 = vshll.u32 %v5528, %v5535
      %v5538 = vshrl.u32 %v5520, %v5536
      %v5539 = vor.u32 %v5537, %v5538
      %v5540 = vsub.s32 4294967266, %v5535
      %v5541 = vadd.s32 %v5540, 127
      %v5542 = vshll.u32 %v5541, 23
      %v5543 = vor.u32 4788187, %v5542
      %v5544 = vand.u32 2147483647, %v5543
      %v5546 = vcvt.s32.f32 %v5539
      %v5547 = vmul.f32 %v5546, %v5544
      %v5548 = vxor.u32 %v5547, 2147483648
      %v5549 = vsel %vm5466, %v5548, %v5547
      %v5550 = vsub.s32 4, %v5526
      %v5551 = vsel %vm5466, %v5550, %v5526
      %v5552 = vsel %vm5465, %v4002, %v5549
      %v5553 = vsel %vm5465, 0, %v5551
      %v5554 = vcosq.f32.pop %v5552
      %v5555 = vsinq.f32.pop %v5552
      %vm5556 = vweird.f32 %v4002
      %v5557 = vadd.s32 %v5553, 3
      %v5558 = vand.u32 %v5557, 3
      %vm5559 = vcmp.lt.s32.totalorder %v5558, 2
      %vm5560 = vcmp.eq.s32.totalorder %v5558, 0
      %v5561 = vxor.u32 %v5555, 2147483648
      %v5562 = vsel %vm5560, %v5554, %v5561
      %vm5563 = vcmp.eq.s32.totalorder %v5558, 2
      %v5564 = vxor.u32 %v5554, 2147483648
      %v5565 = vsel %vm5563, %v5564, %v5555
      %v5566 = vsel %vm5559, %v5562, %v5565
      %v5567 = vsel %vm5556, nan, %v5566
      %v5568 = vand.u32 2147483647, %v4003
      %vm5569 = vcmp.le.f32.partialorder %v5568, 0.7853982
      %vm5570 = vcmp.lt.s32.totalorder %v4003, 0
      %v5571 = vand.u32 %v4003, 2139095040
      %v5572 = vshrl.u32 %v5571, 23
      %v5573 = vsub.s32 %v5572, 127
      %v5574 = vand.u32 2147483647, %v4003
      %v5575 = vand.u32 %v5574, 8388607
      %v5576 = vor.u32 %v5575, 8388608
      %v5577 = vsub.s32 0, %v5576
      %v5578 = vadd.s32 %v5573, 1
      %vm5579 = vcmp.gt.s32.totalorder %v5578, 0
      %v5580 = vsel %vm5579, %v5578, 0
      %v5581 = vshrl.u32 %v5580, 5
      %v5582 = vand.u32 %v5580, 31
      %v5583 = vsub.s32 32, %v5582
      %v5584 = vshrl.u32 683565275, %v5583
      %v5585 = vshll.u32 683565275, %v5582
      %v5586 = vshrl.u32 2475754826, %v5583
      %v5587 = vor.u32 %v5585, %v5586
      %v5588 = vshll.u32 2475754826, %v5582
      %v5589 = vshrl.u32 2131351028, %v5583
      %v5590 = vor.u32 %v5588, %v5589
      %v5591 = vshll.u32 2131351028, %v5582
      %v5592 = vshrl.u32 2102212464, %v5583
      %v5593 = vor.u32 %v5591, %v5592
      %v5594 = vshll.u32 2102212464, %v5582
      %v5595 = vshrl.u32 920167782, %v5583
      %v5596 = vor.u32 %v5594, %v5595
      %v5597 = vshll.u32 920167782, %v5582
      %v5598 = vshrl.u32 1326507024, %v5583
      %v5599 = vor.u32 %v5597, %v5598
      %vm5600 = vcmp.lt.s32.totalorder %v5581, 1
      %vm5601 = vcmp.lt.s32.totalorder %v5581, 2
      %vm5602 = vcmp.lt.s32.totalorder %v5581, 3
      %vm5603 = vcmp.lt.s32.totalorder %v5581, 4
      %v5604 = vsel %vm5600, %v5584, %v5587
      %v5605 = vsel %vm5603, %v5593, 2102212464
      %v5606 = vsel %vm5602, %v5590, %v5605
      %v5607 = vsel %vm5601, %v5604, %v5606
      %v5608 = vsel %vm5600, %v5587, %v5590
      %v5609 = vsel %vm5603, %v5596, 920167782
      %v5610 = vsel %vm5602, %v5593, %v5609
      %v5611 = vsel %vm5601, %v5608, %v5610
      %v5612 = vsel %vm5600, %v5590, %v5593
      %v5613 = vsel %vm5603, %v5599, 1326507024
      %v5614 = vsel %vm5602, %v5596, %v5613
      %v5615 = vsel %vm5601, %v5612, %v5614
      %v5616 = vshll.u32 %v5576, 8
      %v5617 = vmul.u32.u64.compose %v5616, %v5615
      %v5618 = vextract.low.u32 %v5617
      %v5619 = vextract.high.u32 %v5617
      %v5620 = vmul.u32.u64.compose %v5616, %v5611
      %v5621 = vextract.low.u32 %v5620
      %v5622 = vextract.high.u32 %v5620
      %v5623 = vmul.u32 %v5616, %v5607
      %v5624 = vadd.s32 %v5619, %v5621
      %vm5625 = vc.u32 %v5619, %v5621
      %v5626 = vadd.s32 %v5622, 1
      %v5627 = vsel %vm5625, %v5626, %v5622
      %v5628 = vadd.s32 %v5623, %v5627
      %v5629 = vadd.s32 %v5628, 536870912
      %v5630 = vshrl.u32 %v5629, 30
      %v5631 = vshll.u32 %v5630, 30
      %v5632 = vsub.s32 %v5628, %v5631
      %vm5633 = vcmp.lt.s32.totalorder %v5632, 0
      %v5634 = vsub.s32 0, %v5632
      %v5635 = vsel %vm5633, %v5634, %v5632
      %v5636 = vclz %v5635
      %v5637 = vsub.s32 %v5636, 2
      %vm5638 = vcmp.gt.s32.totalorder 0, %v5637
      %v5639 = vsel %vm5638, 0, %v5637
      %v5640 = vsub.s32 32, %v5639
      %v5641 = vshll.u32 %v5632, %v5639
      %v5642 = vshrl.u32 %v5624, %v5640
      %v5643 = vor.u32 %v5641, %v5642
      %v5644 = vsub.s32 4294967266, %v5639
      %v5645 = vadd.s32 %v5644, 127
      %v5646 = vshll.u32 %v5645, 23
      %v5647 = vor.u32 4788187, %v5646
      %v5648 = vand.u32 2147483647, %v5647
      %v5650 = vcvt.s32.f32 %v5643
      %v5651 = vmul.f32 %v5650, %v5648
      %v5652 = vxor.u32 %v5651, 2147483648
      %v5653 = vsel %vm5570, %v5652, %v5651
      %v5654 = vsub.s32 4, %v5630
      %v5655 = vsel %vm5570, %v5654, %v5630
      %v5656 = vsel %vm5569, %v4003, %v5653
      %v5657 = vsel %vm5569, 0, %v5655
      %v5658 = vcosq.f32.pop %v5656
      %v5659 = vsinq.f32.pop %v5656
      %vm5660 = vweird.f32 %v4003
      %v5661 = vadd.s32 %v5657, 3
      %v5662 = vand.u32 %v5661, 3
      %vm5663 = vcmp.lt.s32.totalorder %v5662, 2
      %vm5664 = vcmp.eq.s32.totalorder %v5662, 0
      %v5665 = vxor.u32 %v5659, 2147483648
      %v5666 = vsel %vm5664, %v5658, %v5665
      %vm5667 = vcmp.eq.s32.totalorder %v5662, 2
      %v5668 = vxor.u32 %v5658, 2147483648
      %v5669 = vsel %vm5667, %v5668, %v5659
      %v5670 = vsel %vm5663, %v5666, %v5669
      %v5671 = vsel %vm5660, nan, %v5670
      %v5672 = vmul.f32 %v3974, %v5359
      %v5673 = vmul.f32 %v3976, %v5463
      %v5674 = vmul.f32 %v3980, %v5567
      %v5675 = vmul.f32 %v3982, %v5671
      %5676 = vrot.lane.b32.xlu0 %v4416, 64
      %v5677 = vpop.permute.xlu0 %5676
      %v5678 = vsel %vm2196, %v5677, %v4417
      %5679 = vrot.lane.b32.xlu0 %v4418, 64
      %v5680 = vpop.permute.xlu0 %5679
      %v5681 = vsel %vm2196, %v5680, %v4419
      %5682 = vrot.lane.b32.xlu0 %v4836, 64
      %v5683 = vpop.permute.xlu0 %5682
      %v5684 = vsel %vm2196, %v5683, %v4837
      %5685 = vrot.lane.b32.xlu0 %v4838, 64
      %v5686 = vpop.permute.xlu0 %5685
      %v5687 = vsel %vm2196, %v5686, %v4839
      %5688 = vrot.lane.b32.xlu0 %v5678, 64
      %v5689 = vpop.permute.xlu0 %5688
      %5690 = vrot.lane.b32.xlu0 %v5681, 64
      %v5691 = vpop.permute.xlu0 %5690
      %5692 = vrot.lane.b32.xlu0 %v5684, 64
      %v5693 = vpop.permute.xlu0 %5692
      %5694 = vrot.lane.b32.xlu0 %v5687, 64
      %v5695 = vpop.permute.xlu0 %5694
      %v5696 = vsel %vm2196, %v5689, %v5677
      %v5697 = vsel %vm2196, %v5691, %v5680
      %v5698 = vsel %vm2196, %v5693, %v5683
      %v5699 = vsel %vm2196, %v5695, %v5686
      %v5700 = vld [vmem:[%s5] sm:$0x3]
      %v5702 = vlaneseq
      %v5703 = vshrl.u32 %v5702, 7
      %v5704 = vsub.s32 0, %v5703
      %v5705 = vrot.slane %v5700, %v5704
      %v5706 = vlaneseq
      %v5707 = vshrl.u32 %v5706, 7
      %v5708 = vsub.s32 1, %v5707
      %v5709 = vrot.slane %v5700, %v5708
      %5710 = vrot.lane.b32.xlu0 %v5705, 61
      %v5711 = vpop.permute.xlu0 %5710
      %5712 = vrot.lane.b32.xlu0 %v5709, 61
      %v5713 = vpop.permute.xlu0 %5712
      %v5714 = vsel %vm2235, %v5711, %v5713
      %v5717 = vmul.f32 %v5678, %v5711
      %v5718 = vmul.f32 %v5696, %v5714
      %v5719 = vmul.f32 %v5681, %v5711
      %v5720 = vmul.f32 %v5697, %v5714
      %v5721 = vmul.f32 %v5684, %v5711
      %v5722 = vmul.f32 %v5698, %v5714
      %v5723 = vmul.f32 %v5687, %v5711
      %v5724 = vmul.f32 %v5699, %v5714
      %5733 = vrot.lane.b32.xlu0 %v5717, 67
      %v5734 = vpop.permute.xlu0 %5733
      %5735 = vrot.lane.b32.xlu0 %v5718, 67
      %v5736 = vpop.permute.xlu0 %5735
      %5737 = vrot.lane.b32.xlu0 %v5719, 67
      %v5738 = vpop.permute.xlu0 %5737
      %5739 = vrot.lane.b32.xlu0 %v5720, 67
      %v5740 = vpop.permute.xlu0 %5739
      %5741 = vrot.lane.b32.xlu0 %v5721, 67
      %v5742 = vpop.permute.xlu0 %5741
      %5743 = vrot.lane.b32.xlu0 %v5722, 67
      %v5744 = vpop.permute.xlu0 %5743
      %5745 = vrot.lane.b32.xlu0 %v5723, 67
      %v5746 = vpop.permute.xlu0 %5745
      %5747 = vrot.lane.b32.xlu0 %v5724, 67
      %v5748 = vpop.permute.xlu0 %5747
      %v5749 = vsel %vm2271, %v5734, %v5736
      %v5750 = vsel %vm2271, %v5738, %v5740
      %v5751 = vsel %vm2271, %v5742, %v5744
      %v5752 = vsel %vm2271, %v5746, %v5748
      %5761 = vst [vmem:[#allocation2] sm:$0xff] %v5749
      %5762 = vst.msk [vmem:[#allocation2 + $0x8] sm:$0xff] %vm2285, %v5736
      %5763 = vst [vmem:[#allocation2 + $0x10] sm:$0xff] %v5750
      %5764 = vst.msk [vmem:[#allocation2 + $0x18] sm:$0xff] %vm2285, %v5740
      %5765 = vst [vmem:[#allocation2 + $0x20] sm:$0xff] %v5751
      %5766 = vst.msk [vmem:[#allocation2 + $0x28] sm:$0xff] %vm2285, %v5744
      %5767 = vst [vmem:[#allocation2 + $0x30] sm:$0xff] %v5752
      %5768 = vst.msk [vmem:[#allocation2 + $0x38] sm:$0xff] %vm2285, %v5748
      %v5769 = vld [vmem:[%s2293] sm:$0x3]
      %v5771 = vlaneseq
      %v5772 = vshrl.u32 %v5771, 7
      %v5773 = vsub.s32 0, %v5772
      %v5774 = vrot.slane %v5769, %v5773
      %v5775 = vlaneseq
      %v5776 = vshrl.u32 %v5775, 7
      %v5777 = vsub.s32 1, %v5776
      %v5778 = vrot.slane %v5769, %v5777
      %5779 = vrot.lane.b32.xlu0 %v5774, 62
      %v5780 = vpop.permute.xlu0 %5779
      %5781 = vrot.lane.b32.xlu0 %v5778, 62
      %v5782 = vpop.permute.xlu0 %5781
      %v5783 = vsel %vm2308, %v5780, %v5782
      %v5786 = vmul.f32 %v5678, %v5780
      %v5787 = vmul.f32 %v5696, %v5783
      %v5788 = vmul.f32 %v5681, %v5780
      %v5789 = vmul.f32 %v5697, %v5783
      %v5790 = vmul.f32 %v5684, %v5780
      %v5791 = vmul.f32 %v5698, %v5783
      %v5792 = vmul.f32 %v5687, %v5780
      %v5793 = vmul.f32 %v5699, %v5783
      %5802 = vrot.lane.b32.xlu0 %v5786, 66
      %v5803 = vpop.permute.xlu0 %5802
      %5804 = vrot.lane.b32.xlu0 %v5787, 66
      %v5805 = vpop.permute.xlu0 %5804
      %5806 = vrot.lane.b32.xlu0 %v5788, 66
      %v5807 = vpop.permute.xlu0 %5806
      %5808 = vrot.lane.b32.xlu0 %v5789, 66
      %v5809 = vpop.permute.xlu0 %5808
      %5810 = vrot.lane.b32.xlu0 %v5790, 66
      %v5811 = vpop.permute.xlu0 %5810
      %5812 = vrot.lane.b32.xlu0 %v5791, 66
      %v5813 = vpop.permute.xlu0 %5812
      %5814 = vrot.lane.b32.xlu0 %v5792, 66
      %v5815 = vpop.permute.xlu0 %5814
      %5816 = vrot.lane.b32.xlu0 %v5793, 66
      %v5817 = vpop.permute.xlu0 %5816
      %v5818 = vsel %vm2344, %v5803, %v5805
      %v5819 = vsel %vm2344, %v5807, %v5809
      %v5820 = vsel %vm2344, %v5811, %v5813
      %v5821 = vsel %vm2344, %v5815, %v5817
      %5830 = vst [vmem:[#allocation2 + $0x40] sm:$0xff] %v5818
      %5831 = vst.msk [vmem:[#allocation2 + $0x48] sm:$0xff] %vm2285, %v5805
      %5832 = vst [vmem:[#allocation2 + $0x50] sm:$0xff] %v5819
      %5833 = vst.msk [vmem:[#allocation2 + $0x58] sm:$0xff] %vm2285, %v5809
      %5834 = vst [vmem:[#allocation2 + $0x60] sm:$0xff] %v5820
      %5835 = vst.msk [vmem:[#allocation2 + $0x68] sm:$0xff] %vm2285, %v5813
      %5836 = vst [vmem:[#allocation2 + $0x70] sm:$0xff] %v5821
      %5837 = vst.msk [vmem:[#allocation2 + $0x78] sm:$0xff] %vm2285, %v5817
      %v5838 = vld [vmem:[%s2365] sm:$0x3]
      %v5840 = vlaneseq
      %v5841 = vshrl.u32 %v5840, 7
      %v5842 = vsub.s32 0, %v5841
      %v5843 = vrot.slane %v5838, %v5842
      %v5844 = vlaneseq
      %v5845 = vshrl.u32 %v5844, 7
      %v5846 = vsub.s32 1, %v5845
      %v5847 = vrot.slane %v5838, %v5846
      %5848 = vrot.lane.b32.xlu0 %v5843, 63
      %v5849 = vpop.permute.xlu0 %5848
      %5850 = vrot.lane.b32.xlu0 %v5847, 63
      %v5851 = vpop.permute.xlu0 %5850
      %v5852 = vsel %vm2380, %v5849, %v5851
      %v5855 = vmul.f32 %v5678, %v5849
      %v5856 = vmul.f32 %v5696, %v5852
      %v5857 = vmul.f32 %v5681, %v5849
      %v5858 = vmul.f32 %v5697, %v5852
      %v5859 = vmul.f32 %v5684, %v5849
      %v5860 = vmul.f32 %v5698, %v5852
      %v5861 = vmul.f32 %v5687, %v5849
      %v5862 = vmul.f32 %v5699, %v5852
      %5871 = vrot.lane.b32.xlu0 %v5855, 65
      %v5872 = vpop.permute.xlu0 %5871
      %5873 = vrot.lane.b32.xlu0 %v5856, 65
      %v5874 = vpop.permute.xlu0 %5873
      %5875 = vrot.lane.b32.xlu0 %v5857, 65
      %v5876 = vpop.permute.xlu0 %5875
      %5877 = vrot.lane.b32.xlu0 %v5858, 65
      %v5878 = vpop.permute.xlu0 %5877
      %5879 = vrot.lane.b32.xlu0 %v5859, 65
      %v5880 = vpop.permute.xlu0 %5879
      %5881 = vrot.lane.b32.xlu0 %v5860, 65
      %v5882 = vpop.permute.xlu0 %5881
      %5883 = vrot.lane.b32.xlu0 %v5861, 65
      %v5884 = vpop.permute.xlu0 %5883
      %5885 = vrot.lane.b32.xlu0 %v5862, 65
      %v5886 = vpop.permute.xlu0 %5885
      %v5887 = vsel %vm2416, %v5872, %v5874
      %v5888 = vsel %vm2416, %v5876, %v5878
      %v5889 = vsel %vm2416, %v5880, %v5882
      %v5890 = vsel %vm2416, %v5884, %v5886
      %5899 = vst [vmem:[#allocation2 + $0x80] sm:$0xff] %v5887
      %5900 = vst.msk [vmem:[#allocation2 + $0x88] sm:$0xff] %vm2285, %v5874
      %5901 = vst [vmem:[#allocation2 + $0x90] sm:$0xff] %v5888
      %5902 = vst.msk [vmem:[#allocation2 + $0x98] sm:$0xff] %vm2285, %v5878
      %5903 = vst [vmem:[#allocation2 + $0xa0] sm:$0xff] %v5889
      %5904 = vst.msk [vmem:[#allocation2 + $0xa8] sm:$0xff] %vm2285, %v5882
      %5905 = vst [vmem:[#allocation2 + $0xb0] sm:$0xff] %v5890
      %5906 = vst.msk [vmem:[#allocation2 + $0xb8] sm:$0xff] %vm2285, %v5886
      %v5907 = vld [vmem:[%s2437] sm:$0x3]
      %v5909 = vlaneseq
      %v5910 = vshrl.u32 %v5909, 7
      %v5911 = vsub.s32 0, %v5910
      %v5912 = vrot.slane %v5907, %v5911
      %v5913 = vlaneseq
      %v5914 = vshrl.u32 %v5913, 7
      %v5915 = vsub.s32 1, %v5914
      %v5916 = vrot.slane %v5907, %v5915
      %v5919 = vmul.f32 %v4416, %v5912
      %v5920 = vmul.f32 %v4417, %v5916
      %v5921 = vmul.f32 %v4418, %v5912
      %v5922 = vmul.f32 %v4419, %v5916
      %v5923 = vmul.f32 %v4836, %v5912
      %v5924 = vmul.f32 %v4837, %v5916
      %v5925 = vmul.f32 %v4838, %v5912
      %v5926 = vmul.f32 %v4839, %v5916
      %5927 = vst [vmem:[#allocation2 + $0xc0] sm:$0xff] %v5919
      %5928 = vst.msk [vmem:[#allocation2 + $0xc8] sm:$0xff] %vm2285, %v5920
      %5929 = vst [vmem:[#allocation2 + $0xd0] sm:$0xff] %v5921
      %5930 = vst.msk [vmem:[#allocation2 + $0xd8] sm:$0xff] %vm2285, %v5922
      %5931 = vst [vmem:[#allocation2 + $0xe0] sm:$0xff] %v5923
      %5932 = vst.msk [vmem:[#allocation2 + $0xe8] sm:$0xff] %vm2285, %v5924
      %5933 = vst [vmem:[#allocation2 + $0xf0] sm:$0xff] %v5925
      %5934 = vst.msk [vmem:[#allocation2 + $0xf8] sm:$0xff] %vm2285, %v5926
      %v5935 = vld [vmem:[%s2466] sm:$0x3]
      %v5937 = vlaneseq
      %v5938 = vshrl.u32 %v5937, 7
      %v5939 = vsub.s32 0, %v5938
      %v5940 = vrot.slane %v5935, %v5939
      %v5941 = vlaneseq
      %v5942 = vshrl.u32 %v5941, 7
      %v5943 = vsub.s32 1, %v5942
      %v5944 = vrot.slane %v5935, %v5943
      %5945 = vrot.lane.b32.xlu0 %v5940, 1
      %v5946 = vpop.permute.xlu0 %5945
      %5947 = vrot.lane.b32.xlu0 %v5944, 1
      %v5948 = vpop.permute.xlu0 %5947
      %v5949 = vsel %vm2481, %v5946, %v5948
      %v5952 = vmul.f32 %v4416, %v5946
      %v5953 = vmul.f32 %v5678, %v5949
      %v5954 = vmul.f32 %v4418, %v5946
      %v5955 = vmul.f32 %v5681, %v5949
      %v5956 = vmul.f32 %v4836, %v5946
      %v5957 = vmul.f32 %v5684, %v5949
      %v5958 = vmul.f32 %v4838, %v5946
      %v5959 = vmul.f32 %v5687, %v5949
      %5968 = vrot.lane.b32.xlu0 %v5952, 127
      %v5969 = vpop.permute.xlu0 %5968
      %5970 = vrot.lane.b32.xlu0 %v5953, 127
      %v5971 = vpop.permute.xlu0 %5970
      %5972 = vrot.lane.b32.xlu0 %v5954, 127
      %v5973 = vpop.permute.xlu0 %5972
      %5974 = vrot.lane.b32.xlu0 %v5955, 127
      %v5975 = vpop.permute.xlu0 %5974
      %5976 = vrot.lane.b32.xlu0 %v5956, 127
      %v5977 = vpop.permute.xlu0 %5976
      %5978 = vrot.lane.b32.xlu0 %v5957, 127
      %v5979 = vpop.permute.xlu0 %5978
      %5980 = vrot.lane.b32.xlu0 %v5958, 127
      %v5981 = vpop.permute.xlu0 %5980
      %5982 = vrot.lane.b32.xlu0 %v5959, 127
      %v5983 = vpop.permute.xlu0 %5982
      %v5984 = vsel %vm2517, %v5969, %v5971
      %v5985 = vsel %vm2517, %v5973, %v5975
      %v5986 = vsel %vm2517, %v5977, %v5979
      %v5987 = vsel %vm2517, %v5981, %v5983
      %5996 = vst [vmem:[#allocation2 + $0x100] sm:$0xff] %v5984
      %5997 = vst.msk [vmem:[#allocation2 + $0x108] sm:$0xff] %vm2285, %v5971
      %5998 = vst [vmem:[#allocation2 + $0x110] sm:$0xff] %v5985
      %5999 = vst.msk [vmem:[#allocation2 + $0x118] sm:$0xff] %vm2285, %v5975
      %6000 = vst [vmem:[#allocation2 + $0x120] sm:$0xff] %v5986
      %6001 = vst.msk [vmem:[#allocation2 + $0x128] sm:$0xff] %vm2285, %v5979
      %6002 = vst [vmem:[#allocation2 + $0x130] sm:$0xff] %v5987
      %6003 = vst.msk [vmem:[#allocation2 + $0x138] sm:$0xff] %vm2285, %v5983
      %v6004 = vld [vmem:[%s2538] sm:$0x3]
      %v6006 = vlaneseq
      %v6007 = vshrl.u32 %v6006, 7
      %v6008 = vsub.s32 0, %v6007
      %v6009 = vrot.slane %v6004, %v6008
      %v6010 = vlaneseq
      %v6011 = vshrl.u32 %v6010, 7
      %v6012 = vsub.s32 1, %v6011
      %v6013 = vrot.slane %v6004, %v6012
      %6014 = vrot.lane.b32.xlu0 %v6009, 2
      %v6015 = vpop.permute.xlu0 %6014
      %6016 = vrot.lane.b32.xlu0 %v6013, 2
      %v6017 = vpop.permute.xlu0 %6016
      %v6018 = vsel %vm2553, %v6015, %v6017
      %v6021 = vmul.f32 %v4416, %v6015
      %v6022 = vmul.f32 %v5678, %v6018
      %v6023 = vmul.f32 %v4418, %v6015
      %v6024 = vmul.f32 %v5681, %v6018
      %v6025 = vmul.f32 %v4836, %v6015
      %v6026 = vmul.f32 %v5684, %v6018
      %v6027 = vmul.f32 %v4838, %v6015
      %v6028 = vmul.f32 %v5687, %v6018
      %6037 = vrot.lane.b32.xlu0 %v6021, 126
      %v6038 = vpop.permute.xlu0 %6037
      %6039 = vrot.lane.b32.xlu0 %v6022, 126
      %v6040 = vpop.permute.xlu0 %6039
      %6041 = vrot.lane.b32.xlu0 %v6023, 126
      %v6042 = vpop.permute.xlu0 %6041
      %6043 = vrot.lane.b32.xlu0 %v6024, 126
      %v6044 = vpop.permute.xlu0 %6043
      %6045 = vrot.lane.b32.xlu0 %v6025, 126
      %v6046 = vpop.permute.xlu0 %6045
      %6047 = vrot.lane.b32.xlu0 %v6026, 126
      %v6048 = vpop.permute.xlu0 %6047
      %6049 = vrot.lane.b32.xlu0 %v6027, 126
      %v6050 = vpop.permute.xlu0 %6049
      %6051 = vrot.lane.b32.xlu0 %v6028, 126
      %v6052 = vpop.permute.xlu0 %6051
      %v6053 = vsel %vm2589, %v6038, %v6040
      %v6054 = vsel %vm2589, %v6042, %v6044
      %v6055 = vsel %vm2589, %v6046, %v6048
      %v6056 = vsel %vm2589, %v6050, %v6052
      %6065 = vst [vmem:[#allocation2 + $0x140] sm:$0xff] %v6053
      %6066 = vst.msk [vmem:[#allocation2 + $0x148] sm:$0xff] %vm2285, %v6040
      %6067 = vst [vmem:[#allocation2 + $0x150] sm:$0xff] %v6054
      %6068 = vst.msk [vmem:[#allocation2 + $0x158] sm:$0xff] %vm2285, %v6044
      %6069 = vst [vmem:[#allocation2 + $0x160] sm:$0xff] %v6055
      %6070 = vst.msk [vmem:[#allocation2 + $0x168] sm:$0xff] %vm2285, %v6048
      %6071 = vst [vmem:[#allocation2 + $0x170] sm:$0xff] %v6056
      %6072 = vst.msk [vmem:[#allocation2 + $0x178] sm:$0xff] %vm2285, %v6052
      %v6073 = vld [vmem:[%s2610] sm:$0x3]
      %v6075 = vlaneseq
      %v6076 = vshrl.u32 %v6075, 7
      %v6077 = vsub.s32 0, %v6076
      %v6078 = vrot.slane %v6073, %v6077
      %v6079 = vlaneseq
      %v6080 = vshrl.u32 %v6079, 7
      %v6081 = vsub.s32 1, %v6080
      %v6082 = vrot.slane %v6073, %v6081
      %6083 = vrot.lane.b32.xlu0 %v6078, 3
      %v6084 = vpop.permute.xlu0 %6083
      %6085 = vrot.lane.b32.xlu0 %v6082, 3
      %v6086 = vpop.permute.xlu0 %6085
      %v6087 = vsel %vm2625, %v6084, %v6086
      %v6090 = vmul.f32 %v4416, %v6084
      %v6091 = vmul.f32 %v5678, %v6087
      %v6092 = vmul.f32 %v4418, %v6084
      %v6093 = vmul.f32 %v5681, %v6087
      %v6094 = vmul.f32 %v4836, %v6084
      %v6095 = vmul.f32 %v5684, %v6087
      %v6096 = vmul.f32 %v4838, %v6084
      %v6097 = vmul.f32 %v5687, %v6087
      %6106 = vrot.lane.b32.xlu0 %v6090, 125
      %v6107 = vpop.permute.xlu0 %6106
      %6108 = vrot.lane.b32.xlu0 %v6091, 125
      %v6109 = vpop.permute.xlu0 %6108
      %6110 = vrot.lane.b32.xlu0 %v6092, 125
      %v6111 = vpop.permute.xlu0 %6110
      %6112 = vrot.lane.b32.xlu0 %v6093, 125
      %v6113 = vpop.permute.xlu0 %6112
      %6114 = vrot.lane.b32.xlu0 %v6094, 125
      %v6115 = vpop.permute.xlu0 %6114
      %6116 = vrot.lane.b32.xlu0 %v6095, 125
      %v6117 = vpop.permute.xlu0 %6116
      %6118 = vrot.lane.b32.xlu0 %v6096, 125
      %v6119 = vpop.permute.xlu0 %6118
      %6120 = vrot.lane.b32.xlu0 %v6097, 125
      %v6121 = vpop.permute.xlu0 %6120
      %v6122 = vsel %vm2661, %v6107, %v6109
      %v6123 = vsel %vm2661, %v6111, %v6113
      %v6124 = vsel %vm2661, %v6115, %v6117
      %v6125 = vsel %vm2661, %v6119, %v6121
      %6134 = vst [vmem:[#allocation2 + $0x180] sm:$0xff] %v6122
      %6135 = vst.msk [vmem:[#allocation2 + $0x188] sm:$0xff] %vm2285, %v6109
      %6136 = vst [vmem:[#allocation2 + $0x190] sm:$0xff] %v6123
      %6137 = vst.msk [vmem:[#allocation2 + $0x198] sm:$0xff] %vm2285, %v6113
      %6138 = vst [vmem:[#allocation2 + $0x1a0] sm:$0xff] %v6124
      %6139 = vst.msk [vmem:[#allocation2 + $0x1a8] sm:$0xff] %vm2285, %v6117
      %6140 = vst [vmem:[#allocation2 + $0x1b0] sm:$0xff] %v6125
      %6141 = vst.msk [vmem:[#allocation2 + $0x1b8] sm:$0xff] %vm2285, %v6121
      %v6142 = vld [vmem:[#allocation2] sm:$0xff]
      %v6143 = vld [vmem:[#allocation2 + $0x8] sm:$0xff]
      %v6144 = vld [vmem:[#allocation2 + $0x10] sm:$0xff]
      %v6145 = vld [vmem:[#allocation2 + $0x18] sm:$0xff]
      %v6146 = vld [vmem:[#allocation2 + $0x20] sm:$0xff]
      %v6147 = vld [vmem:[#allocation2 + $0x28] sm:$0xff]
      %v6148 = vld [vmem:[#allocation2 + $0x30] sm:$0xff]
      %v6149 = vld [vmem:[#allocation2 + $0x38] sm:$0xff]
      %v6150 = vld [vmem:[#allocation2 + $0x40] sm:$0xff]
      %v6151 = vld [vmem:[#allocation2 + $0x48] sm:$0xff]
      %v6152 = vld [vmem:[#allocation2 + $0x50] sm:$0xff]
      %v6153 = vld [vmem:[#allocation2 + $0x58] sm:$0xff]
      %v6154 = vld [vmem:[#allocation2 + $0x60] sm:$0xff]
      %v6155 = vld [vmem:[#allocation2 + $0x68] sm:$0xff]
      %v6156 = vld [vmem:[#allocation2 + $0x70] sm:$0xff]
      %v6157 = vld [vmem:[#allocation2 + $0x78] sm:$0xff]
      %v6158 = vld [vmem:[#allocation2 + $0x80] sm:$0xff]
      %v6159 = vld [vmem:[#allocation2 + $0x88] sm:$0xff]
      %v6160 = vld [vmem:[#allocation2 + $0x90] sm:$0xff]
      %v6161 = vld [vmem:[#allocation2 + $0x98] sm:$0xff]
      %v6162 = vld [vmem:[#allocation2 + $0xa0] sm:$0xff]
      %v6163 = vld [vmem:[#allocation2 + $0xa8] sm:$0xff]
      %v6164 = vld [vmem:[#allocation2 + $0xb0] sm:$0xff]
      %v6165 = vld [vmem:[#allocation2 + $0xb8] sm:$0xff]
      %v6166 = vld [vmem:[#allocation2 + $0xc0] sm:$0xff]
      %v6167 = vld [vmem:[#allocation2 + $0xc8] sm:$0xff]
      %v6168 = vld [vmem:[#allocation2 + $0xd0] sm:$0xff]
      %v6169 = vld [vmem:[#allocation2 + $0xd8] sm:$0xff]
      %v6170 = vld [vmem:[#allocation2 + $0xe0] sm:$0xff]
      %v6171 = vld [vmem:[#allocation2 + $0xe8] sm:$0xff]
      %v6172 = vld [vmem:[#allocation2 + $0xf0] sm:$0xff]
      %v6173 = vld [vmem:[#allocation2 + $0xf8] sm:$0xff]
      %v6174 = vld [vmem:[#allocation2 + $0x100] sm:$0xff]
      %v6175 = vld [vmem:[#allocation2 + $0x108] sm:$0xff]
      %v6176 = vld [vmem:[#allocation2 + $0x110] sm:$0xff]
      %v6177 = vld [vmem:[#allocation2 + $0x118] sm:$0xff]
      %v6178 = vld [vmem:[#allocation2 + $0x120] sm:$0xff]
      %v6179 = vld [vmem:[#allocation2 + $0x128] sm:$0xff]
      %v6180 = vld [vmem:[#allocation2 + $0x130] sm:$0xff]
      %v6181 = vld [vmem:[#allocation2 + $0x138] sm:$0xff]
      %v6182 = vld [vmem:[#allocation2 + $0x140] sm:$0xff]
      %v6183 = vld [vmem:[#allocation2 + $0x148] sm:$0xff]
      %v6184 = vld [vmem:[#allocation2 + $0x150] sm:$0xff]
      %v6185 = vld [vmem:[#allocation2 + $0x158] sm:$0xff]
      %v6186 = vld [vmem:[#allocation2 + $0x160] sm:$0xff]
      %v6187 = vld [vmem:[#allocation2 + $0x168] sm:$0xff]
      %v6188 = vld [vmem:[#allocation2 + $0x170] sm:$0xff]
      %v6189 = vld [vmem:[#allocation2 + $0x178] sm:$0xff]
      %v6190 = vld [vmem:[#allocation2 + $0x180] sm:$0xff]
      %v6191 = vld [vmem:[#allocation2 + $0x188] sm:$0xff]
      %v6192 = vld [vmem:[#allocation2 + $0x190] sm:$0xff]
      %v6193 = vld [vmem:[#allocation2 + $0x198] sm:$0xff]
      %v6194 = vld [vmem:[#allocation2 + $0x1a0] sm:$0xff]
      %v6195 = vld [vmem:[#allocation2 + $0x1a8] sm:$0xff]
      %v6196 = vld [vmem:[#allocation2 + $0x1b0] sm:$0xff]
      %v6197 = vld [vmem:[#allocation2 + $0x1b8] sm:$0xff]
      %6198 = vmatprep.subr.mxu0 %v6173
      %6199 = vmatpush1.msra.mxu0 %v6172
      %6200 = vmatprep.subr.mxu0 %v6171
      %6201 = vmatpush1.msra.mxu0 %v6170
      %6202 = vmatprep.subr.mxu0 %v6169
      %6203 = vmatpush1.msra.mxu0 %v6168
      %6204 = vmatprep.subr.mxu0 %v6167
      %6205 = vmatpush1.msra.mxu0 %v6166
      %6206 = vmatprep.subr.mxu0 %v6165
      %6207 = vmatpush1.msra.mxu0 %v6164
      %6208 = vmatprep.subr.mxu0 %v6163
      %6209 = vmatpush1.msra.mxu0 %v6162
      %6210 = vmatprep.subr.mxu0 %v6161
      %6211 = vmatpush1.msra.mxu0 %v6160
      %6212 = vmatprep.subr.mxu0 %v6159
      %6213 = vmatpush1.msra.mxu0 %v6158
      %6214 = vmatprep.subr.mxu0 %v6157
      %6215 = vmatpush1.msra.mxu0 %v6156
      %6216 = vmatprep.subr.mxu0 %v6155
      %6217 = vmatpush1.msra.mxu0 %v6154
      %6218 = vmatprep.subr.mxu0 %v6153
      %6219 = vmatpush1.msra.mxu0 %v6152
      %6220 = vmatprep.subr.mxu0 %v6151
      %6221 = vmatpush1.msra.mxu0 %v6150
      %6222 = vmatprep.subr.mxu0 %v6149
      %6223 = vmatpush1.msra.mxu0 %v6148
      %6224 = vmatprep.subr.mxu0 %v6147
      %6225 = vmatpush1.msra.mxu0 %v6146
      %6226 = vmatprep.subr.mxu0 %v6145
      %6227 = vmatpush1.msra.mxu0 %v6144
      %6228 = vmatprep.subr.mxu0 %v6143
      %6229 = vmatpush1.msra.mxu0 %v6142
      %6230 = vmatprep.subr.mxu0 0.0
      %6231 = vmatpush2.msra.mxu0 0.0
      %6232 = vmatprep.subr.mxu0 0.0
      %6233 = vmatpush2.msra.mxu0 0.0
      %6234 = vmatprep.subr.mxu0 0.0
      %6235 = vmatpush2.msra.mxu0 0.0
      %6236 = vmatprep.subr.mxu0 0.0
      %6237 = vmatpush2.msra.mxu0 0.0
      %6238 = vmatprep.subr.mxu0 %v6197
      %6239 = vmatpush2.msra.mxu0 %v6196
      %6240 = vmatprep.subr.mxu0 %v6195
      %6241 = vmatpush2.msra.mxu0 %v6194
      %6242 = vmatprep.subr.mxu0 %v6193
      %6243 = vmatpush2.msra.mxu0 %v6192
      %6244 = vmatprep.subr.mxu0 %v6191
      %6245 = vmatpush2.msra.mxu0 %v6190
      %6246 = vmatprep.subr.mxu0 %v6189
      %6247 = vmatpush2.msra.mxu0 %v6188
      %6248 = vmatprep.subr.mxu0 %v6187
      %6249 = vmatpush2.msra.mxu0 %v6186
      %6250 = vmatprep.subr.mxu0 %v6185
      %6251 = vmatpush2.msra.mxu0 %v6184
      %6252 = vmatprep.subr.mxu0 %v6183
      %6253 = vmatpush2.msra.mxu0 %v6182
      %6254 = vmatprep.subr.mxu0 %v6181
      %6255 = vmatpush2.msra.mxu0 %v6180
      %6256 = vmatprep.subr.mxu0 %v6179
      %6257 = vmatpush2.msra.mxu0 %v6178
      %6258 = vmatprep.subr.mxu0 %v6177
      %6259 = vmatpush2.msra.mxu0 %v6176
      %6260 = vmatprep.subr.mxu0 %v6175
      %6261 = vmatpush2.msra.mxu0 %v6174
      %6262 = vmatprep.mubr.f32.mxu0 %v2740
      %6263 = vmatmul.mubr.f32.gmra.mxu0 %v273
      %v6264 = vpop.f32.mrf.mxu0
      %v6265 = vadd.f32 0.0, %v6264
      %v6266 = vpop.f32.mrf.mxu0
      %v6267 = vadd.f32 0.0, %v6266
      %6268 = vmatprep.mubr.f32.mxu0 %v2743
      %6269 = vmatmul.mubr.f32.gmra.mxu0 %v275
      %v6270 = vpop.f32.mrf.mxu0
      %v6271 = vadd.f32 0.0, %v6270
      %v6272 = vpop.f32.mrf.mxu0
      %v6273 = vadd.f32 0.0, %v6272
      %6274 = vdwg.mxu0
      %6275 = vrot.lane.b32.xlu0 %v5252, 64
      %v6276 = vpop.permute.xlu0 %6275
      %v6277 = vsel %vm2196, %v6276, %v5253
      %6278 = vrot.lane.b32.xlu0 %v5254, 64
      %v6279 = vpop.permute.xlu0 %6278
      %v6280 = vsel %vm2196, %v6279, %v5255
      %6281 = vrot.lane.b32.xlu0 %v5672, 64
      %v6282 = vpop.permute.xlu0 %6281
      %v6283 = vsel %vm2196, %v6282, %v5673
      %6284 = vrot.lane.b32.xlu0 %v5674, 64
      %v6285 = vpop.permute.xlu0 %6284
      %v6286 = vsel %vm2196, %v6285, %v5675
      %6287 = vrot.lane.b32.xlu0 %v6277, 64
      %v6288 = vpop.permute.xlu0 %6287
      %6289 = vrot.lane.b32.xlu0 %v6280, 64
      %v6290 = vpop.permute.xlu0 %6289
      %6291 = vrot.lane.b32.xlu0 %v6283, 64
      %v6292 = vpop.permute.xlu0 %6291
      %6293 = vrot.lane.b32.xlu0 %v6286, 64
      %v6294 = vpop.permute.xlu0 %6293
      %v6295 = vsel %vm2196, %v6288, %v6276
      %v6296 = vsel %vm2196, %v6290, %v6279
      %v6297 = vsel %vm2196, %v6292, %v6282
      %v6298 = vsel %vm2196, %v6294, %v6285
      %v6299 = vld [vmem:[%s2846] sm:$0x3]
      %v6301 = vlaneseq
      %v6302 = vshrl.u32 %v6301, 7
      %v6303 = vsub.s32 0, %v6302
      %v6304 = vrot.slane %v6299, %v6303
      %v6305 = vlaneseq
      %v6306 = vshrl.u32 %v6305, 7
      %v6307 = vsub.s32 1, %v6306
      %v6308 = vrot.slane %v6299, %v6307
      %6309 = vrot.lane.b32.xlu0 %v6304, 28
      %v6310 = vpop.permute.xlu0 %6309
      %6311 = vrot.lane.b32.xlu0 %v6308, 28
      %v6312 = vpop.permute.xlu0 %6311
      %v6313 = vsel %vm2861, %v6310, %v6312
      %v6316 = vmul.f32 %v6277, %v6310
      %v6317 = vmul.f32 %v6295, %v6313
      %v6318 = vmul.f32 %v6280, %v6310
      %v6319 = vmul.f32 %v6296, %v6313
      %v6320 = vmul.f32 %v6283, %v6310
      %v6321 = vmul.f32 %v6297, %v6313
      %v6322 = vmul.f32 %v6286, %v6310
      %v6323 = vmul.f32 %v6298, %v6313
      %6332 = vrot.lane.b32.xlu0 %v6316, 100
      %v6333 = vpop.permute.xlu0 %6332
      %6334 = vrot.lane.b32.xlu0 %v6317, 100
      %v6335 = vpop.permute.xlu0 %6334
      %6336 = vrot.lane.b32.xlu0 %v6318, 100
      %v6337 = vpop.permute.xlu0 %6336
      %6338 = vrot.lane.b32.xlu0 %v6319, 100
      %v6339 = vpop.permute.xlu0 %6338
      %6340 = vrot.lane.b32.xlu0 %v6320, 100
      %v6341 = vpop.permute.xlu0 %6340
      %6342 = vrot.lane.b32.xlu0 %v6321, 100
      %v6343 = vpop.permute.xlu0 %6342
      %6344 = vrot.lane.b32.xlu0 %v6322, 100
      %v6345 = vpop.permute.xlu0 %6344
      %6346 = vrot.lane.b32.xlu0 %v6323, 100
      %v6347 = vpop.permute.xlu0 %6346
      %v6348 = vsel %vm2897, %v6333, %v6335
      %v6349 = vsel %vm2897, %v6337, %v6339
      %v6350 = vsel %vm2897, %v6341, %v6343
      %v6351 = vsel %vm2897, %v6345, %v6347
      %6360 = vst [vmem:[#allocation2] sm:$0xff] %v6348
      %6361 = vst.msk [vmem:[#allocation2 + $0x8] sm:$0xff] %vm2285, %v6335
      %6362 = vst [vmem:[#allocation2 + $0x10] sm:$0xff] %v6349
      %6363 = vst.msk [vmem:[#allocation2 + $0x18] sm:$0xff] %vm2285, %v6339
      %6364 = vst [vmem:[#allocation2 + $0x20] sm:$0xff] %v6350
      %6365 = vst.msk [vmem:[#allocation2 + $0x28] sm:$0xff] %vm2285, %v6343
      %6366 = vst [vmem:[#allocation2 + $0x30] sm:$0xff] %v6351
      %6367 = vst.msk [vmem:[#allocation2 + $0x38] sm:$0xff] %vm2285, %v6347
      %v6368 = vld [vmem:[%s2918] sm:$0x3]
      %v6370 = vlaneseq
      %v6371 = vshrl.u32 %v6370, 7
      %v6372 = vsub.s32 0, %v6371
      %v6373 = vrot.slane %v6368, %v6372
      %v6374 = vlaneseq
      %v6375 = vshrl.u32 %v6374, 7
      %v6376 = vsub.s32 1, %v6375
      %v6377 = vrot.slane %v6368, %v6376
      %6378 = vrot.lane.b32.xlu0 %v6373, 40
      %v6379 = vpop.permute.xlu0 %6378
      %6380 = vrot.lane.b32.xlu0 %v6377, 40
      %v6381 = vpop.permute.xlu0 %6380
      %v6382 = vsel %vm2933, %v6379, %v6381
      %v6385 = vmul.f32 %v6277, %v6379
      %v6386 = vmul.f32 %v6295, %v6382
      %v6387 = vmul.f32 %v6280, %v6379
      %v6388 = vmul.f32 %v6296, %v6382
      %v6389 = vmul.f32 %v6283, %v6379
      %v6390 = vmul.f32 %v6297, %v6382
      %v6391 = vmul.f32 %v6286, %v6379
      %v6392 = vmul.f32 %v6298, %v6382
      %6401 = vrot.lane.b32.xlu0 %v6385, 88
      %v6402 = vpop.permute.xlu0 %6401
      %6403 = vrot.lane.b32.xlu0 %v6386, 88
      %v6404 = vpop.permute.xlu0 %6403
      %6405 = vrot.lane.b32.xlu0 %v6387, 88
      %v6406 = vpop.permute.xlu0 %6405
      %6407 = vrot.lane.b32.xlu0 %v6388, 88
      %v6408 = vpop.permute.xlu0 %6407
      %6409 = vrot.lane.b32.xlu0 %v6389, 88
      %v6410 = vpop.permute.xlu0 %6409
      %6411 = vrot.lane.b32.xlu0 %v6390, 88
      %v6412 = vpop.permute.xlu0 %6411
      %6413 = vrot.lane.b32.xlu0 %v6391, 88
      %v6414 = vpop.permute.xlu0 %6413
      %6415 = vrot.lane.b32.xlu0 %v6392, 88
      %v6416 = vpop.permute.xlu0 %6415
      %v6417 = vsel %vm2969, %v6402, %v6404
      %v6418 = vsel %vm2969, %v6406, %v6408
      %v6419 = vsel %vm2969, %v6410, %v6412
      %v6420 = vsel %vm2969, %v6414, %v6416
      %6429 = vst [vmem:[#allocation2 + $0x40] sm:$0xff] %v6417
      %6430 = vst.msk [vmem:[#allocation2 + $0x48] sm:$0xff] %vm2285, %v6404
      %6431 = vst [vmem:[#allocation2 + $0x50] sm:$0xff] %v6418
      %6432 = vst.msk [vmem:[#allocation2 + $0x58] sm:$0xff] %vm2285, %v6408
      %6433 = vst [vmem:[#allocation2 + $0x60] sm:$0xff] %v6419
      %6434 = vst.msk [vmem:[#allocation2 + $0x68] sm:$0xff] %vm2285, %v6412
      %6435 = vst [vmem:[#allocation2 + $0x70] sm:$0xff] %v6420
      %6436 = vst.msk [vmem:[#allocation2 + $0x78] sm:$0xff] %vm2285, %v6416
      %v6437 = vld [vmem:[%s2990] sm:$0x3]
      %v6439 = vlaneseq
      %v6440 = vshrl.u32 %v6439, 7
      %v6441 = vsub.s32 0, %v6440
      %v6442 = vrot.slane %v6437, %v6441
      %v6443 = vlaneseq
      %v6444 = vshrl.u32 %v6443, 7
      %v6445 = vsub.s32 1, %v6444
      %v6446 = vrot.slane %v6437, %v6445
      %6447 = vrot.lane.b32.xlu0 %v6442, 52
      %v6448 = vpop.permute.xlu0 %6447
      %6449 = vrot.lane.b32.xlu0 %v6446, 52
      %v6450 = vpop.permute.xlu0 %6449
      %v6451 = vsel %vm3005, %v6448, %v6450
      %v6454 = vmul.f32 %v6277, %v6448
      %v6455 = vmul.f32 %v6295, %v6451
      %v6456 = vmul.f32 %v6280, %v6448
      %v6457 = vmul.f32 %v6296, %v6451
      %v6458 = vmul.f32 %v6283, %v6448
      %v6459 = vmul.f32 %v6297, %v6451
      %v6460 = vmul.f32 %v6286, %v6448
      %v6461 = vmul.f32 %v6298, %v6451
      %6470 = vrot.lane.b32.xlu0 %v6454, 76
      %v6471 = vpop.permute.xlu0 %6470
      %6472 = vrot.lane.b32.xlu0 %v6455, 76
      %v6473 = vpop.permute.xlu0 %6472
      %6474 = vrot.lane.b32.xlu0 %v6456, 76
      %v6475 = vpop.permute.xlu0 %6474
      %6476 = vrot.lane.b32.xlu0 %v6457, 76
      %v6477 = vpop.permute.xlu0 %6476
      %6478 = vrot.lane.b32.xlu0 %v6458, 76
      %v6479 = vpop.permute.xlu0 %6478
      %6480 = vrot.lane.b32.xlu0 %v6459, 76
      %v6481 = vpop.permute.xlu0 %6480
      %6482 = vrot.lane.b32.xlu0 %v6460, 76
      %v6483 = vpop.permute.xlu0 %6482
      %6484 = vrot.lane.b32.xlu0 %v6461, 76
      %v6485 = vpop.permute.xlu0 %6484
      %v6486 = vsel %vm3041, %v6471, %v6473
      %v6487 = vsel %vm3041, %v6475, %v6477
      %v6488 = vsel %vm3041, %v6479, %v6481
      %v6489 = vsel %vm3041, %v6483, %v6485
      %6498 = vst [vmem:[#allocation2 + $0x80] sm:$0xff] %v6486
      %6499 = vst.msk [vmem:[#allocation2 + $0x88] sm:$0xff] %vm2285, %v6473
      %6500 = vst [vmem:[#allocation2 + $0x90] sm:$0xff] %v6487
      %6501 = vst.msk [vmem:[#allocation2 + $0x98] sm:$0xff] %vm2285, %v6477
      %6502 = vst [vmem:[#allocation2 + $0xa0] sm:$0xff] %v6488
      %6503 = vst.msk [vmem:[#allocation2 + $0xa8] sm:$0xff] %vm2285, %v6481
      %6504 = vst [vmem:[#allocation2 + $0xb0] sm:$0xff] %v6489
      %6505 = vst.msk [vmem:[#allocation2 + $0xb8] sm:$0xff] %vm2285, %v6485
      %v6506 = vld [vmem:[%s3062] sm:$0x3]
      %v6508 = vlaneseq
      %v6509 = vshrl.u32 %v6508, 7
      %v6510 = vsub.s32 0, %v6509
      %v6511 = vrot.slane %v6506, %v6510
      %v6512 = vlaneseq
      %v6513 = vshrl.u32 %v6512, 7
      %v6514 = vsub.s32 1, %v6513
      %v6515 = vrot.slane %v6506, %v6514
      %v6518 = vmul.f32 %v5252, %v6511
      %v6519 = vmul.f32 %v5253, %v6515
      %v6520 = vmul.f32 %v5254, %v6511
      %v6521 = vmul.f32 %v5255, %v6515
      %v6522 = vmul.f32 %v5672, %v6511
      %v6523 = vmul.f32 %v5673, %v6515
      %v6524 = vmul.f32 %v5674, %v6511
      %v6525 = vmul.f32 %v5675, %v6515
      %6526 = vst [vmem:[#allocation2 + $0xc0] sm:$0xff] %v6518
      %6527 = vst.msk [vmem:[#allocation2 + $0xc8] sm:$0xff] %vm2285, %v6519
      %6528 = vst [vmem:[#allocation2 + $0xd0] sm:$0xff] %v6520
      %6529 = vst.msk [vmem:[#allocation2 + $0xd8] sm:$0xff] %vm2285, %v6521
      %6530 = vst [vmem:[#allocation2 + $0xe0] sm:$0xff] %v6522
      %6531 = vst.msk [vmem:[#allocation2 + $0xe8] sm:$0xff] %vm2285, %v6523
      %6532 = vst [vmem:[#allocation2 + $0xf0] sm:$0xff] %v6524
      %6533 = vst.msk [vmem:[#allocation2 + $0xf8] sm:$0xff] %vm2285, %v6525
      %v6534 = vld [vmem:[%s3091] sm:$0x3]
      %v6536 = vlaneseq
      %v6537 = vshrl.u32 %v6536, 7
      %v6538 = vsub.s32 0, %v6537
      %v6539 = vrot.slane %v6534, %v6538
      %v6540 = vlaneseq
      %v6541 = vshrl.u32 %v6540, 7
      %v6542 = vsub.s32 1, %v6541
      %v6543 = vrot.slane %v6534, %v6542
      %6544 = vrot.lane.b32.xlu0 %v6539, 12
      %v6545 = vpop.permute.xlu0 %6544
      %6546 = vrot.lane.b32.xlu0 %v6543, 12
      %v6547 = vpop.permute.xlu0 %6546
      %v6548 = vsel %vm3106, %v6545, %v6547
      %v6551 = vmul.f32 %v5252, %v6545
      %v6552 = vmul.f32 %v6277, %v6548
      %v6553 = vmul.f32 %v5254, %v6545
      %v6554 = vmul.f32 %v6280, %v6548
      %v6555 = vmul.f32 %v5672, %v6545
      %v6556 = vmul.f32 %v6283, %v6548
      %v6557 = vmul.f32 %v5674, %v6545
      %v6558 = vmul.f32 %v6286, %v6548
      %6567 = vrot.lane.b32.xlu0 %v6551, 116
      %v6568 = vpop.permute.xlu0 %6567
      %6569 = vrot.lane.b32.xlu0 %v6552, 116
      %v6570 = vpop.permute.xlu0 %6569
      %6571 = vrot.lane.b32.xlu0 %v6553, 116
      %v6572 = vpop.permute.xlu0 %6571
      %6573 = vrot.lane.b32.xlu0 %v6554, 116
      %v6574 = vpop.permute.xlu0 %6573
      %6575 = vrot.lane.b32.xlu0 %v6555, 116
      %v6576 = vpop.permute.xlu0 %6575
      %6577 = vrot.lane.b32.xlu0 %v6556, 116
      %v6578 = vpop.permute.xlu0 %6577
      %6579 = vrot.lane.b32.xlu0 %v6557, 116
      %v6580 = vpop.permute.xlu0 %6579
      %6581 = vrot.lane.b32.xlu0 %v6558, 116
      %v6582 = vpop.permute.xlu0 %6581
      %v6583 = vsel %vm3142, %v6568, %v6570
      %v6584 = vsel %vm3142, %v6572, %v6574
      %v6585 = vsel %vm3142, %v6576, %v6578
      %v6586 = vsel %vm3142, %v6580, %v6582
      %6595 = vst [vmem:[#allocation2 + $0x100] sm:$0xff] %v6583
      %6596 = vst.msk [vmem:[#allocation2 + $0x108] sm:$0xff] %vm2285, %v6570
      %6597 = vst [vmem:[#allocation2 + $0x110] sm:$0xff] %v6584
      %6598 = vst.msk [vmem:[#allocation2 + $0x118] sm:$0xff] %vm2285, %v6574
      %6599 = vst [vmem:[#allocation2 + $0x120] sm:$0xff] %v6585
      %6600 = vst.msk [vmem:[#allocation2 + $0x128] sm:$0xff] %vm2285, %v6578
      %6601 = vst [vmem:[#allocation2 + $0x130] sm:$0xff] %v6586
      %6602 = vst.msk [vmem:[#allocation2 + $0x138] sm:$0xff] %vm2285, %v6582
      %v6603 = vld [vmem:[%s3163] sm:$0x3]
      %v6605 = vlaneseq
      %v6606 = vshrl.u32 %v6605, 7
      %v6607 = vsub.s32 0, %v6606
      %v6608 = vrot.slane %v6603, %v6607
      %v6609 = vlaneseq
      %v6610 = vshrl.u32 %v6609, 7
      %v6611 = vsub.s32 1, %v6610
      %v6612 = vrot.slane %v6603, %v6611
      %6613 = vrot.lane.b32.xlu0 %v6608, 24
      %v6614 = vpop.permute.xlu0 %6613
      %6615 = vrot.lane.b32.xlu0 %v6612, 24
      %v6616 = vpop.permute.xlu0 %6615
      %v6617 = vsel %vm3178, %v6614, %v6616
      %v6620 = vmul.f32 %v5252, %v6614
      %v6621 = vmul.f32 %v6277, %v6617
      %v6622 = vmul.f32 %v5254, %v6614
      %v6623 = vmul.f32 %v6280, %v6617
      %v6624 = vmul.f32 %v5672, %v6614
      %v6625 = vmul.f32 %v6283, %v6617
      %v6626 = vmul.f32 %v5674, %v6614
      %v6627 = vmul.f32 %v6286, %v6617
      %6636 = vrot.lane.b32.xlu0 %v6620, 104
      %v6637 = vpop.permute.xlu0 %6636
      %6638 = vrot.lane.b32.xlu0 %v6621, 104
      %v6639 = vpop.permute.xlu0 %6638
      %6640 = vrot.lane.b32.xlu0 %v6622, 104
      %v6641 = vpop.permute.xlu0 %6640
      %6642 = vrot.lane.b32.xlu0 %v6623, 104
      %v6643 = vpop.permute.xlu0 %6642
      %6644 = vrot.lane.b32.xlu0 %v6624, 104
      %v6645 = vpop.permute.xlu0 %6644
      %6646 = vrot.lane.b32.xlu0 %v6625, 104
      %v6647 = vpop.permute.xlu0 %6646
      %6648 = vrot.lane.b32.xlu0 %v6626, 104
      %v6649 = vpop.permute.xlu0 %6648
      %6650 = vrot.lane.b32.xlu0 %v6627, 104
      %v6651 = vpop.permute.xlu0 %6650
      %v6652 = vsel %vm3214, %v6637, %v6639
      %v6653 = vsel %vm3214, %v6641, %v6643
      %v6654 = vsel %vm3214, %v6645, %v6647
      %v6655 = vsel %vm3214, %v6649, %v6651
      %6664 = vst [vmem:[#allocation2 + $0x140] sm:$0xff] %v6652
      %6665 = vst.msk [vmem:[#allocation2 + $0x148] sm:$0xff] %vm2285, %v6639
      %6666 = vst [vmem:[#allocation2 + $0x150] sm:$0xff] %v6653
      %6667 = vst.msk [vmem:[#allocation2 + $0x158] sm:$0xff] %vm2285, %v6643
      %6668 = vst [vmem:[#allocation2 + $0x160] sm:$0xff] %v6654
      %6669 = vst.msk [vmem:[#allocation2 + $0x168] sm:$0xff] %vm2285, %v6647
      %6670 = vst [vmem:[#allocation2 + $0x170] sm:$0xff] %v6655
      %6671 = vst.msk [vmem:[#allocation2 + $0x178] sm:$0xff] %vm2285, %v6651
      %v6672 = vld [vmem:[%s3235] sm:$0x3]
      %v6674 = vlaneseq
      %v6675 = vshrl.u32 %v6674, 7
      %v6676 = vsub.s32 0, %v6675
      %v6677 = vrot.slane %v6672, %v6676
      %v6678 = vlaneseq
      %v6679 = vshrl.u32 %v6678, 7
      %v6680 = vsub.s32 1, %v6679
      %v6681 = vrot.slane %v6672, %v6680
      %6682 = vrot.lane.b32.xlu0 %v6677, 36
      %v6683 = vpop.permute.xlu0 %6682
      %6684 = vrot.lane.b32.xlu0 %v6681, 36
      %v6685 = vpop.permute.xlu0 %6684
      %v6686 = vsel %vm3250, %v6683, %v6685
      %v6689 = vmul.f32 %v5252, %v6683
      %v6690 = vmul.f32 %v6277, %v6686
      %v6691 = vmul.f32 %v5254, %v6683
      %v6692 = vmul.f32 %v6280, %v6686
      %v6693 = vmul.f32 %v5672, %v6683
      %v6694 = vmul.f32 %v6283, %v6686
      %v6695 = vmul.f32 %v5674, %v6683
      %v6696 = vmul.f32 %v6286, %v6686
      %6705 = vrot.lane.b32.xlu0 %v6689, 92
      %v6706 = vpop.permute.xlu0 %6705
      %6707 = vrot.lane.b32.xlu0 %v6690, 92
      %v6708 = vpop.permute.xlu0 %6707
      %6709 = vrot.lane.b32.xlu0 %v6691, 92
      %v6710 = vpop.permute.xlu0 %6709
      %6711 = vrot.lane.b32.xlu0 %v6692, 92
      %v6712 = vpop.permute.xlu0 %6711
      %6713 = vrot.lane.b32.xlu0 %v6693, 92
      %v6714 = vpop.permute.xlu0 %6713
      %6715 = vrot.lane.b32.xlu0 %v6694, 92
      %v6716 = vpop.permute.xlu0 %6715
      %6717 = vrot.lane.b32.xlu0 %v6695, 92
      %v6718 = vpop.permute.xlu0 %6717
      %6719 = vrot.lane.b32.xlu0 %v6696, 92
      %v6720 = vpop.permute.xlu0 %6719
      %v6721 = vsel %vm3286, %v6706, %v6708
      %v6722 = vsel %vm3286, %v6710, %v6712
      %v6723 = vsel %vm3286, %v6714, %v6716
      %v6724 = vsel %vm3286, %v6718, %v6720
      %6733 = vst [vmem:[#allocation2 + $0x180] sm:$0xff] %v6721
      %6734 = vst.msk [vmem:[#allocation2 + $0x188] sm:$0xff] %vm2285, %v6708
      %6735 = vst [vmem:[#allocation2 + $0x190] sm:$0xff] %v6722
      %6736 = vst.msk [vmem:[#allocation2 + $0x198] sm:$0xff] %vm2285, %v6712
      %6737 = vst [vmem:[#allocation2 + $0x1a0] sm:$0xff] %v6723
      %6738 = vst.msk [vmem:[#allocation2 + $0x1a8] sm:$0xff] %vm2285, %v6716
      %6739 = vst [vmem:[#allocation2 + $0x1b0] sm:$0xff] %v6724
      %6740 = vst.msk [vmem:[#allocation2 + $0x1b8] sm:$0xff] %vm2285, %v6720
      %v6741 = vld [vmem:[#allocation2] sm:$0xff]
      %v6742 = vld [vmem:[#allocation2 + $0x8] sm:$0xff]
      %v6743 = vld [vmem:[#allocation2 + $0x10] sm:$0xff]
      %v6744 = vld [vmem:[#allocation2 + $0x18] sm:$0xff]
      %v6745 = vld [vmem:[#allocation2 + $0x20] sm:$0xff]
      %v6746 = vld [vmem:[#allocation2 + $0x28] sm:$0xff]
      %v6747 = vld [vmem:[#allocation2 + $0x30] sm:$0xff]
      %v6748 = vld [vmem:[#allocation2 + $0x38] sm:$0xff]
      %v6749 = vld [vmem:[#allocation2 + $0x40] sm:$0xff]
      %v6750 = vld [vmem:[#allocation2 + $0x48] sm:$0xff]
      %v6751 = vld [vmem:[#allocation2 + $0x50] sm:$0xff]
      %v6752 = vld [vmem:[#allocation2 + $0x58] sm:$0xff]
      %v6753 = vld [vmem:[#allocation2 + $0x60] sm:$0xff]
      %v6754 = vld [vmem:[#allocation2 + $0x68] sm:$0xff]
      %v6755 = vld [vmem:[#allocation2 + $0x70] sm:$0xff]
      %v6756 = vld [vmem:[#allocation2 + $0x78] sm:$0xff]
      %v6757 = vld [vmem:[#allocation2 + $0x80] sm:$0xff]
      %v6758 = vld [vmem:[#allocation2 + $0x88] sm:$0xff]
      %v6759 = vld [vmem:[#allocation2 + $0x90] sm:$0xff]
      %v6760 = vld [vmem:[#allocation2 + $0x98] sm:$0xff]
      %v6761 = vld [vmem:[#allocation2 + $0xa0] sm:$0xff]
      %v6762 = vld [vmem:[#allocation2 + $0xa8] sm:$0xff]
      %v6763 = vld [vmem:[#allocation2 + $0xb0] sm:$0xff]
      %v6764 = vld [vmem:[#allocation2 + $0xb8] sm:$0xff]
      %v6765 = vld [vmem:[#allocation2 + $0xc0] sm:$0xff]
      %v6766 = vld [vmem:[#allocation2 + $0xc8] sm:$0xff]
      %v6767 = vld [vmem:[#allocation2 + $0xd0] sm:$0xff]
      %v6768 = vld [vmem:[#allocation2 + $0xd8] sm:$0xff]
      %v6769 = vld [vmem:[#allocation2 + $0xe0] sm:$0xff]
      %v6770 = vld [vmem:[#allocation2 + $0xe8] sm:$0xff]
      %v6771 = vld [vmem:[#allocation2 + $0xf0] sm:$0xff]
      %v6772 = vld [vmem:[#allocation2 + $0xf8] sm:$0xff]
      %v6773 = vld [vmem:[#allocation2 + $0x100] sm:$0xff]
      %v6774 = vld [vmem:[#allocation2 + $0x108] sm:$0xff]
      %v6775 = vld [vmem:[#allocation2 + $0x110] sm:$0xff]
      %v6776 = vld [vmem:[#allocation2 + $0x118] sm:$0xff]
      %v6777 = vld [vmem:[#allocation2 + $0x120] sm:$0xff]
      %v6778 = vld [vmem:[#allocation2 + $0x128] sm:$0xff]
      %v6779 = vld [vmem:[#allocation2 + $0x130] sm:$0xff]
      %v6780 = vld [vmem:[#allocation2 + $0x138] sm:$0xff]
      %v6781 = vld [vmem:[#allocation2 + $0x140] sm:$0xff]
      %v6782 = vld [vmem:[#allocation2 + $0x148] sm:$0xff]
      %v6783 = vld [vmem:[#allocation2 + $0x150] sm:$0xff]
      %v6784 = vld [vmem:[#allocation2 + $0x158] sm:$0xff]
      %v6785 = vld [vmem:[#allocation2 + $0x160] sm:$0xff]
      %v6786 = vld [vmem:[#allocation2 + $0x168] sm:$0xff]
      %v6787 = vld [vmem:[#allocation2 + $0x170] sm:$0xff]
      %v6788 = vld [vmem:[#allocation2 + $0x178] sm:$0xff]
      %v6789 = vld [vmem:[#allocation2 + $0x180] sm:$0xff]
      %v6790 = vld [vmem:[#allocation2 + $0x188] sm:$0xff]
      %v6791 = vld [vmem:[#allocation2 + $0x190] sm:$0xff]
      %v6792 = vld [vmem:[#allocation2 + $0x198] sm:$0xff]
      %v6793 = vld [vmem:[#allocation2 + $0x1a0] sm:$0xff]
      %v6794 = vld [vmem:[#allocation2 + $0x1a8] sm:$0xff]
      %v6795 = vld [vmem:[#allocation2 + $0x1b0] sm:$0xff]
      %v6796 = vld [vmem:[#allocation2 + $0x1b8] sm:$0xff]
      %6797 = vmatprep.subr.mxu0 %v6772
      %6798 = vmatpush1.msra.mxu0 %v6771
      %6799 = vmatprep.subr.mxu0 %v6770
      %6800 = vmatpush1.msra.mxu0 %v6769
      %6801 = vmatprep.subr.mxu0 %v6768
      %6802 = vmatpush1.msra.mxu0 %v6767
      %6803 = vmatprep.subr.mxu0 %v6766
      %6804 = vmatpush1.msra.mxu0 %v6765
      %6805 = vmatprep.subr.mxu0 %v6764
      %6806 = vmatpush1.msra.mxu0 %v6763
      %6807 = vmatprep.subr.mxu0 %v6762
      %6808 = vmatpush1.msra.mxu0 %v6761
      %6809 = vmatprep.subr.mxu0 %v6760
      %6810 = vmatpush1.msra.mxu0 %v6759
      %6811 = vmatprep.subr.mxu0 %v6758
      %6812 = vmatpush1.msra.mxu0 %v6757
      %6813 = vmatprep.subr.mxu0 %v6756
      %6814 = vmatpush1.msra.mxu0 %v6755
      %6815 = vmatprep.subr.mxu0 %v6754
      %6816 = vmatpush1.msra.mxu0 %v6753
      %6817 = vmatprep.subr.mxu0 %v6752
      %6818 = vmatpush1.msra.mxu0 %v6751
      %6819 = vmatprep.subr.mxu0 %v6750
      %6820 = vmatpush1.msra.mxu0 %v6749
      %6821 = vmatprep.subr.mxu0 %v6748
      %6822 = vmatpush1.msra.mxu0 %v6747
      %6823 = vmatprep.subr.mxu0 %v6746
      %6824 = vmatpush1.msra.mxu0 %v6745
      %6825 = vmatprep.subr.mxu0 %v6744
      %6826 = vmatpush1.msra.mxu0 %v6743
      %6827 = vmatprep.subr.mxu0 %v6742
      %6828 = vmatpush1.msra.mxu0 %v6741
      %6829 = vmatprep.subr.mxu0 0.0
      %6830 = vmatpush2.msra.mxu0 0.0
      %6831 = vmatprep.subr.mxu0 0.0
      %6832 = vmatpush2.msra.mxu0 0.0
      %6833 = vmatprep.subr.mxu0 0.0
      %6834 = vmatpush2.msra.mxu0 0.0
      %6835 = vmatprep.subr.mxu0 0.0
      %6836 = vmatpush2.msra.mxu0 0.0
      %6837 = vmatprep.subr.mxu0 %v6796
      %6838 = vmatpush2.msra.mxu0 %v6795
      %6839 = vmatprep.subr.mxu0 %v6794
      %6840 = vmatpush2.msra.mxu0 %v6793
      %6841 = vmatprep.subr.mxu0 %v6792
      %6842 = vmatpush2.msra.mxu0 %v6791
      %6843 = vmatprep.subr.mxu0 %v6790
      %6844 = vmatpush2.msra.mxu0 %v6789
      %6845 = vmatprep.subr.mxu0 %v6788
      %6846 = vmatpush2.msra.mxu0 %v6787
      %6847 = vmatprep.subr.mxu0 %v6786
      %6848 = vmatpush2.msra.mxu0 %v6785
      %6849 = vmatprep.subr.mxu0 %v6784
      %6850 = vmatpush2.msra.mxu0 %v6783
      %6851 = vmatprep.subr.mxu0 %v6782
      %6852 = vmatpush2.msra.mxu0 %v6781
      %6853 = vmatprep.subr.mxu0 %v6780
      %6854 = vmatpush2.msra.mxu0 %v6779
      %6855 = vmatprep.subr.mxu0 %v6778
      %6856 = vmatpush2.msra.mxu0 %v6777
      %6857 = vmatprep.subr.mxu0 %v6776
      %6858 = vmatpush2.msra.mxu0 %v6775
      %6859 = vmatprep.subr.mxu0 %v6774
      %6860 = vmatpush2.msra.mxu0 %v6773
      %6861 = vmatprep.mubr.f32.mxu0 %v3364
      %6862 = vmatmul.mubr.f32.gmra.mxu0 %v277
      %v6863 = vpop.f32.mrf.mxu0
      %v6864 = vadd.f32 0.0, %v6863
      %v6865 = vpop.f32.mrf.mxu0
      %v6866 = vadd.f32 0.0, %v6865
      %6867 = vmatprep.mubr.f32.mxu0 %v3367
      %6868 = vmatmul.mubr.f32.gmra.mxu0 %v279
      %v6869 = vpop.f32.mrf.mxu0
      %v6870 = vadd.f32 0.0, %v6869
      %v6871 = vpop.f32.mrf.mxu0
      %v6872 = vadd.f32 0.0, %v6871
      %6873 = vdwg.mxu0
      %v6874 = vadd.f32 %v6265, %v6864
      %v6875 = vadd.f32 %v6267, %v6866
      %v6876 = vadd.f32 %v6271, %v6870
      %v6877 = vadd.f32 %v6273, %v6872
      %v6878 = vadd.f32 %v6874, %v3986
      %v6879 = vadd.f32 %v6875, %v3988
      %v6880 = vadd.f32 %v6876, %v3992
      %v6881 = vadd.f32 %v6877, %v3994
      %v6882 = vsel %vm2285, %v6879, 0.0
      %v6883 = vadd.f32 %v6878, %v6882
      %6884 = vadd.xlane.f32.xlu0 %v6883
      %v6885 = vpop.xlane.xlu0 %6884
      %v6886 = vsel %vm2285, %v6881, 0.0
      %v6887 = vadd.f32 %v6880, %v6886
      %6888 = vadd.xlane.f32.xlu0 %v6887
      %v6889 = vpop.xlane.xlu0 %6888
      %v6890 = vmul.f32 %v6885, %v3462
      %v6891 = vmul.f32 %v6889, %v3462
      %6892 = vmatprep.subr.mxu0 0.0
      %6893 = vmatpush1.msra.mxu0 0.0
      %6894 = vmatprep.subr.mxu0 0.0
      %6895 = vmatpush1.msra.mxu0 0.0
      %6896 = vmatprep.subr.mxu0 0.0
      %6897 = vmatpush1.msra.mxu0 0.0
      %6898 = vmatprep.subr.mxu0 0.0
      %6899 = vmatpush1.msra.mxu0 0.0
      %6900 = vmatprep.subr.mxu0 0.0
      %6901 = vmatpush1.msra.mxu0 0.0
      %6902 = vmatprep.subr.mxu0 0.0
      %6903 = vmatpush1.msra.mxu0 0.0
      %6904 = vmatprep.subr.mxu0 0.0
      %6905 = vmatpush1.msra.mxu0 0.0
      %6906 = vmatprep.subr.mxu0 0.0
      %6907 = vmatpush1.msra.mxu0 0.0
      %6908 = vmatprep.subr.mxu0 0.0
      %6909 = vmatpush1.msra.mxu0 0.0
      %6910 = vmatprep.subr.mxu0 0.0
      %6911 = vmatpush1.msra.mxu0 0.0
      %6912 = vmatprep.subr.mxu0 0.0
      %6913 = vmatpush1.msra.mxu0 0.0
      %6914 = vmatprep.subr.mxu0 0.0
      %6915 = vmatpush1.msra.mxu0 0.0
      %6916 = vmatprep.subr.mxu0 0.0
      %6917 = vmatpush1.msra.mxu0 0.0
      %6918 = vmatprep.subr.mxu0 0.0
      %6919 = vmatpush1.msra.mxu0 0.0
      %6920 = vmatprep.subr.mxu0 0.0
      %6921 = vmatpush1.msra.mxu0 %v6891
      %6922 = vmatprep.subr.mxu0 0.0
      %6923 = vmatpush1.msra.mxu0 %v6890
      %6924 = vmatprep.subr.mxu0 0.0
      %6925 = vmatpush2.msra.mxu0 0.0
      %6926 = vmatprep.subr.mxu0 0.0
      %6927 = vmatpush2.msra.mxu0 0.0
      %6928 = vmatprep.subr.mxu0 0.0
      %6929 = vmatpush2.msra.mxu0 0.0
      %6930 = vmatprep.subr.mxu0 0.0
      %6931 = vmatpush2.msra.mxu0 0.0
      %6932 = vmatprep.subr.mxu0 0.0
      %6933 = vmatpush2.msra.mxu0 0.0
      %6934 = vmatprep.subr.mxu0 0.0
      %6935 = vmatpush2.msra.mxu0 0.0
      %6936 = vmatprep.subr.mxu0 0.0
      %6937 = vmatpush2.msra.mxu0 0.0
      %6938 = vmatprep.subr.mxu0 0.0
      %6939 = vmatpush2.msra.mxu0 0.0
      %6940 = vmatprep.subr.mxu0 0.0
      %6941 = vmatpush2.msra.mxu0 0.0
      %6942 = vmatprep.subr.mxu0 0.0
      %6943 = vmatpush2.msra.mxu0 0.0
      %6944 = vmatprep.subr.mxu0 0.0
      %6945 = vmatpush2.msra.mxu0 0.0
      %6946 = vmatprep.subr.mxu0 0.0
      %6947 = vmatpush2.msra.mxu0 0.0
      %6948 = vmatprep.subr.mxu0 0.0
      %6949 = vmatpush2.msra.mxu0 0.0
      %6950 = vmatprep.subr.mxu0 0.0
      %6951 = vmatpush2.msra.mxu0 0.0
      %6952 = vmatprep.subr.mxu0 0.0
      %6953 = vmatpush2.msra.mxu0 0.0
      %6954 = vmatprep.subr.mxu0 0.0
      %6955 = vmatpush2.msra.mxu0 0.0
      %6956 = vmatprep.mubr.f32.mxu0 0.0
      %6957 = vmatmul.mubr.f32.gmra.mxu0 %v3466
      %v6958 = vpop.f32.mrf.mxu0
      %v6959 = vadd.f32 %v299, %v6958
      %v6960 = vpop.f32.mrf.mxu0
      %6961 = vdwg.mxu0
      %v6962 = vmul.f32 %v6959, 0.70710677
      %v6963 = vand.u32 2147483647, %v6962
      %v6964 = vmul.f32 %v6963, 0.3275911
      %v6965 = vadd.f32 %v6964, 1.0
      %v6966 = vrcp.pop %v6965
      %v6967 = vmul.f32 1.0, %v6966
      %v6968 = vmul.f32 %v6967, 1.0614054
      %v6969 = vadd.f32 %v6968, -1.4531521
      %v6970 = vmul.f32 %v6967, %v6969
      %v6971 = vadd.f32 %v6970, 1.4214138
      %v6972 = vmul.f32 %v6967, %v6971
      %v6973 = vadd.f32 %v6972, -0.28449672
      %v6974 = vmul.f32 %v6967, %v6973
      %v6975 = vadd.f32 %v6974, 0.2548296
      %v6976 = vmul.f32 %v6967, %v6975
      %v6977 = vsub.f32 0.0, %v6963
      %v6978 = vmul.f32 %v6977, %v6963
      %v6979 = vmul.f32 %v6978, 1.442695
      %v6980 = vpow.pop %v6979
      %v6981 = vmul.f32 %v6976, %v6980
      %v6982 = vsub.f32 1.0, %v6981
      %vm6983 = vcmp.ge.f32.partialorder %v6962, 0.0
      %v6984 = vsub.f32 0.0, %v6982
      %v6985 = vsel %vm6983, %v6982, %v6984
      %v6986 = vmul.f32 %v6959, 0.5
      %v6987 = vadd.f32 %v6985, 1.0
      %v6988 = vmul.f32 %v6986, %v6987
      %v6990 = vsel %vm3584, %v6988, 0
      %6992 = vmatprep.subr.mxu0 0.0
      %6993 = vmatpush1.msra.mxu0 0.0
      %6994 = vmatprep.subr.mxu0 0.0
      %6995 = vmatpush1.msra.mxu0 0.0
      %6996 = vmatprep.subr.mxu0 0.0
      %6997 = vmatpush1.msra.mxu0 0.0
      %6998 = vmatprep.subr.mxu0 0.0
      %6999 = vmatpush1.msra.mxu0 0.0
      %7000 = vmatprep.subr.mxu0 0.0
      %7001 = vmatpush1.msra.mxu0 0.0
      %7002 = vmatprep.subr.mxu0 0.0
      %7003 = vmatpush1.msra.mxu0 0.0
      %7004 = vmatprep.subr.mxu0 0.0
      %7005 = vmatpush1.msra.mxu0 0.0
      %7006 = vmatprep.subr.mxu0 0.0
      %7007 = vmatpush1.msra.mxu0 0.0
      %7008 = vmatprep.subr.mxu0 0.0
      %7009 = vmatpush1.msra.mxu0 0.0
      %7010 = vmatprep.subr.mxu0 0.0
      %7011 = vmatpush1.msra.mxu0 0.0
      %7012 = vmatprep.subr.mxu0 0.0
      %7013 = vmatpush1.msra.mxu0 0.0
      %7014 = vmatprep.subr.mxu0 0.0
      %7015 = vmatpush1.msra.mxu0 0.0
      %7016 = vmatprep.subr.mxu0 0.0
      %7017 = vmatpush1.msra.mxu0 0.0
      %7018 = vmatprep.subr.mxu0 0.0
      %7019 = vmatpush1.msra.mxu0 0.0
      %7020 = vmatprep.subr.mxu0 0.0
      %7021 = vmatpush1.msra.mxu0 0.0
      %7022 = vmatprep.subr.mxu0 0.0
      %7023 = vmatpush1.msra.mxu0 %v6990
      %7024 = vmatprep.subr.mxu0 0.0
      %7025 = vmatpush2.msra.mxu0 0.0
      %7026 = vmatprep.subr.mxu0 0.0
      %7027 = vmatpush2.msra.mxu0 0.0
      %7028 = vmatprep.subr.mxu0 0.0
      %7029 = vmatpush2.msra.mxu0 0.0
      %7030 = vmatprep.subr.mxu0 0.0
      %7031 = vmatpush2.msra.mxu0 0.0
      %7032 = vmatprep.subr.mxu0 0.0
      %7033 = vmatpush2.msra.mxu0 0.0
      %7034 = vmatprep.subr.mxu0 0.0
      %7035 = vmatpush2.msra.mxu0 0.0
      %7036 = vmatprep.subr.mxu0 0.0
      %7037 = vmatpush2.msra.mxu0 0.0
      %7038 = vmatprep.subr.mxu0 0.0
      %7039 = vmatpush2.msra.mxu0 0.0
      %7040 = vmatprep.subr.mxu0 0.0
      %7041 = vmatpush2.msra.mxu0 0.0
      %7042 = vmatprep.subr.mxu0 0.0
      %7043 = vmatpush2.msra.mxu0 0.0
      %7044 = vmatprep.subr.mxu0 0.0
      %7045 = vmatpush2.msra.mxu0 0.0
      %7046 = vmatprep.subr.mxu0 0.0
      %7047 = vmatpush2.msra.mxu0 0.0
      %7048 = vmatprep.subr.mxu0 0.0
      %7049 = vmatpush2.msra.mxu0 0.0
      %7050 = vmatprep.subr.mxu0 0.0
      %7051 = vmatpush2.msra.mxu0 0.0
      %7052 = vmatprep.subr.mxu0 0.0
      %7053 = vmatpush2.msra.mxu0 0.0
      %7054 = vmatprep.subr.mxu0 0.0
      %7055 = vmatpush2.msra.mxu0 0.0
      %7056 = vmatprep.mubr.f32.mxu0 0.0
      %7057 = vmatmul.mubr.f32.gmra.mxu0 %v3567
      %v7058 = vpop.f32.mrf.mxu0
      %v7059 = vadd.f32 %v291, %v7058
      %v7060 = vpop.f32.mrf.mxu0
      %7061 = vmatprep.mubr.f32.mxu0 0.0
      %7062 = vmatmul.mubr.f32.gmra.mxu0 %v3570
      %v7063 = vpop.f32.mrf.mxu0
      %v7064 = vadd.f32 %v292, %v7063
      %v7065 = vpop.f32.mrf.mxu0
      %7066 = vmatprep.mubr.f32.mxu0 0.0
      %7067 = vmatmul.mubr.f32.gmra.mxu0 %v3573
      %v7068 = vpop.f32.mrf.mxu0
      %v7069 = vadd.f32 %v293, %v7068
      %v7070 = vpop.f32.mrf.mxu0
      %7071 = vmatprep.mubr.f32.mxu0 0.0
      %7072 = vmatmul.mubr.f32.gmra.mxu0 %v3576
      %v7073 = vpop.f32.mrf.mxu0
      %v7074 = vadd.f32 %v294, %v7073
      %v7075 = vpop.f32.mrf.mxu0
      %7076 = vmatprep.mubr.f32.mxu0 0.0
      %7077 = vmatmul.mubr.f32.gmra.mxu0 %v3579
      %v7078 = vpop.f32.mrf.mxu0
      %v7079 = vadd.f32 %v295, %v7078
      %v7080 = vpop.f32.mrf.mxu0
      %7081 = vmatprep.mubr.f32.mxu0 0.0
      %7082 = vmatmul.mubr.f32.gmra.mxu0 %v3582
      %v7083 = vpop.f32.mrf.mxu0
      %v7084 = vadd.f32 %v296, %v7083
      %v7085 = vpop.f32.mrf.mxu0
      %7086 = vdwg.mxu0
      %v7087 = vmax.f32 %v7059, %v7069
      %v7088 = vmax.f32 %v7064, %v7074
      %v7089 = vmax.f32 %v7087, %v7079
      %v7090 = vmax.f32 %v7088, %v7084
      %v7091 = vsub.f32 %v7059, %v7089
      %v7092 = vsub.f32 %v7064, %v7090
      %v7093 = vmul.f32 %v7091, 1.442695
      %v7094 = vpow.pop %v7093
      %v7095 = vmul.f32 %v7092, 1.442695
      %v7096 = vpow.pop %v7095
      %v7097 = vsub.f32 %v7069, %v7089
      %v7098 = vsub.f32 %v7074, %v7090
      %v7099 = vmul.f32 %v7097, 1.442695
      %v7100 = vpow.pop %v7099
      %v7101 = vmul.f32 %v7098, 1.442695
      %v7102 = vpow.pop %v7101
      %v7103 = vsub.f32 %v7079, %v7089
      %v7104 = vsub.f32 %v7084, %v7090
      %v7105 = vmul.f32 %v7103, 1.442695
      %v7106 = vpow.pop %v7105
      %v7107 = vmul.f32 %v7104, 1.442695
      %v7108 = vpow.pop %v7107
      %v7109 = vadd.f32 %v7094, %v7100
      %v7110 = vadd.f32 %v7096, %v7102
      %v7111 = vadd.f32 %v7109, %v7106
      %v7112 = vadd.f32 %v7110, %v7108
      %v7113 = vrcp.pop %v7111
      %v7114 = vmul.f32 1.0, %v7113
      %v7115 = vrcp.pop %v7112
      %v7116 = vmul.f32 1.0, %v7115
      %v7117 = vmul.f32 %v7094, %v7114
      %v7118 = vmul.f32 %v7096, %v7116
      %7120 = vset.pattern.permute.xlu0 0
      %7121 = vperm.xlu0 %7120, %v7117
      %v7122 = vpop.permute.xlu0 %7121
      %7125 = vset.pattern.permute.xlu0 0
      %7126 = vperm.xlu0 %7125, %v7118
      %v7127 = vpop.permute.xlu0 %7126
      %v7129 = vmul.f32 %v6265, %v7122
      %v7130 = vmul.f32 %v6267, %v7122
      %v7131 = vmul.f32 %v6271, %v7127
      %v7132 = vmul.f32 %v6273, %v7127
      %v7133 = vmul.f32 %v7100, %v7114
      %v7134 = vmul.f32 %v7102, %v7116
      %7136 = vset.pattern.permute.xlu0 0
      %7137 = vperm.xlu0 %7136, %v7133
      %v7138 = vpop.permute.xlu0 %7137
      %7141 = vset.pattern.permute.xlu0 0
      %7142 = vperm.xlu0 %7141, %v7134
      %v7143 = vpop.permute.xlu0 %7142
      %v7145 = vmul.f32 %v6864, %v7138
      %v7146 = vmul.f32 %v6866, %v7138
      %v7147 = vmul.f32 %v6870, %v7143
      %v7148 = vmul.f32 %v6872, %v7143
      %v7149 = vadd.f32 %v7129, %v7145
      %v7150 = vadd.f32 %v7130, %v7146
      %v7151 = vadd.f32 %v7131, %v7147
      %v7152 = vadd.f32 %v7132, %v7148
      %v7153 = vmul.f32 %v7106, %v7114
      %v7154 = vmul.f32 %v7108, %v7116
      %7156 = vset.pattern.permute.xlu0 0
      %7157 = vperm.xlu0 %7156, %v7153
      %v7158 = vpop.permute.xlu0 %7157
      %7161 = vset.pattern.permute.xlu0 0
      %7162 = vperm.xlu0 %7161, %v7154
      %v7163 = vpop.permute.xlu0 %7162
      %v7165 = vmul.f32 %v3986, %v7158
      %v7166 = vmul.f32 %v3988, %v7158
      %v7167 = vmul.f32 %v3992, %v7163
      %v7168 = vmul.f32 %v3994, %v7163
      %v7169 = vadd.f32 %v7149, %v7165
      %v7170 = vadd.f32 %v7150, %v7166
      %v7171 = vadd.f32 %v7151, %v7167
      %v7172 = vadd.f32 %v7152, %v7168
      %7173 = vmatprep.subr.mxu0 0.0
      %7174 = vmatpush1.msra.mxu0 0.0
      %7175 = vmatprep.subr.mxu0 0.0
      %7176 = vmatpush1.msra.mxu0 0.0
      %7177 = vmatprep.subr.mxu0 0.0
      %7178 = vmatpush1.msra.mxu0 0.0
      %7179 = vmatprep.subr.mxu0 0.0
      %7180 = vmatpush1.msra.mxu0 0.0
      %7181 = vmatprep.subr.mxu0 0.0
      %7182 = vmatpush1.msra.mxu0 0.0
      %7183 = vmatprep.subr.mxu0 0.0
      %7184 = vmatpush1.msra.mxu0 0.0
      %7185 = vmatprep.subr.mxu0 0.0
      %7186 = vmatpush1.msra.mxu0 0.0
      %7187 = vmatprep.subr.mxu0 0.0
      %7188 = vmatpush1.msra.mxu0 0.0
      %7189 = vmatprep.subr.mxu0 0.0
      %7190 = vmatpush1.msra.mxu0 0.0
      %7191 = vmatprep.subr.mxu0 0.0
      %7192 = vmatpush1.msra.mxu0 0.0
      %7193 = vmatprep.subr.mxu0 0.0
      %7194 = vmatpush1.msra.mxu0 0.0
      %7195 = vmatprep.subr.mxu0 0.0
      %7196 = vmatpush1.msra.mxu0 0.0
      %7197 = vmatprep.subr.mxu0 0.0
      %7198 = vmatpush1.msra.mxu0 0.0
      %7199 = vmatprep.subr.mxu0 0.0
      %7200 = vmatpush1.msra.mxu0 0.0
      %7201 = vmatprep.subr.mxu0 %v7172
      %7202 = vmatpush1.msra.mxu0 %v7171
      %7203 = vmatprep.subr.mxu0 %v7170
      %7204 = vmatpush1.msra.mxu0 %v7169
      %7205 = vmatprep.subr.mxu0 0.0
      %7206 = vmatpush2.msra.mxu0 0.0
      %7207 = vmatprep.subr.mxu0 0.0
      %7208 = vmatpush2.msra.mxu0 0.0
      %7209 = vmatprep.subr.mxu0 0.0
      %7210 = vmatpush2.msra.mxu0 0.0
      %7211 = vmatprep.subr.mxu0 0.0
      %7212 = vmatpush2.msra.mxu0 0.0
      %7213 = vmatprep.subr.mxu0 0.0
      %7214 = vmatpush2.msra.mxu0 0.0
      %7215 = vmatprep.subr.mxu0 0.0
      %7216 = vmatpush2.msra.mxu0 0.0
      %7217 = vmatprep.subr.mxu0 0.0
      %7218 = vmatpush2.msra.mxu0 0.0
      %7219 = vmatprep.subr.mxu0 0.0
      %7220 = vmatpush2.msra.mxu0 0.0
      %7221 = vmatprep.subr.mxu0 0.0
      %7222 = vmatpush2.msra.mxu0 0.0
      %7223 = vmatprep.subr.mxu0 0.0
      %7224 = vmatpush2.msra.mxu0 0.0
      %7225 = vmatprep.subr.mxu0 0.0
      %7226 = vmatpush2.msra.mxu0 0.0
      %7227 = vmatprep.subr.mxu0 0.0
      %7228 = vmatpush2.msra.mxu0 0.0
      %7229 = vmatprep.subr.mxu0 0.0
      %7230 = vmatpush2.msra.mxu0 0.0
      %7231 = vmatprep.subr.mxu0 0.0
      %7232 = vmatpush2.msra.mxu0 0.0
      %7233 = vmatprep.subr.mxu0 0.0
      %7234 = vmatpush2.msra.mxu0 0.0
      %7235 = vmatprep.subr.mxu0 0.0
      %7236 = vmatpush2.msra.mxu0 0.0
      %7237 = vmatprep.mubr.f32.mxu0 0.0
      %7238 = vmatmul.mubr.f32.gmra.mxu0 %v3780
      %v7239 = vpop.f32.mrf.mxu0
      %v7240 = vadd.f32 %v3772, %v7239
      %v7241 = vpop.f32.mrf.mxu0
      %v7242 = vadd.f32 %v3772, %v7241
      %7243 = vmatprep.mubr.f32.mxu0 0.0
      %7244 = vmatmul.mubr.f32.gmra.mxu0 %v3783
      %v7245 = vpop.f32.mrf.mxu0
      %v7246 = vadd.f32 %v3777, %v7245
      %v7247 = vpop.f32.mrf.mxu0
      %v7248 = vadd.f32 %v3777, %v7247
      %7249 = vdwg.mxu0
      %s7250 = scalar_lea.vmem %s258, 32
      %7251 = vst [vmem:[%s7250] sm:$0xff] %v7240
      %7252 = vst.msk [vmem:[%s7250 + $0x8] sm:$0xff] %vm2285, %v7242
      %7253 = vst [vmem:[%s7250 + $0x10] sm:$0xff] %v7246
      %7254 = vst.msk [vmem:[%s7250 + $0x18] sm:$0xff] %vm2285, %v7248
      %s7255 = smul.u32 2, %s17
      %p7256 = scmp.lt.s32.totalorder %s7255, 3
      %s7257 = scalar_select %p7256, %s7255, 3
      %s7258 = smul.addr %s7257, 4
      %s7259 = smul.addr %s7258, 8
      %s7260 = scalar_lea.vmem %s6, %s7259
      // Predicated region
      $region45: #{forward.1} parent=43 // pred_check
        %p7261 = pneg %p166
      $region46: #{forward.1} parent=43 // pred_check_branch
        %7263 = sbr.rel (%p7261) target = $region48
      $region47: #{forward.1} parent=43 // pred_region
        %s7264 = smul.u32 2, %s17
      $region48: #{forward.1} parent=43 // pred_fallthru
        _
    $region44: #{forward.1} parent=5 // pred_fallthru
      _
    %p7265 = scmp.le.s32.totalorder 2, %s12
    // Predicated region
    $region49: #{forward.1} parent=5 // pred_check
      %p7266 = pneg %p7265
    $region50: #{forward.1} parent=5 // pred_check_branch
      %7268 = sbr.rel (%p7266) target = $region52
    $region51: #{forward.1} parent=5 // pred_region
      %s7269 = ssub.s32 %s12, 2
      // Predicated region
      $region53: #{forward.1} parent=51 // pred_check
        %p7270 = pneg %p172
      $region54: #{forward.1} parent=51 // pred_check_branch
        %7272 = sbr.rel (%p7270) target = $region56
      $region55: #{forward.1} parent=51 // pred_region
        %s7273 = smul.u32 2, %s18
        %p7274 = scmp.lt.s32.totalorder %s7273, 3
        %s7275 = scalar_select %p7274, %s7273, 3
        %s7276 = smul.addr %s7275, 4
        %s7277 = smul.addr %s7276, 8
        %s7278 = scalar_lea.vmem %s6, %s7277
      $region56: #{forward.1} parent=51 // pred_fallthru
        _
    $region52: #{forward.1} parent=5 // pred_fallthru
      _
  $region6: #{forward.1} parent=0 // loop_footer
    %s16 = sadd.s32 1, %s12
  $region7: #{forward.1} parent=0 // loop_footer_branch
    %11 = sbr.rel target = $region3
  $region8: #{forward.1} parent=0 // loop_exit
    _

</llo_original>
